<compile_context>
chip_gen: v7x
topology: tpu7x:2x2x1
jax: 0.10.0
libtpu: 0.0.40
codegen_flags: <defaults>
</compile_context>

<pallas_src>
import math
from functools import partial

import numpy as np
import jax
import jax.numpy as jnp
from jax.experimental import pallas as pl
from jax.experimental.pallas import tpu as pltpu

BN_EPS = 1e-5
PADS = (0, 0, 1, 1)          # Conv2d padding per block (from the PyTorch module)
COUT = 64


def _rup(x, m):
    return ((x + m - 1) // m) * m


# --------------------------- geometry helpers ---------------------------
def _block_geoms(H, W):
    """Static geometry for the 4 blocks. Flat activation layouts (blocks >= 1) use a
    row stride Wp rounded up to a multiple of 8 sublanes; the extra columns are never
    read by the next conv's valid output positions."""
    geoms = []
    h, w = H, W
    for i in range(4):
        pad = PADS[i]
        hp, wp_real = h + 2 * pad, w + 2 * pad
        ho, wo = hp - 2, wp_real - 2
        hq, wq = ho // 2, wo // 2
        wp = _rup(wp_real, 8)
        np_rows = (ho - 1) * wp + wo              # flat conv-output rows (blocks >= 1)
        geoms.append(dict(pad=pad, Hp=hp, Wp=wp, Ho=ho, Wo=wo, Hq=hq, Wq=wq,
                          A=hp * wp, Np=np_rows, Np8=_rup(max(np_rows, 1), 8),
                          Nm=np_rows - 1 - wp))
        h, w = hq, wq
    return geoms


def _sel_scatter(g, g_next):
    """One-hot (A_next, Nm) bf16 matrix: gathers the 2x2-window-max rows of block g and
    scatters them into block g_next's zero-padded flat layout (other rows exact zero)."""
    sel = np.zeros((g_next["A"], g["Nm"]), np.float32)
    off = g_next["pad"]
    for q in range(g["Hq"]):
        for v in range(g["Wq"]):
            sel[(q + off) * g_next["Wp"] + (v + off), 2 * q * g["Wp"] + 2 * v] = 1.0
    return jnp.asarray(sel, jnp.bfloat16)


def _sel_plain(g):
    """One-hot (Hq*Wq, Nm) bf16 matrix producing the plain pooled layout (final block)."""
    sel = np.zeros((g["Hq"] * g["Wq"], g["Nm"]), np.float32)
    for q in range(g["Hq"]):
        for v in range(g["Wq"]):
            sel[q * g["Wq"] + v, 2 * q * g["Wp"] + 2 * v] = 1.0
    return jnp.asarray(sel, jnp.bfloat16)


# --------------------------- parameter folding ---------------------------
def init_params(key):
    cins = (3, 64, 64, 64)
    params = []
    for cin in cins:
        key, k1, k2, k3, k4, k5, k6 = jax.random.split(key, 7)
        bound = 1.0 / math.sqrt(cin * 9)
        params.append(dict(
            w=jax.random.uniform(k1, (3, 3, cin, COUT), jnp.float32, -bound, bound),
            b=jax.random.uniform(k2, (COUT,), jnp.float32, -bound, bound),
            gamma=jax.random.uniform(k3, (COUT,), jnp.float32, 0.5, 1.5),
            beta=0.1 * jax.random.normal(k4, (COUT,), jnp.float32),
            mean=0.1 * jax.random.normal(k5, (COUT,), jnp.float32),
            var=jax.random.uniform(k6, (COUT,), jnp.float32, 0.5, 1.5),
        ))
    return params


def _fold_bn(p):
    scale = p["gamma"] / jnp.sqrt(p["var"] + BN_EPS)
    shift = p["beta"] + (p["b"] - p["mean"]) * scale
    return scale, shift


def _fold_params(params, n_blocks):
    """BN scale folded into bf16 weights; per-block shift kept in f32."""
    w0, wks, shifts = None, [], []
    for i in range(n_blocks):
        p = params[i]
        scale, shift = _fold_bn(p)
        wf = (p["w"] * scale).astype(jnp.bfloat16)        # (3,3,Cin,64)
        cin = p["w"].shape[2]
        if i == 0:
            w0 = wf.reshape(9 * cin, COUT)                 # (27, 64)
        else:
            wks.append(wf.reshape(9 * cin, COUT))          # (576, 64) K-concat weights
        shifts.append(shift.astype(jnp.float32))
    return w0, wks, jnp.stack(shifts)[:, None, :]          # (nb, 1, 64)


def _im2col_block0(x_nhwc, g0, Wg):
    """(N,H,W,3) -> (N, 4*Hq0*Wg, 27) bf16. The 4 row-groups are the four 2x2-pool
    window offsets; within a group rows are laid out in block-1's flat (Hq0, Wg)
    activation layout, so block-0 pooling is an aligned slab max in the kernel."""
    N, H, W, C = x_nhwc.shape
    Ho, Wo, Hq, Wq = g0["Ho"], g0["Wo"], g0["Hq"], g0["Wq"]
    cols = [x_nhwc[:, ky:ky + Ho, kx:kx + Wo, :] for ky in range(3) for kx in range(3)]
    p = jnp.concatenate(cols, axis=-1)[:, :2 * Hq, :2 * Wq, :]     # (N, 2Hq, 2Wq, 27)
    p = p.reshape(N, Hq, 2, Wq, 2, 9 * C).transpose(0, 2, 4, 1, 3, 5)  # (N,dy,dx,q,v,27)
    p = jnp.pad(p, ((0, 0), (0, 0), (0, 0), (0, 0), (0, Wg - Wq), (0, 0)))
    return p.reshape(N, 4 * Hq * Wg, 9 * C).astype(jnp.bfloat16)


# ------------------------------ fused kernel ------------------------------
def _make_fused_kernel(geoms, n_blocks, B, G):
    n_mid = n_blocks - 1

    def kernel(*refs):
        xc_ref, w0_ref = refs[0], refs[1]
        wk_refs = refs[2:2 + n_mid]
        sel_refs = refs[2 + n_mid:2 + 2 * n_mid]
        sh_ref = refs[2 + 2 * n_mid]
        o_ref = refs[3 + 2 * n_mid]
        act_refs = refs[4 + 2 * n_mid:4 + 3 * n_mid]
        stage_ref = refs[4 + 3 * n_mid] if n_mid else None

        R0, K0 = xc_ref.shape[1], xc_ref.shape[2]

        # ---- block 0: one (B*R0, 27)x(27, 64) matmul; pooling = aligned slab max ----
        y0 = jnp.dot(xc_ref[...].reshape(B * R0, K0), w0_ref[...],
                     preferred_element_type=jnp.float32)
        y0 = jnp.maximum(y0.reshape(B, R0, COUT) + sh_ref[0], 0.0)
        pooled = jnp.maximum(jnp.maximum(y0[:, 0:G], y0[:, G:2 * G]),
                             jnp.maximum(y0[:, 2 * G:3 * G], y0[:, 3 * G:4 * G]))
        if n_blocks == 1:
            o_ref[...] = pooled
            return
        act_refs[0][...] = pooled.astype(jnp.bfloat16)

        # ---- blocks 1..n_blocks-1: K-concat conv (one K=576 matmul per block) ----
        for i in range(1, n_blocks):
            g = geoms[i]
            Wp, Np, Np8, Nm = g["Wp"], g["Np"], g["Np8"], g["Nm"]
            a_ref = act_refs[i - 1]
            # stage the 9 shifted row windows as 64-lane column slabs (bf16, done once)
            for ky in range(3):
                for kx in range(3):
                    t = ky * 3 + kx
                    d = ky * Wp + kx
                    stage_ref[:, 0:Np, t * COUT:(t + 1) * COUT] = a_ref[:, d:d + Np, :]
            y = jnp.dot(stage_ref[:, 0:Np8, :].reshape(B * Np8, 9 * COUT),
                        wk_refs[i - 1][...], preferred_element_type=jnp.float32)
            y = jnp.maximum(y.reshape(B, Np8, COUT) + sh_ref[i], 0.0)
            # 2x2 max-pool: two shifted maxima (VPU) then a one-hot gather matmul.
            d1 = jnp.maximum(y[:, 0:Np - 1], y[:, 1:Np])
            m = jnp.maximum(d1[:, 0:Nm], d1[:, Wp:Wp + Nm])
            last = (i == n_blocks - 1)
            if last and g["Hq"] * g["Wq"] == 1:
                o_ref[...] = m[:, 0:1, :]                 # final 1x1: no matmul needed
            else:
                mb = m.astype(jnp.bfloat16)
                sel = sel_refs[i - 1][...]
                for b in range(B):
                    r = jnp.dot(sel, mb[b], preferred_element_type=jnp.float32)
                    if last:
                        o_ref[b] = r
                    else:
                        act_refs[i][b] = r.astype(jnp.bfloat16)

    return kernel


def _full_spec(shape):
    return pl.BlockSpec(shape, lambda n: (0,) * len(shape))


def _pick_batch(N, cap=8):
    # largest divisor of N that is <= cap (keeps VMEM modest on v5e's 16 MiB default;
    # raise cap together with vmem_limit_bytes for bigger per-step batches)
    b = 1
    for c in range(2, min(N, cap) + 1):
        if N % c == 0:
            b = c
    return b


@partial(jax.jit, static_argnames=("latent",))
def _forward_impl(x_nchw, params, latent):
    n_blocks = 4 if latent is None else latent + 1
    x = jnp.transpose(x_nchw, (0, 2, 3, 1)).astype(jnp.float32)
    N, H, W, _ = x.shape
    geoms = _block_geoms(H, W)
    g0 = geoms[0]
    assert geoms[n_blocks - 1]["Hq"] >= 1 and geoms[n_blocks - 1]["Wq"] >= 1, \
        "input spatial size too small for the requested depth"

    Wg = _rup(g0["Wq"], 8)
    G = g0["Hq"] * Wg
    if n_blocks > 1:
        assert geoms[1]["Wp"] == Wg and geoms[1]["A"] == G

    w0, wks, shifts = _fold_params(params, n_blocks)
    xc = _im2col_block0(x, g0, Wg)                          # (N, 4G, 27) bf16

    sels = []
    for i in range(1, n_blocks):
        sels.append(_sel_scatter(geoms[i], geoms[i + 1]) if i < n_blocks - 1
                    else _sel_plain(geoms[i]))

    g_last = geoms[n_blocks - 1]
    R_out = G if n_blocks == 1 else g_last["Hq"] * g_last["Wq"]

    B = _pick_batch(N)
    kernel = _make_fused_kernel(geoms, n_blocks, B, G)

    in_specs = [pl.BlockSpec((B,) + tuple(xc.shape[1:]), lambda n: (n, 0, 0)),
                _full_spec(w0.shape)]
    args = [xc, w0]
    for wk in wks:
        in_specs.append(_full_spec(wk.shape)); args.append(wk)
    for s in sels:
        in_specs.append(_full_spec(s.shape)); args.append(s)
    in_specs.append(_full_spec(shifts.shape)); args.append(shifts)

    scratch = [pltpu.VMEM((B, geoms[i]["A"], COUT), jnp.bfloat16)
               for i in range(1, n_blocks)]
    if n_blocks > 1:
        np8_max = max(geoms[i]["Np8"] for i in range(1, n_blocks))
        scratch.append(pltpu.VMEM((B, np8_max, 9 * COUT), jnp.bfloat16))

    out = pl.pallas_call(
        kernel,
        out_shape=jax.ShapeDtypeStruct((N, R_out, COUT), jnp.float32),
        grid=(N // B,),
        in_specs=in_specs,
        out_specs=pl.BlockSpec((B, R_out, COUT), lambda n: (n, 0, 0)),
        scratch_shapes=scratch,
        compiler_params=pltpu.CompilerParams(dimension_semantics=("parallel",)),
    )(*args)

    if n_blocks == 1:
        out = out.reshape(N, g0["Hq"], Wg, COUT)[:, :, :g0["Wq"], :]
    else:
        out = out.reshape(N, g_last["Hq"], g_last["Wq"], COUT)
    return jnp.transpose(out, (0, 3, 1, 2))                 # NHWC -> NCHW


def scnn_deeper_forward(x_nchw, params, latent=None):
    # TODO(synk): BatchNorm uses eval-mode running statistics; PyTorch train-mode batch
    # statistics (the default right after __init__) are not implemented.
    if latent is not None and (latent < 0 or latent > 3):
        raise ValueError("Invalid layer index")
    return _forward_impl(x_nchw, params, latent=latent)


# ------------------------- pure-JAX reference -------------------------
def _ref_block(x, p, pad):
    scale, shift = _fold_bn(p)
    if pad:
        x = jnp.pad(x, ((0, 0), (1, 1), (1, 1), (0, 0)))
    N, Hp, Wp, _ = x.shape
    Ho, Wo = Hp - 2, Wp - 2
    acc = jnp.zeros((N, Ho, Wo, p["w"].shape[-1]), jnp.float32)
    for ky in range(3):
        for kx in range(3):
            acc = acc + jnp.einsum("nhwc,cd->nhwd",
                                   x[:, ky:ky + Ho, kx:kx + Wo, :], p["w"][ky, kx],
                                   preferred_element_type=jnp.float32)
    y = jnp.maximum(acc * scale + shift, 0.0)
    Hq, Wq = Ho // 2, Wo // 2
    y = y[:, :2 * Hq, :2 * Wq, :].reshape(N, Hq, 2, Wq, 2, -1).max(axis=(2, 4))
    return y


def scnn_deeper_ref(x_nchw, params, latent=None):
    out = jnp.transpose(x_nchw, (0, 2, 3, 1))
    for i, p in enumerate(params):
        out = _ref_block(out, p, PADS[i])
        if i == latent:
            return jnp.transpose(out, (0, 3, 1, 2))
    return jnp.transpose(out, (0, 3, 1, 2))


if __name__ == "__main__":
    key = jax.random.PRNGKey(0)
    k_x, k_p = jax.random.split(key)
    x = jax.random.normal(k_x, (2, 3, 32, 32), jnp.float32)   # NCHW, CIFAR-like
    params = init_params(k_p)

    out = jax.block_until_ready(scnn_deeper_forward(x, params))
    assert out.shape == (2, 64, 1, 1), out.shape
    ref = jax.block_until_ready(scnn_deeper_ref(x, params))
    assert jnp.allclose(out, ref, rtol=5e-2, atol=5e-2), float(jnp.max(jnp.abs(out - ref)))

    # early-exit ("latent") paths
    out1 = jax.block_until_ready(scnn_deeper_forward(x, params, latent=1))
    ref1 = jax.block_until_ready(scnn_deeper_ref(x, params, latent=1))
    assert out1.shape == (2, 64, 6, 6), out1.shape
    assert jnp.allclose(out1, ref1, rtol=5e-2, atol=5e-2), float(jnp.max(jnp.abs(out1 - ref1)))

    out0 = jax.block_until_ready(scnn_deeper_forward(x, params, latent=0))
    ref0 = jax.block_until_ready(scnn_deeper_ref(x, params, latent=0))
    assert out0.shape == (2, 64, 15, 15), out0.shape
    assert jnp.allclose(out0, ref0, rtol=5e-2, atol=5e-2), float(jnp.max(jnp.abs(out0 - ref0)))

    print("KERNEL_OK")
</pallas_src>

<mosaic_0001>
module attributes {stable_mosaic.version = 11 : i64} {
  func.func @kernel(%arg0: i32, %arg1: memref<2x960x27xbf16, #tpu.memory_space<vmem>>, %arg2: memref<27x64xbf16, #tpu.memory_space<vmem>>, %arg3: memref<576x64xbf16, #tpu.memory_space<vmem>>, %arg4: memref<576x64xbf16, #tpu.memory_space<vmem>>, %arg5: memref<576x64xbf16, #tpu.memory_space<vmem>>, %arg6: memref<64x188xbf16, #tpu.memory_space<vmem>>, %arg7: memref<40x37xbf16, #tpu.memory_space<vmem>>, %arg8: memref<1x10xbf16, #tpu.memory_space<vmem>>, %arg9: memref<4x1x64xf32, #tpu.memory_space<vmem>>, %arg10: memref<2x1x64xf32, #tpu.memory_space<vmem>>, %arg11: memref<2x240x64xbf16, #tpu.memory_space<vmem>>, %arg12: memref<2x64x64xbf16, #tpu.memory_space<vmem>>, %arg13: memref<2x40x64xbf16, #tpu.memory_space<vmem>>, %arg14: memref<2x208x576xbf16, #tpu.memory_space<vmem>>) attributes {dimension_semantics = [#tpu.dimension_semantics<parallel>], iteration_bounds = array<i64: 1>, scalar_prefetch = 0 : i64, scratch_operands = 4 : i64, tpu.core_type = #tpu.core_type<tc>, window_params = [{transform_indices = @transform_0, window_bounds = array<i64: 2, 960, 27>}, {pipeline_mode = #tpu.pipeline_mode<synchronous>, transform_indices = @transform_1, window_bounds = array<i64: 27, 64>}, {pipeline_mode = #tpu.pipeline_mode<synchronous>, transform_indices = @transform_2, window_bounds = array<i64: 576, 64>}, {pipeline_mode = #tpu.pipeline_mode<synchronous>, transform_indices = @transform_3, window_bounds = array<i64: 576, 64>}, {pipeline_mode = #tpu.pipeline_mode<synchronous>, transform_indices = @transform_4, window_bounds = array<i64: 576, 64>}, {pipeline_mode = #tpu.pipeline_mode<synchronous>, transform_indices = @transform_5, window_bounds = array<i64: 64, 188>}, {pipeline_mode = #tpu.pipeline_mode<synchronous>, transform_indices = @transform_6, window_bounds = array<i64: 40, 37>}, {pipeline_mode = #tpu.pipeline_mode<synchronous>, transform_indices = @transform_7, window_bounds = array<i64: 1, 10>}, {pipeline_mode = #tpu.pipeline_mode<synchronous>, transform_indices = @transform_8, window_bounds = array<i64: 4, 1, 64>}, {transform_indices = @transform_9, window_bounds = array<i64: 2, 1, 64>}]} {
    %c0 = arith.constant 0 : index
    %c0_0 = arith.constant 0 : index
    %c0_1 = arith.constant 0 : index
    %0 = vector.load %arg1[%c0, %c0_0, %c0_1] : memref<2x960x27xbf16, #tpu.memory_space<vmem>>, vector<2x960x27xbf16>
    %1 = vector.shape_cast %0 : vector<2x960x27xbf16> to vector<1920x27xbf16>
    %c0_2 = arith.constant 0 : index
    %c0_3 = arith.constant 0 : index
    %2 = vector.load %arg2[%c0_2, %c0_3] : memref<27x64xbf16, #tpu.memory_space<vmem>>, vector<27x64xbf16>
    %cst = arith.constant dense<0.000000e+00> : vector<1920x64xf32>
    %3 = tpu.matmul %1, %2, %cst {dimension_numbers = #tpu.dot_dimension_numbers<[1], [0], [0], [1], [0, 0, 1, 1], [], []>} : vector<1920x27xbf16>, vector<27x64xbf16>, vector<1920x64xf32> -> vector<1920x64xf32>
    %4 = vector.shape_cast %3 : vector<1920x64xf32> to vector<2x960x64xf32>
    %c0_4 = arith.constant 0 : index
    %c0_5 = arith.constant 0 : index
    %c0_6 = arith.constant 0 : index
    %5 = vector.load %arg9[%c0_4, %c0_5, %c0_6] : memref<4x1x64xf32, #tpu.memory_space<vmem>>, vector<1x1x64xf32>
    %6 = vector.shape_cast %5 : vector<1x1x64xf32> to vector<1x64xf32>
    %7 = vector.shape_cast %6 : vector<1x64xf32> to vector<1x1x64xf32>
    %8 = vector.broadcast %7 : vector<1x1x64xf32> to vector<2x960x64xf32>
    %9 = arith.addf %4, %8 : vector<2x960x64xf32>
    %cst_7 = arith.constant 0.000000e+00 : f32
    %10 = vector.broadcast %cst_7 : f32 to vector<2x960x64xf32>
    %11 = arith.maximumf %9, %10 : vector<2x960x64xf32>
    %12 = vector.extract_strided_slice %11 {offsets = [0, 0, 0], sizes = [2, 240, 64], strides = [1, 1, 1]} : vector<2x960x64xf32> to vector<2x240x64xf32>
    %13 = vector.extract_strided_slice %11 {offsets = [0, 240, 0], sizes = [2, 240, 64], strides = [1, 1, 1]} : vector<2x960x64xf32> to vector<2x240x64xf32>
    %14 = arith.maximumf %12, %13 : vector<2x240x64xf32>
    %15 = vector.extract_strided_slice %11 {offsets = [0, 480, 0], sizes = [2, 240, 64], strides = [1, 1, 1]} : vector<2x960x64xf32> to vector<2x240x64xf32>
    %16 = vector.extract_strided_slice %11 {offsets = [0, 720, 0], sizes = [2, 240, 64], strides = [1, 1, 1]} : vector<2x960x64xf32> to vector<2x240x64xf32>
    %17 = arith.maximumf %15, %16 : vector<2x240x64xf32>
    %18 = arith.maximumf %14, %17 : vector<2x240x64xf32>
    %19 = arith.truncf %18 : vector<2x240x64xf32> to vector<2x240x64xbf16>
    %c0_8 = arith.constant 0 : index
    %c0_9 = arith.constant 0 : index
    %c0_10 = arith.constant 0 : index
    %20 = vector.load %arg11[%c0_8, %c0_9, %c0_10] : memref<2x240x64xbf16, #tpu.memory_space<vmem>>, vector<2x240x64xbf16>
    tpu.vector_store %arg11[%c0_8, %c0_9, %c0_10], %19 {strides = array<i32>} : memref<2x240x64xbf16, #tpu.memory_space<vmem>>, vector<2x240x64xbf16>,
    %c0_11 = arith.constant 0 : index
    %c0_12 = arith.constant 0 : index
    %c0_13 = arith.constant 0 : index
    %21 = vector.load %arg11[%c0_11, %c0_12, %c0_13] : memref<2x240x64xbf16, #tpu.memory_space<vmem>>, vector<2x205x64xbf16>
    %c0_14 = arith.constant 0 : index
    %c0_15 = arith.constant 0 : index
    %c0_16 = arith.constant 0 : index
    %22 = vector.load %arg14[%c0_14, %c0_15, %c0_16] : memref<2x208x576xbf16, #tpu.memory_space<vmem>>, vector<2x205x64xbf16>
    tpu.vector_store %arg14[%c0_14, %c0_15, %c0_16], %21 {strides = array<i32>} : memref<2x208x576xbf16, #tpu.memory_space<vmem>>, vector<2x205x64xbf16>,
    %c0_17 = arith.constant 0 : index
    %c1 = arith.constant 1 : index
    %c0_18 = arith.constant 0 : index
    %23 = vector.load %arg11[%c0_17, %c1, %c0_18] : memref<2x240x64xbf16, #tpu.memory_space<vmem>>, vector<2x205x64xbf16>
    %c0_19 = arith.constant 0 : index
    %c0_20 = arith.constant 0 : index
    %c64 = arith.constant 64 : index
    %24 = vector.load %arg14[%c0_19, %c0_20, %c64] : memref<2x208x576xbf16, #tpu.memory_space<vmem>>, vector<2x205x64xbf16>
    tpu.vector_store %arg14[%c0_19, %c0_20, %c64], %23 {strides = array<i32>} : memref<2x208x576xbf16, #tpu.memory_space<vmem>>, vector<2x205x64xbf16>,
    %c0_21 = arith.constant 0 : index
    %c2 = arith.constant 2 : index
    %c0_22 = arith.constant 0 : index
    %25 = vector.load %arg11[%c0_21, %c2, %c0_22] : memref<2x240x64xbf16, #tpu.memory_space<vmem>>, vector<2x205x64xbf16>
    %c0_23 = arith.constant 0 : index
    %c0_24 = arith.constant 0 : index
    %c128 = arith.constant 128 : index
    %26 = vector.load %arg14[%c0_23, %c0_24, %c128] : memref<2x208x576xbf16, #tpu.memory_space<vmem>>, vector<2x205x64xbf16>
    tpu.vector_store %arg14[%c0_23, %c0_24, %c128], %25 {strides = array<i32>} : memref<2x208x576xbf16, #tpu.memory_space<vmem>>, vector<2x205x64xbf16>,
    %c0_25 = arith.constant 0 : index
    %c16 = arith.constant 16 : index
    %c0_26 = arith.constant 0 : index
    %27 = vector.load %arg11[%c0_25, %c16, %c0_26] : memref<2x240x64xbf16, #tpu.memory_space<vmem>>, vector<2x205x64xbf16>
    %c0_27 = arith.constant 0 : index
    %c0_28 = arith.constant 0 : index
    %c192 = arith.constant 192 : index
    %28 = vector.load %arg14[%c0_27, %c0_28, %c192] : memref<2x208x576xbf16, #tpu.memory_space<vmem>>, vector<2x205x64xbf16>
    tpu.vector_store %arg14[%c0_27, %c0_28, %c192], %27 {strides = array<i32>} : memref<2x208x576xbf16, #tpu.memory_space<vmem>>, vector<2x205x64xbf16>,
    %c0_29 = arith.constant 0 : index
    %c17 = arith.constant 17 : index
    %c0_30 = arith.constant 0 : index
    %29 = vector.load %arg11[%c0_29, %c17, %c0_30] : memref<2x240x64xbf16, #tpu.memory_space<vmem>>, vector<2x205x64xbf16>
    %c0_31 = arith.constant 0 : index
    %c0_32 = arith.constant 0 : index
    %c256 = arith.constant 256 : index
    %30 = vector.load %arg14[%c0_31, %c0_32, %c256] : memref<2x208x576xbf16, #tpu.memory_space<vmem>>, vector<2x205x64xbf16>
    tpu.vector_store %arg14[%c0_31, %c0_32, %c256], %29 {strides = array<i32>} : memref<2x208x576xbf16, #tpu.memory_space<vmem>>, vector<2x205x64xbf16>,
    %c0_33 = arith.constant 0 : index
    %c18 = arith.constant 18 : index
    %c0_34 = arith.constant 0 : index
    %31 = vector.load %arg11[%c0_33, %c18, %c0_34] : memref<2x240x64xbf16, #tpu.memory_space<vmem>>, vector<2x205x64xbf16>
    %c0_35 = arith.constant 0 : index
    %c0_36 = arith.constant 0 : index
    %c320 = arith.constant 320 : index
    %32 = vector.load %arg14[%c0_35, %c0_36, %c320] : memref<2x208x576xbf16, #tpu.memory_space<vmem>>, vector<2x205x64xbf16>
    tpu.vector_store %arg14[%c0_35, %c0_36, %c320], %31 {strides = array<i32>} : memref<2x208x576xbf16, #tpu.memory_space<vmem>>, vector<2x205x64xbf16>,
    %c0_37 = arith.constant 0 : index
    %c32 = arith.constant 32 : index
    %c0_38 = arith.constant 0 : index
    %33 = vector.load %arg11[%c0_37, %c32, %c0_38] : memref<2x240x64xbf16, #tpu.memory_space<vmem>>, vector<2x205x64xbf16>
    %c0_39 = arith.constant 0 : index
    %c0_40 = arith.constant 0 : index
    %c384 = arith.constant 384 : index
    %34 = vector.load %arg14[%c0_39, %c0_40, %c384] : memref<2x208x576xbf16, #tpu.memory_space<vmem>>, vector<2x205x64xbf16>
    tpu.vector_store %arg14[%c0_39, %c0_40, %c384], %33 {strides = array<i32>} : memref<2x208x576xbf16, #tpu.memory_space<vmem>>, vector<2x205x64xbf16>,
    %c0_41 = arith.constant 0 : index
    %c33 = arith.constant 33 : index
    %c0_42 = arith.constant 0 : index
    %35 = vector.load %arg11[%c0_41, %c33, %c0_42] : memref<2x240x64xbf16, #tpu.memory_space<vmem>>, vector<2x205x64xbf16>
    %c0_43 = arith.constant 0 : index
    %c0_44 = arith.constant 0 : index
    %c448 = arith.constant 448 : index
    %36 = vector.load %arg14[%c0_43, %c0_44, %c448] : memref<2x208x576xbf16, #tpu.memory_space<vmem>>, vector<2x205x64xbf16>
    tpu.vector_store %arg14[%c0_43, %c0_44, %c448], %35 {strides = array<i32>} : memref<2x208x576xbf16, #tpu.memory_space<vmem>>, vector<2x205x64xbf16>,
    %c0_45 = arith.constant 0 : index
    %c34 = arith.constant 34 : index
    %c0_46 = arith.constant 0 : index
    %37 = vector.load %arg11[%c0_45, %c34, %c0_46] : memref<2x240x64xbf16, #tpu.memory_space<vmem>>, vector<2x205x64xbf16>
    %c0_47 = arith.constant 0 : index
    %c0_48 = arith.constant 0 : index
    %c512 = arith.constant 512 : index
    %38 = vector.load %arg14[%c0_47, %c0_48, %c512] : memref<2x208x576xbf16, #tpu.memory_space<vmem>>, vector<2x205x64xbf16>
    tpu.vector_store %arg14[%c0_47, %c0_48, %c512], %37 {strides = array<i32>} : memref<2x208x576xbf16, #tpu.memory_space<vmem>>, vector<2x205x64xbf16>,
    %c0_49 = arith.constant 0 : index
    %c0_50 = arith.constant 0 : index
    %c0_51 = arith.constant 0 : index
    %39 = vector.load %arg14[%c0_49, %c0_50, %c0_51] : memref<2x208x576xbf16, #tpu.memory_space<vmem>>, vector<2x208x576xbf16>
    %40 = vector.shape_cast %39 : vector<2x208x576xbf16> to vector<416x576xbf16>
    %c0_52 = arith.constant 0 : index
    %c0_53 = arith.constant 0 : index
    %41 = vector.load %arg3[%c0_52, %c0_53] : memref<576x64xbf16, #tpu.memory_space<vmem>>, vector<576x64xbf16>
    %cst_54 = arith.constant dense<0.000000e+00> : vector<416x64xf32>
    %42 = tpu.matmul %40, %41, %cst_54 {dimension_numbers = #tpu.dot_dimension_numbers<[1], [0], [0], [1], [0, 0, 1, 1], [], []>} : vector<416x576xbf16>, vector<576x64xbf16>, vector<416x64xf32> -> vector<416x64xf32>
    %43 = vector.shape_cast %42 : vector<416x64xf32> to vector<2x208x64xf32>
    %c1_55 = arith.constant 1 : index
    %c0_56 = arith.constant 0 : index
    %c0_57 = arith.constant 0 : index
    %44 = vector.load %arg9[%c1_55, %c0_56, %c0_57] : memref<4x1x64xf32, #tpu.memory_space<vmem>>, vector<1x1x64xf32>
    %45 = vector.shape_cast %44 : vector<1x1x64xf32> to vector<1x64xf32>
    %46 = vector.shape_cast %45 : vector<1x64xf32> to vector<1x1x64xf32>
    %47 = vector.broadcast %46 : vector<1x1x64xf32> to vector<2x208x64xf32>
    %48 = arith.addf %43, %47 : vector<2x208x64xf32>
    %cst_58 = arith.constant 0.000000e+00 : f32
    %49 = vector.broadcast %cst_58 : f32 to vector<2x208x64xf32>
    %50 = arith.maximumf %48, %49 : vector<2x208x64xf32>
    %51 = vector.extract_strided_slice %50 {offsets = [0, 0, 0], sizes = [2, 204, 64], strides = [1, 1, 1]} : vector<2x208x64xf32> to vector<2x204x64xf32>
    %52 = vector.extract_strided_slice %50 {offsets = [0, 1, 0], sizes = [2, 204, 64], strides = [1, 1, 1]} : vector<2x208x64xf32> to vector<2x204x64xf32>
    %53 = arith.maximumf %51, %52 : vector<2x204x64xf32>
    %54 = vector.extract_strided_slice %53 {offsets = [0, 0, 0], sizes = [2, 188, 64], strides = [1, 1, 1]} : vector<2x204x64xf32> to vector<2x188x64xf32>
    %55 = vector.extract_strided_slice %53 {offsets = [0, 16, 0], sizes = [2, 188, 64], strides = [1, 1, 1]} : vector<2x204x64xf32> to vector<2x188x64xf32>
    %56 = arith.maximumf %54, %55 : vector<2x188x64xf32>
    %57 = arith.truncf %56 : vector<2x188x64xf32> to vector<2x188x64xbf16>
    %c0_59 = arith.constant 0 : index
    %c0_60 = arith.constant 0 : index
    %58 = vector.load %arg6[%c0_59, %c0_60] : memref<64x188xbf16, #tpu.memory_space<vmem>>, vector<64x188xbf16>
    %59 = vector.extract_strided_slice %57 {offsets = [0, 0, 0], sizes = [1, 188, 64], strides = [1, 1, 1]} : vector<2x188x64xbf16> to vector<1x188x64xbf16>
    %60 = vector.shape_cast %59 : vector<1x188x64xbf16> to vector<188x64xbf16>
    %cst_61 = arith.constant dense<0.000000e+00> : vector<64x64xf32>
    %61 = tpu.matmul %58, %60, %cst_61 {dimension_numbers = #tpu.dot_dimension_numbers<[1], [0], [0], [1], [0, 0, 1, 1], [], []>} : vector<64x188xbf16>, vector<188x64xbf16>, vector<64x64xf32> -> vector<64x64xf32>
    %62 = arith.truncf %61 : vector<64x64xf32> to vector<64x64xbf16>
    %c0_62 = arith.constant 0 : index
    %c0_63 = arith.constant 0 : index
    %c0_64 = arith.constant 0 : index
    %63 = vector.load %arg12[%c0_62, %c0_63, %c0_64] : memref<2x64x64xbf16, #tpu.memory_space<vmem>>, vector<1x64x64xbf16>
    %64 = vector.shape_cast %63 : vector<1x64x64xbf16> to vector<64x64xbf16>
    %65 = vector.shape_cast %62 : vector<64x64xbf16> to vector<1x64x64xbf16>
    tpu.vector_store %arg12[%c0_62, %c0_63, %c0_64], %65 {strides = array<i32>} : memref<2x64x64xbf16, #tpu.memory_space<vmem>>, vector<1x64x64xbf16>,
    %66 = vector.extract_strided_slice %57 {offsets = [1, 0, 0], sizes = [1, 188, 64], strides = [1, 1, 1]} : vector<2x188x64xbf16> to vector<1x188x64xbf16>
    %67 = vector.shape_cast %66 : vector<1x188x64xbf16> to vector<188x64xbf16>
    %cst_65 = arith.constant dense<0.000000e+00> : vector<64x64xf32>
    %68 = tpu.matmul %58, %67, %cst_65 {dimension_numbers = #tpu.dot_dimension_numbers<[1], [0], [0], [1], [0, 0, 1, 1], [], []>} : vector<64x188xbf16>, vector<188x64xbf16>, vector<64x64xf32> -> vector<64x64xf32>
    %69 = arith.truncf %68 : vector<64x64xf32> to vector<64x64xbf16>
    %c1_66 = arith.constant 1 : index
    %c0_67 = arith.constant 0 : index
    %c0_68 = arith.constant 0 : index
    %70 = vector.load %arg12[%c1_66, %c0_67, %c0_68] : memref<2x64x64xbf16, #tpu.memory_space<vmem>>, vector<1x64x64xbf16>
    %71 = vector.shape_cast %70 : vector<1x64x64xbf16> to vector<64x64xbf16>
    %72 = vector.shape_cast %69 : vector<64x64xbf16> to vector<1x64x64xbf16>
    tpu.vector_store %arg12[%c1_66, %c0_67, %c0_68], %72 {strides = array<i32>} : memref<2x64x64xbf16, #tpu.memory_space<vmem>>, vector<1x64x64xbf16>,
    %c0_69 = arith.constant 0 : index
    %c0_70 = arith.constant 0 : index
    %c0_71 = arith.constant 0 : index
    %73 = vector.load %arg12[%c0_69, %c0_70, %c0_71] : memref<2x64x64xbf16, #tpu.memory_space<vmem>>, vector<2x46x64xbf16>
    %c0_72 = arith.constant 0 : index
    %c0_73 = arith.constant 0 : index
    %c0_74 = arith.constant 0 : index
    %74 = vector.load %arg14[%c0_72, %c0_73, %c0_74] : memref<2x208x576xbf16, #tpu.memory_space<vmem>>, vector<2x46x64xbf16>
    tpu.vector_store %arg14[%c0_72, %c0_73, %c0_74], %73 {strides = array<i32>} : memref<2x208x576xbf16, #tpu.memory_space<vmem>>, vector<2x46x64xbf16>,
    %c0_75 = arith.constant 0 : index
    %c1_76 = arith.constant 1 : index
    %c0_77 = arith.constant 0 : index
    %75 = vector.load %arg12[%c0_75, %c1_76, %c0_77] : memref<2x64x64xbf16, #tpu.memory_space<vmem>>, vector<2x46x64xbf16>
    %c0_78 = arith.constant 0 : index
    %c0_79 = arith.constant 0 : index
    %c64_80 = arith.constant 64 : index
    %76 = vector.load %arg14[%c0_78, %c0_79, %c64_80] : memref<2x208x576xbf16, #tpu.memory_space<vmem>>, vector<2x46x64xbf16>
    tpu.vector_store %arg14[%c0_78, %c0_79, %c64_80], %75 {strides = array<i32>} : memref<2x208x576xbf16, #tpu.memory_space<vmem>>, vector<2x46x64xbf16>,
    %c0_81 = arith.constant 0 : index
    %c2_82 = arith.constant 2 : index
    %c0_83 = arith.constant 0 : index
    %77 = vector.load %arg12[%c0_81, %c2_82, %c0_83] : memref<2x64x64xbf16, #tpu.memory_space<vmem>>, vector<2x46x64xbf16>
    %c0_84 = arith.constant 0 : index
    %c0_85 = arith.constant 0 : index
    %c128_86 = arith.constant 128 : index
    %78 = vector.load %arg14[%c0_84, %c0_85, %c128_86] : memref<2x208x576xbf16, #tpu.memory_space<vmem>>, vector<2x46x64xbf16>
    tpu.vector_store %arg14[%c0_84, %c0_85, %c128_86], %77 {strides = array<i32>} : memref<2x208x576xbf16, #tpu.memory_space<vmem>>, vector<2x46x64xbf16>,
    %c0_87 = arith.constant 0 : index
    %c8 = arith.constant 8 : index
    %c0_88 = arith.constant 0 : index
    %79 = vector.load %arg12[%c0_87, %c8, %c0_88] : memref<2x64x64xbf16, #tpu.memory_space<vmem>>, vector<2x46x64xbf16>
    %c0_89 = arith.constant 0 : index
    %c0_90 = arith.constant 0 : index
    %c192_91 = arith.constant 192 : index
    %80 = vector.load %arg14[%c0_89, %c0_90, %c192_91] : memref<2x208x576xbf16, #tpu.memory_space<vmem>>, vector<2x46x64xbf16>
    tpu.vector_store %arg14[%c0_89, %c0_90, %c192_91], %79 {strides = array<i32>} : memref<2x208x576xbf16, #tpu.memory_space<vmem>>, vector<2x46x64xbf16>,
    %c0_92 = arith.constant 0 : index
    %c9 = arith.constant 9 : index
    %c0_93 = arith.constant 0 : index
    %81 = vector.load %arg12[%c0_92, %c9, %c0_93] : memref<2x64x64xbf16, #tpu.memory_space<vmem>>, vector<2x46x64xbf16>
    %c0_94 = arith.constant 0 : index
    %c0_95 = arith.constant 0 : index
    %c256_96 = arith.constant 256 : index
    %82 = vector.load %arg14[%c0_94, %c0_95, %c256_96] : memref<2x208x576xbf16, #tpu.memory_space<vmem>>, vector<2x46x64xbf16>
    tpu.vector_store %arg14[%c0_94, %c0_95, %c256_96], %81 {strides = array<i32>} : memref<2x208x576xbf16, #tpu.memory_space<vmem>>, vector<2x46x64xbf16>,
    %c0_97 = arith.constant 0 : index
    %c10 = arith.constant 10 : index
    %c0_98 = arith.constant 0 : index
    %83 = vector.load %arg12[%c0_97, %c10, %c0_98] : memref<2x64x64xbf16, #tpu.memory_space<vmem>>, vector<2x46x64xbf16>
    %c0_99 = arith.constant 0 : index
    %c0_100 = arith.constant 0 : index
    %c320_101 = arith.constant 320 : index
    %84 = vector.load %arg14[%c0_99, %c0_100, %c320_101] : memref<2x208x576xbf16, #tpu.memory_space<vmem>>, vector<2x46x64xbf16>
    tpu.vector_store %arg14[%c0_99, %c0_100, %c320_101], %83 {strides = array<i32>} : memref<2x208x576xbf16, #tpu.memory_space<vmem>>, vector<2x46x64xbf16>,
    %c0_102 = arith.constant 0 : index
    %c16_103 = arith.constant 16 : index
    %c0_104 = arith.constant 0 : index
    %85 = vector.load %arg12[%c0_102, %c16_103, %c0_104] : memref<2x64x64xbf16, #tpu.memory_space<vmem>>, vector<2x46x64xbf16>
    %c0_105 = arith.constant 0 : index
    %c0_106 = arith.constant 0 : index
    %c384_107 = arith.constant 384 : index
    %86 = vector.load %arg14[%c0_105, %c0_106, %c384_107] : memref<2x208x576xbf16, #tpu.memory_space<vmem>>, vector<2x46x64xbf16>
    tpu.vector_store %arg14[%c0_105, %c0_106, %c384_107], %85 {strides = array<i32>} : memref<2x208x576xbf16, #tpu.memory_space<vmem>>, vector<2x46x64xbf16>,
    %c0_108 = arith.constant 0 : index
    %c17_109 = arith.constant 17 : index
    %c0_110 = arith.constant 0 : index
    %87 = vector.load %arg12[%c0_108, %c17_109, %c0_110] : memref<2x64x64xbf16, #tpu.memory_space<vmem>>, vector<2x46x64xbf16>
    %c0_111 = arith.constant 0 : index
    %c0_112 = arith.constant 0 : index
    %c448_113 = arith.constant 448 : index
    %88 = vector.load %arg14[%c0_111, %c0_112, %c448_113] : memref<2x208x576xbf16, #tpu.memory_space<vmem>>, vector<2x46x64xbf16>
    tpu.vector_store %arg14[%c0_111, %c0_112, %c448_113], %87 {strides = array<i32>} : memref<2x208x576xbf16, #tpu.memory_space<vmem>>, vector<2x46x64xbf16>,
    %c0_114 = arith.constant 0 : index
    %c18_115 = arith.constant 18 : index
    %c0_116 = arith.constant 0 : index
    %89 = vector.load %arg12[%c0_114, %c18_115, %c0_116] : memref<2x64x64xbf16, #tpu.memory_space<vmem>>, vector<2x46x64xbf16>
    %c0_117 = arith.constant 0 : index
    %c0_118 = arith.constant 0 : index
    %c512_119 = arith.constant 512 : index
    %90 = vector.load %arg14[%c0_117, %c0_118, %c512_119] : memref<2x208x576xbf16, #tpu.memory_space<vmem>>, vector<2x46x64xbf16>
    tpu.vector_store %arg14[%c0_117, %c0_118, %c512_119], %89 {strides = array<i32>} : memref<2x208x576xbf16, #tpu.memory_space<vmem>>, vector<2x46x64xbf16>,
    %c0_120 = arith.constant 0 : index
    %c0_121 = arith.constant 0 : index
    %c0_122 = arith.constant 0 : index
    %91 = vector.load %arg14[%c0_120, %c0_121, %c0_122] : memref<2x208x576xbf16, #tpu.memory_space<vmem>>, vector<2x48x576xbf16>
    %92 = vector.shape_cast %91 : vector<2x48x576xbf16> to vector<96x576xbf16>
    %c0_123 = arith.constant 0 : index
    %c0_124 = arith.constant 0 : index
    %93 = vector.load %arg4[%c0_123, %c0_124] : memref<576x64xbf16, #tpu.memory_space<vmem>>, vector<576x64xbf16>
    %cst_125 = arith.constant dense<0.000000e+00> : vector<96x64xf32>
    %94 = tpu.matmul %92, %93, %cst_125 {dimension_numbers = #tpu.dot_dimension_numbers<[1], [0], [0], [1], [0, 0, 1, 1], [], []>} : vector<96x576xbf16>, vector<576x64xbf16>, vector<96x64xf32> -> vector<96x64xf32>
    %95 = vector.shape_cast %94 : vector<96x64xf32> to vector<2x48x64xf32>
    %c2_126 = arith.constant 2 : index
    %c0_127 = arith.constant 0 : index
    %c0_128 = arith.constant 0 : index
    %96 = vector.load %arg9[%c2_126, %c0_127, %c0_128] : memref<4x1x64xf32, #tpu.memory_space<vmem>>, vector<1x1x64xf32>
    %97 = vector.shape_cast %96 : vector<1x1x64xf32> to vector<1x64xf32>
    %98 = vector.shape_cast %97 : vector<1x64xf32> to vector<1x1x64xf32>
    %99 = vector.broadcast %98 : vector<1x1x64xf32> to vector<2x48x64xf32>
    %100 = arith.addf %95, %99 : vector<2x48x64xf32>
    %cst_129 = arith.constant 0.000000e+00 : f32
    %101 = vector.broadcast %cst_129 : f32 to vector<2x48x64xf32>
    %102 = arith.maximumf %100, %101 : vector<2x48x64xf32>
    %103 = vector.extract_strided_slice %102 {offsets = [0, 0, 0], sizes = [2, 45, 64], strides = [1, 1, 1]} : vector<2x48x64xf32> to vector<2x45x64xf32>
    %104 = vector.extract_strided_slice %102 {offsets = [0, 1, 0], sizes = [2, 45, 64], strides = [1, 1, 1]} : vector<2x48x64xf32> to vector<2x45x64xf32>
    %105 = arith.maximumf %103, %104 : vector<2x45x64xf32>
    %106 = vector.extract_strided_slice %105 {offsets = [0, 0, 0], sizes = [2, 37, 64], strides = [1, 1, 1]} : vector<2x45x64xf32> to vector<2x37x64xf32>
    %107 = vector.extract_strided_slice %105 {offsets = [0, 8, 0], sizes = [2, 37, 64], strides = [1, 1, 1]} : vector<2x45x64xf32> to vector<2x37x64xf32>
    %108 = arith.maximumf %106, %107 : vector<2x37x64xf32>
    %109 = arith.truncf %108 : vector<2x37x64xf32> to vector<2x37x64xbf16>
    %c0_130 = arith.constant 0 : index
    %c0_131 = arith.constant 0 : index
    %110 = vector.load %arg7[%c0_130, %c0_131] : memref<40x37xbf16, #tpu.memory_space<vmem>>, vector<40x37xbf16>
    %111 = vector.extract_strided_slice %109 {offsets = [0, 0, 0], sizes = [1, 37, 64], strides = [1, 1, 1]} : vector<2x37x64xbf16> to vector<1x37x64xbf16>
    %112 = vector.shape_cast %111 : vector<1x37x64xbf16> to vector<37x64xbf16>
    %cst_132 = arith.constant dense<0.000000e+00> : vector<40x64xf32>
    %113 = tpu.matmul %110, %112, %cst_132 {dimension_numbers = #tpu.dot_dimension_numbers<[1], [0], [0], [1], [0, 0, 1, 1], [], []>} : vector<40x37xbf16>, vector<37x64xbf16>, vector<40x64xf32> -> vector<40x64xf32>
    %114 = arith.truncf %113 : vector<40x64xf32> to vector<40x64xbf16>
    %c0_133 = arith.constant 0 : index
    %c0_134 = arith.constant 0 : index
    %c0_135 = arith.constant 0 : index
    %115 = vector.load %arg13[%c0_133, %c0_134, %c0_135] : memref<2x40x64xbf16, #tpu.memory_space<vmem>>, vector<1x40x64xbf16>
    %116 = vector.shape_cast %115 : vector<1x40x64xbf16> to vector<40x64xbf16>
    %117 = vector.shape_cast %114 : vector<40x64xbf16> to vector<1x40x64xbf16>
    tpu.vector_store %arg13[%c0_133, %c0_134, %c0_135], %117 {strides = array<i32>} : memref<2x40x64xbf16, #tpu.memory_space<vmem>>, vector<1x40x64xbf16>,
    %118 = vector.extract_strided_slice %109 {offsets = [1, 0, 0], sizes = [1, 37, 64], strides = [1, 1, 1]} : vector<2x37x64xbf16> to vector<1x37x64xbf16>
    %119 = vector.shape_cast %118 : vector<1x37x64xbf16> to vector<37x64xbf16>
    %cst_136 = arith.constant dense<0.000000e+00> : vector<40x64xf32>
    %120 = tpu.matmul %110, %119, %cst_136 {dimension_numbers = #tpu.dot_dimension_numbers<[1], [0], [0], [1], [0, 0, 1, 1], [], []>} : vector<40x37xbf16>, vector<37x64xbf16>, vector<40x64xf32> -> vector<40x64xf32>
    %121 = arith.truncf %120 : vector<40x64xf32> to vector<40x64xbf16>
    %c1_137 = arith.constant 1 : index
    %c0_138 = arith.constant 0 : index
    %c0_139 = arith.constant 0 : index
    %122 = vector.load %arg13[%c1_137, %c0_138, %c0_139] : memref<2x40x64xbf16, #tpu.memory_space<vmem>>, vector<1x40x64xbf16>
    %123 = vector.shape_cast %122 : vector<1x40x64xbf16> to vector<40x64xbf16>
    %124 = vector.shape_cast %121 : vector<40x64xbf16> to vector<1x40x64xbf16>
    tpu.vector_store %arg13[%c1_137, %c0_138, %c0_139], %124 {strides = array<i32>} : memref<2x40x64xbf16, #tpu.memory_space<vmem>>, vector<1x40x64xbf16>,
    %c0_140 = arith.constant 0 : index
    %c0_141 = arith.constant 0 : index
    %c0_142 = arith.constant 0 : index
    %125 = vector.load %arg13[%c0_140, %c0_141, %c0_142] : memref<2x40x64xbf16, #tpu.memory_space<vmem>>, vector<2x19x64xbf16>
    %c0_143 = arith.constant 0 : index
    %c0_144 = arith.constant 0 : index
    %c0_145 = arith.constant 0 : index
    %126 = vector.load %arg14[%c0_143, %c0_144, %c0_145] : memref<2x208x576xbf16, #tpu.memory_space<vmem>>, vector<2x19x64xbf16>
    tpu.vector_store %arg14[%c0_143, %c0_144, %c0_145], %125 {strides = array<i32>} : memref<2x208x576xbf16, #tpu.memory_space<vmem>>, vector<2x19x64xbf16>,
    %c0_146 = arith.constant 0 : index
    %c1_147 = arith.constant 1 : index
    %c0_148 = arith.constant 0 : index
    %127 = vector.load %arg13[%c0_146, %c1_147, %c0_148] : memref<2x40x64xbf16, #tpu.memory_space<vmem>>, vector<2x19x64xbf16>
    %c0_149 = arith.constant 0 : index
    %c0_150 = arith.constant 0 : index
    %c64_151 = arith.constant 64 : index
    %128 = vector.load %arg14[%c0_149, %c0_150, %c64_151] : memref<2x208x576xbf16, #tpu.memory_space<vmem>>, vector<2x19x64xbf16>
    tpu.vector_store %arg14[%c0_149, %c0_150, %c64_151], %127 {strides = array<i32>} : memref<2x208x576xbf16, #tpu.memory_space<vmem>>, vector<2x19x64xbf16>,
    %c0_152 = arith.constant 0 : index
    %c2_153 = arith.constant 2 : index
    %c0_154 = arith.constant 0 : index
    %129 = vector.load %arg13[%c0_152, %c2_153, %c0_154] : memref<2x40x64xbf16, #tpu.memory_space<vmem>>, vector<2x19x64xbf16>
    %c0_155 = arith.constant 0 : index
    %c0_156 = arith.constant 0 : index
    %c128_157 = arith.constant 128 : index
    %130 = vector.load %arg14[%c0_155, %c0_156, %c128_157] : memref<2x208x576xbf16, #tpu.memory_space<vmem>>, vector<2x19x64xbf16>
    tpu.vector_store %arg14[%c0_155, %c0_156, %c128_157], %129 {strides = array<i32>} : memref<2x208x576xbf16, #tpu.memory_space<vmem>>, vector<2x19x64xbf16>,
    %c0_158 = arith.constant 0 : index
    %c8_159 = arith.constant 8 : index
    %c0_160 = arith.constant 0 : index
    %131 = vector.load %arg13[%c0_158, %c8_159, %c0_160] : memref<2x40x64xbf16, #tpu.memory_space<vmem>>, vector<2x19x64xbf16>
    %c0_161 = arith.constant 0 : index
    %c0_162 = arith.constant 0 : index
    %c192_163 = arith.constant 192 : index
    %132 = vector.load %arg14[%c0_161, %c0_162, %c192_163] : memref<2x208x576xbf16, #tpu.memory_space<vmem>>, vector<2x19x64xbf16>
    tpu.vector_store %arg14[%c0_161, %c0_162, %c192_163], %131 {strides = array<i32>} : memref<2x208x576xbf16, #tpu.memory_space<vmem>>, vector<2x19x64xbf16>,
    %c0_164 = arith.constant 0 : index
    %c9_165 = arith.constant 9 : index
    %c0_166 = arith.constant 0 : index
    %133 = vector.load %arg13[%c0_164, %c9_165, %c0_166] : memref<2x40x64xbf16, #tpu.memory_space<vmem>>, vector<2x19x64xbf16>
    %c0_167 = arith.constant 0 : index
    %c0_168 = arith.constant 0 : index
    %c256_169 = arith.constant 256 : index
    %134 = vector.load %arg14[%c0_167, %c0_168, %c256_169] : memref<2x208x576xbf16, #tpu.memory_space<vmem>>, vector<2x19x64xbf16>
    tpu.vector_store %arg14[%c0_167, %c0_168, %c256_169], %133 {strides = array<i32>} : memref<2x208x576xbf16, #tpu.memory_space<vmem>>, vector<2x19x64xbf16>,
    %c0_170 = arith.constant 0 : index
    %c10_171 = arith.constant 10 : index
    %c0_172 = arith.constant 0 : index
    %135 = vector.load %arg13[%c0_170, %c10_171, %c0_172] : memref<2x40x64xbf16, #tpu.memory_space<vmem>>, vector<2x19x64xbf16>
    %c0_173 = arith.constant 0 : index
    %c0_174 = arith.constant 0 : index
    %c320_175 = arith.constant 320 : index
    %136 = vector.load %arg14[%c0_173, %c0_174, %c320_175] : memref<2x208x576xbf16, #tpu.memory_space<vmem>>, vector<2x19x64xbf16>
    tpu.vector_store %arg14[%c0_173, %c0_174, %c320_175], %135 {strides = array<i32>} : memref<2x208x576xbf16, #tpu.memory_space<vmem>>, vector<2x19x64xbf16>,
    %c0_176 = arith.constant 0 : index
    %c16_177 = arith.constant 16 : index
    %c0_178 = arith.constant 0 : index
    %137 = vector.load %arg13[%c0_176, %c16_177, %c0_178] : memref<2x40x64xbf16, #tpu.memory_space<vmem>>, vector<2x19x64xbf16>
    %c0_179 = arith.constant 0 : index
    %c0_180 = arith.constant 0 : index
    %c384_181 = arith.constant 384 : index
    %138 = vector.load %arg14[%c0_179, %c0_180, %c384_181] : memref<2x208x576xbf16, #tpu.memory_space<vmem>>, vector<2x19x64xbf16>
    tpu.vector_store %arg14[%c0_179, %c0_180, %c384_181], %137 {strides = array<i32>} : memref<2x208x576xbf16, #tpu.memory_space<vmem>>, vector<2x19x64xbf16>,
    %c0_182 = arith.constant 0 : index
    %c17_183 = arith.constant 17 : index
    %c0_184 = arith.constant 0 : index
    %139 = vector.load %arg13[%c0_182, %c17_183, %c0_184] : memref<2x40x64xbf16, #tpu.memory_space<vmem>>, vector<2x19x64xbf16>
    %c0_185 = arith.constant 0 : index
    %c0_186 = arith.constant 0 : index
    %c448_187 = arith.constant 448 : index
    %140 = vector.load %arg14[%c0_185, %c0_186, %c448_187] : memref<2x208x576xbf16, #tpu.memory_space<vmem>>, vector<2x19x64xbf16>
    tpu.vector_store %arg14[%c0_185, %c0_186, %c448_187], %139 {strides = array<i32>} : memref<2x208x576xbf16, #tpu.memory_space<vmem>>, vector<2x19x64xbf16>,
    %c0_188 = arith.constant 0 : index
    %c18_189 = arith.constant 18 : index
    %c0_190 = arith.constant 0 : index
    %141 = vector.load %arg13[%c0_188, %c18_189, %c0_190] : memref<2x40x64xbf16, #tpu.memory_space<vmem>>, vector<2x19x64xbf16>
    %c0_191 = arith.constant 0 : index
    %c0_192 = arith.constant 0 : index
    %c512_193 = arith.constant 512 : index
    %142 = vector.load %arg14[%c0_191, %c0_192, %c512_193] : memref<2x208x576xbf16, #tpu.memory_space<vmem>>, vector<2x19x64xbf16>
    tpu.vector_store %arg14[%c0_191, %c0_192, %c512_193], %141 {strides = array<i32>} : memref<2x208x576xbf16, #tpu.memory_space<vmem>>, vector<2x19x64xbf16>,
    %c0_194 = arith.constant 0 : index
    %c0_195 = arith.constant 0 : index
    %c0_196 = arith.constant 0 : index
    %143 = vector.load %arg14[%c0_194, %c0_195, %c0_196] : memref<2x208x576xbf16, #tpu.memory_space<vmem>>, vector<2x24x576xbf16>
    %144 = vector.shape_cast %143 : vector<2x24x576xbf16> to vector<48x576xbf16>
    %c0_197 = arith.constant 0 : index
    %c0_198 = arith.constant 0 : index
    %145 = vector.load %arg5[%c0_197, %c0_198] : memref<576x64xbf16, #tpu.memory_space<vmem>>, vector<576x64xbf16>
    %cst_199 = arith.constant dense<0.000000e+00> : vector<48x64xf32>
    %146 = tpu.matmul %144, %145, %cst_199 {dimension_numbers = #tpu.dot_dimension_numbers<[1], [0], [0], [1], [0, 0, 1, 1], [], []>} : vector<48x576xbf16>, vector<576x64xbf16>, vector<48x64xf32> -> vector<48x64xf32>
    %147 = vector.shape_cast %146 : vector<48x64xf32> to vector<2x24x64xf32>
    %c3 = arith.constant 3 : index
    %c0_200 = arith.constant 0 : index
    %c0_201 = arith.constant 0 : index
    %148 = vector.load %arg9[%c3, %c0_200, %c0_201] : memref<4x1x64xf32, #tpu.memory_space<vmem>>, vector<1x1x64xf32>
    %149 = vector.shape_cast %148 : vector<1x1x64xf32> to vector<1x64xf32>
    %150 = vector.shape_cast %149 : vector<1x64xf32> to vector<1x1x64xf32>
    %151 = vector.broadcast %150 : vector<1x1x64xf32> to vector<2x24x64xf32>
    %152 = arith.addf %147, %151 : vector<2x24x64xf32>
    %cst_202 = arith.constant 0.000000e+00 : f32
    %153 = vector.broadcast %cst_202 : f32 to vector<2x24x64xf32>
    %154 = arith.maximumf %152, %153 : vector<2x24x64xf32>
    %155 = vector.extract_strided_slice %154 {offsets = [0, 0, 0], sizes = [2, 18, 64], strides = [1, 1, 1]} : vector<2x24x64xf32> to vector<2x18x64xf32>
    %156 = vector.extract_strided_slice %154 {offsets = [0, 1, 0], sizes = [2, 18, 64], strides = [1, 1, 1]} : vector<2x24x64xf32> to vector<2x18x64xf32>
    %157 = arith.maximumf %155, %156 : vector<2x18x64xf32>
    %158 = vector.extract_strided_slice %157 {offsets = [0, 0, 0], sizes = [2, 10, 64], strides = [1, 1, 1]} : vector<2x18x64xf32> to vector<2x10x64xf32>
    %159 = vector.extract_strided_slice %157 {offsets = [0, 8, 0], sizes = [2, 10, 64], strides = [1, 1, 1]} : vector<2x18x64xf32> to vector<2x10x64xf32>
    %160 = arith.maximumf %158, %159 : vector<2x10x64xf32>
    %161 = vector.extract_strided_slice %160 {offsets = [0, 0, 0], sizes = [2, 1, 64], strides = [1, 1, 1]} : vector<2x10x64xf32> to vector<2x1x64xf32>
    %c0_203 = arith.constant 0 : index
    %c0_204 = arith.constant 0 : index
    %c0_205 = arith.constant 0 : index
    %162 = vector.load %arg10[%c0_203, %c0_204, %c0_205] : memref<2x1x64xf32, #tpu.memory_space<vmem>>, vector<2x1x64xf32>
    tpu.vector_store %arg10[%c0_203, %c0_204, %c0_205], %161 {strides = array<i32>} : memref<2x1x64xf32, #tpu.memory_space<vmem>>, vector<2x1x64xf32>,
    return
  }
  func.func @transform_0(%arg0: i32) -> (i32, i32, i32) {
    %c0_i32 = arith.constant 0 : i32
    %c0_i32_0 = arith.constant 0 : i32
    %c0_i32_1 = arith.constant 0 : i32
    return %arg0, %c0_i32, %c0_i32_0 : i32, i32, i32
  }
  func.func @transform_1(%arg0: i32) -> (i32, i32) {
    %c0_i32 = arith.constant 0 : i32
    %c0_i32_0 = arith.constant 0 : i32
    %c0_i32_1 = arith.constant 0 : i32
    return %c0_i32, %c0_i32_0 : i32, i32
  }
  func.func @transform_2(%arg0: i32) -> (i32, i32) {
    %c0_i32 = arith.constant 0 : i32
    %c0_i32_0 = arith.constant 0 : i32
    %c0_i32_1 = arith.constant 0 : i32
    return %c0_i32, %c0_i32_0 : i32, i32
  }
  func.func @transform_3(%arg0: i32) -> (i32, i32) {
    %c0_i32 = arith.constant 0 : i32
    %c0_i32_0 = arith.constant 0 : i32
    %c0_i32_1 = arith.constant 0 : i32
    return %c0_i32, %c0_i32_0 : i32, i32
  }
  func.func @transform_4(%arg0: i32) -> (i32, i32) {
    %c0_i32 = arith.constant 0 : i32
    %c0_i32_0 = arith.constant 0 : i32
    %c0_i32_1 = arith.constant 0 : i32
    return %c0_i32, %c0_i32_0 : i32, i32
  }
  func.func @transform_5(%arg0: i32) -> (i32, i32) {
    %c0_i32 = arith.constant 0 : i32
    %c0_i32_0 = arith.constant 0 : i32
    %c0_i32_1 = arith.constant 0 : i32
    return %c0_i32, %c0_i32_0 : i32, i32
  }
  func.func @transform_6(%arg0: i32) -> (i32, i32) {
    %c0_i32 = arith.constant 0 : i32
    %c0_i32_0 = arith.constant 0 : i32
    %c0_i32_1 = arith.constant 0 : i32
    return %c0_i32, %c0_i32_0 : i32, i32
  }
  func.func @transform_7(%arg0: i32) -> (i32, i32) {
    %c0_i32 = arith.constant 0 : i32
    %c0_i32_0 = arith.constant 0 : i32
    %c0_i32_1 = arith.constant 0 : i32
    return %c0_i32, %c0_i32_0 : i32, i32
  }
  func.func @transform_8(%arg0: i32) -> (i32, i32, i32) {
    %c0_i32 = arith.constant 0 : i32
    %c0_i32_0 = arith.constant 0 : i32
    %c0_i32_1 = arith.constant 0 : i32
    %c0_i32_2 = arith.constant 0 : i32
    return %c0_i32, %c0_i32_0, %c0_i32_1 : i32, i32, i32
  }
  func.func @transform_9(%arg0: i32) -> (i32, i32, i32) {
    %c0_i32 = arith.constant 0 : i32
    %c0_i32_0 = arith.constant 0 : i32
    %c0_i32_1 = arith.constant 0 : i32
    return %arg0, %c0_i32, %c0_i32_0 : i32, i32, i32
  }
}

</mosaic_0001>

<llo_original>
// kernel: _forward_impl.1
$region0: #{_forward_impl.1}
  #allocation0 [shape = 'u32[]', space=smem, size = 0x4, offset = 0x4, fixed_abs, tag = 'smem constant byte address 0x4 - core index']
  #allocation1 [shape = 'u32[144,128]{1,0:T(1,128)}', space=vmem, size = 0x12000, scoped, tag = 'internal scratch']
  #allocation2 [shape = 'bf16[2,240,64]{2,1,0:T(16,128)(2,1)}', space=vmem, size = 0x1e000, scoped, tag = 'scratch operand']
  #allocation3 [shape = 'bf16[2,64,64]{2,1,0:T(16,128)(2,1)}', space=vmem, size = 0x8000, scoped, tag = 'scratch operand']
  #allocation4 [shape = 'bf16[2,40,64]{2,1,0:T(8,128)(2,1)}', space=vmem, size = 0x5000, scoped, tag = 'scratch operand']
  #allocation5 [shape = 'bf16[2,208,576]{2,1,0:T(16,128)(2,1)}', space=vmem, size = 0x82000, scoped, tag = 'scratch operand']
  %s0 = inlined_call_operand.vmem [shape: bf16[2,960,27], index: 0, kind: input, shape index: {}]
  %s1 = inlined_call_operand.vmem [shape: bf16[27,64], index: 1, kind: input, shape index: {}]
  %s2 = inlined_call_operand.vmem [shape: bf16[576,64], index: 2, kind: input, shape index: {}]
  %s3 = inlined_call_operand.vmem [shape: bf16[576,64], index: 3, kind: input, shape index: {}]
  %s4 = inlined_call_operand.vmem [shape: bf16[576,64], index: 4, kind: input, shape index: {}]
  %s5 = inlined_call_operand.vmem [shape: bf16[64,188], index: 5, kind: input, shape index: {}]
  %s6 = inlined_call_operand.vmem [shape: bf16[40,37], index: 6, kind: input, shape index: {}]
  %s7 = inlined_call_operand.vmem [shape: bf16[1,10], index: 7, kind: input, shape index: {}]
  %s8 = inlined_call_operand.vmem [shape: f32[4,1,64], index: 8, kind: input, shape index: {}]
  %s9 = inlined_call_operand.hbm [shape: f32[2,1,64], index: 9, kind: output, shape index: {}]
  %s10 = sld [smem:[#allocation0]]
  $region46: #{_forward_impl.1} parent=0
    _
  %s12 = ssub.s32 1, %s10
  %s13 = scalar_select 0, %s12, %s10
  $region1: #{_forward_impl.1} parent=0
    #allocation6 [shape = 'u8[1024]{0}', space=vmem, size = 0x400, scoped, tag = 'output window, operand 0, single buffered']
    #allocation7 [shape = 's32[1]{0}', space=sflag, size = 0x4, scoped, tag = 'scoped memory for _forward_impl.1']
    %14 = vsyncpa [#allocation7], 0
    // Predicated region
    $region2: #{_forward_impl.1} parent=1 // pred_check
      _
    $region3: #{_forward_impl.1} parent=1 // pred_check_branch
      %16 = sbr.rel (0) target = $region5
    $region4: #{_forward_impl.1} parent=1 // pred_region
      _
    $region5: #{_forward_impl.1} parent=1 // pred_fallthru
      _
    // Predicated region
    $region6: #{_forward_impl.1} parent=1 // pred_check
      _
    $region7: #{_forward_impl.1} parent=1 // pred_check_branch
      %18 = sbr.rel (0) target = $region9
    $region8: #{_forward_impl.1} parent=1 // pred_region
      _
    $region9: #{_forward_impl.1} parent=1 // pred_fallthru
      _
    // Predicated region
    $region10: #{_forward_impl.1} parent=1 // pred_check
      _
    $region11: #{_forward_impl.1} parent=1 // pred_check_branch
      %20 = sbr.rel (0) target = $region13
    $region12: #{_forward_impl.1} parent=1 // pred_region
      _
    $region13: #{_forward_impl.1} parent=1 // pred_fallthru
      _
    // Predicated region
    $region14: #{_forward_impl.1} parent=1 // pred_check
      _
    $region15: #{_forward_impl.1} parent=1 // pred_check_branch
      %22 = sbr.rel (0) target = $region17
    $region16: #{_forward_impl.1} parent=1 // pred_region
      _
    $region17: #{_forward_impl.1} parent=1 // pred_fallthru
      _
    // Predicated region
    $region18: #{_forward_impl.1} parent=1 // pred_check
      _
    $region19: #{_forward_impl.1} parent=1 // pred_check_branch
      %24 = sbr.rel (0) target = $region21
    $region20: #{_forward_impl.1} parent=1 // pred_region
      _
    $region21: #{_forward_impl.1} parent=1 // pred_fallthru
      _
    // Predicated region
    $region22: #{_forward_impl.1} parent=1 // pred_check
      _
    $region23: #{_forward_impl.1} parent=1 // pred_check_branch
      %26 = sbr.rel (0) target = $region25
    $region24: #{_forward_impl.1} parent=1 // pred_region
      _
    $region25: #{_forward_impl.1} parent=1 // pred_fallthru
      _
    // Predicated region
    $region26: #{_forward_impl.1} parent=1 // pred_check
      _
    $region27: #{_forward_impl.1} parent=1 // pred_check_branch
      %28 = sbr.rel (0) target = $region29
    $region28: #{_forward_impl.1} parent=1 // pred_region
      _
    $region29: #{_forward_impl.1} parent=1 // pred_fallthru
      _
    // Predicated region
    $region30: #{_forward_impl.1} parent=1 // pred_check
      _
    $region31: #{_forward_impl.1} parent=1 // pred_check_branch
      %30 = sbr.rel (0) target = $region33
    $region32: #{_forward_impl.1} parent=1 // pred_region
      _
    $region33: #{_forward_impl.1} parent=1 // pred_fallthru
      _
    // Predicated region
    $region34: #{_forward_impl.1} parent=1 // pred_check
      _
    $region35: #{_forward_impl.1} parent=1 // pred_check_branch
      %32 = sbr.rel (0) target = $region37
    $region36: #{_forward_impl.1} parent=1 // pred_region
      _
    $region37: #{_forward_impl.1} parent=1 // pred_fallthru
      _
    %v34 = vld [vmem:[%s0] sm:$0xf]
    %v35 = vld [vmem:[%s0 + $0x4] sm:$0xf]
    %v36 = vld [vmem:[%s0 + $0x8] sm:$0xf]
    %v37 = vld [vmem:[%s0 + $0xc] sm:$0xf]
    %v38 = vld [vmem:[%s0 + $0x10] sm:$0xf]
    %v39 = vld [vmem:[%s0 + $0x14] sm:$0xf]
    %v40 = vld [vmem:[%s0 + $0x18] sm:$0xf]
    %v41 = vld [vmem:[%s0 + $0x1c] sm:$0xf]
    %v42 = vld [vmem:[%s0 + $0x20] sm:$0xf]
    %v43 = vld [vmem:[%s0 + $0x24] sm:$0xf]
    %v44 = vld [vmem:[%s0 + $0x28] sm:$0xf]
    %v45 = vld [vmem:[%s0 + $0x2c] sm:$0xf]
    %v46 = vld [vmem:[%s0 + $0x30] sm:$0xf]
    %v47 = vld [vmem:[%s0 + $0x34] sm:$0xf]
    %v48 = vld [vmem:[%s0 + $0x38] sm:$0xf]
    %v49 = vld [vmem:[%s0 + $0x3c] sm:$0xf]
    %v50 = vld [vmem:[%s0 + $0x40] sm:$0xf]
    %v51 = vld [vmem:[%s0 + $0x44] sm:$0xf]
    %v52 = vld [vmem:[%s0 + $0x48] sm:$0xf]
    %v53 = vld [vmem:[%s0 + $0x4c] sm:$0xf]
    %v54 = vld [vmem:[%s0 + $0x50] sm:$0xf]
    %v55 = vld [vmem:[%s0 + $0x54] sm:$0xf]
    %v56 = vld [vmem:[%s0 + $0x58] sm:$0xf]
    %v57 = vld [vmem:[%s0 + $0x5c] sm:$0xf]
    %v58 = vld [vmem:[%s0 + $0x60] sm:$0xf]
    %v59 = vld [vmem:[%s0 + $0x64] sm:$0xf]
    %v60 = vld [vmem:[%s0 + $0x68] sm:$0xf]
    %v61 = vld [vmem:[%s0 + $0x6c] sm:$0xf]
    %v62 = vld [vmem:[%s0 + $0x70] sm:$0xf]
    %v63 = vld [vmem:[%s0 + $0x74] sm:$0xf]
    %v64 = vld [vmem:[%s0 + $0x78] sm:$0xf]
    %v65 = vld [vmem:[%s0 + $0x7c] sm:$0xf]
    %v66 = vld [vmem:[%s0 + $0x80] sm:$0xf]
    %v67 = vld [vmem:[%s0 + $0x84] sm:$0xf]
    %v68 = vld [vmem:[%s0 + $0x88] sm:$0xf]
    %v69 = vld [vmem:[%s0 + $0x8c] sm:$0xf]
    %v70 = vld [vmem:[%s0 + $0x90] sm:$0xf]
    %v71 = vld [vmem:[%s0 + $0x94] sm:$0xf]
    %v72 = vld [vmem:[%s0 + $0x98] sm:$0xf]
    %v73 = vld [vmem:[%s0 + $0x9c] sm:$0xf]
    %v74 = vld [vmem:[%s0 + $0xa0] sm:$0xf]
    %v75 = vld [vmem:[%s0 + $0xa4] sm:$0xf]
    %v76 = vld [vmem:[%s0 + $0xa8] sm:$0xf]
    %v77 = vld [vmem:[%s0 + $0xac] sm:$0xf]
    %v78 = vld [vmem:[%s0 + $0xb0] sm:$0xf]
    %v79 = vld [vmem:[%s0 + $0xb4] sm:$0xf]
    %v80 = vld [vmem:[%s0 + $0xb8] sm:$0xf]
    %v81 = vld [vmem:[%s0 + $0xbc] sm:$0xf]
    %v82 = vld [vmem:[%s0 + $0xc0] sm:$0xf]
    %v83 = vld [vmem:[%s0 + $0xc4] sm:$0xf]
    %v84 = vld [vmem:[%s0 + $0xc8] sm:$0xf]
    %v85 = vld [vmem:[%s0 + $0xcc] sm:$0xf]
    %v86 = vld [vmem:[%s0 + $0xd0] sm:$0xf]
    %v87 = vld [vmem:[%s0 + $0xd4] sm:$0xf]
    %v88 = vld [vmem:[%s0 + $0xd8] sm:$0xf]
    %v89 = vld [vmem:[%s0 + $0xdc] sm:$0xf]
    %v90 = vld [vmem:[%s0 + $0xe0] sm:$0xf]
    %v91 = vld [vmem:[%s0 + $0xe4] sm:$0xf]
    %v92 = vld [vmem:[%s0 + $0xe8] sm:$0xf]
    %v93 = vld [vmem:[%s0 + $0xec] sm:$0xf]
    %v94 = vld [vmem:[%s0 + $0xf0] sm:$0xf]
    %v95 = vld [vmem:[%s0 + $0xf4] sm:$0xf]
    %v96 = vld [vmem:[%s0 + $0xf8] sm:$0xf]
    %v97 = vld [vmem:[%s0 + $0xfc] sm:$0xf]
    %v98 = vld [vmem:[%s0 + $0x100] sm:$0xf]
    %v99 = vld [vmem:[%s0 + $0x104] sm:$0xf]
    %v100 = vld [vmem:[%s0 + $0x108] sm:$0xf]
    %v101 = vld [vmem:[%s0 + $0x10c] sm:$0xf]
    %v102 = vld [vmem:[%s0 + $0x110] sm:$0xf]
    %v103 = vld [vmem:[%s0 + $0x114] sm:$0xf]
    %v104 = vld [vmem:[%s0 + $0x118] sm:$0xf]
    %v105 = vld [vmem:[%s0 + $0x11c] sm:$0xf]
    %v106 = vld [vmem:[%s0 + $0x120] sm:$0xf]
    %v107 = vld [vmem:[%s0 + $0x124] sm:$0xf]
    %v108 = vld [vmem:[%s0 + $0x128] sm:$0xf]
    %v109 = vld [vmem:[%s0 + $0x12c] sm:$0xf]
    %v110 = vld [vmem:[%s0 + $0x130] sm:$0xf]
    %v111 = vld [vmem:[%s0 + $0x134] sm:$0xf]
    %v112 = vld [vmem:[%s0 + $0x138] sm:$0xf]
    %v113 = vld [vmem:[%s0 + $0x13c] sm:$0xf]
    %v114 = vld [vmem:[%s0 + $0x140] sm:$0xf]
    %v115 = vld [vmem:[%s0 + $0x144] sm:$0xf]
    %v116 = vld [vmem:[%s0 + $0x148] sm:$0xf]
    %v117 = vld [vmem:[%s0 + $0x14c] sm:$0xf]
    %v118 = vld [vmem:[%s0 + $0x150] sm:$0xf]
    %v119 = vld [vmem:[%s0 + $0x154] sm:$0xf]
    %v120 = vld [vmem:[%s0 + $0x158] sm:$0xf]
    %v121 = vld [vmem:[%s0 + $0x15c] sm:$0xf]
    %v122 = vld [vmem:[%s0 + $0x160] sm:$0xf]
    %v123 = vld [vmem:[%s0 + $0x164] sm:$0xf]
    %v124 = vld [vmem:[%s0 + $0x168] sm:$0xf]
    %v125 = vld [vmem:[%s0 + $0x16c] sm:$0xf]
    %v126 = vld [vmem:[%s0 + $0x170] sm:$0xf]
    %v127 = vld [vmem:[%s0 + $0x174] sm:$0xf]
    %v128 = vld [vmem:[%s0 + $0x178] sm:$0xf]
    %v129 = vld [vmem:[%s0 + $0x17c] sm:$0xf]
    %v130 = vld [vmem:[%s0 + $0x180] sm:$0xf]
    %v131 = vld [vmem:[%s0 + $0x184] sm:$0xf]
    %v132 = vld [vmem:[%s0 + $0x188] sm:$0xf]
    %v133 = vld [vmem:[%s0 + $0x18c] sm:$0xf]
    %v134 = vld [vmem:[%s0 + $0x190] sm:$0xf]
    %v135 = vld [vmem:[%s0 + $0x194] sm:$0xf]
    %v136 = vld [vmem:[%s0 + $0x198] sm:$0xf]
    %v137 = vld [vmem:[%s0 + $0x19c] sm:$0xf]
    %v138 = vld [vmem:[%s0 + $0x1a0] sm:$0xf]
    %v139 = vld [vmem:[%s0 + $0x1a4] sm:$0xf]
    %v140 = vld [vmem:[%s0 + $0x1a8] sm:$0xf]
    %v141 = vld [vmem:[%s0 + $0x1ac] sm:$0xf]
    %v142 = vld [vmem:[%s0 + $0x1b0] sm:$0xf]
    %v143 = vld [vmem:[%s0 + $0x1b4] sm:$0xf]
    %v144 = vld [vmem:[%s0 + $0x1b8] sm:$0xf]
    %v145 = vld [vmem:[%s0 + $0x1bc] sm:$0xf]
    %v146 = vld [vmem:[%s0 + $0x1c0] sm:$0xf]
    %v147 = vld [vmem:[%s0 + $0x1c4] sm:$0xf]
    %v148 = vld [vmem:[%s0 + $0x1c8] sm:$0xf]
    %v149 = vld [vmem:[%s0 + $0x1cc] sm:$0xf]
    %v150 = vld [vmem:[%s0 + $0x1d0] sm:$0xf]
    %v151 = vld [vmem:[%s0 + $0x1d4] sm:$0xf]
    %v152 = vld [vmem:[%s0 + $0x1d8] sm:$0xf]
    %v153 = vld [vmem:[%s0 + $0x1dc] sm:$0xf]
    %v154 = vld [vmem:[%s0 + $0x1e0] sm:$0xf]
    %v155 = vld [vmem:[%s0 + $0x1e4] sm:$0xf]
    %v156 = vld [vmem:[%s0 + $0x1e8] sm:$0xf]
    %v157 = vld [vmem:[%s0 + $0x1ec] sm:$0xf]
    %v158 = vld [vmem:[%s0 + $0x1f0] sm:$0xf]
    %v159 = vld [vmem:[%s0 + $0x1f4] sm:$0xf]
    %v160 = vld [vmem:[%s0 + $0x1f8] sm:$0xf]
    %v161 = vld [vmem:[%s0 + $0x1fc] sm:$0xf]
    %v162 = vld [vmem:[%s0 + $0x200] sm:$0xf]
    %v163 = vld [vmem:[%s0 + $0x204] sm:$0xf]
    %v164 = vld [vmem:[%s0 + $0x208] sm:$0xf]
    %v165 = vld [vmem:[%s0 + $0x20c] sm:$0xf]
    %v166 = vld [vmem:[%s0 + $0x210] sm:$0xf]
    %v167 = vld [vmem:[%s0 + $0x214] sm:$0xf]
    %v168 = vld [vmem:[%s0 + $0x218] sm:$0xf]
    %v169 = vld [vmem:[%s0 + $0x21c] sm:$0xf]
    %v170 = vld [vmem:[%s0 + $0x220] sm:$0xf]
    %v171 = vld [vmem:[%s0 + $0x224] sm:$0xf]
    %v172 = vld [vmem:[%s0 + $0x228] sm:$0xf]
    %v173 = vld [vmem:[%s0 + $0x22c] sm:$0xf]
    %v174 = vld [vmem:[%s0 + $0x230] sm:$0xf]
    %v175 = vld [vmem:[%s0 + $0x234] sm:$0xf]
    %v176 = vld [vmem:[%s0 + $0x238] sm:$0xf]
    %v177 = vld [vmem:[%s0 + $0x23c] sm:$0xf]
    %v178 = vld [vmem:[%s0 + $0x240] sm:$0xf]
    %v179 = vld [vmem:[%s0 + $0x244] sm:$0xf]
    %v180 = vld [vmem:[%s0 + $0x248] sm:$0xf]
    %v181 = vld [vmem:[%s0 + $0x24c] sm:$0xf]
    %v182 = vld [vmem:[%s0 + $0x250] sm:$0xf]
    %v183 = vld [vmem:[%s0 + $0x254] sm:$0xf]
    %v184 = vld [vmem:[%s0 + $0x258] sm:$0xf]
    %v185 = vld [vmem:[%s0 + $0x25c] sm:$0xf]
    %v186 = vld [vmem:[%s0 + $0x260] sm:$0xf]
    %v187 = vld [vmem:[%s0 + $0x264] sm:$0xf]
    %v188 = vld [vmem:[%s0 + $0x268] sm:$0xf]
    %v189 = vld [vmem:[%s0 + $0x26c] sm:$0xf]
    %v190 = vld [vmem:[%s0 + $0x270] sm:$0xf]
    %v191 = vld [vmem:[%s0 + $0x274] sm:$0xf]
    %v192 = vld [vmem:[%s0 + $0x278] sm:$0xf]
    %v193 = vld [vmem:[%s0 + $0x27c] sm:$0xf]
    %v194 = vld [vmem:[%s0 + $0x280] sm:$0xf]
    %v195 = vld [vmem:[%s0 + $0x284] sm:$0xf]
    %v196 = vld [vmem:[%s0 + $0x288] sm:$0xf]
    %v197 = vld [vmem:[%s0 + $0x28c] sm:$0xf]
    %v198 = vld [vmem:[%s0 + $0x290] sm:$0xf]
    %v199 = vld [vmem:[%s0 + $0x294] sm:$0xf]
    %v200 = vld [vmem:[%s0 + $0x298] sm:$0xf]
    %v201 = vld [vmem:[%s0 + $0x29c] sm:$0xf]
    %v202 = vld [vmem:[%s0 + $0x2a0] sm:$0xf]
    %v203 = vld [vmem:[%s0 + $0x2a4] sm:$0xf]
    %v204 = vld [vmem:[%s0 + $0x2a8] sm:$0xf]
    %v205 = vld [vmem:[%s0 + $0x2ac] sm:$0xf]
    %v206 = vld [vmem:[%s0 + $0x2b0] sm:$0xf]
    %v207 = vld [vmem:[%s0 + $0x2b4] sm:$0xf]
    %v208 = vld [vmem:[%s0 + $0x2b8] sm:$0xf]
    %v209 = vld [vmem:[%s0 + $0x2bc] sm:$0xf]
    %v210 = vld [vmem:[%s0 + $0x2c0] sm:$0xf]
    %v211 = vld [vmem:[%s0 + $0x2c4] sm:$0xf]
    %v212 = vld [vmem:[%s0 + $0x2c8] sm:$0xf]
    %v213 = vld [vmem:[%s0 + $0x2cc] sm:$0xf]
    %v214 = vld [vmem:[%s0 + $0x2d0] sm:$0xf]
    %v215 = vld [vmem:[%s0 + $0x2d4] sm:$0xf]
    %v216 = vld [vmem:[%s0 + $0x2d8] sm:$0xf]
    %v217 = vld [vmem:[%s0 + $0x2dc] sm:$0xf]
    %v218 = vld [vmem:[%s0 + $0x2e0] sm:$0xf]
    %v219 = vld [vmem:[%s0 + $0x2e4] sm:$0xf]
    %v220 = vld [vmem:[%s0 + $0x2e8] sm:$0xf]
    %v221 = vld [vmem:[%s0 + $0x2ec] sm:$0xf]
    %v222 = vld [vmem:[%s0 + $0x2f0] sm:$0xf]
    %v223 = vld [vmem:[%s0 + $0x2f4] sm:$0xf]
    %v224 = vld [vmem:[%s0 + $0x2f8] sm:$0xf]
    %v225 = vld [vmem:[%s0 + $0x2fc] sm:$0xf]
    %v226 = vld [vmem:[%s0 + $0x300] sm:$0xf]
    %v227 = vld [vmem:[%s0 + $0x304] sm:$0xf]
    %v228 = vld [vmem:[%s0 + $0x308] sm:$0xf]
    %v229 = vld [vmem:[%s0 + $0x30c] sm:$0xf]
    %v230 = vld [vmem:[%s0 + $0x310] sm:$0xf]
    %v231 = vld [vmem:[%s0 + $0x314] sm:$0xf]
    %v232 = vld [vmem:[%s0 + $0x318] sm:$0xf]
    %v233 = vld [vmem:[%s0 + $0x31c] sm:$0xf]
    %v234 = vld [vmem:[%s0 + $0x320] sm:$0xf]
    %v235 = vld [vmem:[%s0 + $0x324] sm:$0xf]
    %v236 = vld [vmem:[%s0 + $0x328] sm:$0xf]
    %v237 = vld [vmem:[%s0 + $0x32c] sm:$0xf]
    %v238 = vld [vmem:[%s0 + $0x330] sm:$0xf]
    %v239 = vld [vmem:[%s0 + $0x334] sm:$0xf]
    %v240 = vld [vmem:[%s0 + $0x338] sm:$0xf]
    %v241 = vld [vmem:[%s0 + $0x33c] sm:$0xf]
    %v242 = vld [vmem:[%s0 + $0x340] sm:$0xf]
    %v243 = vld [vmem:[%s0 + $0x344] sm:$0xf]
    %v244 = vld [vmem:[%s0 + $0x348] sm:$0xf]
    %v245 = vld [vmem:[%s0 + $0x34c] sm:$0xf]
    %v246 = vld [vmem:[%s0 + $0x350] sm:$0xf]
    %v247 = vld [vmem:[%s0 + $0x354] sm:$0xf]
    %v248 = vld [vmem:[%s0 + $0x358] sm:$0xf]
    %v249 = vld [vmem:[%s0 + $0x35c] sm:$0xf]
    %v250 = vld [vmem:[%s0 + $0x360] sm:$0xf]
    %v251 = vld [vmem:[%s0 + $0x364] sm:$0xf]
    %v252 = vld [vmem:[%s0 + $0x368] sm:$0xf]
    %v253 = vld [vmem:[%s0 + $0x36c] sm:$0xf]
    %v254 = vld [vmem:[%s0 + $0x370] sm:$0xf]
    %v255 = vld [vmem:[%s0 + $0x374] sm:$0xf]
    %v256 = vld [vmem:[%s0 + $0x378] sm:$0xf]
    %v257 = vld [vmem:[%s0 + $0x37c] sm:$0xf]
    %v258 = vld [vmem:[%s0 + $0x380] sm:$0xf]
    %v259 = vld [vmem:[%s0 + $0x384] sm:$0xf]
    %v260 = vld [vmem:[%s0 + $0x388] sm:$0xf]
    %v261 = vld [vmem:[%s0 + $0x38c] sm:$0xf]
    %v262 = vld [vmem:[%s0 + $0x390] sm:$0xf]
    %v263 = vld [vmem:[%s0 + $0x394] sm:$0xf]
    %v264 = vld [vmem:[%s0 + $0x398] sm:$0xf]
    %v265 = vld [vmem:[%s0 + $0x39c] sm:$0xf]
    %v266 = vld [vmem:[%s0 + $0x3a0] sm:$0xf]
    %v267 = vld [vmem:[%s0 + $0x3a4] sm:$0xf]
    %v268 = vld [vmem:[%s0 + $0x3a8] sm:$0xf]
    %v269 = vld [vmem:[%s0 + $0x3ac] sm:$0xf]
    %v270 = vld [vmem:[%s0 + $0x3b0] sm:$0xf]
    %v271 = vld [vmem:[%s0 + $0x3b4] sm:$0xf]
    %v272 = vld [vmem:[%s0 + $0x3b8] sm:$0xf]
    %v273 = vld [vmem:[%s0 + $0x3bc] sm:$0xf]
    %v274 = vld [vmem:[%s1] sm:$0xf]
    %v275 = vld [vmem:[%s1 + $0x4] sm:$0xf]
    %v276 = vld [vmem:[%s1 + $0x8] sm:$0xf]
    %v277 = vld [vmem:[%s1 + $0xc] sm:$0x3]
    %v518 = vunpack.c.l.b16 %v34
    %v519 = vunpack.c.l.b16 %v35
    %v520 = vunpack.c.l.b16 %v36
    %v521 = vunpack.c.l.b16 %v37
    %v522 = vunpack.c.l.b16 %v38
    %v523 = vunpack.c.l.b16 %v39
    %v524 = vunpack.c.l.b16 %v40
    %v525 = vunpack.c.l.b16 %v41
    %v526 = vunpack.c.l.b16 %v42
    %v527 = vunpack.c.l.b16 %v43
    %v528 = vunpack.c.l.b16 %v44
    %v529 = vunpack.c.l.b16 %v45
    %v530 = vunpack.c.l.b16 %v46
    %v531 = vunpack.c.l.b16 %v47
    %v532 = vunpack.c.l.b16 %v48
    %v533 = vunpack.c.l.b16 %v49
    %v534 = vunpack.c.l.b16 %v50
    %v535 = vunpack.c.l.b16 %v51
    %v536 = vunpack.c.l.b16 %v52
    %v537 = vunpack.c.l.b16 %v53
    %v538 = vunpack.c.l.b16 %v54
    %v539 = vunpack.c.l.b16 %v55
    %v540 = vunpack.c.l.b16 %v56
    %v541 = vunpack.c.l.b16 %v57
    %v542 = vunpack.c.l.b16 %v58
    %v543 = vunpack.c.l.b16 %v59
    %v544 = vunpack.c.l.b16 %v60
    %v545 = vunpack.c.l.b16 %v61
    %v546 = vunpack.c.l.b16 %v62
    %v547 = vunpack.c.l.b16 %v63
    %v548 = vunpack.c.l.b16 %v64
    %v549 = vunpack.c.l.b16 %v65
    %v550 = vunpack.c.l.b16 %v66
    %v551 = vunpack.c.l.b16 %v67
    %v552 = vunpack.c.l.b16 %v68
    %v553 = vunpack.c.l.b16 %v69
    %v554 = vunpack.c.l.b16 %v70
    %v555 = vunpack.c.l.b16 %v71
    %v556 = vunpack.c.l.b16 %v72
    %v557 = vunpack.c.l.b16 %v73
    %v558 = vunpack.c.l.b16 %v74
    %v559 = vunpack.c.l.b16 %v75
    %v560 = vunpack.c.l.b16 %v76
    %v561 = vunpack.c.l.b16 %v77
    %v562 = vunpack.c.l.b16 %v78
    %v563 = vunpack.c.l.b16 %v79
    %v564 = vunpack.c.l.b16 %v80
    %v565 = vunpack.c.l.b16 %v81
    %v566 = vunpack.c.l.b16 %v82
    %v567 = vunpack.c.l.b16 %v83
    %v568 = vunpack.c.l.b16 %v84
    %v569 = vunpack.c.l.b16 %v85
    %v570 = vunpack.c.l.b16 %v86
    %v571 = vunpack.c.l.b16 %v87
    %v572 = vunpack.c.l.b16 %v88
    %v573 = vunpack.c.l.b16 %v89
    %v574 = vunpack.c.l.b16 %v90
    %v575 = vunpack.c.l.b16 %v91
    %v576 = vunpack.c.l.b16 %v92
    %v577 = vunpack.c.l.b16 %v93
    %v578 = vunpack.c.l.b16 %v94
    %v579 = vunpack.c.l.b16 %v95
    %v580 = vunpack.c.l.b16 %v96
    %v581 = vunpack.c.l.b16 %v97
    %v582 = vunpack.c.l.b16 %v98
    %v583 = vunpack.c.l.b16 %v99
    %v584 = vunpack.c.l.b16 %v100
    %v585 = vunpack.c.l.b16 %v101
    %v586 = vunpack.c.l.b16 %v102
    %v587 = vunpack.c.l.b16 %v103
    %v588 = vunpack.c.l.b16 %v104
    %v589 = vunpack.c.l.b16 %v105
    %v590 = vunpack.c.l.b16 %v106
    %v591 = vunpack.c.l.b16 %v107
    %v592 = vunpack.c.l.b16 %v108
    %v593 = vunpack.c.l.b16 %v109
    %v594 = vunpack.c.l.b16 %v110
    %v595 = vunpack.c.l.b16 %v111
    %v596 = vunpack.c.l.b16 %v112
    %v597 = vunpack.c.l.b16 %v113
    %v598 = vunpack.c.l.b16 %v114
    %v599 = vunpack.c.l.b16 %v115
    %v600 = vunpack.c.l.b16 %v116
    %v601 = vunpack.c.l.b16 %v117
    %v602 = vunpack.c.l.b16 %v118
    %v603 = vunpack.c.l.b16 %v119
    %v604 = vunpack.c.l.b16 %v120
    %v605 = vunpack.c.l.b16 %v121
    %v606 = vunpack.c.l.b16 %v122
    %v607 = vunpack.c.l.b16 %v123
    %v608 = vunpack.c.l.b16 %v124
    %v609 = vunpack.c.l.b16 %v125
    %v610 = vunpack.c.l.b16 %v126
    %v611 = vunpack.c.l.b16 %v127
    %v612 = vunpack.c.l.b16 %v128
    %v613 = vunpack.c.l.b16 %v129
    %v614 = vunpack.c.l.b16 %v130
    %v615 = vunpack.c.l.b16 %v131
    %v616 = vunpack.c.l.b16 %v132
    %v617 = vunpack.c.l.b16 %v133
    %v618 = vunpack.c.l.b16 %v134
    %v619 = vunpack.c.l.b16 %v135
    %v620 = vunpack.c.l.b16 %v136
    %v621 = vunpack.c.l.b16 %v137
    %v622 = vunpack.c.l.b16 %v138
    %v623 = vunpack.c.l.b16 %v139
    %v624 = vunpack.c.l.b16 %v140
    %v625 = vunpack.c.l.b16 %v141
    %v626 = vunpack.c.l.b16 %v142
    %v627 = vunpack.c.l.b16 %v143
    %v628 = vunpack.c.l.b16 %v144
    %v629 = vunpack.c.l.b16 %v145
    %v630 = vunpack.c.l.b16 %v146
    %v631 = vunpack.c.l.b16 %v147
    %v632 = vunpack.c.l.b16 %v148
    %v633 = vunpack.c.l.b16 %v149
    %v634 = vunpack.c.l.b16 %v150
    %v635 = vunpack.c.l.b16 %v151
    %v636 = vunpack.c.l.b16 %v152
    %v637 = vunpack.c.l.b16 %v153
    %v638 = vunpack.c.l.b16 %v154
    %v639 = vunpack.c.l.b16 %v155
    %v640 = vunpack.c.l.b16 %v156
    %v641 = vunpack.c.l.b16 %v157
    %v642 = vunpack.c.l.b16 %v158
    %v643 = vunpack.c.l.b16 %v159
    %v644 = vunpack.c.l.b16 %v160
    %v645 = vunpack.c.l.b16 %v161
    %v646 = vunpack.c.l.b16 %v162
    %v647 = vunpack.c.l.b16 %v163
    %v648 = vunpack.c.l.b16 %v164
    %v649 = vunpack.c.l.b16 %v165
    %v650 = vunpack.c.l.b16 %v166
    %v651 = vunpack.c.l.b16 %v167
    %v652 = vunpack.c.l.b16 %v168
    %v653 = vunpack.c.l.b16 %v169
    %v654 = vunpack.c.l.b16 %v170
    %v655 = vunpack.c.l.b16 %v171
    %v656 = vunpack.c.l.b16 %v172
    %v657 = vunpack.c.l.b16 %v173
    %v658 = vunpack.c.l.b16 %v174
    %v659 = vunpack.c.l.b16 %v175
    %v660 = vunpack.c.l.b16 %v176
    %v661 = vunpack.c.l.b16 %v177
    %v662 = vunpack.c.l.b16 %v178
    %v663 = vunpack.c.l.b16 %v179
    %v664 = vunpack.c.l.b16 %v180
    %v665 = vunpack.c.l.b16 %v181
    %v666 = vunpack.c.l.b16 %v182
    %v667 = vunpack.c.l.b16 %v183
    %v668 = vunpack.c.l.b16 %v184
    %v669 = vunpack.c.l.b16 %v185
    %v670 = vunpack.c.l.b16 %v186
    %v671 = vunpack.c.l.b16 %v187
    %v672 = vunpack.c.l.b16 %v188
    %v673 = vunpack.c.l.b16 %v189
    %v674 = vunpack.c.l.b16 %v190
    %v675 = vunpack.c.l.b16 %v191
    %v676 = vunpack.c.l.b16 %v192
    %v677 = vunpack.c.l.b16 %v193
    %v678 = vunpack.c.l.b16 %v194
    %v679 = vunpack.c.l.b16 %v195
    %v680 = vunpack.c.l.b16 %v196
    %v681 = vunpack.c.l.b16 %v197
    %v682 = vunpack.c.l.b16 %v198
    %v683 = vunpack.c.l.b16 %v199
    %v684 = vunpack.c.l.b16 %v200
    %v685 = vunpack.c.l.b16 %v201
    %v686 = vunpack.c.l.b16 %v202
    %v687 = vunpack.c.l.b16 %v203
    %v688 = vunpack.c.l.b16 %v204
    %v689 = vunpack.c.l.b16 %v205
    %v690 = vunpack.c.l.b16 %v206
    %v691 = vunpack.c.l.b16 %v207
    %v692 = vunpack.c.l.b16 %v208
    %v693 = vunpack.c.l.b16 %v209
    %v694 = vunpack.c.l.b16 %v210
    %v695 = vunpack.c.l.b16 %v211
    %v696 = vunpack.c.l.b16 %v212
    %v697 = vunpack.c.l.b16 %v213
    %v698 = vunpack.c.l.b16 %v214
    %v699 = vunpack.c.l.b16 %v215
    %v700 = vunpack.c.l.b16 %v216
    %v701 = vunpack.c.l.b16 %v217
    %v702 = vunpack.c.l.b16 %v218
    %v703 = vunpack.c.l.b16 %v219
    %v704 = vunpack.c.l.b16 %v220
    %v705 = vunpack.c.l.b16 %v221
    %v706 = vunpack.c.l.b16 %v222
    %v707 = vunpack.c.l.b16 %v223
    %v708 = vunpack.c.l.b16 %v224
    %v709 = vunpack.c.l.b16 %v225
    %v710 = vunpack.c.l.b16 %v226
    %v711 = vunpack.c.l.b16 %v227
    %v712 = vunpack.c.l.b16 %v228
    %v713 = vunpack.c.l.b16 %v229
    %v714 = vunpack.c.l.b16 %v230
    %v715 = vunpack.c.l.b16 %v231
    %v716 = vunpack.c.l.b16 %v232
    %v717 = vunpack.c.l.b16 %v233
    %v718 = vunpack.c.l.b16 %v234
    %v719 = vunpack.c.l.b16 %v235
    %v720 = vunpack.c.l.b16 %v236
    %v721 = vunpack.c.l.b16 %v237
    %v722 = vunpack.c.l.b16 %v238
    %v723 = vunpack.c.l.b16 %v239
    %v724 = vunpack.c.l.b16 %v240
    %v725 = vunpack.c.l.b16 %v241
    %v726 = vunpack.c.l.b16 %v242
    %v727 = vunpack.c.l.b16 %v243
    %v728 = vunpack.c.l.b16 %v244
    %v729 = vunpack.c.l.b16 %v245
    %v730 = vunpack.c.l.b16 %v246
    %v731 = vunpack.c.l.b16 %v247
    %v732 = vunpack.c.l.b16 %v248
    %v733 = vunpack.c.l.b16 %v249
    %v734 = vunpack.c.l.b16 %v250
    %v735 = vunpack.c.l.b16 %v251
    %v736 = vunpack.c.l.b16 %v252
    %v737 = vunpack.c.l.b16 %v253
    %v738 = vunpack.c.l.b16 %v254
    %v739 = vunpack.c.l.b16 %v255
    %v740 = vunpack.c.l.b16 %v256
    %v741 = vunpack.c.l.b16 %v257
    %v742 = vunpack.c.l.b16 %v258
    %v743 = vunpack.c.l.b16 %v259
    %v744 = vunpack.c.l.b16 %v260
    %v745 = vunpack.c.l.b16 %v261
    %v746 = vunpack.c.l.b16 %v262
    %v747 = vunpack.c.l.b16 %v263
    %v748 = vunpack.c.l.b16 %v264
    %v749 = vunpack.c.l.b16 %v265
    %v750 = vunpack.c.l.b16 %v266
    %v751 = vunpack.c.l.b16 %v267
    %v752 = vunpack.c.l.b16 %v268
    %v753 = vunpack.c.l.b16 %v269
    %v754 = vunpack.c.l.b16 %v270
    %v755 = vunpack.c.l.b16 %v271
    %v756 = vunpack.c.l.b16 %v272
    %v757 = vunpack.c.l.b16 %v273
    %v758 = vpack.c.b16 %v519, %v518
    %v759 = vpack.c.b16 %v521, %v520
    %v760 = vpack.c.b16 %v523, %v522
    %v761 = vpack.c.b16 %v525, %v524
    %v762 = vpack.c.b16 %v527, %v526
    %v763 = vpack.c.b16 %v529, %v528
    %v764 = vpack.c.b16 %v531, %v530
    %v765 = vpack.c.b16 %v533, %v532
    %v766 = vpack.c.b16 %v535, %v534
    %v767 = vpack.c.b16 %v537, %v536
    %v768 = vpack.c.b16 %v539, %v538
    %v769 = vpack.c.b16 %v541, %v540
    %v770 = vpack.c.b16 %v543, %v542
    %v771 = vpack.c.b16 %v545, %v544
    %v772 = vpack.c.b16 %v547, %v546
    %v773 = vpack.c.b16 %v549, %v548
    %v774 = vpack.c.b16 %v551, %v550
    %v775 = vpack.c.b16 %v553, %v552
    %v776 = vpack.c.b16 %v555, %v554
    %v777 = vpack.c.b16 %v557, %v556
    %v778 = vpack.c.b16 %v559, %v558
    %v779 = vpack.c.b16 %v561, %v560
    %v780 = vpack.c.b16 %v563, %v562
    %v781 = vpack.c.b16 %v565, %v564
    %v782 = vpack.c.b16 %v567, %v566
    %v783 = vpack.c.b16 %v569, %v568
    %v784 = vpack.c.b16 %v571, %v570
    %v785 = vpack.c.b16 %v573, %v572
    %v786 = vpack.c.b16 %v575, %v574
    %v787 = vpack.c.b16 %v577, %v576
    %v788 = vpack.c.b16 %v579, %v578
    %v789 = vpack.c.b16 %v581, %v580
    %v790 = vpack.c.b16 %v583, %v582
    %v791 = vpack.c.b16 %v585, %v584
    %v792 = vpack.c.b16 %v587, %v586
    %v793 = vpack.c.b16 %v589, %v588
    %v794 = vpack.c.b16 %v591, %v590
    %v795 = vpack.c.b16 %v593, %v592
    %v796 = vpack.c.b16 %v595, %v594
    %v797 = vpack.c.b16 %v597, %v596
    %v798 = vpack.c.b16 %v599, %v598
    %v799 = vpack.c.b16 %v601, %v600
    %v800 = vpack.c.b16 %v603, %v602
    %v801 = vpack.c.b16 %v605, %v604
    %v802 = vpack.c.b16 %v607, %v606
    %v803 = vpack.c.b16 %v609, %v608
    %v804 = vpack.c.b16 %v611, %v610
    %v805 = vpack.c.b16 %v613, %v612
    %v806 = vpack.c.b16 %v615, %v614
    %v807 = vpack.c.b16 %v617, %v616
    %v808 = vpack.c.b16 %v619, %v618
    %v809 = vpack.c.b16 %v621, %v620
    %v810 = vpack.c.b16 %v623, %v622
    %v811 = vpack.c.b16 %v625, %v624
    %v812 = vpack.c.b16 %v627, %v626
    %v813 = vpack.c.b16 %v629, %v628
    %v814 = vpack.c.b16 %v631, %v630
    %v815 = vpack.c.b16 %v633, %v632
    %v816 = vpack.c.b16 %v635, %v634
    %v817 = vpack.c.b16 %v637, %v636
    %v818 = vpack.c.b16 %v639, %v638
    %v819 = vpack.c.b16 %v641, %v640
    %v820 = vpack.c.b16 %v643, %v642
    %v821 = vpack.c.b16 %v645, %v644
    %v822 = vpack.c.b16 %v647, %v646
    %v823 = vpack.c.b16 %v649, %v648
    %v824 = vpack.c.b16 %v651, %v650
    %v825 = vpack.c.b16 %v653, %v652
    %v826 = vpack.c.b16 %v655, %v654
    %v827 = vpack.c.b16 %v657, %v656
    %v828 = vpack.c.b16 %v659, %v658
    %v829 = vpack.c.b16 %v661, %v660
    %v830 = vpack.c.b16 %v663, %v662
    %v831 = vpack.c.b16 %v665, %v664
    %v832 = vpack.c.b16 %v667, %v666
    %v833 = vpack.c.b16 %v669, %v668
    %v834 = vpack.c.b16 %v671, %v670
    %v835 = vpack.c.b16 %v673, %v672
    %v836 = vpack.c.b16 %v675, %v674
    %v837 = vpack.c.b16 %v677, %v676
    %v838 = vpack.c.b16 %v679, %v678
    %v839 = vpack.c.b16 %v681, %v680
    %v840 = vpack.c.b16 %v683, %v682
    %v841 = vpack.c.b16 %v685, %v684
    %v842 = vpack.c.b16 %v687, %v686
    %v843 = vpack.c.b16 %v689, %v688
    %v844 = vpack.c.b16 %v691, %v690
    %v845 = vpack.c.b16 %v693, %v692
    %v846 = vpack.c.b16 %v695, %v694
    %v847 = vpack.c.b16 %v697, %v696
    %v848 = vpack.c.b16 %v699, %v698
    %v849 = vpack.c.b16 %v701, %v700
    %v850 = vpack.c.b16 %v703, %v702
    %v851 = vpack.c.b16 %v705, %v704
    %v852 = vpack.c.b16 %v707, %v706
    %v853 = vpack.c.b16 %v709, %v708
    %v854 = vpack.c.b16 %v711, %v710
    %v855 = vpack.c.b16 %v713, %v712
    %v856 = vpack.c.b16 %v715, %v714
    %v857 = vpack.c.b16 %v717, %v716
    %v858 = vpack.c.b16 %v719, %v718
    %v859 = vpack.c.b16 %v721, %v720
    %v860 = vpack.c.b16 %v723, %v722
    %v861 = vpack.c.b16 %v725, %v724
    %v862 = vpack.c.b16 %v727, %v726
    %v863 = vpack.c.b16 %v729, %v728
    %v864 = vpack.c.b16 %v731, %v730
    %v865 = vpack.c.b16 %v733, %v732
    %v866 = vpack.c.b16 %v735, %v734
    %v867 = vpack.c.b16 %v737, %v736
    %v868 = vpack.c.b16 %v739, %v738
    %v869 = vpack.c.b16 %v741, %v740
    %v870 = vpack.c.b16 %v743, %v742
    %v871 = vpack.c.b16 %v745, %v744
    %v872 = vpack.c.b16 %v747, %v746
    %v873 = vpack.c.b16 %v749, %v748
    %v874 = vpack.c.b16 %v751, %v750
    %v875 = vpack.c.b16 %v753, %v752
    %v876 = vpack.c.b16 %v755, %v754
    %v877 = vpack.c.b16 %v757, %v756
    %v882 = vunpack.c.l.b16 %v274
    %v883 = vunpack.c.l.b16 %v275
    %v884 = vunpack.c.l.b16 %v276
    %v885 = vunpack.c.l.b16 %v277
    %v886 = vpack.c.b16 %v883, %v882
    %v887 = vpack.c.b16 %v885, %v884
    %vm889 = vcmask 220160
    %v891 = vsel %vm889, %v758, 0
    %v894 = vsel %vm889, %v759, 0
    %v897 = vsel %vm889, %v760, 0
    %v900 = vsel %vm889, %v761, 0
    %v903 = vsel %vm889, %v762, 0
    %v906 = vsel %vm889, %v763, 0
    %v909 = vsel %vm889, %v764, 0
    %v912 = vsel %vm889, %v765, 0
    %v915 = vsel %vm889, %v766, 0
    %v918 = vsel %vm889, %v767, 0
    %v921 = vsel %vm889, %v768, 0
    %v924 = vsel %vm889, %v769, 0
    %v927 = vsel %vm889, %v770, 0
    %v930 = vsel %vm889, %v771, 0
    %v933 = vsel %vm889, %v772, 0
    %v936 = vsel %vm889, %v773, 0
    %v939 = vsel %vm889, %v774, 0
    %v942 = vsel %vm889, %v775, 0
    %v945 = vsel %vm889, %v776, 0
    %v948 = vsel %vm889, %v777, 0
    %v951 = vsel %vm889, %v778, 0
    %v954 = vsel %vm889, %v779, 0
    %v957 = vsel %vm889, %v780, 0
    %v960 = vsel %vm889, %v781, 0
    %v963 = vsel %vm889, %v782, 0
    %v966 = vsel %vm889, %v783, 0
    %v969 = vsel %vm889, %v784, 0
    %v972 = vsel %vm889, %v785, 0
    %v975 = vsel %vm889, %v786, 0
    %v978 = vsel %vm889, %v787, 0
    %v981 = vsel %vm889, %v788, 0
    %v984 = vsel %vm889, %v789, 0
    %v987 = vsel %vm889, %v790, 0
    %v990 = vsel %vm889, %v791, 0
    %v993 = vsel %vm889, %v792, 0
    %v996 = vsel %vm889, %v793, 0
    %v999 = vsel %vm889, %v794, 0
    %v1002 = vsel %vm889, %v795, 0
    %v1005 = vsel %vm889, %v796, 0
    %v1008 = vsel %vm889, %v797, 0
    %v1011 = vsel %vm889, %v798, 0
    %v1014 = vsel %vm889, %v799, 0
    %v1017 = vsel %vm889, %v800, 0
    %v1020 = vsel %vm889, %v801, 0
    %v1023 = vsel %vm889, %v802, 0
    %v1026 = vsel %vm889, %v803, 0
    %v1029 = vsel %vm889, %v804, 0
    %v1032 = vsel %vm889, %v805, 0
    %v1035 = vsel %vm889, %v806, 0
    %v1038 = vsel %vm889, %v807, 0
    %v1041 = vsel %vm889, %v808, 0
    %v1044 = vsel %vm889, %v809, 0
    %v1047 = vsel %vm889, %v810, 0
    %v1050 = vsel %vm889, %v811, 0
    %v1053 = vsel %vm889, %v812, 0
    %v1056 = vsel %vm889, %v813, 0
    %v1059 = vsel %vm889, %v814, 0
    %v1062 = vsel %vm889, %v815, 0
    %v1065 = vsel %vm889, %v816, 0
    %v1068 = vsel %vm889, %v817, 0
    %v1071 = vsel %vm889, %v818, 0
    %v1074 = vsel %vm889, %v819, 0
    %v1077 = vsel %vm889, %v820, 0
    %v1080 = vsel %vm889, %v821, 0
    %v1083 = vsel %vm889, %v822, 0
    %v1086 = vsel %vm889, %v823, 0
    %v1089 = vsel %vm889, %v824, 0
    %v1092 = vsel %vm889, %v825, 0
    %v1095 = vsel %vm889, %v826, 0
    %v1098 = vsel %vm889, %v827, 0
    %v1101 = vsel %vm889, %v828, 0
    %v1104 = vsel %vm889, %v829, 0
    %v1107 = vsel %vm889, %v830, 0
    %v1110 = vsel %vm889, %v831, 0
    %v1113 = vsel %vm889, %v832, 0
    %v1116 = vsel %vm889, %v833, 0
    %v1119 = vsel %vm889, %v834, 0
    %v1122 = vsel %vm889, %v835, 0
    %v1125 = vsel %vm889, %v836, 0
    %v1128 = vsel %vm889, %v837, 0
    %v1131 = vsel %vm889, %v838, 0
    %v1134 = vsel %vm889, %v839, 0
    %v1137 = vsel %vm889, %v840, 0
    %v1140 = vsel %vm889, %v841, 0
    %v1143 = vsel %vm889, %v842, 0
    %v1146 = vsel %vm889, %v843, 0
    %v1149 = vsel %vm889, %v844, 0
    %v1152 = vsel %vm889, %v845, 0
    %v1155 = vsel %vm889, %v846, 0
    %v1158 = vsel %vm889, %v847, 0
    %v1161 = vsel %vm889, %v848, 0
    %v1164 = vsel %vm889, %v849, 0
    %v1167 = vsel %vm889, %v850, 0
    %v1170 = vsel %vm889, %v851, 0
    %v1173 = vsel %vm889, %v852, 0
    %v1176 = vsel %vm889, %v853, 0
    %v1179 = vsel %vm889, %v854, 0
    %v1182 = vsel %vm889, %v855, 0
    %v1185 = vsel %vm889, %v856, 0
    %v1188 = vsel %vm889, %v857, 0
    %v1191 = vsel %vm889, %v858, 0
    %v1194 = vsel %vm889, %v859, 0
    %v1197 = vsel %vm889, %v860, 0
    %v1200 = vsel %vm889, %v861, 0
    %v1203 = vsel %vm889, %v862, 0
    %v1206 = vsel %vm889, %v863, 0
    %v1209 = vsel %vm889, %v864, 0
    %v1212 = vsel %vm889, %v865, 0
    %v1215 = vsel %vm889, %v866, 0
    %v1218 = vsel %vm889, %v867, 0
    %v1221 = vsel %vm889, %v868, 0
    %v1224 = vsel %vm889, %v869, 0
    %v1227 = vsel %vm889, %v870, 0
    %v1230 = vsel %vm889, %v871, 0
    %v1233 = vsel %vm889, %v872, 0
    %v1236 = vsel %vm889, %v873, 0
    %v1239 = vsel %vm889, %v874, 0
    %v1242 = vsel %vm889, %v875, 0
    %v1245 = vsel %vm889, %v876, 0
    %v1248 = vsel %vm889, %v877, 0
    %vm1250 = vcmask 1044480
    %vm1251 = vcmask 1045504
    %v1252 = vsel %vm1250, 4294967295, 65535
    %v1253 = vsel %vm1251, %v1252, 0
    %v1255 = vand.u32 %v887, %v1253
    %1257 = vmatprep.subr.bf16.mxu0 0
    %1258 = vmatpush1.bf16.msra.mxu0 %v886
    %1259 = vmatprep.subr.bf16.mxu0 0
    %1260 = vmatpush1.bf16.msra.mxu0 %v1255
    %1261 = vmatprep.subr.bf16.mxu0 0
    %1262 = vmatpush1.bf16.msra.mxu0 0
    %1263 = vmatprep.subr.bf16.mxu0 0
    %1264 = vmatpush1.bf16.msra.mxu0 0
    %1265 = vmatprep.subr.bf16.mxu0 0
    %1266 = vmatpush1.bf16.msra.mxu0 0
    %1267 = vmatprep.subr.bf16.mxu0 0
    %1268 = vmatpush1.bf16.msra.mxu0 0
    %1269 = vmatprep.subr.bf16.mxu0 0
    %1270 = vmatpush1.bf16.msra.mxu0 0
    %1271 = vmatprep.subr.bf16.mxu0 0
    %1272 = vmatpush1.bf16.msra.mxu0 0
    %1273 = vmatprep.subr.bf16.mxu0 0
    %1274 = vmatpush1.bf16.msra.mxu0 0
    %1275 = vmatprep.subr.bf16.mxu0 0
    %1276 = vmatpush1.bf16.msra.mxu0 0
    %1277 = vmatprep.subr.bf16.mxu0 0
    %1278 = vmatpush1.bf16.msra.mxu0 0
    %1279 = vmatprep.subr.bf16.mxu0 0
    %1280 = vmatpush1.bf16.msra.mxu0 0
    %1281 = vmatprep.subr.bf16.mxu0 0
    %1282 = vmatpush1.bf16.msra.mxu0 0
    %1283 = vmatprep.subr.bf16.mxu0 0
    %1284 = vmatpush1.bf16.msra.mxu0 0
    %1285 = vmatprep.subr.bf16.mxu0 0
    %1286 = vmatpush1.bf16.msra.mxu0 0
    %1287 = vmatprep.subr.bf16.mxu0 0
    %1288 = vmatpush1.bf16.msra.mxu0 0
    %1289 = vmatprep.mubr.bf16.mxu0 0
    %1290 = vmatmul.mubr.bf16.gmra.mrb[0].mxu0 %v891
    %v1291 = vpop.f32.mrb[0].mxu0
    %v1292 = vadd.f32 0.0, %v1291
    %v1293 = vpop.f32.mrb[0].mxu0
    %v1294 = vpop.f32.mrb[0].mxu0
    %v1295 = vadd.f32 0.0, %v1294
    %v1296 = vpop.f32.mrb[0].mxu0
    %1297 = vmatprep.mubr.bf16.mxu0 0
    %1298 = vmatmul.mubr.bf16.gmra.mrb[0].mxu0 %v894
    %v1299 = vpop.f32.mrb[0].mxu0
    %v1300 = vadd.f32 0.0, %v1299
    %v1301 = vpop.f32.mrb[0].mxu0
    %v1302 = vpop.f32.mrb[0].mxu0
    %v1303 = vadd.f32 0.0, %v1302
    %v1304 = vpop.f32.mrb[0].mxu0
    %1305 = vmatprep.mubr.bf16.mxu0 0
    %1306 = vmatmul.mubr.bf16.gmra.mrb[0].mxu0 %v897
    %v1307 = vpop.f32.mrb[0].mxu0
    %v1308 = vadd.f32 0.0, %v1307
    %v1309 = vpop.f32.mrb[0].mxu0
    %v1310 = vpop.f32.mrb[0].mxu0
    %v1311 = vadd.f32 0.0, %v1310
    %v1312 = vpop.f32.mrb[0].mxu0
    %1313 = vmatprep.mubr.bf16.mxu0 0
    %1314 = vmatmul.mubr.bf16.gmra.mrb[0].mxu0 %v900
    %v1315 = vpop.f32.mrb[0].mxu0
    %v1316 = vadd.f32 0.0, %v1315
    %v1317 = vpop.f32.mrb[0].mxu0
    %v1318 = vpop.f32.mrb[0].mxu0
    %v1319 = vadd.f32 0.0, %v1318
    %v1320 = vpop.f32.mrb[0].mxu0
    %1321 = vmatprep.mubr.bf16.mxu0 0
    %1322 = vmatmul.mubr.bf16.gmra.mrb[0].mxu0 %v903
    %v1323 = vpop.f32.mrb[0].mxu0
    %v1324 = vadd.f32 0.0, %v1323
    %v1325 = vpop.f32.mrb[0].mxu0
    %v1326 = vpop.f32.mrb[0].mxu0
    %v1327 = vadd.f32 0.0, %v1326
    %v1328 = vpop.f32.mrb[0].mxu0
    %1329 = vmatprep.mubr.bf16.mxu0 0
    %1330 = vmatmul.mubr.bf16.gmra.mrb[0].mxu0 %v906
    %v1331 = vpop.f32.mrb[0].mxu0
    %v1332 = vadd.f32 0.0, %v1331
    %v1333 = vpop.f32.mrb[0].mxu0
    %v1334 = vpop.f32.mrb[0].mxu0
    %v1335 = vadd.f32 0.0, %v1334
    %v1336 = vpop.f32.mrb[0].mxu0
    %1337 = vmatprep.mubr.bf16.mxu0 0
    %1338 = vmatmul.mubr.bf16.gmra.mrb[0].mxu0 %v909
    %v1339 = vpop.f32.mrb[0].mxu0
    %v1340 = vadd.f32 0.0, %v1339
    %v1341 = vpop.f32.mrb[0].mxu0
    %v1342 = vpop.f32.mrb[0].mxu0
    %v1343 = vadd.f32 0.0, %v1342
    %v1344 = vpop.f32.mrb[0].mxu0
    %1345 = vmatprep.mubr.bf16.mxu0 0
    %1346 = vmatmul.mubr.bf16.gmra.mrb[0].mxu0 %v912
    %v1347 = vpop.f32.mrb[0].mxu0
    %v1348 = vadd.f32 0.0, %v1347
    %v1349 = vpop.f32.mrb[0].mxu0
    %v1350 = vpop.f32.mrb[0].mxu0
    %v1351 = vadd.f32 0.0, %v1350
    %v1352 = vpop.f32.mrb[0].mxu0
    %1353 = vmatprep.mubr.bf16.mxu0 0
    %1354 = vmatmul.mubr.bf16.gmra.mrb[0].mxu0 %v915
    %v1355 = vpop.f32.mrb[0].mxu0
    %v1356 = vadd.f32 0.0, %v1355
    %v1357 = vpop.f32.mrb[0].mxu0
    %v1358 = vpop.f32.mrb[0].mxu0
    %v1359 = vadd.f32 0.0, %v1358
    %v1360 = vpop.f32.mrb[0].mxu0
    %1361 = vmatprep.mubr.bf16.mxu0 0
    %1362 = vmatmul.mubr.bf16.gmra.mrb[0].mxu0 %v918
    %v1363 = vpop.f32.mrb[0].mxu0
    %v1364 = vadd.f32 0.0, %v1363
    %v1365 = vpop.f32.mrb[0].mxu0
    %v1366 = vpop.f32.mrb[0].mxu0
    %v1367 = vadd.f32 0.0, %v1366
    %v1368 = vpop.f32.mrb[0].mxu0
    %1369 = vmatprep.mubr.bf16.mxu0 0
    %1370 = vmatmul.mubr.bf16.gmra.mrb[0].mxu0 %v921
    %v1371 = vpop.f32.mrb[0].mxu0
    %v1372 = vadd.f32 0.0, %v1371
    %v1373 = vpop.f32.mrb[0].mxu0
    %v1374 = vpop.f32.mrb[0].mxu0
    %v1375 = vadd.f32 0.0, %v1374
    %v1376 = vpop.f32.mrb[0].mxu0
    %1377 = vmatprep.mubr.bf16.mxu0 0
    %1378 = vmatmul.mubr.bf16.gmra.mrb[0].mxu0 %v924
    %v1379 = vpop.f32.mrb[0].mxu0
    %v1380 = vadd.f32 0.0, %v1379
    %v1381 = vpop.f32.mrb[0].mxu0
    %v1382 = vpop.f32.mrb[0].mxu0
    %v1383 = vadd.f32 0.0, %v1382
    %v1384 = vpop.f32.mrb[0].mxu0
    %1385 = vmatprep.mubr.bf16.mxu0 0
    %1386 = vmatmul.mubr.bf16.gmra.mrb[0].mxu0 %v927
    %v1387 = vpop.f32.mrb[0].mxu0
    %v1388 = vadd.f32 0.0, %v1387
    %v1389 = vpop.f32.mrb[0].mxu0
    %v1390 = vpop.f32.mrb[0].mxu0
    %v1391 = vadd.f32 0.0, %v1390
    %v1392 = vpop.f32.mrb[0].mxu0
    %1393 = vmatprep.mubr.bf16.mxu0 0
    %1394 = vmatmul.mubr.bf16.gmra.mrb[0].mxu0 %v930
    %v1395 = vpop.f32.mrb[0].mxu0
    %v1396 = vadd.f32 0.0, %v1395
    %v1397 = vpop.f32.mrb[0].mxu0
    %v1398 = vpop.f32.mrb[0].mxu0
    %v1399 = vadd.f32 0.0, %v1398
    %v1400 = vpop.f32.mrb[0].mxu0
    %1401 = vmatprep.mubr.bf16.mxu0 0
    %1402 = vmatmul.mubr.bf16.gmra.mrb[0].mxu0 %v933
    %v1403 = vpop.f32.mrb[0].mxu0
    %v1404 = vadd.f32 0.0, %v1403
    %v1405 = vpop.f32.mrb[0].mxu0
    %v1406 = vpop.f32.mrb[0].mxu0
    %v1407 = vadd.f32 0.0, %v1406
    %v1408 = vpop.f32.mrb[0].mxu0
    %1409 = vmatprep.mubr.bf16.mxu0 0
    %1410 = vmatmul.mubr.bf16.gmra.mrb[0].mxu0 %v936
    %v1411 = vpop.f32.mrb[0].mxu0
    %v1412 = vadd.f32 0.0, %v1411
    %v1413 = vpop.f32.mrb[0].mxu0
    %v1414 = vpop.f32.mrb[0].mxu0
    %v1415 = vadd.f32 0.0, %v1414
    %v1416 = vpop.f32.mrb[0].mxu0
    %1417 = vmatprep.mubr.bf16.mxu0 0
    %1418 = vmatmul.mubr.bf16.gmra.mrb[0].mxu0 %v939
    %v1419 = vpop.f32.mrb[0].mxu0
    %v1420 = vadd.f32 0.0, %v1419
    %v1421 = vpop.f32.mrb[0].mxu0
    %v1422 = vpop.f32.mrb[0].mxu0
    %v1423 = vadd.f32 0.0, %v1422
    %v1424 = vpop.f32.mrb[0].mxu0
    %1425 = vmatprep.mubr.bf16.mxu0 0
    %1426 = vmatmul.mubr.bf16.gmra.mrb[0].mxu0 %v942
    %v1427 = vpop.f32.mrb[0].mxu0
    %v1428 = vadd.f32 0.0, %v1427
    %v1429 = vpop.f32.mrb[0].mxu0
    %v1430 = vpop.f32.mrb[0].mxu0
    %v1431 = vadd.f32 0.0, %v1430
    %v1432 = vpop.f32.mrb[0].mxu0
    %1433 = vmatprep.mubr.bf16.mxu0 0
    %1434 = vmatmul.mubr.bf16.gmra.mrb[0].mxu0 %v945
    %v1435 = vpop.f32.mrb[0].mxu0
    %v1436 = vadd.f32 0.0, %v1435
    %v1437 = vpop.f32.mrb[0].mxu0
    %v1438 = vpop.f32.mrb[0].mxu0
    %v1439 = vadd.f32 0.0, %v1438
    %v1440 = vpop.f32.mrb[0].mxu0
    %1441 = vmatprep.mubr.bf16.mxu0 0
    %1442 = vmatmul.mubr.bf16.gmra.mrb[0].mxu0 %v948
    %v1443 = vpop.f32.mrb[0].mxu0
    %v1444 = vadd.f32 0.0, %v1443
    %v1445 = vpop.f32.mrb[0].mxu0
    %v1446 = vpop.f32.mrb[0].mxu0
    %v1447 = vadd.f32 0.0, %v1446
    %v1448 = vpop.f32.mrb[0].mxu0
    %1449 = vmatprep.mubr.bf16.mxu0 0
    %1450 = vmatmul.mubr.bf16.gmra.mrb[0].mxu0 %v951
    %v1451 = vpop.f32.mrb[0].mxu0
    %v1452 = vadd.f32 0.0, %v1451
    %v1453 = vpop.f32.mrb[0].mxu0
    %v1454 = vpop.f32.mrb[0].mxu0
    %v1455 = vadd.f32 0.0, %v1454
    %v1456 = vpop.f32.mrb[0].mxu0
    %1457 = vmatprep.mubr.bf16.mxu0 0
    %1458 = vmatmul.mubr.bf16.gmra.mrb[0].mxu0 %v954
    %v1459 = vpop.f32.mrb[0].mxu0
    %v1460 = vadd.f32 0.0, %v1459
    %v1461 = vpop.f32.mrb[0].mxu0
    %v1462 = vpop.f32.mrb[0].mxu0
    %v1463 = vadd.f32 0.0, %v1462
    %v1464 = vpop.f32.mrb[0].mxu0
    %1465 = vmatprep.mubr.bf16.mxu0 0
    %1466 = vmatmul.mubr.bf16.gmra.mrb[0].mxu0 %v957
    %v1467 = vpop.f32.mrb[0].mxu0
    %v1468 = vadd.f32 0.0, %v1467
    %v1469 = vpop.f32.mrb[0].mxu0
    %v1470 = vpop.f32.mrb[0].mxu0
    %v1471 = vadd.f32 0.0, %v1470
    %v1472 = vpop.f32.mrb[0].mxu0
    %1473 = vmatprep.mubr.bf16.mxu0 0
    %1474 = vmatmul.mubr.bf16.gmra.mrb[0].mxu0 %v960
    %v1475 = vpop.f32.mrb[0].mxu0
    %v1476 = vadd.f32 0.0, %v1475
    %v1477 = vpop.f32.mrb[0].mxu0
    %v1478 = vpop.f32.mrb[0].mxu0
    %v1479 = vadd.f32 0.0, %v1478
    %v1480 = vpop.f32.mrb[0].mxu0
    %1481 = vmatprep.mubr.bf16.mxu0 0
    %1482 = vmatmul.mubr.bf16.gmra.mrb[0].mxu0 %v963
    %v1483 = vpop.f32.mrb[0].mxu0
    %v1484 = vadd.f32 0.0, %v1483
    %v1485 = vpop.f32.mrb[0].mxu0
    %v1486 = vpop.f32.mrb[0].mxu0
    %v1487 = vadd.f32 0.0, %v1486
    %v1488 = vpop.f32.mrb[0].mxu0
    %1489 = vmatprep.mubr.bf16.mxu0 0
    %1490 = vmatmul.mubr.bf16.gmra.mrb[0].mxu0 %v966
    %v1491 = vpop.f32.mrb[0].mxu0
    %v1492 = vadd.f32 0.0, %v1491
    %v1493 = vpop.f32.mrb[0].mxu0
    %v1494 = vpop.f32.mrb[0].mxu0
    %v1495 = vadd.f32 0.0, %v1494
    %v1496 = vpop.f32.mrb[0].mxu0
    %1497 = vmatprep.mubr.bf16.mxu0 0
    %1498 = vmatmul.mubr.bf16.gmra.mrb[0].mxu0 %v969
    %v1499 = vpop.f32.mrb[0].mxu0
    %v1500 = vadd.f32 0.0, %v1499
    %v1501 = vpop.f32.mrb[0].mxu0
    %v1502 = vpop.f32.mrb[0].mxu0
    %v1503 = vadd.f32 0.0, %v1502
    %v1504 = vpop.f32.mrb[0].mxu0
    %1505 = vmatprep.mubr.bf16.mxu0 0
    %1506 = vmatmul.mubr.bf16.gmra.mrb[0].mxu0 %v972
    %v1507 = vpop.f32.mrb[0].mxu0
    %v1508 = vadd.f32 0.0, %v1507
    %v1509 = vpop.f32.mrb[0].mxu0
    %v1510 = vpop.f32.mrb[0].mxu0
    %v1511 = vadd.f32 0.0, %v1510
    %v1512 = vpop.f32.mrb[0].mxu0
    %1513 = vmatprep.mubr.bf16.mxu0 0
    %1514 = vmatmul.mubr.bf16.gmra.mrb[0].mxu0 %v975
    %v1515 = vpop.f32.mrb[0].mxu0
    %v1516 = vadd.f32 0.0, %v1515
    %v1517 = vpop.f32.mrb[0].mxu0
    %v1518 = vpop.f32.mrb[0].mxu0
    %v1519 = vadd.f32 0.0, %v1518
    %v1520 = vpop.f32.mrb[0].mxu0
    %1521 = vmatprep.mubr.bf16.mxu0 0
    %1522 = vmatmul.mubr.bf16.gmra.mrb[0].mxu0 %v978
    %v1523 = vpop.f32.mrb[0].mxu0
    %v1524 = vadd.f32 0.0, %v1523
    %v1525 = vpop.f32.mrb[0].mxu0
    %v1526 = vpop.f32.mrb[0].mxu0
    %v1527 = vadd.f32 0.0, %v1526
    %v1528 = vpop.f32.mrb[0].mxu0
    %1529 = vmatprep.mubr.bf16.mxu0 0
    %1530 = vmatmul.mubr.bf16.gmra.mrb[0].mxu0 %v981
    %v1531 = vpop.f32.mrb[0].mxu0
    %v1532 = vadd.f32 0.0, %v1531
    %v1533 = vpop.f32.mrb[0].mxu0
    %v1534 = vpop.f32.mrb[0].mxu0
    %v1535 = vadd.f32 0.0, %v1534
    %v1536 = vpop.f32.mrb[0].mxu0
    %1537 = vmatprep.mubr.bf16.mxu0 0
    %1538 = vmatmul.mubr.bf16.gmra.mrb[0].mxu0 %v984
    %v1539 = vpop.f32.mrb[0].mxu0
    %v1540 = vadd.f32 0.0, %v1539
    %v1541 = vpop.f32.mrb[0].mxu0
    %v1542 = vpop.f32.mrb[0].mxu0
    %v1543 = vadd.f32 0.0, %v1542
    %v1544 = vpop.f32.mrb[0].mxu0
    %1545 = vmatprep.mubr.bf16.mxu0 0
    %1546 = vmatmul.mubr.bf16.gmra.mrb[0].mxu0 %v987
    %v1547 = vpop.f32.mrb[0].mxu0
    %v1548 = vadd.f32 0.0, %v1547
    %v1549 = vpop.f32.mrb[0].mxu0
    %v1550 = vpop.f32.mrb[0].mxu0
    %v1551 = vadd.f32 0.0, %v1550
    %v1552 = vpop.f32.mrb[0].mxu0
    %1553 = vmatprep.mubr.bf16.mxu0 0
    %1554 = vmatmul.mubr.bf16.gmra.mrb[0].mxu0 %v990
    %v1555 = vpop.f32.mrb[0].mxu0
    %v1556 = vadd.f32 0.0, %v1555
    %v1557 = vpop.f32.mrb[0].mxu0
    %v1558 = vpop.f32.mrb[0].mxu0
    %v1559 = vadd.f32 0.0, %v1558
    %v1560 = vpop.f32.mrb[0].mxu0
    %1561 = vmatprep.mubr.bf16.mxu0 0
    %1562 = vmatmul.mubr.bf16.gmra.mrb[0].mxu0 %v993
    %v1563 = vpop.f32.mrb[0].mxu0
    %v1564 = vadd.f32 0.0, %v1563
    %v1565 = vpop.f32.mrb[0].mxu0
    %v1566 = vpop.f32.mrb[0].mxu0
    %v1567 = vadd.f32 0.0, %v1566
    %v1568 = vpop.f32.mrb[0].mxu0
    %1569 = vmatprep.mubr.bf16.mxu0 0
    %1570 = vmatmul.mubr.bf16.gmra.mrb[0].mxu0 %v996
    %v1571 = vpop.f32.mrb[0].mxu0
    %v1572 = vadd.f32 0.0, %v1571
    %v1573 = vpop.f32.mrb[0].mxu0
    %v1574 = vpop.f32.mrb[0].mxu0
    %v1575 = vadd.f32 0.0, %v1574
    %v1576 = vpop.f32.mrb[0].mxu0
    %1577 = vmatprep.mubr.bf16.mxu0 0
    %1578 = vmatmul.mubr.bf16.gmra.mrb[0].mxu0 %v999
    %v1579 = vpop.f32.mrb[0].mxu0
    %v1580 = vadd.f32 0.0, %v1579
    %v1581 = vpop.f32.mrb[0].mxu0
    %v1582 = vpop.f32.mrb[0].mxu0
    %v1583 = vadd.f32 0.0, %v1582
    %v1584 = vpop.f32.mrb[0].mxu0
    %1585 = vmatprep.mubr.bf16.mxu0 0
    %1586 = vmatmul.mubr.bf16.gmra.mrb[0].mxu0 %v1002
    %v1587 = vpop.f32.mrb[0].mxu0
    %v1588 = vadd.f32 0.0, %v1587
    %v1589 = vpop.f32.mrb[0].mxu0
    %v1590 = vpop.f32.mrb[0].mxu0
    %v1591 = vadd.f32 0.0, %v1590
    %v1592 = vpop.f32.mrb[0].mxu0
    %1593 = vmatprep.mubr.bf16.mxu0 0
    %1594 = vmatmul.mubr.bf16.gmra.mrb[0].mxu0 %v1005
    %v1595 = vpop.f32.mrb[0].mxu0
    %v1596 = vadd.f32 0.0, %v1595
    %v1597 = vpop.f32.mrb[0].mxu0
    %v1598 = vpop.f32.mrb[0].mxu0
    %v1599 = vadd.f32 0.0, %v1598
    %v1600 = vpop.f32.mrb[0].mxu0
    %1601 = vmatprep.mubr.bf16.mxu0 0
    %1602 = vmatmul.mubr.bf16.gmra.mrb[0].mxu0 %v1008
    %v1603 = vpop.f32.mrb[0].mxu0
    %v1604 = vadd.f32 0.0, %v1603
    %v1605 = vpop.f32.mrb[0].mxu0
    %v1606 = vpop.f32.mrb[0].mxu0
    %v1607 = vadd.f32 0.0, %v1606
    %v1608 = vpop.f32.mrb[0].mxu0
    %1609 = vmatprep.mubr.bf16.mxu0 0
    %1610 = vmatmul.mubr.bf16.gmra.mrb[0].mxu0 %v1011
    %v1611 = vpop.f32.mrb[0].mxu0
    %v1612 = vadd.f32 0.0, %v1611
    %v1613 = vpop.f32.mrb[0].mxu0
    %v1614 = vpop.f32.mrb[0].mxu0
    %v1615 = vadd.f32 0.0, %v1614
    %v1616 = vpop.f32.mrb[0].mxu0
    %1617 = vmatprep.mubr.bf16.mxu0 0
    %1618 = vmatmul.mubr.bf16.gmra.mrb[0].mxu0 %v1014
    %v1619 = vpop.f32.mrb[0].mxu0
    %v1620 = vadd.f32 0.0, %v1619
    %v1621 = vpop.f32.mrb[0].mxu0
    %v1622 = vpop.f32.mrb[0].mxu0
    %v1623 = vadd.f32 0.0, %v1622
    %v1624 = vpop.f32.mrb[0].mxu0
    %1625 = vmatprep.mubr.bf16.mxu0 0
    %1626 = vmatmul.mubr.bf16.gmra.mrb[0].mxu0 %v1017
    %v1627 = vpop.f32.mrb[0].mxu0
    %v1628 = vadd.f32 0.0, %v1627
    %v1629 = vpop.f32.mrb[0].mxu0
    %v1630 = vpop.f32.mrb[0].mxu0
    %v1631 = vadd.f32 0.0, %v1630
    %v1632 = vpop.f32.mrb[0].mxu0
    %1633 = vmatprep.mubr.bf16.mxu0 0
    %1634 = vmatmul.mubr.bf16.gmra.mrb[0].mxu0 %v1020
    %v1635 = vpop.f32.mrb[0].mxu0
    %v1636 = vadd.f32 0.0, %v1635
    %v1637 = vpop.f32.mrb[0].mxu0
    %v1638 = vpop.f32.mrb[0].mxu0
    %v1639 = vadd.f32 0.0, %v1638
    %v1640 = vpop.f32.mrb[0].mxu0
    %1641 = vmatprep.mubr.bf16.mxu0 0
    %1642 = vmatmul.mubr.bf16.gmra.mrb[0].mxu0 %v1023
    %v1643 = vpop.f32.mrb[0].mxu0
    %v1644 = vadd.f32 0.0, %v1643
    %v1645 = vpop.f32.mrb[0].mxu0
    %v1646 = vpop.f32.mrb[0].mxu0
    %v1647 = vadd.f32 0.0, %v1646
    %v1648 = vpop.f32.mrb[0].mxu0
    %1649 = vmatprep.mubr.bf16.mxu0 0
    %1650 = vmatmul.mubr.bf16.gmra.mrb[0].mxu0 %v1026
    %v1651 = vpop.f32.mrb[0].mxu0
    %v1652 = vadd.f32 0.0, %v1651
    %v1653 = vpop.f32.mrb[0].mxu0
    %v1654 = vpop.f32.mrb[0].mxu0
    %v1655 = vadd.f32 0.0, %v1654
    %v1656 = vpop.f32.mrb[0].mxu0
    %1657 = vmatprep.mubr.bf16.mxu0 0
    %1658 = vmatmul.mubr.bf16.gmra.mrb[0].mxu0 %v1029
    %v1659 = vpop.f32.mrb[0].mxu0
    %v1660 = vadd.f32 0.0, %v1659
    %v1661 = vpop.f32.mrb[0].mxu0
    %v1662 = vpop.f32.mrb[0].mxu0
    %v1663 = vadd.f32 0.0, %v1662
    %v1664 = vpop.f32.mrb[0].mxu0
    %1665 = vmatprep.mubr.bf16.mxu0 0
    %1666 = vmatmul.mubr.bf16.gmra.mrb[0].mxu0 %v1032
    %v1667 = vpop.f32.mrb[0].mxu0
    %v1668 = vadd.f32 0.0, %v1667
    %v1669 = vpop.f32.mrb[0].mxu0
    %v1670 = vpop.f32.mrb[0].mxu0
    %v1671 = vadd.f32 0.0, %v1670
    %v1672 = vpop.f32.mrb[0].mxu0
    %1673 = vmatprep.mubr.bf16.mxu0 0
    %1674 = vmatmul.mubr.bf16.gmra.mrb[0].mxu0 %v1035
    %v1675 = vpop.f32.mrb[0].mxu0
    %v1676 = vadd.f32 0.0, %v1675
    %v1677 = vpop.f32.mrb[0].mxu0
    %v1678 = vpop.f32.mrb[0].mxu0
    %v1679 = vadd.f32 0.0, %v1678
    %v1680 = vpop.f32.mrb[0].mxu0
    %1681 = vmatprep.mubr.bf16.mxu0 0
    %1682 = vmatmul.mubr.bf16.gmra.mrb[0].mxu0 %v1038
    %v1683 = vpop.f32.mrb[0].mxu0
    %v1684 = vadd.f32 0.0, %v1683
    %v1685 = vpop.f32.mrb[0].mxu0
    %v1686 = vpop.f32.mrb[0].mxu0
    %v1687 = vadd.f32 0.0, %v1686
    %v1688 = vpop.f32.mrb[0].mxu0
    %1689 = vmatprep.mubr.bf16.mxu0 0
    %1690 = vmatmul.mubr.bf16.gmra.mrb[0].mxu0 %v1041
    %v1691 = vpop.f32.mrb[0].mxu0
    %v1692 = vadd.f32 0.0, %v1691
    %v1693 = vpop.f32.mrb[0].mxu0
    %v1694 = vpop.f32.mrb[0].mxu0
    %v1695 = vadd.f32 0.0, %v1694
    %v1696 = vpop.f32.mrb[0].mxu0
    %1697 = vmatprep.mubr.bf16.mxu0 0
    %1698 = vmatmul.mubr.bf16.gmra.mrb[0].mxu0 %v1044
    %v1699 = vpop.f32.mrb[0].mxu0
    %v1700 = vadd.f32 0.0, %v1699
    %v1701 = vpop.f32.mrb[0].mxu0
    %v1702 = vpop.f32.mrb[0].mxu0
    %v1703 = vadd.f32 0.0, %v1702
    %v1704 = vpop.f32.mrb[0].mxu0
    %1705 = vmatprep.mubr.bf16.mxu0 0
    %1706 = vmatmul.mubr.bf16.gmra.mrb[0].mxu0 %v1047
    %v1707 = vpop.f32.mrb[0].mxu0
    %v1708 = vadd.f32 0.0, %v1707
    %v1709 = vpop.f32.mrb[0].mxu0
    %v1710 = vpop.f32.mrb[0].mxu0
    %v1711 = vadd.f32 0.0, %v1710
    %v1712 = vpop.f32.mrb[0].mxu0
    %1713 = vmatprep.mubr.bf16.mxu0 0
    %1714 = vmatmul.mubr.bf16.gmra.mrb[0].mxu0 %v1050
    %v1715 = vpop.f32.mrb[0].mxu0
    %v1716 = vadd.f32 0.0, %v1715
    %v1717 = vpop.f32.mrb[0].mxu0
    %v1718 = vpop.f32.mrb[0].mxu0
    %v1719 = vadd.f32 0.0, %v1718
    %v1720 = vpop.f32.mrb[0].mxu0
    %1721 = vmatprep.mubr.bf16.mxu0 0
    %1722 = vmatmul.mubr.bf16.gmra.mrb[0].mxu0 %v1053
    %v1723 = vpop.f32.mrb[0].mxu0
    %v1724 = vadd.f32 0.0, %v1723
    %v1725 = vpop.f32.mrb[0].mxu0
    %v1726 = vpop.f32.mrb[0].mxu0
    %v1727 = vadd.f32 0.0, %v1726
    %v1728 = vpop.f32.mrb[0].mxu0
    %1729 = vmatprep.mubr.bf16.mxu0 0
    %1730 = vmatmul.mubr.bf16.gmra.mrb[0].mxu0 %v1056
    %v1731 = vpop.f32.mrb[0].mxu0
    %v1732 = vadd.f32 0.0, %v1731
    %v1733 = vpop.f32.mrb[0].mxu0
    %v1734 = vpop.f32.mrb[0].mxu0
    %v1735 = vadd.f32 0.0, %v1734
    %v1736 = vpop.f32.mrb[0].mxu0
    %1737 = vmatprep.mubr.bf16.mxu0 0
    %1738 = vmatmul.mubr.bf16.gmra.mrb[0].mxu0 %v1059
    %v1739 = vpop.f32.mrb[0].mxu0
    %v1740 = vadd.f32 0.0, %v1739
    %v1741 = vpop.f32.mrb[0].mxu0
    %v1742 = vpop.f32.mrb[0].mxu0
    %v1743 = vadd.f32 0.0, %v1742
    %v1744 = vpop.f32.mrb[0].mxu0
    %1745 = vmatprep.mubr.bf16.mxu0 0
    %1746 = vmatmul.mubr.bf16.gmra.mrb[0].mxu0 %v1062
    %v1747 = vpop.f32.mrb[0].mxu0
    %v1748 = vadd.f32 0.0, %v1747
    %v1749 = vpop.f32.mrb[0].mxu0
    %v1750 = vpop.f32.mrb[0].mxu0
    %v1751 = vadd.f32 0.0, %v1750
    %v1752 = vpop.f32.mrb[0].mxu0
    %1753 = vmatprep.mubr.bf16.mxu0 0
    %1754 = vmatmul.mubr.bf16.gmra.mrb[0].mxu0 %v1065
    %v1755 = vpop.f32.mrb[0].mxu0
    %v1756 = vadd.f32 0.0, %v1755
    %v1757 = vpop.f32.mrb[0].mxu0
    %v1758 = vpop.f32.mrb[0].mxu0
    %v1759 = vadd.f32 0.0, %v1758
    %v1760 = vpop.f32.mrb[0].mxu0
    %1761 = vmatprep.mubr.bf16.mxu0 0
    %1762 = vmatmul.mubr.bf16.gmra.mrb[0].mxu0 %v1068
    %v1763 = vpop.f32.mrb[0].mxu0
    %v1764 = vadd.f32 0.0, %v1763
    %v1765 = vpop.f32.mrb[0].mxu0
    %v1766 = vpop.f32.mrb[0].mxu0
    %v1767 = vadd.f32 0.0, %v1766
    %v1768 = vpop.f32.mrb[0].mxu0
    %1769 = vmatprep.mubr.bf16.mxu0 0
    %1770 = vmatmul.mubr.bf16.gmra.mrb[0].mxu0 %v1071
    %v1771 = vpop.f32.mrb[0].mxu0
    %v1772 = vadd.f32 0.0, %v1771
    %v1773 = vpop.f32.mrb[0].mxu0
    %v1774 = vpop.f32.mrb[0].mxu0
    %v1775 = vadd.f32 0.0, %v1774
    %v1776 = vpop.f32.mrb[0].mxu0
    %1777 = vmatprep.mubr.bf16.mxu0 0
    %1778 = vmatmul.mubr.bf16.gmra.mrb[0].mxu0 %v1074
    %v1779 = vpop.f32.mrb[0].mxu0
    %v1780 = vadd.f32 0.0, %v1779
    %v1781 = vpop.f32.mrb[0].mxu0
    %v1782 = vpop.f32.mrb[0].mxu0
    %v1783 = vadd.f32 0.0, %v1782
    %v1784 = vpop.f32.mrb[0].mxu0
    %1785 = vmatprep.mubr.bf16.mxu0 0
    %1786 = vmatmul.mubr.bf16.gmra.mrb[0].mxu0 %v1077
    %v1787 = vpop.f32.mrb[0].mxu0
    %v1788 = vadd.f32 0.0, %v1787
    %v1789 = vpop.f32.mrb[0].mxu0
    %v1790 = vpop.f32.mrb[0].mxu0
    %v1791 = vadd.f32 0.0, %v1790
    %v1792 = vpop.f32.mrb[0].mxu0
    %1793 = vmatprep.mubr.bf16.mxu0 0
    %1794 = vmatmul.mubr.bf16.gmra.mrb[0].mxu0 %v1080
    %v1795 = vpop.f32.mrb[0].mxu0
    %v1796 = vadd.f32 0.0, %v1795
    %v1797 = vpop.f32.mrb[0].mxu0
    %v1798 = vpop.f32.mrb[0].mxu0
    %v1799 = vadd.f32 0.0, %v1798
    %v1800 = vpop.f32.mrb[0].mxu0
    %1801 = vmatprep.mubr.bf16.mxu0 0
    %1802 = vmatmul.mubr.bf16.gmra.mrb[0].mxu0 %v1083
    %v1803 = vpop.f32.mrb[0].mxu0
    %v1804 = vadd.f32 0.0, %v1803
    %v1805 = vpop.f32.mrb[0].mxu0
    %v1806 = vpop.f32.mrb[0].mxu0
    %v1807 = vadd.f32 0.0, %v1806
    %v1808 = vpop.f32.mrb[0].mxu0
    %1809 = vmatprep.mubr.bf16.mxu0 0
    %1810 = vmatmul.mubr.bf16.gmra.mrb[0].mxu0 %v1086
    %v1811 = vpop.f32.mrb[0].mxu0
    %v1812 = vadd.f32 0.0, %v1811
    %v1813 = vpop.f32.mrb[0].mxu0
    %v1814 = vpop.f32.mrb[0].mxu0
    %v1815 = vadd.f32 0.0, %v1814
    %v1816 = vpop.f32.mrb[0].mxu0
    %1817 = vmatprep.mubr.bf16.mxu0 0
    %1818 = vmatmul.mubr.bf16.gmra.mrb[0].mxu0 %v1089
    %v1819 = vpop.f32.mrb[0].mxu0
    %v1820 = vadd.f32 0.0, %v1819
    %v1821 = vpop.f32.mrb[0].mxu0
    %v1822 = vpop.f32.mrb[0].mxu0
    %v1823 = vadd.f32 0.0, %v1822
    %v1824 = vpop.f32.mrb[0].mxu0
    %1825 = vmatprep.mubr.bf16.mxu0 0
    %1826 = vmatmul.mubr.bf16.gmra.mrb[0].mxu0 %v1092
    %v1827 = vpop.f32.mrb[0].mxu0
    %v1828 = vadd.f32 0.0, %v1827
    %v1829 = vpop.f32.mrb[0].mxu0
    %v1830 = vpop.f32.mrb[0].mxu0
    %v1831 = vadd.f32 0.0, %v1830
    %v1832 = vpop.f32.mrb[0].mxu0
    %1833 = vmatprep.mubr.bf16.mxu0 0
    %1834 = vmatmul.mubr.bf16.gmra.mrb[0].mxu0 %v1095
    %v1835 = vpop.f32.mrb[0].mxu0
    %v1836 = vadd.f32 0.0, %v1835
    %v1837 = vpop.f32.mrb[0].mxu0
    %v1838 = vpop.f32.mrb[0].mxu0
    %v1839 = vadd.f32 0.0, %v1838
    %v1840 = vpop.f32.mrb[0].mxu0
    %1841 = vmatprep.mubr.bf16.mxu0 0
    %1842 = vmatmul.mubr.bf16.gmra.mrb[0].mxu0 %v1098
    %v1843 = vpop.f32.mrb[0].mxu0
    %v1844 = vadd.f32 0.0, %v1843
    %v1845 = vpop.f32.mrb[0].mxu0
    %v1846 = vpop.f32.mrb[0].mxu0
    %v1847 = vadd.f32 0.0, %v1846
    %v1848 = vpop.f32.mrb[0].mxu0
    %1849 = vmatprep.mubr.bf16.mxu0 0
    %1850 = vmatmul.mubr.bf16.gmra.mrb[0].mxu0 %v1101
    %v1851 = vpop.f32.mrb[0].mxu0
    %v1852 = vadd.f32 0.0, %v1851
    %v1853 = vpop.f32.mrb[0].mxu0
    %v1854 = vpop.f32.mrb[0].mxu0
    %v1855 = vadd.f32 0.0, %v1854
    %v1856 = vpop.f32.mrb[0].mxu0
    %1857 = vmatprep.mubr.bf16.mxu0 0
    %1858 = vmatmul.mubr.bf16.gmra.mrb[0].mxu0 %v1104
    %v1859 = vpop.f32.mrb[0].mxu0
    %v1860 = vadd.f32 0.0, %v1859
    %v1861 = vpop.f32.mrb[0].mxu0
    %v1862 = vpop.f32.mrb[0].mxu0
    %v1863 = vadd.f32 0.0, %v1862
    %v1864 = vpop.f32.mrb[0].mxu0
    %1865 = vmatprep.mubr.bf16.mxu0 0
    %1866 = vmatmul.mubr.bf16.gmra.mrb[0].mxu0 %v1107
    %v1867 = vpop.f32.mrb[0].mxu0
    %v1868 = vadd.f32 0.0, %v1867
    %v1869 = vpop.f32.mrb[0].mxu0
    %v1870 = vpop.f32.mrb[0].mxu0
    %v1871 = vadd.f32 0.0, %v1870
    %v1872 = vpop.f32.mrb[0].mxu0
    %1873 = vmatprep.mubr.bf16.mxu0 0
    %1874 = vmatmul.mubr.bf16.gmra.mrb[0].mxu0 %v1110
    %v1875 = vpop.f32.mrb[0].mxu0
    %v1876 = vadd.f32 0.0, %v1875
    %v1877 = vpop.f32.mrb[0].mxu0
    %v1878 = vpop.f32.mrb[0].mxu0
    %v1879 = vadd.f32 0.0, %v1878
    %v1880 = vpop.f32.mrb[0].mxu0
    %1881 = vmatprep.mubr.bf16.mxu0 0
    %1882 = vmatmul.mubr.bf16.gmra.mrb[0].mxu0 %v1113
    %v1883 = vpop.f32.mrb[0].mxu0
    %v1884 = vadd.f32 0.0, %v1883
    %v1885 = vpop.f32.mrb[0].mxu0
    %v1886 = vpop.f32.mrb[0].mxu0
    %v1887 = vadd.f32 0.0, %v1886
    %v1888 = vpop.f32.mrb[0].mxu0
    %1889 = vmatprep.mubr.bf16.mxu0 0
    %1890 = vmatmul.mubr.bf16.gmra.mrb[0].mxu0 %v1116
    %v1891 = vpop.f32.mrb[0].mxu0
    %v1892 = vadd.f32 0.0, %v1891
    %v1893 = vpop.f32.mrb[0].mxu0
    %v1894 = vpop.f32.mrb[0].mxu0
    %v1895 = vadd.f32 0.0, %v1894
    %v1896 = vpop.f32.mrb[0].mxu0
    %1897 = vmatprep.mubr.bf16.mxu0 0
    %1898 = vmatmul.mubr.bf16.gmra.mrb[0].mxu0 %v1119
    %v1899 = vpop.f32.mrb[0].mxu0
    %v1900 = vadd.f32 0.0, %v1899
    %v1901 = vpop.f32.mrb[0].mxu0
    %v1902 = vpop.f32.mrb[0].mxu0
    %v1903 = vadd.f32 0.0, %v1902
    %v1904 = vpop.f32.mrb[0].mxu0
    %1905 = vmatprep.mubr.bf16.mxu0 0
    %1906 = vmatmul.mubr.bf16.gmra.mrb[0].mxu0 %v1122
    %v1907 = vpop.f32.mrb[0].mxu0
    %v1908 = vadd.f32 0.0, %v1907
    %v1909 = vpop.f32.mrb[0].mxu0
    %v1910 = vpop.f32.mrb[0].mxu0
    %v1911 = vadd.f32 0.0, %v1910
    %v1912 = vpop.f32.mrb[0].mxu0
    %1913 = vmatprep.mubr.bf16.mxu0 0
    %1914 = vmatmul.mubr.bf16.gmra.mrb[0].mxu0 %v1125
    %v1915 = vpop.f32.mrb[0].mxu0
    %v1916 = vadd.f32 0.0, %v1915
    %v1917 = vpop.f32.mrb[0].mxu0
    %v1918 = vpop.f32.mrb[0].mxu0
    %v1919 = vadd.f32 0.0, %v1918
    %v1920 = vpop.f32.mrb[0].mxu0
    %1921 = vmatprep.mubr.bf16.mxu0 0
    %1922 = vmatmul.mubr.bf16.gmra.mrb[0].mxu0 %v1128
    %v1923 = vpop.f32.mrb[0].mxu0
    %v1924 = vadd.f32 0.0, %v1923
    %v1925 = vpop.f32.mrb[0].mxu0
    %v1926 = vpop.f32.mrb[0].mxu0
    %v1927 = vadd.f32 0.0, %v1926
    %v1928 = vpop.f32.mrb[0].mxu0
    %1929 = vmatprep.mubr.bf16.mxu0 0
    %1930 = vmatmul.mubr.bf16.gmra.mrb[0].mxu0 %v1131
    %v1931 = vpop.f32.mrb[0].mxu0
    %v1932 = vadd.f32 0.0, %v1931
    %v1933 = vpop.f32.mrb[0].mxu0
    %v1934 = vpop.f32.mrb[0].mxu0
    %v1935 = vadd.f32 0.0, %v1934
    %v1936 = vpop.f32.mrb[0].mxu0
    %1937 = vmatprep.mubr.bf16.mxu0 0
    %1938 = vmatmul.mubr.bf16.gmra.mrb[0].mxu0 %v1134
    %v1939 = vpop.f32.mrb[0].mxu0
    %v1940 = vadd.f32 0.0, %v1939
    %v1941 = vpop.f32.mrb[0].mxu0
    %v1942 = vpop.f32.mrb[0].mxu0
    %v1943 = vadd.f32 0.0, %v1942
    %v1944 = vpop.f32.mrb[0].mxu0
    %1945 = vmatprep.mubr.bf16.mxu0 0
    %1946 = vmatmul.mubr.bf16.gmra.mrb[0].mxu0 %v1137
    %v1947 = vpop.f32.mrb[0].mxu0
    %v1948 = vadd.f32 0.0, %v1947
    %v1949 = vpop.f32.mrb[0].mxu0
    %v1950 = vpop.f32.mrb[0].mxu0
    %v1951 = vadd.f32 0.0, %v1950
    %v1952 = vpop.f32.mrb[0].mxu0
    %1953 = vmatprep.mubr.bf16.mxu0 0
    %1954 = vmatmul.mubr.bf16.gmra.mrb[0].mxu0 %v1140
    %v1955 = vpop.f32.mrb[0].mxu0
    %v1956 = vadd.f32 0.0, %v1955
    %v1957 = vpop.f32.mrb[0].mxu0
    %v1958 = vpop.f32.mrb[0].mxu0
    %v1959 = vadd.f32 0.0, %v1958
    %v1960 = vpop.f32.mrb[0].mxu0
    %1961 = vmatprep.mubr.bf16.mxu0 0
    %1962 = vmatmul.mubr.bf16.gmra.mrb[0].mxu0 %v1143
    %v1963 = vpop.f32.mrb[0].mxu0
    %v1964 = vadd.f32 0.0, %v1963
    %v1965 = vpop.f32.mrb[0].mxu0
    %v1966 = vpop.f32.mrb[0].mxu0
    %v1967 = vadd.f32 0.0, %v1966
    %v1968 = vpop.f32.mrb[0].mxu0
    %1969 = vmatprep.mubr.bf16.mxu0 0
    %1970 = vmatmul.mubr.bf16.gmra.mrb[0].mxu0 %v1146
    %v1971 = vpop.f32.mrb[0].mxu0
    %v1972 = vadd.f32 0.0, %v1971
    %v1973 = vpop.f32.mrb[0].mxu0
    %v1974 = vpop.f32.mrb[0].mxu0
    %v1975 = vadd.f32 0.0, %v1974
    %v1976 = vpop.f32.mrb[0].mxu0
    %1977 = vmatprep.mubr.bf16.mxu0 0
    %1978 = vmatmul.mubr.bf16.gmra.mrb[0].mxu0 %v1149
    %v1979 = vpop.f32.mrb[0].mxu0
    %v1980 = vadd.f32 0.0, %v1979
    %v1981 = vpop.f32.mrb[0].mxu0
    %v1982 = vpop.f32.mrb[0].mxu0
    %v1983 = vadd.f32 0.0, %v1982
    %v1984 = vpop.f32.mrb[0].mxu0
    %1985 = vmatprep.mubr.bf16.mxu0 0
    %1986 = vmatmul.mubr.bf16.gmra.mrb[0].mxu0 %v1152
    %v1987 = vpop.f32.mrb[0].mxu0
    %v1988 = vadd.f32 0.0, %v1987
    %v1989 = vpop.f32.mrb[0].mxu0
    %v1990 = vpop.f32.mrb[0].mxu0
    %v1991 = vadd.f32 0.0, %v1990
    %v1992 = vpop.f32.mrb[0].mxu0
    %1993 = vmatprep.mubr.bf16.mxu0 0
    %1994 = vmatmul.mubr.bf16.gmra.mrb[0].mxu0 %v1155
    %v1995 = vpop.f32.mrb[0].mxu0
    %v1996 = vadd.f32 0.0, %v1995
    %v1997 = vpop.f32.mrb[0].mxu0
    %v1998 = vpop.f32.mrb[0].mxu0
    %v1999 = vadd.f32 0.0, %v1998
    %v2000 = vpop.f32.mrb[0].mxu0
    %2001 = vmatprep.mubr.bf16.mxu0 0
    %2002 = vmatmul.mubr.bf16.gmra.mrb[0].mxu0 %v1158
    %v2003 = vpop.f32.mrb[0].mxu0
    %v2004 = vadd.f32 0.0, %v2003
    %v2005 = vpop.f32.mrb[0].mxu0
    %v2006 = vpop.f32.mrb[0].mxu0
    %v2007 = vadd.f32 0.0, %v2006
    %v2008 = vpop.f32.mrb[0].mxu0
    %2009 = vmatprep.mubr.bf16.mxu0 0
    %2010 = vmatmul.mubr.bf16.gmra.mrb[0].mxu0 %v1161
    %v2011 = vpop.f32.mrb[0].mxu0
    %v2012 = vadd.f32 0.0, %v2011
    %v2013 = vpop.f32.mrb[0].mxu0
    %v2014 = vpop.f32.mrb[0].mxu0
    %v2015 = vadd.f32 0.0, %v2014
    %v2016 = vpop.f32.mrb[0].mxu0
    %2017 = vmatprep.mubr.bf16.mxu0 0
    %2018 = vmatmul.mubr.bf16.gmra.mrb[0].mxu0 %v1164
    %v2019 = vpop.f32.mrb[0].mxu0
    %v2020 = vadd.f32 0.0, %v2019
    %v2021 = vpop.f32.mrb[0].mxu0
    %v2022 = vpop.f32.mrb[0].mxu0
    %v2023 = vadd.f32 0.0, %v2022
    %v2024 = vpop.f32.mrb[0].mxu0
    %2025 = vmatprep.mubr.bf16.mxu0 0
    %2026 = vmatmul.mubr.bf16.gmra.mrb[0].mxu0 %v1167
    %v2027 = vpop.f32.mrb[0].mxu0
    %v2028 = vadd.f32 0.0, %v2027
    %v2029 = vpop.f32.mrb[0].mxu0
    %v2030 = vpop.f32.mrb[0].mxu0
    %v2031 = vadd.f32 0.0, %v2030
    %v2032 = vpop.f32.mrb[0].mxu0
    %2033 = vmatprep.mubr.bf16.mxu0 0
    %2034 = vmatmul.mubr.bf16.gmra.mrb[0].mxu0 %v1170
    %v2035 = vpop.f32.mrb[0].mxu0
    %v2036 = vadd.f32 0.0, %v2035
    %v2037 = vpop.f32.mrb[0].mxu0
    %v2038 = vpop.f32.mrb[0].mxu0
    %v2039 = vadd.f32 0.0, %v2038
    %v2040 = vpop.f32.mrb[0].mxu0
    %2041 = vmatprep.mubr.bf16.mxu0 0
    %2042 = vmatmul.mubr.bf16.gmra.mrb[0].mxu0 %v1173
    %v2043 = vpop.f32.mrb[0].mxu0
    %v2044 = vadd.f32 0.0, %v2043
    %v2045 = vpop.f32.mrb[0].mxu0
    %v2046 = vpop.f32.mrb[0].mxu0
    %v2047 = vadd.f32 0.0, %v2046
    %v2048 = vpop.f32.mrb[0].mxu0
    %2049 = vmatprep.mubr.bf16.mxu0 0
    %2050 = vmatmul.mubr.bf16.gmra.mrb[0].mxu0 %v1176
    %v2051 = vpop.f32.mrb[0].mxu0
    %v2052 = vadd.f32 0.0, %v2051
    %v2053 = vpop.f32.mrb[0].mxu0
    %v2054 = vpop.f32.mrb[0].mxu0
    %v2055 = vadd.f32 0.0, %v2054
    %v2056 = vpop.f32.mrb[0].mxu0
    %2057 = vmatprep.mubr.bf16.mxu0 0
    %2058 = vmatmul.mubr.bf16.gmra.mrb[0].mxu0 %v1179
    %v2059 = vpop.f32.mrb[0].mxu0
    %v2060 = vadd.f32 0.0, %v2059
    %v2061 = vpop.f32.mrb[0].mxu0
    %v2062 = vpop.f32.mrb[0].mxu0
    %v2063 = vadd.f32 0.0, %v2062
    %v2064 = vpop.f32.mrb[0].mxu0
    %2065 = vmatprep.mubr.bf16.mxu0 0
    %2066 = vmatmul.mubr.bf16.gmra.mrb[0].mxu0 %v1182
    %v2067 = vpop.f32.mrb[0].mxu0
    %v2068 = vadd.f32 0.0, %v2067
    %v2069 = vpop.f32.mrb[0].mxu0
    %v2070 = vpop.f32.mrb[0].mxu0
    %v2071 = vadd.f32 0.0, %v2070
    %v2072 = vpop.f32.mrb[0].mxu0
    %2073 = vmatprep.mubr.bf16.mxu0 0
    %2074 = vmatmul.mubr.bf16.gmra.mrb[0].mxu0 %v1185
    %v2075 = vpop.f32.mrb[0].mxu0
    %v2076 = vadd.f32 0.0, %v2075
    %v2077 = vpop.f32.mrb[0].mxu0
    %v2078 = vpop.f32.mrb[0].mxu0
    %v2079 = vadd.f32 0.0, %v2078
    %v2080 = vpop.f32.mrb[0].mxu0
    %2081 = vmatprep.mubr.bf16.mxu0 0
    %2082 = vmatmul.mubr.bf16.gmra.mrb[0].mxu0 %v1188
    %v2083 = vpop.f32.mrb[0].mxu0
    %v2084 = vadd.f32 0.0, %v2083
    %v2085 = vpop.f32.mrb[0].mxu0
    %v2086 = vpop.f32.mrb[0].mxu0
    %v2087 = vadd.f32 0.0, %v2086
    %v2088 = vpop.f32.mrb[0].mxu0
    %2089 = vmatprep.mubr.bf16.mxu0 0
    %2090 = vmatmul.mubr.bf16.gmra.mrb[0].mxu0 %v1191
    %v2091 = vpop.f32.mrb[0].mxu0
    %v2092 = vadd.f32 0.0, %v2091
    %v2093 = vpop.f32.mrb[0].mxu0
    %v2094 = vpop.f32.mrb[0].mxu0
    %v2095 = vadd.f32 0.0, %v2094
    %v2096 = vpop.f32.mrb[0].mxu0
    %2097 = vmatprep.mubr.bf16.mxu0 0
    %2098 = vmatmul.mubr.bf16.gmra.mrb[0].mxu0 %v1194
    %v2099 = vpop.f32.mrb[0].mxu0
    %v2100 = vadd.f32 0.0, %v2099
    %v2101 = vpop.f32.mrb[0].mxu0
    %v2102 = vpop.f32.mrb[0].mxu0
    %v2103 = vadd.f32 0.0, %v2102
    %v2104 = vpop.f32.mrb[0].mxu0
    %2105 = vmatprep.mubr.bf16.mxu0 0
    %2106 = vmatmul.mubr.bf16.gmra.mrb[0].mxu0 %v1197
    %v2107 = vpop.f32.mrb[0].mxu0
    %v2108 = vadd.f32 0.0, %v2107
    %v2109 = vpop.f32.mrb[0].mxu0
    %v2110 = vpop.f32.mrb[0].mxu0
    %v2111 = vadd.f32 0.0, %v2110
    %v2112 = vpop.f32.mrb[0].mxu0
    %2113 = vmatprep.mubr.bf16.mxu0 0
    %2114 = vmatmul.mubr.bf16.gmra.mrb[0].mxu0 %v1200
    %v2115 = vpop.f32.mrb[0].mxu0
    %v2116 = vadd.f32 0.0, %v2115
    %v2117 = vpop.f32.mrb[0].mxu0
    %v2118 = vpop.f32.mrb[0].mxu0
    %v2119 = vadd.f32 0.0, %v2118
    %v2120 = vpop.f32.mrb[0].mxu0
    %2121 = vmatprep.mubr.bf16.mxu0 0
    %2122 = vmatmul.mubr.bf16.gmra.mrb[0].mxu0 %v1203
    %v2123 = vpop.f32.mrb[0].mxu0
    %v2124 = vadd.f32 0.0, %v2123
    %v2125 = vpop.f32.mrb[0].mxu0
    %v2126 = vpop.f32.mrb[0].mxu0
    %v2127 = vadd.f32 0.0, %v2126
    %v2128 = vpop.f32.mrb[0].mxu0
    %2129 = vmatprep.mubr.bf16.mxu0 0
    %2130 = vmatmul.mubr.bf16.gmra.mrb[0].mxu0 %v1206
    %v2131 = vpop.f32.mrb[0].mxu0
    %v2132 = vadd.f32 0.0, %v2131
    %v2133 = vpop.f32.mrb[0].mxu0
    %v2134 = vpop.f32.mrb[0].mxu0
    %v2135 = vadd.f32 0.0, %v2134
    %v2136 = vpop.f32.mrb[0].mxu0
    %2137 = vmatprep.mubr.bf16.mxu0 0
    %2138 = vmatmul.mubr.bf16.gmra.mrb[0].mxu0 %v1209
    %v2139 = vpop.f32.mrb[0].mxu0
    %v2140 = vadd.f32 0.0, %v2139
    %v2141 = vpop.f32.mrb[0].mxu0
    %v2142 = vpop.f32.mrb[0].mxu0
    %v2143 = vadd.f32 0.0, %v2142
    %v2144 = vpop.f32.mrb[0].mxu0
    %2145 = vmatprep.mubr.bf16.mxu0 0
    %2146 = vmatmul.mubr.bf16.gmra.mrb[0].mxu0 %v1212
    %v2147 = vpop.f32.mrb[0].mxu0
    %v2148 = vadd.f32 0.0, %v2147
    %v2149 = vpop.f32.mrb[0].mxu0
    %v2150 = vpop.f32.mrb[0].mxu0
    %v2151 = vadd.f32 0.0, %v2150
    %v2152 = vpop.f32.mrb[0].mxu0
    %2153 = vmatprep.mubr.bf16.mxu0 0
    %2154 = vmatmul.mubr.bf16.gmra.mrb[0].mxu0 %v1215
    %v2155 = vpop.f32.mrb[0].mxu0
    %v2156 = vadd.f32 0.0, %v2155
    %v2157 = vpop.f32.mrb[0].mxu0
    %v2158 = vpop.f32.mrb[0].mxu0
    %v2159 = vadd.f32 0.0, %v2158
    %v2160 = vpop.f32.mrb[0].mxu0
    %2161 = vmatprep.mubr.bf16.mxu0 0
    %2162 = vmatmul.mubr.bf16.gmra.mrb[0].mxu0 %v1218
    %v2163 = vpop.f32.mrb[0].mxu0
    %v2164 = vadd.f32 0.0, %v2163
    %v2165 = vpop.f32.mrb[0].mxu0
    %v2166 = vpop.f32.mrb[0].mxu0
    %v2167 = vadd.f32 0.0, %v2166
    %v2168 = vpop.f32.mrb[0].mxu0
    %2169 = vmatprep.mubr.bf16.mxu0 0
    %2170 = vmatmul.mubr.bf16.gmra.mrb[0].mxu0 %v1221
    %v2171 = vpop.f32.mrb[0].mxu0
    %v2172 = vadd.f32 0.0, %v2171
    %v2173 = vpop.f32.mrb[0].mxu0
    %v2174 = vpop.f32.mrb[0].mxu0
    %v2175 = vadd.f32 0.0, %v2174
    %v2176 = vpop.f32.mrb[0].mxu0
    %2177 = vmatprep.mubr.bf16.mxu0 0
    %2178 = vmatmul.mubr.bf16.gmra.mrb[0].mxu0 %v1224
    %v2179 = vpop.f32.mrb[0].mxu0
    %v2180 = vadd.f32 0.0, %v2179
    %v2181 = vpop.f32.mrb[0].mxu0
    %v2182 = vpop.f32.mrb[0].mxu0
    %v2183 = vadd.f32 0.0, %v2182
    %v2184 = vpop.f32.mrb[0].mxu0
    %2185 = vmatprep.mubr.bf16.mxu0 0
    %2186 = vmatmul.mubr.bf16.gmra.mrb[0].mxu0 %v1227
    %v2187 = vpop.f32.mrb[0].mxu0
    %v2188 = vadd.f32 0.0, %v2187
    %v2189 = vpop.f32.mrb[0].mxu0
    %v2190 = vpop.f32.mrb[0].mxu0
    %v2191 = vadd.f32 0.0, %v2190
    %v2192 = vpop.f32.mrb[0].mxu0
    %2193 = vmatprep.mubr.bf16.mxu0 0
    %2194 = vmatmul.mubr.bf16.gmra.mrb[0].mxu0 %v1230
    %v2195 = vpop.f32.mrb[0].mxu0
    %v2196 = vadd.f32 0.0, %v2195
    %v2197 = vpop.f32.mrb[0].mxu0
    %v2198 = vpop.f32.mrb[0].mxu0
    %v2199 = vadd.f32 0.0, %v2198
    %v2200 = vpop.f32.mrb[0].mxu0
    %2201 = vmatprep.mubr.bf16.mxu0 0
    %2202 = vmatmul.mubr.bf16.gmra.mrb[0].mxu0 %v1233
    %v2203 = vpop.f32.mrb[0].mxu0
    %v2204 = vadd.f32 0.0, %v2203
    %v2205 = vpop.f32.mrb[0].mxu0
    %v2206 = vpop.f32.mrb[0].mxu0
    %v2207 = vadd.f32 0.0, %v2206
    %v2208 = vpop.f32.mrb[0].mxu0
    %2209 = vmatprep.mubr.bf16.mxu0 0
    %2210 = vmatmul.mubr.bf16.gmra.mrb[0].mxu0 %v1236
    %v2211 = vpop.f32.mrb[0].mxu0
    %v2212 = vadd.f32 0.0, %v2211
    %v2213 = vpop.f32.mrb[0].mxu0
    %v2214 = vpop.f32.mrb[0].mxu0
    %v2215 = vadd.f32 0.0, %v2214
    %v2216 = vpop.f32.mrb[0].mxu0
    %2217 = vmatprep.mubr.bf16.mxu0 0
    %2218 = vmatmul.mubr.bf16.gmra.mrb[0].mxu0 %v1239
    %v2219 = vpop.f32.mrb[0].mxu0
    %v2220 = vadd.f32 0.0, %v2219
    %v2221 = vpop.f32.mrb[0].mxu0
    %v2222 = vpop.f32.mrb[0].mxu0
    %v2223 = vadd.f32 0.0, %v2222
    %v2224 = vpop.f32.mrb[0].mxu0
    %2225 = vmatprep.mubr.bf16.mxu0 0
    %2226 = vmatmul.mubr.bf16.gmra.mrb[0].mxu0 %v1242
    %v2227 = vpop.f32.mrb[0].mxu0
    %v2228 = vadd.f32 0.0, %v2227
    %v2229 = vpop.f32.mrb[0].mxu0
    %v2230 = vpop.f32.mrb[0].mxu0
    %v2231 = vadd.f32 0.0, %v2230
    %v2232 = vpop.f32.mrb[0].mxu0
    %2233 = vmatprep.mubr.bf16.mxu0 0
    %2234 = vmatmul.mubr.bf16.gmra.mrb[0].mxu0 %v1245
    %v2235 = vpop.f32.mrb[0].mxu0
    %v2236 = vadd.f32 0.0, %v2235
    %v2237 = vpop.f32.mrb[0].mxu0
    %v2238 = vpop.f32.mrb[0].mxu0
    %v2239 = vadd.f32 0.0, %v2238
    %v2240 = vpop.f32.mrb[0].mxu0
    %2241 = vmatprep.mubr.bf16.mxu0 0
    %2242 = vmatmul.mubr.bf16.gmra.mrb[0].mxu0 %v1248
    %v2243 = vpop.f32.mrb[0].mxu0
    %v2244 = vadd.f32 0.0, %v2243
    %v2245 = vpop.f32.mrb[0].mxu0
    %v2246 = vpop.f32.mrb[0].mxu0
    %v2247 = vadd.f32 0.0, %v2246
    %v2248 = vpop.f32.mrb[0].mxu0
    %2249 = vdwg.mxu0
    %v2250 = vld [vmem:[%s8] sm:$0x1]
    %v2252 = vlaneseq
    %v2253 = vshrl.u32 %v2252, 7
    %v2254 = vsub.s32 0, %v2253
    %v2255 = vrot.slane %v2250, %v2254
    %v2257 = vadd.f32 %v1292, %v2255
    %v2258 = vadd.f32 %v1295, %v2255
    %v2259 = vadd.f32 %v1300, %v2255
    %v2260 = vadd.f32 %v1303, %v2255
    %v2261 = vadd.f32 %v1308, %v2255
    %v2262 = vadd.f32 %v1311, %v2255
    %v2263 = vadd.f32 %v1316, %v2255
    %v2264 = vadd.f32 %v1319, %v2255
    %v2265 = vadd.f32 %v1324, %v2255
    %v2266 = vadd.f32 %v1327, %v2255
    %v2267 = vadd.f32 %v1332, %v2255
    %v2268 = vadd.f32 %v1335, %v2255
    %v2269 = vadd.f32 %v1340, %v2255
    %v2270 = vadd.f32 %v1343, %v2255
    %v2271 = vadd.f32 %v1348, %v2255
    %v2272 = vadd.f32 %v1351, %v2255
    %v2273 = vadd.f32 %v1356, %v2255
    %v2274 = vadd.f32 %v1359, %v2255
    %v2275 = vadd.f32 %v1364, %v2255
    %v2276 = vadd.f32 %v1367, %v2255
    %v2277 = vadd.f32 %v1372, %v2255
    %v2278 = vadd.f32 %v1375, %v2255
    %v2279 = vadd.f32 %v1380, %v2255
    %v2280 = vadd.f32 %v1383, %v2255
    %v2281 = vadd.f32 %v1388, %v2255
    %v2282 = vadd.f32 %v1391, %v2255
    %v2283 = vadd.f32 %v1396, %v2255
    %v2284 = vadd.f32 %v1399, %v2255
    %v2285 = vadd.f32 %v1404, %v2255
    %v2286 = vadd.f32 %v1407, %v2255
    %v2287 = vadd.f32 %v1412, %v2255
    %v2288 = vadd.f32 %v1415, %v2255
    %v2289 = vadd.f32 %v1420, %v2255
    %v2290 = vadd.f32 %v1423, %v2255
    %v2291 = vadd.f32 %v1428, %v2255
    %v2292 = vadd.f32 %v1431, %v2255
    %v2293 = vadd.f32 %v1436, %v2255
    %v2294 = vadd.f32 %v1439, %v2255
    %v2295 = vadd.f32 %v1444, %v2255
    %v2296 = vadd.f32 %v1447, %v2255
    %v2297 = vadd.f32 %v1452, %v2255
    %v2298 = vadd.f32 %v1455, %v2255
    %v2299 = vadd.f32 %v1460, %v2255
    %v2300 = vadd.f32 %v1463, %v2255
    %v2301 = vadd.f32 %v1468, %v2255
    %v2302 = vadd.f32 %v1471, %v2255
    %v2303 = vadd.f32 %v1476, %v2255
    %v2304 = vadd.f32 %v1479, %v2255
    %v2305 = vadd.f32 %v1484, %v2255
    %v2306 = vadd.f32 %v1487, %v2255
    %v2307 = vadd.f32 %v1492, %v2255
    %v2308 = vadd.f32 %v1495, %v2255
    %v2309 = vadd.f32 %v1500, %v2255
    %v2310 = vadd.f32 %v1503, %v2255
    %v2311 = vadd.f32 %v1508, %v2255
    %v2312 = vadd.f32 %v1511, %v2255
    %v2313 = vadd.f32 %v1516, %v2255
    %v2314 = vadd.f32 %v1519, %v2255
    %v2315 = vadd.f32 %v1524, %v2255
    %v2316 = vadd.f32 %v1527, %v2255
    %v2317 = vadd.f32 %v1532, %v2255
    %v2318 = vadd.f32 %v1535, %v2255
    %v2319 = vadd.f32 %v1540, %v2255
    %v2320 = vadd.f32 %v1543, %v2255
    %v2321 = vadd.f32 %v1548, %v2255
    %v2322 = vadd.f32 %v1551, %v2255
    %v2323 = vadd.f32 %v1556, %v2255
    %v2324 = vadd.f32 %v1559, %v2255
    %v2325 = vadd.f32 %v1564, %v2255
    %v2326 = vadd.f32 %v1567, %v2255
    %v2327 = vadd.f32 %v1572, %v2255
    %v2328 = vadd.f32 %v1575, %v2255
    %v2329 = vadd.f32 %v1580, %v2255
    %v2330 = vadd.f32 %v1583, %v2255
    %v2331 = vadd.f32 %v1588, %v2255
    %v2332 = vadd.f32 %v1591, %v2255
    %v2333 = vadd.f32 %v1596, %v2255
    %v2334 = vadd.f32 %v1599, %v2255
    %v2335 = vadd.f32 %v1604, %v2255
    %v2336 = vadd.f32 %v1607, %v2255
    %v2337 = vadd.f32 %v1612, %v2255
    %v2338 = vadd.f32 %v1615, %v2255
    %v2339 = vadd.f32 %v1620, %v2255
    %v2340 = vadd.f32 %v1623, %v2255
    %v2341 = vadd.f32 %v1628, %v2255
    %v2342 = vadd.f32 %v1631, %v2255
    %v2343 = vadd.f32 %v1636, %v2255
    %v2344 = vadd.f32 %v1639, %v2255
    %v2345 = vadd.f32 %v1644, %v2255
    %v2346 = vadd.f32 %v1647, %v2255
    %v2347 = vadd.f32 %v1652, %v2255
    %v2348 = vadd.f32 %v1655, %v2255
    %v2349 = vadd.f32 %v1660, %v2255
    %v2350 = vadd.f32 %v1663, %v2255
    %v2351 = vadd.f32 %v1668, %v2255
    %v2352 = vadd.f32 %v1671, %v2255
    %v2353 = vadd.f32 %v1676, %v2255
    %v2354 = vadd.f32 %v1679, %v2255
    %v2355 = vadd.f32 %v1684, %v2255
    %v2356 = vadd.f32 %v1687, %v2255
    %v2357 = vadd.f32 %v1692, %v2255
    %v2358 = vadd.f32 %v1695, %v2255
    %v2359 = vadd.f32 %v1700, %v2255
    %v2360 = vadd.f32 %v1703, %v2255
    %v2361 = vadd.f32 %v1708, %v2255
    %v2362 = vadd.f32 %v1711, %v2255
    %v2363 = vadd.f32 %v1716, %v2255
    %v2364 = vadd.f32 %v1719, %v2255
    %v2365 = vadd.f32 %v1724, %v2255
    %v2366 = vadd.f32 %v1727, %v2255
    %v2367 = vadd.f32 %v1732, %v2255
    %v2368 = vadd.f32 %v1735, %v2255
    %v2369 = vadd.f32 %v1740, %v2255
    %v2370 = vadd.f32 %v1743, %v2255
    %v2371 = vadd.f32 %v1748, %v2255
    %v2372 = vadd.f32 %v1751, %v2255
    %v2373 = vadd.f32 %v1756, %v2255
    %v2374 = vadd.f32 %v1759, %v2255
    %v2375 = vadd.f32 %v1764, %v2255
    %v2376 = vadd.f32 %v1767, %v2255
    %v2377 = vadd.f32 %v1772, %v2255
    %v2378 = vadd.f32 %v1775, %v2255
    %v2379 = vadd.f32 %v1780, %v2255
    %v2380 = vadd.f32 %v1783, %v2255
    %v2381 = vadd.f32 %v1788, %v2255
    %v2382 = vadd.f32 %v1791, %v2255
    %v2383 = vadd.f32 %v1796, %v2255
    %v2384 = vadd.f32 %v1799, %v2255
    %v2385 = vadd.f32 %v1804, %v2255
    %v2386 = vadd.f32 %v1807, %v2255
    %v2387 = vadd.f32 %v1812, %v2255
    %v2388 = vadd.f32 %v1815, %v2255
    %v2389 = vadd.f32 %v1820, %v2255
    %v2390 = vadd.f32 %v1823, %v2255
    %v2391 = vadd.f32 %v1828, %v2255
    %v2392 = vadd.f32 %v1831, %v2255
    %v2393 = vadd.f32 %v1836, %v2255
    %v2394 = vadd.f32 %v1839, %v2255
    %v2395 = vadd.f32 %v1844, %v2255
    %v2396 = vadd.f32 %v1847, %v2255
    %v2397 = vadd.f32 %v1852, %v2255
    %v2398 = vadd.f32 %v1855, %v2255
    %v2399 = vadd.f32 %v1860, %v2255
    %v2400 = vadd.f32 %v1863, %v2255
    %v2401 = vadd.f32 %v1868, %v2255
    %v2402 = vadd.f32 %v1871, %v2255
    %v2403 = vadd.f32 %v1876, %v2255
    %v2404 = vadd.f32 %v1879, %v2255
    %v2405 = vadd.f32 %v1884, %v2255
    %v2406 = vadd.f32 %v1887, %v2255
    %v2407 = vadd.f32 %v1892, %v2255
    %v2408 = vadd.f32 %v1895, %v2255
    %v2409 = vadd.f32 %v1900, %v2255
    %v2410 = vadd.f32 %v1903, %v2255
    %v2411 = vadd.f32 %v1908, %v2255
    %v2412 = vadd.f32 %v1911, %v2255
    %v2413 = vadd.f32 %v1916, %v2255
    %v2414 = vadd.f32 %v1919, %v2255
    %v2415 = vadd.f32 %v1924, %v2255
    %v2416 = vadd.f32 %v1927, %v2255
    %v2417 = vadd.f32 %v1932, %v2255
    %v2418 = vadd.f32 %v1935, %v2255
    %v2419 = vadd.f32 %v1940, %v2255
    %v2420 = vadd.f32 %v1943, %v2255
    %v2421 = vadd.f32 %v1948, %v2255
    %v2422 = vadd.f32 %v1951, %v2255
    %v2423 = vadd.f32 %v1956, %v2255
    %v2424 = vadd.f32 %v1959, %v2255
    %v2425 = vadd.f32 %v1964, %v2255
    %v2426 = vadd.f32 %v1967, %v2255
    %v2427 = vadd.f32 %v1972, %v2255
    %v2428 = vadd.f32 %v1975, %v2255
    %v2429 = vadd.f32 %v1980, %v2255
    %v2430 = vadd.f32 %v1983, %v2255
    %v2431 = vadd.f32 %v1988, %v2255
    %v2432 = vadd.f32 %v1991, %v2255
    %v2433 = vadd.f32 %v1996, %v2255
    %v2434 = vadd.f32 %v1999, %v2255
    %v2435 = vadd.f32 %v2004, %v2255
    %v2436 = vadd.f32 %v2007, %v2255
    %v2437 = vadd.f32 %v2012, %v2255
    %v2438 = vadd.f32 %v2015, %v2255
    %v2439 = vadd.f32 %v2020, %v2255
    %v2440 = vadd.f32 %v2023, %v2255
    %v2441 = vadd.f32 %v2028, %v2255
    %v2442 = vadd.f32 %v2031, %v2255
    %v2443 = vadd.f32 %v2036, %v2255
    %v2444 = vadd.f32 %v2039, %v2255
    %v2445 = vadd.f32 %v2044, %v2255
    %v2446 = vadd.f32 %v2047, %v2255
    %v2447 = vadd.f32 %v2052, %v2255
    %v2448 = vadd.f32 %v2055, %v2255
    %v2449 = vadd.f32 %v2060, %v2255
    %v2450 = vadd.f32 %v2063, %v2255
    %v2451 = vadd.f32 %v2068, %v2255
    %v2452 = vadd.f32 %v2071, %v2255
    %v2453 = vadd.f32 %v2076, %v2255
    %v2454 = vadd.f32 %v2079, %v2255
    %v2455 = vadd.f32 %v2084, %v2255
    %v2456 = vadd.f32 %v2087, %v2255
    %v2457 = vadd.f32 %v2092, %v2255
    %v2458 = vadd.f32 %v2095, %v2255
    %v2459 = vadd.f32 %v2100, %v2255
    %v2460 = vadd.f32 %v2103, %v2255
    %v2461 = vadd.f32 %v2108, %v2255
    %v2462 = vadd.f32 %v2111, %v2255
    %v2463 = vadd.f32 %v2116, %v2255
    %v2464 = vadd.f32 %v2119, %v2255
    %v2465 = vadd.f32 %v2124, %v2255
    %v2466 = vadd.f32 %v2127, %v2255
    %v2467 = vadd.f32 %v2132, %v2255
    %v2468 = vadd.f32 %v2135, %v2255
    %v2469 = vadd.f32 %v2140, %v2255
    %v2470 = vadd.f32 %v2143, %v2255
    %v2471 = vadd.f32 %v2148, %v2255
    %v2472 = vadd.f32 %v2151, %v2255
    %v2473 = vadd.f32 %v2156, %v2255
    %v2474 = vadd.f32 %v2159, %v2255
    %v2475 = vadd.f32 %v2164, %v2255
    %v2476 = vadd.f32 %v2167, %v2255
    %v2477 = vadd.f32 %v2172, %v2255
    %v2478 = vadd.f32 %v2175, %v2255
    %v2479 = vadd.f32 %v2180, %v2255
    %v2480 = vadd.f32 %v2183, %v2255
    %v2481 = vadd.f32 %v2188, %v2255
    %v2482 = vadd.f32 %v2191, %v2255
    %v2483 = vadd.f32 %v2196, %v2255
    %v2484 = vadd.f32 %v2199, %v2255
    %v2485 = vadd.f32 %v2204, %v2255
    %v2486 = vadd.f32 %v2207, %v2255
    %v2487 = vadd.f32 %v2212, %v2255
    %v2488 = vadd.f32 %v2215, %v2255
    %v2489 = vadd.f32 %v2220, %v2255
    %v2490 = vadd.f32 %v2223, %v2255
    %v2491 = vadd.f32 %v2228, %v2255
    %v2492 = vadd.f32 %v2231, %v2255
    %v2493 = vadd.f32 %v2236, %v2255
    %v2494 = vadd.f32 %v2239, %v2255
    %v2495 = vadd.f32 %v2244, %v2255
    %v2496 = vadd.f32 %v2247, %v2255
    %v2497 = vmax.f32 %v2257, 0.0
    %v2498 = vmax.f32 %v2258, 0.0
    %v2499 = vmax.f32 %v2259, 0.0
    %v2500 = vmax.f32 %v2260, 0.0
    %v2501 = vmax.f32 %v2261, 0.0
    %v2502 = vmax.f32 %v2262, 0.0
    %v2503 = vmax.f32 %v2263, 0.0
    %v2504 = vmax.f32 %v2264, 0.0
    %v2505 = vmax.f32 %v2265, 0.0
    %v2506 = vmax.f32 %v2266, 0.0
    %v2507 = vmax.f32 %v2267, 0.0
    %v2508 = vmax.f32 %v2268, 0.0
    %v2509 = vmax.f32 %v2269, 0.0
    %v2510 = vmax.f32 %v2270, 0.0
    %v2511 = vmax.f32 %v2271, 0.0
    %v2512 = vmax.f32 %v2272, 0.0
    %v2513 = vmax.f32 %v2273, 0.0
    %v2514 = vmax.f32 %v2274, 0.0
    %v2515 = vmax.f32 %v2275, 0.0
    %v2516 = vmax.f32 %v2276, 0.0
    %v2517 = vmax.f32 %v2277, 0.0
    %v2518 = vmax.f32 %v2278, 0.0
    %v2519 = vmax.f32 %v2279, 0.0
    %v2520 = vmax.f32 %v2280, 0.0
    %v2521 = vmax.f32 %v2281, 0.0
    %v2522 = vmax.f32 %v2282, 0.0
    %v2523 = vmax.f32 %v2283, 0.0
    %v2524 = vmax.f32 %v2284, 0.0
    %v2525 = vmax.f32 %v2285, 0.0
    %v2526 = vmax.f32 %v2286, 0.0
    %v2527 = vmax.f32 %v2287, 0.0
    %v2528 = vmax.f32 %v2288, 0.0
    %v2529 = vmax.f32 %v2289, 0.0
    %v2530 = vmax.f32 %v2290, 0.0
    %v2531 = vmax.f32 %v2291, 0.0
    %v2532 = vmax.f32 %v2292, 0.0
    %v2533 = vmax.f32 %v2293, 0.0
    %v2534 = vmax.f32 %v2294, 0.0
    %v2535 = vmax.f32 %v2295, 0.0
    %v2536 = vmax.f32 %v2296, 0.0
    %v2537 = vmax.f32 %v2297, 0.0
    %v2538 = vmax.f32 %v2298, 0.0
    %v2539 = vmax.f32 %v2299, 0.0
    %v2540 = vmax.f32 %v2300, 0.0
    %v2541 = vmax.f32 %v2301, 0.0
    %v2542 = vmax.f32 %v2302, 0.0
    %v2543 = vmax.f32 %v2303, 0.0
    %v2544 = vmax.f32 %v2304, 0.0
    %v2545 = vmax.f32 %v2305, 0.0
    %v2546 = vmax.f32 %v2306, 0.0
    %v2547 = vmax.f32 %v2307, 0.0
    %v2548 = vmax.f32 %v2308, 0.0
    %v2549 = vmax.f32 %v2309, 0.0
    %v2550 = vmax.f32 %v2310, 0.0
    %v2551 = vmax.f32 %v2311, 0.0
    %v2552 = vmax.f32 %v2312, 0.0
    %v2553 = vmax.f32 %v2313, 0.0
    %v2554 = vmax.f32 %v2314, 0.0
    %v2555 = vmax.f32 %v2315, 0.0
    %v2556 = vmax.f32 %v2316, 0.0
    %v2557 = vmax.f32 %v2317, 0.0
    %v2558 = vmax.f32 %v2318, 0.0
    %v2559 = vmax.f32 %v2319, 0.0
    %v2560 = vmax.f32 %v2320, 0.0
    %v2561 = vmax.f32 %v2321, 0.0
    %v2562 = vmax.f32 %v2322, 0.0
    %v2563 = vmax.f32 %v2323, 0.0
    %v2564 = vmax.f32 %v2324, 0.0
    %v2565 = vmax.f32 %v2325, 0.0
    %v2566 = vmax.f32 %v2326, 0.0
    %v2567 = vmax.f32 %v2327, 0.0
    %v2568 = vmax.f32 %v2328, 0.0
    %v2569 = vmax.f32 %v2329, 0.0
    %v2570 = vmax.f32 %v2330, 0.0
    %v2571 = vmax.f32 %v2331, 0.0
    %v2572 = vmax.f32 %v2332, 0.0
    %v2573 = vmax.f32 %v2333, 0.0
    %v2574 = vmax.f32 %v2334, 0.0
    %v2575 = vmax.f32 %v2335, 0.0
    %v2576 = vmax.f32 %v2336, 0.0
    %v2577 = vmax.f32 %v2337, 0.0
    %v2578 = vmax.f32 %v2338, 0.0
    %v2579 = vmax.f32 %v2339, 0.0
    %v2580 = vmax.f32 %v2340, 0.0
    %v2581 = vmax.f32 %v2341, 0.0
    %v2582 = vmax.f32 %v2342, 0.0
    %v2583 = vmax.f32 %v2343, 0.0
    %v2584 = vmax.f32 %v2344, 0.0
    %v2585 = vmax.f32 %v2345, 0.0
    %v2586 = vmax.f32 %v2346, 0.0
    %v2587 = vmax.f32 %v2347, 0.0
    %v2588 = vmax.f32 %v2348, 0.0
    %v2589 = vmax.f32 %v2349, 0.0
    %v2590 = vmax.f32 %v2350, 0.0
    %v2591 = vmax.f32 %v2351, 0.0
    %v2592 = vmax.f32 %v2352, 0.0
    %v2593 = vmax.f32 %v2353, 0.0
    %v2594 = vmax.f32 %v2354, 0.0
    %v2595 = vmax.f32 %v2355, 0.0
    %v2596 = vmax.f32 %v2356, 0.0
    %v2597 = vmax.f32 %v2357, 0.0
    %v2598 = vmax.f32 %v2358, 0.0
    %v2599 = vmax.f32 %v2359, 0.0
    %v2600 = vmax.f32 %v2360, 0.0
    %v2601 = vmax.f32 %v2361, 0.0
    %v2602 = vmax.f32 %v2362, 0.0
    %v2603 = vmax.f32 %v2363, 0.0
    %v2604 = vmax.f32 %v2364, 0.0
    %v2605 = vmax.f32 %v2365, 0.0
    %v2606 = vmax.f32 %v2366, 0.0
    %v2607 = vmax.f32 %v2367, 0.0
    %v2608 = vmax.f32 %v2368, 0.0
    %v2609 = vmax.f32 %v2369, 0.0
    %v2610 = vmax.f32 %v2370, 0.0
    %v2611 = vmax.f32 %v2371, 0.0
    %v2612 = vmax.f32 %v2372, 0.0
    %v2613 = vmax.f32 %v2373, 0.0
    %v2614 = vmax.f32 %v2374, 0.0
    %v2615 = vmax.f32 %v2375, 0.0
    %v2616 = vmax.f32 %v2376, 0.0
    %v2617 = vmax.f32 %v2377, 0.0
    %v2618 = vmax.f32 %v2378, 0.0
    %v2619 = vmax.f32 %v2379, 0.0
    %v2620 = vmax.f32 %v2380, 0.0
    %v2621 = vmax.f32 %v2381, 0.0
    %v2622 = vmax.f32 %v2382, 0.0
    %v2623 = vmax.f32 %v2383, 0.0
    %v2624 = vmax.f32 %v2384, 0.0
    %v2625 = vmax.f32 %v2385, 0.0
    %v2626 = vmax.f32 %v2386, 0.0
    %v2627 = vmax.f32 %v2387, 0.0
    %v2628 = vmax.f32 %v2388, 0.0
    %v2629 = vmax.f32 %v2389, 0.0
    %v2630 = vmax.f32 %v2390, 0.0
    %v2631 = vmax.f32 %v2391, 0.0
    %v2632 = vmax.f32 %v2392, 0.0
    %v2633 = vmax.f32 %v2393, 0.0
    %v2634 = vmax.f32 %v2394, 0.0
    %v2635 = vmax.f32 %v2395, 0.0
    %v2636 = vmax.f32 %v2396, 0.0
    %v2637 = vmax.f32 %v2397, 0.0
    %v2638 = vmax.f32 %v2398, 0.0
    %v2639 = vmax.f32 %v2399, 0.0
    %v2640 = vmax.f32 %v2400, 0.0
    %v2641 = vmax.f32 %v2401, 0.0
    %v2642 = vmax.f32 %v2402, 0.0
    %v2643 = vmax.f32 %v2403, 0.0
    %v2644 = vmax.f32 %v2404, 0.0
    %v2645 = vmax.f32 %v2405, 0.0
    %v2646 = vmax.f32 %v2406, 0.0
    %v2647 = vmax.f32 %v2407, 0.0
    %v2648 = vmax.f32 %v2408, 0.0
    %v2649 = vmax.f32 %v2409, 0.0
    %v2650 = vmax.f32 %v2410, 0.0
    %v2651 = vmax.f32 %v2411, 0.0
    %v2652 = vmax.f32 %v2412, 0.0
    %v2653 = vmax.f32 %v2413, 0.0
    %v2654 = vmax.f32 %v2414, 0.0
    %v2655 = vmax.f32 %v2415, 0.0
    %v2656 = vmax.f32 %v2416, 0.0
    %v2657 = vmax.f32 %v2417, 0.0
    %v2658 = vmax.f32 %v2418, 0.0
    %v2659 = vmax.f32 %v2419, 0.0
    %v2660 = vmax.f32 %v2420, 0.0
    %v2661 = vmax.f32 %v2421, 0.0
    %v2662 = vmax.f32 %v2422, 0.0
    %v2663 = vmax.f32 %v2423, 0.0
    %v2664 = vmax.f32 %v2424, 0.0
    %v2665 = vmax.f32 %v2425, 0.0
    %v2666 = vmax.f32 %v2426, 0.0
    %v2667 = vmax.f32 %v2427, 0.0
    %v2668 = vmax.f32 %v2428, 0.0
    %v2669 = vmax.f32 %v2429, 0.0
    %v2670 = vmax.f32 %v2430, 0.0
    %v2671 = vmax.f32 %v2431, 0.0
    %v2672 = vmax.f32 %v2432, 0.0
    %v2673 = vmax.f32 %v2433, 0.0
    %v2674 = vmax.f32 %v2434, 0.0
    %v2675 = vmax.f32 %v2435, 0.0
    %v2676 = vmax.f32 %v2436, 0.0
    %v2677 = vmax.f32 %v2437, 0.0
    %v2678 = vmax.f32 %v2438, 0.0
    %v2679 = vmax.f32 %v2439, 0.0
    %v2680 = vmax.f32 %v2440, 0.0
    %v2681 = vmax.f32 %v2441, 0.0
    %v2682 = vmax.f32 %v2442, 0.0
    %v2683 = vmax.f32 %v2443, 0.0
    %v2684 = vmax.f32 %v2444, 0.0
    %v2685 = vmax.f32 %v2445, 0.0
    %v2686 = vmax.f32 %v2446, 0.0
    %v2687 = vmax.f32 %v2447, 0.0
    %v2688 = vmax.f32 %v2448, 0.0
    %v2689 = vmax.f32 %v2449, 0.0
    %v2690 = vmax.f32 %v2450, 0.0
    %v2691 = vmax.f32 %v2451, 0.0
    %v2692 = vmax.f32 %v2452, 0.0
    %v2693 = vmax.f32 %v2453, 0.0
    %v2694 = vmax.f32 %v2454, 0.0
    %v2695 = vmax.f32 %v2455, 0.0
    %v2696 = vmax.f32 %v2456, 0.0
    %v2697 = vmax.f32 %v2457, 0.0
    %v2698 = vmax.f32 %v2458, 0.0
    %v2699 = vmax.f32 %v2459, 0.0
    %v2700 = vmax.f32 %v2460, 0.0
    %v2701 = vmax.f32 %v2461, 0.0
    %v2702 = vmax.f32 %v2462, 0.0
    %v2703 = vmax.f32 %v2463, 0.0
    %v2704 = vmax.f32 %v2464, 0.0
    %v2705 = vmax.f32 %v2465, 0.0
    %v2706 = vmax.f32 %v2466, 0.0
    %v2707 = vmax.f32 %v2467, 0.0
    %v2708 = vmax.f32 %v2468, 0.0
    %v2709 = vmax.f32 %v2469, 0.0
    %v2710 = vmax.f32 %v2470, 0.0
    %v2711 = vmax.f32 %v2471, 0.0
    %v2712 = vmax.f32 %v2472, 0.0
    %v2713 = vmax.f32 %v2473, 0.0
    %v2714 = vmax.f32 %v2474, 0.0
    %v2715 = vmax.f32 %v2475, 0.0
    %v2716 = vmax.f32 %v2476, 0.0
    %v2717 = vmax.f32 %v2477, 0.0
    %v2718 = vmax.f32 %v2478, 0.0
    %v2719 = vmax.f32 %v2479, 0.0
    %v2720 = vmax.f32 %v2480, 0.0
    %v2721 = vmax.f32 %v2481, 0.0
    %v2722 = vmax.f32 %v2482, 0.0
    %v2723 = vmax.f32 %v2483, 0.0
    %v2724 = vmax.f32 %v2484, 0.0
    %v2725 = vmax.f32 %v2485, 0.0
    %v2726 = vmax.f32 %v2486, 0.0
    %v2727 = vmax.f32 %v2487, 0.0
    %v2728 = vmax.f32 %v2488, 0.0
    %v2729 = vmax.f32 %v2489, 0.0
    %v2730 = vmax.f32 %v2490, 0.0
    %v2731 = vmax.f32 %v2491, 0.0
    %v2732 = vmax.f32 %v2492, 0.0
    %v2733 = vmax.f32 %v2493, 0.0
    %v2734 = vmax.f32 %v2494, 0.0
    %v2735 = vmax.f32 %v2495, 0.0
    %v2736 = vmax.f32 %v2496, 0.0
    %v2737 = vmax.f32 %v2497, %v2527
    %v2738 = vmax.f32 %v2498, %v2528
    %v2739 = vmax.f32 %v2499, %v2529
    %v2740 = vmax.f32 %v2500, %v2530
    %v2741 = vmax.f32 %v2501, %v2531
    %v2742 = vmax.f32 %v2502, %v2532
    %v2743 = vmax.f32 %v2503, %v2533
    %v2744 = vmax.f32 %v2504, %v2534
    %v2745 = vmax.f32 %v2505, %v2535
    %v2746 = vmax.f32 %v2506, %v2536
    %v2747 = vmax.f32 %v2507, %v2537
    %v2748 = vmax.f32 %v2508, %v2538
    %v2749 = vmax.f32 %v2509, %v2539
    %v2750 = vmax.f32 %v2510, %v2540
    %v2751 = vmax.f32 %v2511, %v2541
    %v2752 = vmax.f32 %v2512, %v2542
    %v2753 = vmax.f32 %v2513, %v2543
    %v2754 = vmax.f32 %v2514, %v2544
    %v2755 = vmax.f32 %v2515, %v2545
    %v2756 = vmax.f32 %v2516, %v2546
    %v2757 = vmax.f32 %v2517, %v2547
    %v2758 = vmax.f32 %v2518, %v2548
    %v2759 = vmax.f32 %v2519, %v2549
    %v2760 = vmax.f32 %v2520, %v2550
    %v2761 = vmax.f32 %v2521, %v2551
    %v2762 = vmax.f32 %v2522, %v2552
    %v2763 = vmax.f32 %v2523, %v2553
    %v2764 = vmax.f32 %v2524, %v2554
    %v2765 = vmax.f32 %v2525, %v2555
    %v2766 = vmax.f32 %v2526, %v2556
    %v2767 = vmax.f32 %v2617, %v2647
    %v2768 = vmax.f32 %v2618, %v2648
    %v2769 = vmax.f32 %v2619, %v2649
    %v2770 = vmax.f32 %v2620, %v2650
    %v2771 = vmax.f32 %v2621, %v2651
    %v2772 = vmax.f32 %v2622, %v2652
    %v2773 = vmax.f32 %v2623, %v2653
    %v2774 = vmax.f32 %v2624, %v2654
    %v2775 = vmax.f32 %v2625, %v2655
    %v2776 = vmax.f32 %v2626, %v2656
    %v2777 = vmax.f32 %v2627, %v2657
    %v2778 = vmax.f32 %v2628, %v2658
    %v2779 = vmax.f32 %v2629, %v2659
    %v2780 = vmax.f32 %v2630, %v2660
    %v2781 = vmax.f32 %v2631, %v2661
    %v2782 = vmax.f32 %v2632, %v2662
    %v2783 = vmax.f32 %v2633, %v2663
    %v2784 = vmax.f32 %v2634, %v2664
    %v2785 = vmax.f32 %v2635, %v2665
    %v2786 = vmax.f32 %v2636, %v2666
    %v2787 = vmax.f32 %v2637, %v2667
    %v2788 = vmax.f32 %v2638, %v2668
    %v2789 = vmax.f32 %v2639, %v2669
    %v2790 = vmax.f32 %v2640, %v2670
    %v2791 = vmax.f32 %v2641, %v2671
    %v2792 = vmax.f32 %v2642, %v2672
    %v2793 = vmax.f32 %v2643, %v2673
    %v2794 = vmax.f32 %v2644, %v2674
    %v2795 = vmax.f32 %v2645, %v2675
    %v2796 = vmax.f32 %v2646, %v2676
    %v2797 = vmax.f32 %v2557, %v2587
    %v2798 = vmax.f32 %v2558, %v2588
    %v2799 = vmax.f32 %v2559, %v2589
    %v2800 = vmax.f32 %v2560, %v2590
    %v2801 = vmax.f32 %v2561, %v2591
    %v2802 = vmax.f32 %v2562, %v2592
    %v2803 = vmax.f32 %v2563, %v2593
    %v2804 = vmax.f32 %v2564, %v2594
    %v2805 = vmax.f32 %v2565, %v2595
    %v2806 = vmax.f32 %v2566, %v2596
    %v2807 = vmax.f32 %v2567, %v2597
    %v2808 = vmax.f32 %v2568, %v2598
    %v2809 = vmax.f32 %v2569, %v2599
    %v2810 = vmax.f32 %v2570, %v2600
    %v2811 = vmax.f32 %v2571, %v2601
    %v2812 = vmax.f32 %v2572, %v2602
    %v2813 = vmax.f32 %v2573, %v2603
    %v2814 = vmax.f32 %v2574, %v2604
    %v2815 = vmax.f32 %v2575, %v2605
    %v2816 = vmax.f32 %v2576, %v2606
    %v2817 = vmax.f32 %v2577, %v2607
    %v2818 = vmax.f32 %v2578, %v2608
    %v2819 = vmax.f32 %v2579, %v2609
    %v2820 = vmax.f32 %v2580, %v2610
    %v2821 = vmax.f32 %v2581, %v2611
    %v2822 = vmax.f32 %v2582, %v2612
    %v2823 = vmax.f32 %v2583, %v2613
    %v2824 = vmax.f32 %v2584, %v2614
    %v2825 = vmax.f32 %v2585, %v2615
    %v2826 = vmax.f32 %v2586, %v2616
    %v2827 = vmax.f32 %v2677, %v2707
    %v2828 = vmax.f32 %v2678, %v2708
    %v2829 = vmax.f32 %v2679, %v2709
    %v2830 = vmax.f32 %v2680, %v2710
    %v2831 = vmax.f32 %v2681, %v2711
    %v2832 = vmax.f32 %v2682, %v2712
    %v2833 = vmax.f32 %v2683, %v2713
    %v2834 = vmax.f32 %v2684, %v2714
    %v2835 = vmax.f32 %v2685, %v2715
    %v2836 = vmax.f32 %v2686, %v2716
    %v2837 = vmax.f32 %v2687, %v2717
    %v2838 = vmax.f32 %v2688, %v2718
    %v2839 = vmax.f32 %v2689, %v2719
    %v2840 = vmax.f32 %v2690, %v2720
    %v2841 = vmax.f32 %v2691, %v2721
    %v2842 = vmax.f32 %v2692, %v2722
    %v2843 = vmax.f32 %v2693, %v2723
    %v2844 = vmax.f32 %v2694, %v2724
    %v2845 = vmax.f32 %v2695, %v2725
    %v2846 = vmax.f32 %v2696, %v2726
    %v2847 = vmax.f32 %v2697, %v2727
    %v2848 = vmax.f32 %v2698, %v2728
    %v2849 = vmax.f32 %v2699, %v2729
    %v2850 = vmax.f32 %v2700, %v2730
    %v2851 = vmax.f32 %v2701, %v2731
    %v2852 = vmax.f32 %v2702, %v2732
    %v2853 = vmax.f32 %v2703, %v2733
    %v2854 = vmax.f32 %v2704, %v2734
    %v2855 = vmax.f32 %v2705, %v2735
    %v2856 = vmax.f32 %v2706, %v2736
    %v2857 = vmax.f32 %v2737, %v2797
    %v2858 = vmax.f32 %v2738, %v2798
    %v2859 = vmax.f32 %v2739, %v2799
    %v2860 = vmax.f32 %v2740, %v2800
    %v2861 = vmax.f32 %v2741, %v2801
    %v2862 = vmax.f32 %v2742, %v2802
    %v2863 = vmax.f32 %v2743, %v2803
    %v2864 = vmax.f32 %v2744, %v2804
    %v2865 = vmax.f32 %v2745, %v2805
    %v2866 = vmax.f32 %v2746, %v2806
    %v2867 = vmax.f32 %v2747, %v2807
    %v2868 = vmax.f32 %v2748, %v2808
    %v2869 = vmax.f32 %v2749, %v2809
    %v2870 = vmax.f32 %v2750, %v2810
    %v2871 = vmax.f32 %v2751, %v2811
    %v2872 = vmax.f32 %v2752, %v2812
    %v2873 = vmax.f32 %v2753, %v2813
    %v2874 = vmax.f32 %v2754, %v2814
    %v2875 = vmax.f32 %v2755, %v2815
    %v2876 = vmax.f32 %v2756, %v2816
    %v2877 = vmax.f32 %v2757, %v2817
    %v2878 = vmax.f32 %v2758, %v2818
    %v2879 = vmax.f32 %v2759, %v2819
    %v2880 = vmax.f32 %v2760, %v2820
    %v2881 = vmax.f32 %v2761, %v2821
    %v2882 = vmax.f32 %v2762, %v2822
    %v2883 = vmax.f32 %v2763, %v2823
    %v2884 = vmax.f32 %v2764, %v2824
    %v2885 = vmax.f32 %v2765, %v2825
    %v2886 = vmax.f32 %v2766, %v2826
    %v2887 = vmax.f32 %v2767, %v2827
    %v2888 = vmax.f32 %v2768, %v2828
    %v2889 = vmax.f32 %v2769, %v2829
    %v2890 = vmax.f32 %v2770, %v2830
    %v2891 = vmax.f32 %v2771, %v2831
    %v2892 = vmax.f32 %v2772, %v2832
    %v2893 = vmax.f32 %v2773, %v2833
    %v2894 = vmax.f32 %v2774, %v2834
    %v2895 = vmax.f32 %v2775, %v2835
    %v2896 = vmax.f32 %v2776, %v2836
    %v2897 = vmax.f32 %v2777, %v2837
    %v2898 = vmax.f32 %v2778, %v2838
    %v2899 = vmax.f32 %v2779, %v2839
    %v2900 = vmax.f32 %v2780, %v2840
    %v2901 = vmax.f32 %v2781, %v2841
    %v2902 = vmax.f32 %v2782, %v2842
    %v2903 = vmax.f32 %v2783, %v2843
    %v2904 = vmax.f32 %v2784, %v2844
    %v2905 = vmax.f32 %v2785, %v2845
    %v2906 = vmax.f32 %v2786, %v2846
    %v2907 = vmax.f32 %v2787, %v2847
    %v2908 = vmax.f32 %v2788, %v2848
    %v2909 = vmax.f32 %v2789, %v2849
    %v2910 = vmax.f32 %v2790, %v2850
    %v2911 = vmax.f32 %v2791, %v2851
    %v2912 = vmax.f32 %v2792, %v2852
    %v2913 = vmax.f32 %v2793, %v2853
    %v2914 = vmax.f32 %v2794, %v2854
    %v2915 = vmax.f32 %v2795, %v2855
    %v2916 = vmax.f32 %v2796, %v2856
    %v2917 = vpack.c.bf16 %v2858, %v2857
    %v2918 = vpack.c.bf16 %v2860, %v2859
    %v2919 = vpack.c.bf16 %v2862, %v2861
    %v2920 = vpack.c.bf16 %v2864, %v2863
    %v2921 = vpack.c.bf16 %v2866, %v2865
    %v2922 = vpack.c.bf16 %v2868, %v2867
    %v2923 = vpack.c.bf16 %v2870, %v2869
    %v2924 = vpack.c.bf16 %v2872, %v2871
    %v2925 = vpack.c.bf16 %v2874, %v2873
    %v2926 = vpack.c.bf16 %v2876, %v2875
    %v2927 = vpack.c.bf16 %v2878, %v2877
    %v2928 = vpack.c.bf16 %v2880, %v2879
    %v2929 = vpack.c.bf16 %v2882, %v2881
    %v2930 = vpack.c.bf16 %v2884, %v2883
    %v2931 = vpack.c.bf16 %v2886, %v2885
    %v2932 = vpack.c.bf16 %v2888, %v2887
    %v2933 = vpack.c.bf16 %v2890, %v2889
    %v2934 = vpack.c.bf16 %v2892, %v2891
    %v2935 = vpack.c.bf16 %v2894, %v2893
    %v2936 = vpack.c.bf16 %v2896, %v2895
    %v2937 = vpack.c.bf16 %v2898, %v2897
    %v2938 = vpack.c.bf16 %v2900, %v2899
    %v2939 = vpack.c.bf16 %v2902, %v2901
    %v2940 = vpack.c.bf16 %v2904, %v2903
    %v2941 = vpack.c.bf16 %v2906, %v2905
    %v2942 = vpack.c.bf16 %v2908, %v2907
    %v2943 = vpack.c.bf16 %v2910, %v2909
    %v2944 = vpack.c.bf16 %v2912, %v2911
    %v2945 = vpack.c.bf16 %v2914, %v2913
    %v2946 = vpack.c.bf16 %v2916, %v2915
    %vm2947 = vcmask 523264
    %2948 = vst.msk [vmem:[#allocation2] sm:$0xff] %vm2947, %v2917
    %2949 = vst.msk [vmem:[#allocation2 + $0x8] sm:$0xff] %vm2947, %v2918
    %2950 = vst.msk [vmem:[#allocation2 + $0x10] sm:$0xff] %vm2947, %v2919
    %2951 = vst.msk [vmem:[#allocation2 + $0x18] sm:$0xff] %vm2947, %v2920
    %2952 = vst.msk [vmem:[#allocation2 + $0x20] sm:$0xff] %vm2947, %v2921
    %2953 = vst.msk [vmem:[#allocation2 + $0x28] sm:$0xff] %vm2947, %v2922
    %2954 = vst.msk [vmem:[#allocation2 + $0x30] sm:$0xff] %vm2947, %v2923
    %2955 = vst.msk [vmem:[#allocation2 + $0x38] sm:$0xff] %vm2947, %v2924
    %2956 = vst.msk [vmem:[#allocation2 + $0x40] sm:$0xff] %vm2947, %v2925
    %2957 = vst.msk [vmem:[#allocation2 + $0x48] sm:$0xff] %vm2947, %v2926
    %2958 = vst.msk [vmem:[#allocation2 + $0x50] sm:$0xff] %vm2947, %v2927
    %2959 = vst.msk [vmem:[#allocation2 + $0x58] sm:$0xff] %vm2947, %v2928
    %2960 = vst.msk [vmem:[#allocation2 + $0x60] sm:$0xff] %vm2947, %v2929
    %2961 = vst.msk [vmem:[#allocation2 + $0x68] sm:$0xff] %vm2947, %v2930
    %2962 = vst.msk [vmem:[#allocation2 + $0x70] sm:$0xff] %vm2947, %v2931
    %2963 = vst.msk [vmem:[#allocation2 + $0x78] sm:$0xff] %vm2947, %v2932
    %2964 = vst.msk [vmem:[#allocation2 + $0x80] sm:$0xff] %vm2947, %v2933
    %2965 = vst.msk [vmem:[#allocation2 + $0x88] sm:$0xff] %vm2947, %v2934
    %2966 = vst.msk [vmem:[#allocation2 + $0x90] sm:$0xff] %vm2947, %v2935
    %2967 = vst.msk [vmem:[#allocation2 + $0x98] sm:$0xff] %vm2947, %v2936
    %2968 = vst.msk [vmem:[#allocation2 + $0xa0] sm:$0xff] %vm2947, %v2937
    %2969 = vst.msk [vmem:[#allocation2 + $0xa8] sm:$0xff] %vm2947, %v2938
    %2970 = vst.msk [vmem:[#allocation2 + $0xb0] sm:$0xff] %vm2947, %v2939
    %2971 = vst.msk [vmem:[#allocation2 + $0xb8] sm:$0xff] %vm2947, %v2940
    %2972 = vst.msk [vmem:[#allocation2 + $0xc0] sm:$0xff] %vm2947, %v2941
    %2973 = vst.msk [vmem:[#allocation2 + $0xc8] sm:$0xff] %vm2947, %v2942
    %2974 = vst.msk [vmem:[#allocation2 + $0xd0] sm:$0xff] %vm2947, %v2943
    %2975 = vst.msk [vmem:[#allocation2 + $0xd8] sm:$0xff] %vm2947, %v2944
    %2976 = vst.msk [vmem:[#allocation2 + $0xe0] sm:$0xff] %vm2947, %v2945
    %2977 = vst.msk [vmem:[#allocation2 + $0xe8] sm:$0xff] %vm2947, %v2946
    %v2978 = vld [vmem:[#allocation2] sm:$0xff]
    %v2979 = vld [vmem:[#allocation2 + $0x8] sm:$0xff]
    %v2980 = vld [vmem:[#allocation2 + $0x10] sm:$0xff]
    %v2981 = vld [vmem:[#allocation2 + $0x18] sm:$0xff]
    %v2982 = vld [vmem:[#allocation2 + $0x20] sm:$0xff]
    %v2983 = vld [vmem:[#allocation2 + $0x28] sm:$0xff]
    %v2984 = vld [vmem:[#allocation2 + $0x30] sm:$0xff]
    %v2985 = vld [vmem:[#allocation2 + $0x38] sm:$0xff]
    %v2986 = vld [vmem:[#allocation2 + $0x40] sm:$0xff]
    %v2987 = vld [vmem:[#allocation2 + $0x48] sm:$0xff]
    %v2988 = vld [vmem:[#allocation2 + $0x50] sm:$0xff]
    %v2989 = vld [vmem:[#allocation2 + $0x58] sm:$0xff]
    %v2990 = vld [vmem:[#allocation2 + $0x60] sm:$0x7f]
    %v2991 = vld [vmem:[#allocation2 + $0x78] sm:$0xff]
    %v2992 = vld [vmem:[#allocation2 + $0x80] sm:$0xff]
    %v2993 = vld [vmem:[#allocation2 + $0x88] sm:$0xff]
    %v2994 = vld [vmem:[#allocation2 + $0x90] sm:$0xff]
    %v2995 = vld [vmem:[#allocation2 + $0x98] sm:$0xff]
    %v2996 = vld [vmem:[#allocation2 + $0xa0] sm:$0xff]
    %v2997 = vld [vmem:[#allocation2 + $0xa8] sm:$0xff]
    %v2998 = vld [vmem:[#allocation2 + $0xb0] sm:$0xff]
    %v2999 = vld [vmem:[#allocation2 + $0xb8] sm:$0xff]
    %v3000 = vld [vmem:[#allocation2 + $0xc0] sm:$0xff]
    %v3001 = vld [vmem:[#allocation2 + $0xc8] sm:$0xff]
    %v3002 = vld [vmem:[#allocation2 + $0xd0] sm:$0xff]
    %v3003 = vld [vmem:[#allocation2 + $0xd8] sm:$0x7f]
    %3004 = vst.msk [vmem:[#allocation5] sm:$0xff] %vm2947, %v2978
    %3005 = vst.msk [vmem:[#allocation5 + $0x28] sm:$0xff] %vm2947, %v2979
    %3006 = vst.msk [vmem:[#allocation5 + $0x50] sm:$0xff] %vm2947, %v2980
    %3007 = vst.msk [vmem:[#allocation5 + $0x78] sm:$0xff] %vm2947, %v2981
    %3008 = vst.msk [vmem:[#allocation5 + $0xa0] sm:$0xff] %vm2947, %v2982
    %3009 = vst.msk [vmem:[#allocation5 + $0xc8] sm:$0xff] %vm2947, %v2983
    %3010 = vst.msk [vmem:[#allocation5 + $0xf0] sm:$0xff] %vm2947, %v2984
    %3011 = vst.msk [vmem:[#allocation5 + $0x118] sm:$0xff] %vm2947, %v2985
    %3012 = vst.msk [vmem:[#allocation5 + $0x140] sm:$0xff] %vm2947, %v2986
    %3013 = vst.msk [vmem:[#allocation5 + $0x168] sm:$0xff] %vm2947, %v2987
    %3014 = vst.msk [vmem:[#allocation5 + $0x190] sm:$0xff] %vm2947, %v2988
    %3015 = vst.msk [vmem:[#allocation5 + $0x1b8] sm:$0xff] %vm2947, %v2989
    %vm3016 = vcmask 522240
    %vm3017 = vsmask.f32 6400
    %vm3018 = vmand %vm3016, %vm3017
    %v3019 = vld [vmem:[#allocation5 + $0x1e0] sm:$0x7f]
    %v3020 = vsel %vm3018, %v2990, %v3019
    %3021 = vst [vmem:[#allocation5 + $0x1e0] sm:$0x7f] %v3020
    %3022 = vst.msk [vmem:[#allocation5 + $0x208] sm:$0xff] %vm2947, %v2991
    %3023 = vst.msk [vmem:[#allocation5 + $0x230] sm:$0xff] %vm2947, %v2992
    %3024 = vst.msk [vmem:[#allocation5 + $0x258] sm:$0xff] %vm2947, %v2993
    %3025 = vst.msk [vmem:[#allocation5 + $0x280] sm:$0xff] %vm2947, %v2994
    %3026 = vst.msk [vmem:[#allocation5 + $0x2a8] sm:$0xff] %vm2947, %v2995
    %3027 = vst.msk [vmem:[#allocation5 + $0x2d0] sm:$0xff] %vm2947, %v2996
    %3028 = vst.msk [vmem:[#allocation5 + $0x2f8] sm:$0xff] %vm2947, %v2997
    %3029 = vst.msk [vmem:[#allocation5 + $0x320] sm:$0xff] %vm2947, %v2998
    %3030 = vst.msk [vmem:[#allocation5 + $0x348] sm:$0xff] %vm2947, %v2999
    %3031 = vst.msk [vmem:[#allocation5 + $0x370] sm:$0xff] %vm2947, %v3000
    %3032 = vst.msk [vmem:[#allocation5 + $0x398] sm:$0xff] %vm2947, %v3001
    %3033 = vst.msk [vmem:[#allocation5 + $0x3c0] sm:$0xff] %vm2947, %v3002
    %v3034 = vld [vmem:[#allocation5 + $0x3e8] sm:$0x7f]
    %v3035 = vsel %vm3018, %v3003, %v3034
    %3036 = vst [vmem:[#allocation5 + $0x3e8] sm:$0x7f] %v3035
    %v3037 = vld [vmem:[#allocation2] sm:$0xff]
    %v3038 = vld [vmem:[#allocation2 + $0x8] sm:$0xff]
    %v3039 = vld [vmem:[#allocation2 + $0x10] sm:$0xff]
    %v3040 = vld [vmem:[#allocation2 + $0x18] sm:$0xff]
    %v3041 = vld [vmem:[#allocation2 + $0x20] sm:$0xff]
    %v3042 = vld [vmem:[#allocation2 + $0x28] sm:$0xff]
    %v3043 = vld [vmem:[#allocation2 + $0x30] sm:$0xff]
    %v3044 = vld [vmem:[#allocation2 + $0x38] sm:$0xff]
    %v3045 = vld [vmem:[#allocation2 + $0x40] sm:$0xff]
    %v3046 = vld [vmem:[#allocation2 + $0x48] sm:$0xff]
    %v3047 = vld [vmem:[#allocation2 + $0x50] sm:$0xff]
    %v3048 = vld [vmem:[#allocation2 + $0x58] sm:$0xff]
    %v3049 = vld [vmem:[#allocation2 + $0x60] sm:$0x7f]
    %v3050 = vld [vmem:[#allocation2 + $0x78] sm:$0xff]
    %v3051 = vld [vmem:[#allocation2 + $0x80] sm:$0xff]
    %v3052 = vld [vmem:[#allocation2 + $0x88] sm:$0xff]
    %v3053 = vld [vmem:[#allocation2 + $0x90] sm:$0xff]
    %v3054 = vld [vmem:[#allocation2 + $0x98] sm:$0xff]
    %v3055 = vld [vmem:[#allocation2 + $0xa0] sm:$0xff]
    %v3056 = vld [vmem:[#allocation2 + $0xa8] sm:$0xff]
    %v3057 = vld [vmem:[#allocation2 + $0xb0] sm:$0xff]
    %v3058 = vld [vmem:[#allocation2 + $0xb8] sm:$0xff]
    %v3059 = vld [vmem:[#allocation2 + $0xc0] sm:$0xff]
    %v3060 = vld [vmem:[#allocation2 + $0xc8] sm:$0xff]
    %v3061 = vld [vmem:[#allocation2 + $0xd0] sm:$0xff]
    %v3062 = vld [vmem:[#allocation2 + $0xd8] sm:$0x7f]
    %vm3063 = vsmask.f32 7424
    %v3065 = vshrl.u32 %v3037, 16
    %v3067 = vshll.u32 %v3037, 16
    %v3069 = vrot.slane %v3067, 1
    %v3070 = vor.u32 %v3065, %v3069
    %v3072 = vshll.u32 %v3038, 16
    %v3074 = vrot.slane %v3072, 1
    %v3075 = vsel %vm3063, %v3070, %v3074
    %v3076 = vshrl.u32 %v3038, 16
    %v3078 = vor.u32 %v3076, %v3074
    %v3080 = vshll.u32 %v3039, 16
    %v3082 = vrot.slane %v3080, 1
    %v3083 = vsel %vm3063, %v3078, %v3082
    %v3084 = vshrl.u32 %v3039, 16
    %v3086 = vor.u32 %v3084, %v3082
    %v3088 = vshll.u32 %v3040, 16
    %v3090 = vrot.slane %v3088, 1
    %v3091 = vsel %vm3063, %v3086, %v3090
    %v3092 = vshrl.u32 %v3040, 16
    %v3094 = vor.u32 %v3092, %v3090
    %v3096 = vshll.u32 %v3041, 16
    %v3098 = vrot.slane %v3096, 1
    %v3099 = vsel %vm3063, %v3094, %v3098
    %v3100 = vshrl.u32 %v3041, 16
    %v3102 = vor.u32 %v3100, %v3098
    %v3104 = vshll.u32 %v3042, 16
    %v3106 = vrot.slane %v3104, 1
    %v3107 = vsel %vm3063, %v3102, %v3106
    %v3108 = vshrl.u32 %v3042, 16
    %v3110 = vor.u32 %v3108, %v3106
    %v3112 = vshll.u32 %v3043, 16
    %v3114 = vrot.slane %v3112, 1
    %v3115 = vsel %vm3063, %v3110, %v3114
    %v3116 = vshrl.u32 %v3043, 16
    %v3118 = vor.u32 %v3116, %v3114
    %v3120 = vshll.u32 %v3044, 16
    %v3122 = vrot.slane %v3120, 1
    %v3123 = vsel %vm3063, %v3118, %v3122
    %v3124 = vshrl.u32 %v3044, 16
    %v3126 = vor.u32 %v3124, %v3122
    %v3128 = vshll.u32 %v3045, 16
    %v3130 = vrot.slane %v3128, 1
    %v3131 = vsel %vm3063, %v3126, %v3130
    %v3132 = vshrl.u32 %v3045, 16
    %v3134 = vor.u32 %v3132, %v3130
    %v3136 = vshll.u32 %v3046, 16
    %v3138 = vrot.slane %v3136, 1
    %v3139 = vsel %vm3063, %v3134, %v3138
    %v3140 = vshrl.u32 %v3046, 16
    %v3142 = vor.u32 %v3140, %v3138
    %v3144 = vshll.u32 %v3047, 16
    %v3146 = vrot.slane %v3144, 1
    %v3147 = vsel %vm3063, %v3142, %v3146
    %v3148 = vshrl.u32 %v3047, 16
    %v3150 = vor.u32 %v3148, %v3146
    %v3152 = vshll.u32 %v3048, 16
    %v3154 = vrot.slane %v3152, 1
    %v3155 = vsel %vm3063, %v3150, %v3154
    %v3156 = vshrl.u32 %v3048, 16
    %v3158 = vor.u32 %v3156, %v3154
    %v3160 = vshll.u32 %v3049, 16
    %v3162 = vrot.slane %v3160, 1
    %v3163 = vsel %vm3063, %v3158, %v3162
    %v3164 = vshrl.u32 %v3049, 16
    %v3166 = vor.u32 %v3164, %v3162
    %v3168 = vshrl.u32 %v3050, 16
    %v3170 = vshll.u32 %v3050, 16
    %v3172 = vrot.slane %v3170, 1
    %v3173 = vor.u32 %v3168, %v3172
    %v3175 = vshll.u32 %v3051, 16
    %v3177 = vrot.slane %v3175, 1
    %v3178 = vsel %vm3063, %v3173, %v3177
    %v3179 = vshrl.u32 %v3051, 16
    %v3181 = vor.u32 %v3179, %v3177
    %v3183 = vshll.u32 %v3052, 16
    %v3185 = vrot.slane %v3183, 1
    %v3186 = vsel %vm3063, %v3181, %v3185
    %v3187 = vshrl.u32 %v3052, 16
    %v3189 = vor.u32 %v3187, %v3185
    %v3191 = vshll.u32 %v3053, 16
    %v3193 = vrot.slane %v3191, 1
    %v3194 = vsel %vm3063, %v3189, %v3193
    %v3195 = vshrl.u32 %v3053, 16
    %v3197 = vor.u32 %v3195, %v3193
    %v3199 = vshll.u32 %v3054, 16
    %v3201 = vrot.slane %v3199, 1
    %v3202 = vsel %vm3063, %v3197, %v3201
    %v3203 = vshrl.u32 %v3054, 16
    %v3205 = vor.u32 %v3203, %v3201
    %v3207 = vshll.u32 %v3055, 16
    %v3209 = vrot.slane %v3207, 1
    %v3210 = vsel %vm3063, %v3205, %v3209
    %v3211 = vshrl.u32 %v3055, 16
    %v3213 = vor.u32 %v3211, %v3209
    %v3215 = vshll.u32 %v3056, 16
    %v3217 = vrot.slane %v3215, 1
    %v3218 = vsel %vm3063, %v3213, %v3217
    %v3219 = vshrl.u32 %v3056, 16
    %v3221 = vor.u32 %v3219, %v3217
    %v3223 = vshll.u32 %v3057, 16
    %v3225 = vrot.slane %v3223, 1
    %v3226 = vsel %vm3063, %v3221, %v3225
    %v3227 = vshrl.u32 %v3057, 16
    %v3229 = vor.u32 %v3227, %v3225
    %v3231 = vshll.u32 %v3058, 16
    %v3233 = vrot.slane %v3231, 1
    %v3234 = vsel %vm3063, %v3229, %v3233
    %v3235 = vshrl.u32 %v3058, 16
    %v3237 = vor.u32 %v3235, %v3233
    %v3239 = vshll.u32 %v3059, 16
    %v3241 = vrot.slane %v3239, 1
    %v3242 = vsel %vm3063, %v3237, %v3241
    %v3243 = vshrl.u32 %v3059, 16
    %v3245 = vor.u32 %v3243, %v3241
    %v3247 = vshll.u32 %v3060, 16
    %v3249 = vrot.slane %v3247, 1
    %v3250 = vsel %vm3063, %v3245, %v3249
    %v3251 = vshrl.u32 %v3060, 16
    %v3253 = vor.u32 %v3251, %v3249
    %v3255 = vshll.u32 %v3061, 16
    %v3257 = vrot.slane %v3255, 1
    %v3258 = vsel %vm3063, %v3253, %v3257
    %v3259 = vshrl.u32 %v3061, 16
    %v3261 = vor.u32 %v3259, %v3257
    %v3263 = vshll.u32 %v3062, 16
    %v3265 = vrot.slane %v3263, 1
    %v3266 = vsel %vm3063, %v3261, %v3265
    %v3267 = vshrl.u32 %v3062, 16
    %v3269 = vor.u32 %v3267, %v3265
    %3270 = vrot.lane.b32.xlu0 %v3075, 64
    %v3271 = vpop.permute.xlu0 %3270
    %3272 = vrot.lane.b32.xlu0 %v3083, 64
    %v3273 = vpop.permute.xlu0 %3272
    %3274 = vrot.lane.b32.xlu0 %v3091, 64
    %v3275 = vpop.permute.xlu0 %3274
    %3276 = vrot.lane.b32.xlu0 %v3099, 64
    %v3277 = vpop.permute.xlu0 %3276
    %3278 = vrot.lane.b32.xlu0 %v3107, 64
    %v3279 = vpop.permute.xlu0 %3278
    %3280 = vrot.lane.b32.xlu0 %v3115, 64
    %v3281 = vpop.permute.xlu0 %3280
    %3282 = vrot.lane.b32.xlu0 %v3123, 64
    %v3283 = vpop.permute.xlu0 %3282
    %3284 = vrot.lane.b32.xlu0 %v3131, 64
    %v3285 = vpop.permute.xlu0 %3284
    %3286 = vrot.lane.b32.xlu0 %v3139, 64
    %v3287 = vpop.permute.xlu0 %3286
    %3288 = vrot.lane.b32.xlu0 %v3147, 64
    %v3289 = vpop.permute.xlu0 %3288
    %3290 = vrot.lane.b32.xlu0 %v3155, 64
    %v3291 = vpop.permute.xlu0 %3290
    %3292 = vrot.lane.b32.xlu0 %v3163, 64
    %v3293 = vpop.permute.xlu0 %3292
    %3294 = vrot.lane.b32.xlu0 %v3166, 64
    %v3295 = vpop.permute.xlu0 %3294
    %3296 = vrot.lane.b32.xlu0 %v3178, 64
    %v3297 = vpop.permute.xlu0 %3296
    %3298 = vrot.lane.b32.xlu0 %v3186, 64
    %v3299 = vpop.permute.xlu0 %3298
    %3300 = vrot.lane.b32.xlu0 %v3194, 64
    %v3301 = vpop.permute.xlu0 %3300
    %3302 = vrot.lane.b32.xlu0 %v3202, 64
    %v3303 = vpop.permute.xlu0 %3302
    %3304 = vrot.lane.b32.xlu0 %v3210, 64
    %v3305 = vpop.permute.xlu0 %3304
    %3306 = vrot.lane.b32.xlu0 %v3218, 64
    %v3307 = vpop.permute.xlu0 %3306
    %3308 = vrot.lane.b32.xlu0 %v3226, 64
    %v3309 = vpop.permute.xlu0 %3308
    %3310 = vrot.lane.b32.xlu0 %v3234, 64
    %v3311 = vpop.permute.xlu0 %3310
    %3312 = vrot.lane.b32.xlu0 %v3242, 64
    %v3313 = vpop.permute.xlu0 %3312
    %3314 = vrot.lane.b32.xlu0 %v3250, 64
    %v3315 = vpop.permute.xlu0 %3314
    %3316 = vrot.lane.b32.xlu0 %v3258, 64
    %v3317 = vpop.permute.xlu0 %3316
    %3318 = vrot.lane.b32.xlu0 %v3266, 64
    %v3319 = vpop.permute.xlu0 %3318
    %3320 = vrot.lane.b32.xlu0 %v3269, 64
    %v3321 = vpop.permute.xlu0 %3320
    %vm3348 = vcmask 1048064
    %3349 = vst.msk [vmem:[#allocation5] sm:$0xff] %vm3348, %v3271
    %3350 = vst.msk [vmem:[#allocation5 + $0x28] sm:$0xff] %vm3348, %v3273
    %3351 = vst.msk [vmem:[#allocation5 + $0x50] sm:$0xff] %vm3348, %v3275
    %3352 = vst.msk [vmem:[#allocation5 + $0x78] sm:$0xff] %vm3348, %v3277
    %3353 = vst.msk [vmem:[#allocation5 + $0xa0] sm:$0xff] %vm3348, %v3279
    %3354 = vst.msk [vmem:[#allocation5 + $0xc8] sm:$0xff] %vm3348, %v3281
    %3355 = vst.msk [vmem:[#allocation5 + $0xf0] sm:$0xff] %vm3348, %v3283
    %3356 = vst.msk [vmem:[#allocation5 + $0x118] sm:$0xff] %vm3348, %v3285
    %3357 = vst.msk [vmem:[#allocation5 + $0x140] sm:$0xff] %vm3348, %v3287
    %3358 = vst.msk [vmem:[#allocation5 + $0x168] sm:$0xff] %vm3348, %v3289
    %3359 = vst.msk [vmem:[#allocation5 + $0x190] sm:$0xff] %vm3348, %v3291
    %3360 = vst.msk [vmem:[#allocation5 + $0x1b8] sm:$0xff] %vm3348, %v3293
    %vm3361 = vcmask 1047040
    %vm3362 = vmand %vm3361, %vm3017
    %v3363 = vld [vmem:[#allocation5 + $0x1e0] sm:$0x7f]
    %v3364 = vsel %vm3362, %v3295, %v3363
    %3365 = vst [vmem:[#allocation5 + $0x1e0] sm:$0x7f] %v3364
    %3366 = vst.msk [vmem:[#allocation5 + $0x208] sm:$0xff] %vm3348, %v3297
    %3367 = vst.msk [vmem:[#allocation5 + $0x230] sm:$0xff] %vm3348, %v3299
    %3368 = vst.msk [vmem:[#allocation5 + $0x258] sm:$0xff] %vm3348, %v3301
    %3369 = vst.msk [vmem:[#allocation5 + $0x280] sm:$0xff] %vm3348, %v3303
    %3370 = vst.msk [vmem:[#allocation5 + $0x2a8] sm:$0xff] %vm3348, %v3305
    %3371 = vst.msk [vmem:[#allocation5 + $0x2d0] sm:$0xff] %vm3348, %v3307
    %3372 = vst.msk [vmem:[#allocation5 + $0x2f8] sm:$0xff] %vm3348, %v3309
    %3373 = vst.msk [vmem:[#allocation5 + $0x320] sm:$0xff] %vm3348, %v3311
    %3374 = vst.msk [vmem:[#allocation5 + $0x348] sm:$0xff] %vm3348, %v3313
    %3375 = vst.msk [vmem:[#allocation5 + $0x370] sm:$0xff] %vm3348, %v3315
    %3376 = vst.msk [vmem:[#allocation5 + $0x398] sm:$0xff] %vm3348, %v3317
    %3377 = vst.msk [vmem:[#allocation5 + $0x3c0] sm:$0xff] %vm3348, %v3319
    %v3378 = vld [vmem:[#allocation5 + $0x3e8] sm:$0x7f]
    %v3379 = vsel %vm3362, %v3321, %v3378
    %3380 = vst [vmem:[#allocation5 + $0x3e8] sm:$0x7f] %v3379
    %v3381 = vld [vmem:[#allocation2] sm:$0xfe]
    %v3382 = vld [vmem:[#allocation2 + $0x8] sm:$0xff]
    %v3383 = vld [vmem:[#allocation2 + $0x10] sm:$0xff]
    %v3384 = vld [vmem:[#allocation2 + $0x18] sm:$0xff]
    %v3385 = vld [vmem:[#allocation2 + $0x20] sm:$0xff]
    %v3386 = vld [vmem:[#allocation2 + $0x28] sm:$0xff]
    %v3387 = vld [vmem:[#allocation2 + $0x30] sm:$0xff]
    %v3388 = vld [vmem:[#allocation2 + $0x38] sm:$0xff]
    %v3389 = vld [vmem:[#allocation2 + $0x40] sm:$0xff]
    %v3390 = vld [vmem:[#allocation2 + $0x48] sm:$0xff]
    %v3391 = vld [vmem:[#allocation2 + $0x50] sm:$0xff]
    %v3392 = vld [vmem:[#allocation2 + $0x58] sm:$0xff]
    %v3393 = vld [vmem:[#allocation2 + $0x60] sm:$0xff]
    %v3394 = vld [vmem:[#allocation2 + $0x78] sm:$0xfe]
    %v3395 = vld [vmem:[#allocation2 + $0x80] sm:$0xff]
    %v3396 = vld [vmem:[#allocation2 + $0x88] sm:$0xff]
    %v3397 = vld [vmem:[#allocation2 + $0x90] sm:$0xff]
    %v3398 = vld [vmem:[#allocation2 + $0x98] sm:$0xff]
    %v3399 = vld [vmem:[#allocation2 + $0xa0] sm:$0xff]
    %v3400 = vld [vmem:[#allocation2 + $0xa8] sm:$0xff]
    %v3401 = vld [vmem:[#allocation2 + $0xb0] sm:$0xff]
    %v3402 = vld [vmem:[#allocation2 + $0xb8] sm:$0xff]
    %v3403 = vld [vmem:[#allocation2 + $0xc0] sm:$0xff]
    %v3404 = vld [vmem:[#allocation2 + $0xc8] sm:$0xff]
    %v3405 = vld [vmem:[#allocation2 + $0xd0] sm:$0xff]
    %v3406 = vld [vmem:[#allocation2 + $0xd8] sm:$0xff]
    %vm3433 = vcmask 1046528
    %v3434 = vrot.slane %v3381, 1
    %v3435 = vrot.slane %v3382, 1
    %v3436 = vsel %vm3433, %v3434, %v3435
    %v3437 = vrot.slane %v3383, 1
    %v3438 = vsel %vm3433, %v3435, %v3437
    %v3439 = vrot.slane %v3384, 1
    %v3440 = vsel %vm3433, %v3437, %v3439
    %v3441 = vrot.slane %v3385, 1
    %v3442 = vsel %vm3433, %v3439, %v3441
    %v3443 = vrot.slane %v3386, 1
    %v3444 = vsel %vm3433, %v3441, %v3443
    %v3445 = vrot.slane %v3387, 1
    %v3446 = vsel %vm3433, %v3443, %v3445
    %v3447 = vrot.slane %v3388, 1
    %v3448 = vsel %vm3433, %v3445, %v3447
    %v3449 = vrot.slane %v3389, 1
    %v3450 = vsel %vm3433, %v3447, %v3449
    %v3451 = vrot.slane %v3390, 1
    %v3452 = vsel %vm3433, %v3449, %v3451
    %v3453 = vrot.slane %v3391, 1
    %v3454 = vsel %vm3433, %v3451, %v3453
    %v3455 = vrot.slane %v3392, 1
    %v3456 = vsel %vm3433, %v3453, %v3455
    %v3457 = vrot.slane %v3393, 1
    %v3458 = vsel %vm3433, %v3455, %v3457
    %v3459 = vrot.slane %v3394, 1
    %v3460 = vrot.slane %v3395, 1
    %v3461 = vsel %vm3433, %v3459, %v3460
    %v3462 = vrot.slane %v3396, 1
    %v3463 = vsel %vm3433, %v3460, %v3462
    %v3464 = vrot.slane %v3397, 1
    %v3465 = vsel %vm3433, %v3462, %v3464
    %v3466 = vrot.slane %v3398, 1
    %v3467 = vsel %vm3433, %v3464, %v3466
    %v3468 = vrot.slane %v3399, 1
    %v3469 = vsel %vm3433, %v3466, %v3468
    %v3470 = vrot.slane %v3400, 1
    %v3471 = vsel %vm3433, %v3468, %v3470
    %v3472 = vrot.slane %v3401, 1
    %v3473 = vsel %vm3433, %v3470, %v3472
    %v3474 = vrot.slane %v3402, 1
    %v3475 = vsel %vm3433, %v3472, %v3474
    %v3476 = vrot.slane %v3403, 1
    %v3477 = vsel %vm3433, %v3474, %v3476
    %v3478 = vrot.slane %v3404, 1
    %v3479 = vsel %vm3433, %v3476, %v3478
    %v3480 = vrot.slane %v3405, 1
    %v3481 = vsel %vm3433, %v3478, %v3480
    %v3482 = vrot.slane %v3406, 1
    %v3483 = vsel %vm3433, %v3480, %v3482
    %3510 = vst.msk [vmem:[#allocation5 + $0x8] sm:$0xff] %vm2947, %v3436
    %3511 = vst.msk [vmem:[#allocation5 + $0x30] sm:$0xff] %vm2947, %v3438
    %3512 = vst.msk [vmem:[#allocation5 + $0x58] sm:$0xff] %vm2947, %v3440
    %3513 = vst.msk [vmem:[#allocation5 + $0x80] sm:$0xff] %vm2947, %v3442
    %3514 = vst.msk [vmem:[#allocation5 + $0xa8] sm:$0xff] %vm2947, %v3444
    %3515 = vst.msk [vmem:[#allocation5 + $0xd0] sm:$0xff] %vm2947, %v3446
    %3516 = vst.msk [vmem:[#allocation5 + $0xf8] sm:$0xff] %vm2947, %v3448
    %3517 = vst.msk [vmem:[#allocation5 + $0x120] sm:$0xff] %vm2947, %v3450
    %3518 = vst.msk [vmem:[#allocation5 + $0x148] sm:$0xff] %vm2947, %v3452
    %3519 = vst.msk [vmem:[#allocation5 + $0x170] sm:$0xff] %vm2947, %v3454
    %3520 = vst.msk [vmem:[#allocation5 + $0x198] sm:$0xff] %vm2947, %v3456
    %3521 = vst.msk [vmem:[#allocation5 + $0x1c0] sm:$0xff] %vm2947, %v3458
    %v3522 = vld [vmem:[#allocation5 + $0x1e8] sm:$0x7f]
    %v3523 = vsel %vm3018, %v3457, %v3522
    %3524 = vst [vmem:[#allocation5 + $0x1e8] sm:$0x7f] %v3523
    %3525 = vst.msk [vmem:[#allocation5 + $0x210] sm:$0xff] %vm2947, %v3461
    %3526 = vst.msk [vmem:[#allocation5 + $0x238] sm:$0xff] %vm2947, %v3463
    %3527 = vst.msk [vmem:[#allocation5 + $0x260] sm:$0xff] %vm2947, %v3465
    %3528 = vst.msk [vmem:[#allocation5 + $0x288] sm:$0xff] %vm2947, %v3467
    %3529 = vst.msk [vmem:[#allocation5 + $0x2b0] sm:$0xff] %vm2947, %v3469
    %3530 = vst.msk [vmem:[#allocation5 + $0x2d8] sm:$0xff] %vm2947, %v3471
    %3531 = vst.msk [vmem:[#allocation5 + $0x300] sm:$0xff] %vm2947, %v3473
    %3532 = vst.msk [vmem:[#allocation5 + $0x328] sm:$0xff] %vm2947, %v3475
    %3533 = vst.msk [vmem:[#allocation5 + $0x350] sm:$0xff] %vm2947, %v3477
    %3534 = vst.msk [vmem:[#allocation5 + $0x378] sm:$0xff] %vm2947, %v3479
    %3535 = vst.msk [vmem:[#allocation5 + $0x3a0] sm:$0xff] %vm2947, %v3481
    %3536 = vst.msk [vmem:[#allocation5 + $0x3c8] sm:$0xff] %vm2947, %v3483
    %v3537 = vld [vmem:[#allocation5 + $0x3f0] sm:$0x7f]
    %v3538 = vsel %vm3018, %v3482, %v3537
    %3539 = vst [vmem:[#allocation5 + $0x3f0] sm:$0x7f] %v3538
    %v3540 = vld [vmem:[#allocation2 + $0x8] sm:$0xff]
    %v3541 = vld [vmem:[#allocation2 + $0x10] sm:$0xff]
    %v3542 = vld [vmem:[#allocation2 + $0x18] sm:$0xff]
    %v3543 = vld [vmem:[#allocation2 + $0x20] sm:$0xff]
    %v3544 = vld [vmem:[#allocation2 + $0x28] sm:$0xff]
    %v3545 = vld [vmem:[#allocation2 + $0x30] sm:$0xff]
    %v3546 = vld [vmem:[#allocation2 + $0x38] sm:$0xff]
    %v3547 = vld [vmem:[#allocation2 + $0x40] sm:$0xff]
    %v3548 = vld [vmem:[#allocation2 + $0x48] sm:$0xff]
    %v3549 = vld [vmem:[#allocation2 + $0x50] sm:$0xff]
    %v3550 = vld [vmem:[#allocation2 + $0x58] sm:$0xff]
    %v3551 = vld [vmem:[#allocation2 + $0x60] sm:$0xff]
    %v3552 = vld [vmem:[#allocation2 + $0x68] sm:$0x7f]
    %v3553 = vld [vmem:[#allocation2 + $0x80] sm:$0xff]
    %v3554 = vld [vmem:[#allocation2 + $0x88] sm:$0xff]
    %v3555 = vld [vmem:[#allocation2 + $0x90] sm:$0xff]
    %v3556 = vld [vmem:[#allocation2 + $0x98] sm:$0xff]
    %v3557 = vld [vmem:[#allocation2 + $0xa0] sm:$0xff]
    %v3558 = vld [vmem:[#allocation2 + $0xa8] sm:$0xff]
    %v3559 = vld [vmem:[#allocation2 + $0xb0] sm:$0xff]
    %v3560 = vld [vmem:[#allocation2 + $0xb8] sm:$0xff]
    %v3561 = vld [vmem:[#allocation2 + $0xc0] sm:$0xff]
    %v3562 = vld [vmem:[#allocation2 + $0xc8] sm:$0xff]
    %v3563 = vld [vmem:[#allocation2 + $0xd0] sm:$0xff]
    %v3564 = vld [vmem:[#allocation2 + $0xd8] sm:$0xff]
    %v3565 = vld [vmem:[#allocation2 + $0xe0] sm:$0x7f]
    %3592 = vrot.lane.b32.xlu0 %v3540, 64
    %v3593 = vpop.permute.xlu0 %3592
    %3594 = vrot.lane.b32.xlu0 %v3541, 64
    %v3595 = vpop.permute.xlu0 %3594
    %3596 = vrot.lane.b32.xlu0 %v3542, 64
    %v3597 = vpop.permute.xlu0 %3596
    %3598 = vrot.lane.b32.xlu0 %v3543, 64
    %v3599 = vpop.permute.xlu0 %3598
    %3600 = vrot.lane.b32.xlu0 %v3544, 64
    %v3601 = vpop.permute.xlu0 %3600
    %3602 = vrot.lane.b32.xlu0 %v3545, 64
    %v3603 = vpop.permute.xlu0 %3602
    %3604 = vrot.lane.b32.xlu0 %v3546, 64
    %v3605 = vpop.permute.xlu0 %3604
    %3606 = vrot.lane.b32.xlu0 %v3547, 64
    %v3607 = vpop.permute.xlu0 %3606
    %3608 = vrot.lane.b32.xlu0 %v3548, 64
    %v3609 = vpop.permute.xlu0 %3608
    %3610 = vrot.lane.b32.xlu0 %v3549, 64
    %v3611 = vpop.permute.xlu0 %3610
    %3612 = vrot.lane.b32.xlu0 %v3550, 64
    %v3613 = vpop.permute.xlu0 %3612
    %3614 = vrot.lane.b32.xlu0 %v3551, 64
    %v3615 = vpop.permute.xlu0 %3614
    %3616 = vrot.lane.b32.xlu0 %v3552, 64
    %v3617 = vpop.permute.xlu0 %3616
    %3618 = vrot.lane.b32.xlu0 %v3553, 64
    %v3619 = vpop.permute.xlu0 %3618
    %3620 = vrot.lane.b32.xlu0 %v3554, 64
    %v3621 = vpop.permute.xlu0 %3620
    %3622 = vrot.lane.b32.xlu0 %v3555, 64
    %v3623 = vpop.permute.xlu0 %3622
    %3624 = vrot.lane.b32.xlu0 %v3556, 64
    %v3625 = vpop.permute.xlu0 %3624
    %3626 = vrot.lane.b32.xlu0 %v3557, 64
    %v3627 = vpop.permute.xlu0 %3626
    %3628 = vrot.lane.b32.xlu0 %v3558, 64
    %v3629 = vpop.permute.xlu0 %3628
    %3630 = vrot.lane.b32.xlu0 %v3559, 64
    %v3631 = vpop.permute.xlu0 %3630
    %3632 = vrot.lane.b32.xlu0 %v3560, 64
    %v3633 = vpop.permute.xlu0 %3632
    %3634 = vrot.lane.b32.xlu0 %v3561, 64
    %v3635 = vpop.permute.xlu0 %3634
    %3636 = vrot.lane.b32.xlu0 %v3562, 64
    %v3637 = vpop.permute.xlu0 %3636
    %3638 = vrot.lane.b32.xlu0 %v3563, 64
    %v3639 = vpop.permute.xlu0 %3638
    %3640 = vrot.lane.b32.xlu0 %v3564, 64
    %v3641 = vpop.permute.xlu0 %3640
    %3642 = vrot.lane.b32.xlu0 %v3565, 64
    %v3643 = vpop.permute.xlu0 %3642
    %3670 = vst.msk [vmem:[#allocation5 + $0x8] sm:$0xff] %vm3348, %v3593
    %3671 = vst.msk [vmem:[#allocation5 + $0x30] sm:$0xff] %vm3348, %v3595
    %3672 = vst.msk [vmem:[#allocation5 + $0x58] sm:$0xff] %vm3348, %v3597
    %3673 = vst.msk [vmem:[#allocation5 + $0x80] sm:$0xff] %vm3348, %v3599
    %3674 = vst.msk [vmem:[#allocation5 + $0xa8] sm:$0xff] %vm3348, %v3601
    %3675 = vst.msk [vmem:[#allocation5 + $0xd0] sm:$0xff] %vm3348, %v3603
    %3676 = vst.msk [vmem:[#allocation5 + $0xf8] sm:$0xff] %vm3348, %v3605
    %3677 = vst.msk [vmem:[#allocation5 + $0x120] sm:$0xff] %vm3348, %v3607
    %3678 = vst.msk [vmem:[#allocation5 + $0x148] sm:$0xff] %vm3348, %v3609
    %3679 = vst.msk [vmem:[#allocation5 + $0x170] sm:$0xff] %vm3348, %v3611
    %3680 = vst.msk [vmem:[#allocation5 + $0x198] sm:$0xff] %vm3348, %v3613
    %3681 = vst.msk [vmem:[#allocation5 + $0x1c0] sm:$0xff] %vm3348, %v3615
    %v3682 = vld [vmem:[#allocation5 + $0x1e8] sm:$0x7f]
    %v3683 = vsel %vm3362, %v3617, %v3682
    %3684 = vst [vmem:[#allocation5 + $0x1e8] sm:$0x7f] %v3683
    %3685 = vst.msk [vmem:[#allocation5 + $0x210] sm:$0xff] %vm3348, %v3619
    %3686 = vst.msk [vmem:[#allocation5 + $0x238] sm:$0xff] %vm3348, %v3621
    %3687 = vst.msk [vmem:[#allocation5 + $0x260] sm:$0xff] %vm3348, %v3623
    %3688 = vst.msk [vmem:[#allocation5 + $0x288] sm:$0xff] %vm3348, %v3625
    %3689 = vst.msk [vmem:[#allocation5 + $0x2b0] sm:$0xff] %vm3348, %v3627
    %3690 = vst.msk [vmem:[#allocation5 + $0x2d8] sm:$0xff] %vm3348, %v3629
    %3691 = vst.msk [vmem:[#allocation5 + $0x300] sm:$0xff] %vm3348, %v3631
    %3692 = vst.msk [vmem:[#allocation5 + $0x328] sm:$0xff] %vm3348, %v3633
    %3693 = vst.msk [vmem:[#allocation5 + $0x350] sm:$0xff] %vm3348, %v3635
    %3694 = vst.msk [vmem:[#allocation5 + $0x378] sm:$0xff] %vm3348, %v3637
    %3695 = vst.msk [vmem:[#allocation5 + $0x3a0] sm:$0xff] %vm3348, %v3639
    %3696 = vst.msk [vmem:[#allocation5 + $0x3c8] sm:$0xff] %vm3348, %v3641
    %v3697 = vld [vmem:[#allocation5 + $0x3f0] sm:$0x7f]
    %v3698 = vsel %vm3362, %v3643, %v3697
    %3699 = vst [vmem:[#allocation5 + $0x3f0] sm:$0x7f] %v3698
    %v3700 = vld [vmem:[#allocation2 + $0x8] sm:$0xff]
    %v3701 = vld [vmem:[#allocation2 + $0x10] sm:$0xff]
    %v3702 = vld [vmem:[#allocation2 + $0x18] sm:$0xff]
    %v3703 = vld [vmem:[#allocation2 + $0x20] sm:$0xff]
    %v3704 = vld [vmem:[#allocation2 + $0x28] sm:$0xff]
    %v3705 = vld [vmem:[#allocation2 + $0x30] sm:$0xff]
    %v3706 = vld [vmem:[#allocation2 + $0x38] sm:$0xff]
    %v3707 = vld [vmem:[#allocation2 + $0x40] sm:$0xff]
    %v3708 = vld [vmem:[#allocation2 + $0x48] sm:$0xff]
    %v3709 = vld [vmem:[#allocation2 + $0x50] sm:$0xff]
    %v3710 = vld [vmem:[#allocation2 + $0x58] sm:$0xff]
    %v3711 = vld [vmem:[#allocation2 + $0x60] sm:$0xff]
    %v3712 = vld [vmem:[#allocation2 + $0x68] sm:$0x7f]
    %v3713 = vld [vmem:[#allocation2 + $0x80] sm:$0xff]
    %v3714 = vld [vmem:[#allocation2 + $0x88] sm:$0xff]
    %v3715 = vld [vmem:[#allocation2 + $0x90] sm:$0xff]
    %v3716 = vld [vmem:[#allocation2 + $0x98] sm:$0xff]
    %v3717 = vld [vmem:[#allocation2 + $0xa0] sm:$0xff]
    %v3718 = vld [vmem:[#allocation2 + $0xa8] sm:$0xff]
    %v3719 = vld [vmem:[#allocation2 + $0xb0] sm:$0xff]
    %v3720 = vld [vmem:[#allocation2 + $0xb8] sm:$0xff]
    %v3721 = vld [vmem:[#allocation2 + $0xc0] sm:$0xff]
    %v3722 = vld [vmem:[#allocation2 + $0xc8] sm:$0xff]
    %v3723 = vld [vmem:[#allocation2 + $0xd0] sm:$0xff]
    %v3724 = vld [vmem:[#allocation2 + $0xd8] sm:$0xff]
    %v3725 = vld [vmem:[#allocation2 + $0xe0] sm:$0x7f]
    %v3727 = vshrl.u32 %v3700, 16
    %v3729 = vshll.u32 %v3700, 16
    %v3731 = vrot.slane %v3729, 1
    %v3732 = vor.u32 %v3727, %v3731
    %v3734 = vshll.u32 %v3701, 16
    %v3736 = vrot.slane %v3734, 1
    %v3737 = vsel %vm3063, %v3732, %v3736
    %v3738 = vshrl.u32 %v3701, 16
    %v3740 = vor.u32 %v3738, %v3736
    %v3742 = vshll.u32 %v3702, 16
    %v3744 = vrot.slane %v3742, 1
    %v3745 = vsel %vm3063, %v3740, %v3744
    %v3746 = vshrl.u32 %v3702, 16
    %v3748 = vor.u32 %v3746, %v3744
    %v3750 = vshll.u32 %v3703, 16
    %v3752 = vrot.slane %v3750, 1
    %v3753 = vsel %vm3063, %v3748, %v3752
    %v3754 = vshrl.u32 %v3703, 16
    %v3756 = vor.u32 %v3754, %v3752
    %v3758 = vshll.u32 %v3704, 16
    %v3760 = vrot.slane %v3758, 1
    %v3761 = vsel %vm3063, %v3756, %v3760
    %v3762 = vshrl.u32 %v3704, 16
    %v3764 = vor.u32 %v3762, %v3760
    %v3766 = vshll.u32 %v3705, 16
    %v3768 = vrot.slane %v3766, 1
    %v3769 = vsel %vm3063, %v3764, %v3768
    %v3770 = vshrl.u32 %v3705, 16
    %v3772 = vor.u32 %v3770, %v3768
    %v3774 = vshll.u32 %v3706, 16
    %v3776 = vrot.slane %v3774, 1
    %v3777 = vsel %vm3063, %v3772, %v3776
    %v3778 = vshrl.u32 %v3706, 16
    %v3780 = vor.u32 %v3778, %v3776
    %v3782 = vshll.u32 %v3707, 16
    %v3784 = vrot.slane %v3782, 1
    %v3785 = vsel %vm3063, %v3780, %v3784
    %v3786 = vshrl.u32 %v3707, 16
    %v3788 = vor.u32 %v3786, %v3784
    %v3790 = vshll.u32 %v3708, 16
    %v3792 = vrot.slane %v3790, 1
    %v3793 = vsel %vm3063, %v3788, %v3792
    %v3794 = vshrl.u32 %v3708, 16
    %v3796 = vor.u32 %v3794, %v3792
    %v3798 = vshll.u32 %v3709, 16
    %v3800 = vrot.slane %v3798, 1
    %v3801 = vsel %vm3063, %v3796, %v3800
    %v3802 = vshrl.u32 %v3709, 16
    %v3804 = vor.u32 %v3802, %v3800
    %v3806 = vshll.u32 %v3710, 16
    %v3808 = vrot.slane %v3806, 1
    %v3809 = vsel %vm3063, %v3804, %v3808
    %v3810 = vshrl.u32 %v3710, 16
    %v3812 = vor.u32 %v3810, %v3808
    %v3814 = vshll.u32 %v3711, 16
    %v3816 = vrot.slane %v3814, 1
    %v3817 = vsel %vm3063, %v3812, %v3816
    %v3818 = vshrl.u32 %v3711, 16
    %v3820 = vor.u32 %v3818, %v3816
    %v3822 = vshll.u32 %v3712, 16
    %v3824 = vrot.slane %v3822, 1
    %v3825 = vsel %vm3063, %v3820, %v3824
    %v3826 = vshrl.u32 %v3712, 16
    %v3828 = vor.u32 %v3826, %v3824
    %v3830 = vshrl.u32 %v3713, 16
    %v3832 = vshll.u32 %v3713, 16
    %v3834 = vrot.slane %v3832, 1
    %v3835 = vor.u32 %v3830, %v3834
    %v3837 = vshll.u32 %v3714, 16
    %v3839 = vrot.slane %v3837, 1
    %v3840 = vsel %vm3063, %v3835, %v3839
    %v3841 = vshrl.u32 %v3714, 16
    %v3843 = vor.u32 %v3841, %v3839
    %v3845 = vshll.u32 %v3715, 16
    %v3847 = vrot.slane %v3845, 1
    %v3848 = vsel %vm3063, %v3843, %v3847
    %v3849 = vshrl.u32 %v3715, 16
    %v3851 = vor.u32 %v3849, %v3847
    %v3853 = vshll.u32 %v3716, 16
    %v3855 = vrot.slane %v3853, 1
    %v3856 = vsel %vm3063, %v3851, %v3855
    %v3857 = vshrl.u32 %v3716, 16
    %v3859 = vor.u32 %v3857, %v3855
    %v3861 = vshll.u32 %v3717, 16
    %v3863 = vrot.slane %v3861, 1
    %v3864 = vsel %vm3063, %v3859, %v3863
    %v3865 = vshrl.u32 %v3717, 16
    %v3867 = vor.u32 %v3865, %v3863
    %v3869 = vshll.u32 %v3718, 16
    %v3871 = vrot.slane %v3869, 1
    %v3872 = vsel %vm3063, %v3867, %v3871
    %v3873 = vshrl.u32 %v3718, 16
    %v3875 = vor.u32 %v3873, %v3871
    %v3877 = vshll.u32 %v3719, 16
    %v3879 = vrot.slane %v3877, 1
    %v3880 = vsel %vm3063, %v3875, %v3879
    %v3881 = vshrl.u32 %v3719, 16
    %v3883 = vor.u32 %v3881, %v3879
    %v3885 = vshll.u32 %v3720, 16
    %v3887 = vrot.slane %v3885, 1
    %v3888 = vsel %vm3063, %v3883, %v3887
    %v3889 = vshrl.u32 %v3720, 16
    %v3891 = vor.u32 %v3889, %v3887
    %v3893 = vshll.u32 %v3721, 16
    %v3895 = vrot.slane %v3893, 1
    %v3896 = vsel %vm3063, %v3891, %v3895
    %v3897 = vshrl.u32 %v3721, 16
    %v3899 = vor.u32 %v3897, %v3895
    %v3901 = vshll.u32 %v3722, 16
    %v3903 = vrot.slane %v3901, 1
    %v3904 = vsel %vm3063, %v3899, %v3903
    %v3905 = vshrl.u32 %v3722, 16
    %v3907 = vor.u32 %v3905, %v3903
    %v3909 = vshll.u32 %v3723, 16
    %v3911 = vrot.slane %v3909, 1
    %v3912 = vsel %vm3063, %v3907, %v3911
    %v3913 = vshrl.u32 %v3723, 16
    %v3915 = vor.u32 %v3913, %v3911
    %v3917 = vshll.u32 %v3724, 16
    %v3919 = vrot.slane %v3917, 1
    %v3920 = vsel %vm3063, %v3915, %v3919
    %v3921 = vshrl.u32 %v3724, 16
    %v3923 = vor.u32 %v3921, %v3919
    %v3925 = vshll.u32 %v3725, 16
    %v3927 = vrot.slane %v3925, 1
    %v3928 = vsel %vm3063, %v3923, %v3927
    %v3929 = vshrl.u32 %v3725, 16
    %v3931 = vor.u32 %v3929, %v3927
    %3958 = vst.msk [vmem:[#allocation5 + $0x10] sm:$0xff] %vm2947, %v3737
    %3959 = vst.msk [vmem:[#allocation5 + $0x38] sm:$0xff] %vm2947, %v3745
    %3960 = vst.msk [vmem:[#allocation5 + $0x60] sm:$0xff] %vm2947, %v3753
    %3961 = vst.msk [vmem:[#allocation5 + $0x88] sm:$0xff] %vm2947, %v3761
    %3962 = vst.msk [vmem:[#allocation5 + $0xb0] sm:$0xff] %vm2947, %v3769
    %3963 = vst.msk [vmem:[#allocation5 + $0xd8] sm:$0xff] %vm2947, %v3777
    %3964 = vst.msk [vmem:[#allocation5 + $0x100] sm:$0xff] %vm2947, %v3785
    %3965 = vst.msk [vmem:[#allocation5 + $0x128] sm:$0xff] %vm2947, %v3793
    %3966 = vst.msk [vmem:[#allocation5 + $0x150] sm:$0xff] %vm2947, %v3801
    %3967 = vst.msk [vmem:[#allocation5 + $0x178] sm:$0xff] %vm2947, %v3809
    %3968 = vst.msk [vmem:[#allocation5 + $0x1a0] sm:$0xff] %vm2947, %v3817
    %3969 = vst.msk [vmem:[#allocation5 + $0x1c8] sm:$0xff] %vm2947, %v3825
    %v3970 = vld [vmem:[#allocation5 + $0x1f0] sm:$0x7f]
    %v3971 = vsel %vm3018, %v3828, %v3970
    %3972 = vst [vmem:[#allocation5 + $0x1f0] sm:$0x7f] %v3971
    %3973 = vst.msk [vmem:[#allocation5 + $0x218] sm:$0xff] %vm2947, %v3840
    %3974 = vst.msk [vmem:[#allocation5 + $0x240] sm:$0xff] %vm2947, %v3848
    %3975 = vst.msk [vmem:[#allocation5 + $0x268] sm:$0xff] %vm2947, %v3856
    %3976 = vst.msk [vmem:[#allocation5 + $0x290] sm:$0xff] %vm2947, %v3864
    %3977 = vst.msk [vmem:[#allocation5 + $0x2b8] sm:$0xff] %vm2947, %v3872
    %3978 = vst.msk [vmem:[#allocation5 + $0x2e0] sm:$0xff] %vm2947, %v3880
    %3979 = vst.msk [vmem:[#allocation5 + $0x308] sm:$0xff] %vm2947, %v3888
    %3980 = vst.msk [vmem:[#allocation5 + $0x330] sm:$0xff] %vm2947, %v3896
    %3981 = vst.msk [vmem:[#allocation5 + $0x358] sm:$0xff] %vm2947, %v3904
    %3982 = vst.msk [vmem:[#allocation5 + $0x380] sm:$0xff] %vm2947, %v3912
    %3983 = vst.msk [vmem:[#allocation5 + $0x3a8] sm:$0xff] %vm2947, %v3920
    %3984 = vst.msk [vmem:[#allocation5 + $0x3d0] sm:$0xff] %vm2947, %v3928
    %v3985 = vld [vmem:[#allocation5 + $0x3f8] sm:$0x7f]
    %v3986 = vsel %vm3018, %v3931, %v3985
    %3987 = vst [vmem:[#allocation5 + $0x3f8] sm:$0x7f] %v3986
    %v3988 = vld [vmem:[#allocation2 + $0x8] sm:$0xfe]
    %v3989 = vld [vmem:[#allocation2 + $0x10] sm:$0xff]
    %v3990 = vld [vmem:[#allocation2 + $0x18] sm:$0xff]
    %v3991 = vld [vmem:[#allocation2 + $0x20] sm:$0xff]
    %v3992 = vld [vmem:[#allocation2 + $0x28] sm:$0xff]
    %v3993 = vld [vmem:[#allocation2 + $0x30] sm:$0xff]
    %v3994 = vld [vmem:[#allocation2 + $0x38] sm:$0xff]
    %v3995 = vld [vmem:[#allocation2 + $0x40] sm:$0xff]
    %v3996 = vld [vmem:[#allocation2 + $0x48] sm:$0xff]
    %v3997 = vld [vmem:[#allocation2 + $0x50] sm:$0xff]
    %v3998 = vld [vmem:[#allocation2 + $0x58] sm:$0xff]
    %v3999 = vld [vmem:[#allocation2 + $0x60] sm:$0xff]
    %v4000 = vld [vmem:[#allocation2 + $0x68] sm:$0xff]
    %v4001 = vld [vmem:[#allocation2 + $0x80] sm:$0xfe]
    %v4002 = vld [vmem:[#allocation2 + $0x88] sm:$0xff]
    %v4003 = vld [vmem:[#allocation2 + $0x90] sm:$0xff]
    %v4004 = vld [vmem:[#allocation2 + $0x98] sm:$0xff]
    %v4005 = vld [vmem:[#allocation2 + $0xa0] sm:$0xff]
    %v4006 = vld [vmem:[#allocation2 + $0xa8] sm:$0xff]
    %v4007 = vld [vmem:[#allocation2 + $0xb0] sm:$0xff]
    %v4008 = vld [vmem:[#allocation2 + $0xb8] sm:$0xff]
    %v4009 = vld [vmem:[#allocation2 + $0xc0] sm:$0xff]
    %v4010 = vld [vmem:[#allocation2 + $0xc8] sm:$0xff]
    %v4011 = vld [vmem:[#allocation2 + $0xd0] sm:$0xff]
    %v4012 = vld [vmem:[#allocation2 + $0xd8] sm:$0xff]
    %v4013 = vld [vmem:[#allocation2 + $0xe0] sm:$0xff]
    %v4040 = vrot.slane %v3988, 1
    %v4041 = vrot.slane %v3989, 1
    %v4042 = vsel %vm3433, %v4040, %v4041
    %v4043 = vrot.slane %v3990, 1
    %v4044 = vsel %vm3433, %v4041, %v4043
    %v4045 = vrot.slane %v3991, 1
    %v4046 = vsel %vm3433, %v4043, %v4045
    %v4047 = vrot.slane %v3992, 1
    %v4048 = vsel %vm3433, %v4045, %v4047
    %v4049 = vrot.slane %v3993, 1
    %v4050 = vsel %vm3433, %v4047, %v4049
    %v4051 = vrot.slane %v3994, 1
    %v4052 = vsel %vm3433, %v4049, %v4051
    %v4053 = vrot.slane %v3995, 1
    %v4054 = vsel %vm3433, %v4051, %v4053
    %v4055 = vrot.slane %v3996, 1
    %v4056 = vsel %vm3433, %v4053, %v4055
    %v4057 = vrot.slane %v3997, 1
    %v4058 = vsel %vm3433, %v4055, %v4057
    %v4059 = vrot.slane %v3998, 1
    %v4060 = vsel %vm3433, %v4057, %v4059
    %v4061 = vrot.slane %v3999, 1
    %v4062 = vsel %vm3433, %v4059, %v4061
    %v4063 = vrot.slane %v4000, 1
    %v4064 = vsel %vm3433, %v4061, %v4063
    %v4065 = vrot.slane %v4001, 1
    %v4066 = vrot.slane %v4002, 1
    %v4067 = vsel %vm3433, %v4065, %v4066
    %v4068 = vrot.slane %v4003, 1
    %v4069 = vsel %vm3433, %v4066, %v4068
    %v4070 = vrot.slane %v4004, 1
    %v4071 = vsel %vm3433, %v4068, %v4070
    %v4072 = vrot.slane %v4005, 1
    %v4073 = vsel %vm3433, %v4070, %v4072
    %v4074 = vrot.slane %v4006, 1
    %v4075 = vsel %vm3433, %v4072, %v4074
    %v4076 = vrot.slane %v4007, 1
    %v4077 = vsel %vm3433, %v4074, %v4076
    %v4078 = vrot.slane %v4008, 1
    %v4079 = vsel %vm3433, %v4076, %v4078
    %v4080 = vrot.slane %v4009, 1
    %v4081 = vsel %vm3433, %v4078, %v4080
    %v4082 = vrot.slane %v4010, 1
    %v4083 = vsel %vm3433, %v4080, %v4082
    %v4084 = vrot.slane %v4011, 1
    %v4085 = vsel %vm3433, %v4082, %v4084
    %v4086 = vrot.slane %v4012, 1
    %v4087 = vsel %vm3433, %v4084, %v4086
    %v4088 = vrot.slane %v4013, 1
    %v4089 = vsel %vm3433, %v4086, %v4088
    %4090 = vrot.lane.b32.xlu0 %v4042, 64
    %v4091 = vpop.permute.xlu0 %4090
    %4092 = vrot.lane.b32.xlu0 %v4044, 64
    %v4093 = vpop.permute.xlu0 %4092
    %4094 = vrot.lane.b32.xlu0 %v4046, 64
    %v4095 = vpop.permute.xlu0 %4094
    %4096 = vrot.lane.b32.xlu0 %v4048, 64
    %v4097 = vpop.permute.xlu0 %4096
    %4098 = vrot.lane.b32.xlu0 %v4050, 64
    %v4099 = vpop.permute.xlu0 %4098
    %4100 = vrot.lane.b32.xlu0 %v4052, 64
    %v4101 = vpop.permute.xlu0 %4100
    %4102 = vrot.lane.b32.xlu0 %v4054, 64
    %v4103 = vpop.permute.xlu0 %4102
    %4104 = vrot.lane.b32.xlu0 %v4056, 64
    %v4105 = vpop.permute.xlu0 %4104
    %4106 = vrot.lane.b32.xlu0 %v4058, 64
    %v4107 = vpop.permute.xlu0 %4106
    %4108 = vrot.lane.b32.xlu0 %v4060, 64
    %v4109 = vpop.permute.xlu0 %4108
    %4110 = vrot.lane.b32.xlu0 %v4062, 64
    %v4111 = vpop.permute.xlu0 %4110
    %4112 = vrot.lane.b32.xlu0 %v4064, 64
    %v4113 = vpop.permute.xlu0 %4112
    %4114 = vrot.lane.b32.xlu0 %v4063, 64
    %v4115 = vpop.permute.xlu0 %4114
    %4116 = vrot.lane.b32.xlu0 %v4067, 64
    %v4117 = vpop.permute.xlu0 %4116
    %4118 = vrot.lane.b32.xlu0 %v4069, 64
    %v4119 = vpop.permute.xlu0 %4118
    %4120 = vrot.lane.b32.xlu0 %v4071, 64
    %v4121 = vpop.permute.xlu0 %4120
    %4122 = vrot.lane.b32.xlu0 %v4073, 64
    %v4123 = vpop.permute.xlu0 %4122
    %4124 = vrot.lane.b32.xlu0 %v4075, 64
    %v4125 = vpop.permute.xlu0 %4124
    %4126 = vrot.lane.b32.xlu0 %v4077, 64
    %v4127 = vpop.permute.xlu0 %4126
    %4128 = vrot.lane.b32.xlu0 %v4079, 64
    %v4129 = vpop.permute.xlu0 %4128
    %4130 = vrot.lane.b32.xlu0 %v4081, 64
    %v4131 = vpop.permute.xlu0 %4130
    %4132 = vrot.lane.b32.xlu0 %v4083, 64
    %v4133 = vpop.permute.xlu0 %4132
    %4134 = vrot.lane.b32.xlu0 %v4085, 64
    %v4135 = vpop.permute.xlu0 %4134
    %4136 = vrot.lane.b32.xlu0 %v4087, 64
    %v4137 = vpop.permute.xlu0 %4136
    %4138 = vrot.lane.b32.xlu0 %v4089, 64
    %v4139 = vpop.permute.xlu0 %4138
    %4140 = vrot.lane.b32.xlu0 %v4088, 64
    %v4141 = vpop.permute.xlu0 %4140
    %4168 = vst.msk [vmem:[#allocation5 + $0x10] sm:$0xff] %vm3348, %v4091
    %4169 = vst.msk [vmem:[#allocation5 + $0x38] sm:$0xff] %vm3348, %v4093
    %4170 = vst.msk [vmem:[#allocation5 + $0x60] sm:$0xff] %vm3348, %v4095
    %4171 = vst.msk [vmem:[#allocation5 + $0x88] sm:$0xff] %vm3348, %v4097
    %4172 = vst.msk [vmem:[#allocation5 + $0xb0] sm:$0xff] %vm3348, %v4099
    %4173 = vst.msk [vmem:[#allocation5 + $0xd8] sm:$0xff] %vm3348, %v4101
    %4174 = vst.msk [vmem:[#allocation5 + $0x100] sm:$0xff] %vm3348, %v4103
    %4175 = vst.msk [vmem:[#allocation5 + $0x128] sm:$0xff] %vm3348, %v4105
    %4176 = vst.msk [vmem:[#allocation5 + $0x150] sm:$0xff] %vm3348, %v4107
    %4177 = vst.msk [vmem:[#allocation5 + $0x178] sm:$0xff] %vm3348, %v4109
    %4178 = vst.msk [vmem:[#allocation5 + $0x1a0] sm:$0xff] %vm3348, %v4111
    %4179 = vst.msk [vmem:[#allocation5 + $0x1c8] sm:$0xff] %vm3348, %v4113
    %v4180 = vld [vmem:[#allocation5 + $0x1f0] sm:$0x7f]
    %v4181 = vsel %vm3362, %v4115, %v4180
    %4182 = vst [vmem:[#allocation5 + $0x1f0] sm:$0x7f] %v4181
    %4183 = vst.msk [vmem:[#allocation5 + $0x218] sm:$0xff] %vm3348, %v4117
    %4184 = vst.msk [vmem:[#allocation5 + $0x240] sm:$0xff] %vm3348, %v4119
    %4185 = vst.msk [vmem:[#allocation5 + $0x268] sm:$0xff] %vm3348, %v4121
    %4186 = vst.msk [vmem:[#allocation5 + $0x290] sm:$0xff] %vm3348, %v4123
    %4187 = vst.msk [vmem:[#allocation5 + $0x2b8] sm:$0xff] %vm3348, %v4125
    %4188 = vst.msk [vmem:[#allocation5 + $0x2e0] sm:$0xff] %vm3348, %v4127
    %4189 = vst.msk [vmem:[#allocation5 + $0x308] sm:$0xff] %vm3348, %v4129
    %4190 = vst.msk [vmem:[#allocation5 + $0x330] sm:$0xff] %vm3348, %v4131
    %4191 = vst.msk [vmem:[#allocation5 + $0x358] sm:$0xff] %vm3348, %v4133
    %4192 = vst.msk [vmem:[#allocation5 + $0x380] sm:$0xff] %vm3348, %v4135
    %4193 = vst.msk [vmem:[#allocation5 + $0x3a8] sm:$0xff] %vm3348, %v4137
    %4194 = vst.msk [vmem:[#allocation5 + $0x3d0] sm:$0xff] %vm3348, %v4139
    %v4195 = vld [vmem:[#allocation5 + $0x3f8] sm:$0x7f]
    %v4196 = vsel %vm3362, %v4141, %v4195
    %4197 = vst [vmem:[#allocation5 + $0x3f8] sm:$0x7f] %v4196
    %v4198 = vld [vmem:[#allocation2 + $0x10] sm:$0xff]
    %v4199 = vld [vmem:[#allocation2 + $0x18] sm:$0xff]
    %v4200 = vld [vmem:[#allocation2 + $0x20] sm:$0xff]
    %v4201 = vld [vmem:[#allocation2 + $0x28] sm:$0xff]
    %v4202 = vld [vmem:[#allocation2 + $0x30] sm:$0xff]
    %v4203 = vld [vmem:[#allocation2 + $0x38] sm:$0xff]
    %v4204 = vld [vmem:[#allocation2 + $0x40] sm:$0xff]
    %v4205 = vld [vmem:[#allocation2 + $0x48] sm:$0xff]
    %v4206 = vld [vmem:[#allocation2 + $0x50] sm:$0xff]
    %v4207 = vld [vmem:[#allocation2 + $0x58] sm:$0xff]
    %v4208 = vld [vmem:[#allocation2 + $0x60] sm:$0xff]
    %v4209 = vld [vmem:[#allocation2 + $0x68] sm:$0xff]
    %v4210 = vld [vmem:[#allocation2 + $0x70] sm:$0x7f]
    %v4211 = vld [vmem:[#allocation2 + $0x88] sm:$0xff]
    %v4212 = vld [vmem:[#allocation2 + $0x90] sm:$0xff]
    %v4213 = vld [vmem:[#allocation2 + $0x98] sm:$0xff]
    %v4214 = vld [vmem:[#allocation2 + $0xa0] sm:$0xff]
    %v4215 = vld [vmem:[#allocation2 + $0xa8] sm:$0xff]
    %v4216 = vld [vmem:[#allocation2 + $0xb0] sm:$0xff]
    %v4217 = vld [vmem:[#allocation2 + $0xb8] sm:$0xff]
    %v4218 = vld [vmem:[#allocation2 + $0xc0] sm:$0xff]
    %v4219 = vld [vmem:[#allocation2 + $0xc8] sm:$0xff]
    %v4220 = vld [vmem:[#allocation2 + $0xd0] sm:$0xff]
    %v4221 = vld [vmem:[#allocation2 + $0xd8] sm:$0xff]
    %v4222 = vld [vmem:[#allocation2 + $0xe0] sm:$0xff]
    %v4223 = vld [vmem:[#allocation2 + $0xe8] sm:$0x7f]
    %4224 = vst.msk [vmem:[#allocation5 + $0x18] sm:$0xff] %vm2947, %v4198
    %4225 = vst.msk [vmem:[#allocation5 + $0x40] sm:$0xff] %vm2947, %v4199
    %4226 = vst.msk [vmem:[#allocation5 + $0x68] sm:$0xff] %vm2947, %v4200
    %4227 = vst.msk [vmem:[#allocation5 + $0x90] sm:$0xff] %vm2947, %v4201
    %4228 = vst.msk [vmem:[#allocation5 + $0xb8] sm:$0xff] %vm2947, %v4202
    %4229 = vst.msk [vmem:[#allocation5 + $0xe0] sm:$0xff] %vm2947, %v4203
    %4230 = vst.msk [vmem:[#allocation5 + $0x108] sm:$0xff] %vm2947, %v4204
    %4231 = vst.msk [vmem:[#allocation5 + $0x130] sm:$0xff] %vm2947, %v4205
    %4232 = vst.msk [vmem:[#allocation5 + $0x158] sm:$0xff] %vm2947, %v4206
    %4233 = vst.msk [vmem:[#allocation5 + $0x180] sm:$0xff] %vm2947, %v4207
    %4234 = vst.msk [vmem:[#allocation5 + $0x1a8] sm:$0xff] %vm2947, %v4208
    %4235 = vst.msk [vmem:[#allocation5 + $0x1d0] sm:$0xff] %vm2947, %v4209
    %v4236 = vld [vmem:[#allocation5 + $0x1f8] sm:$0x7f]
    %v4237 = vsel %vm3018, %v4210, %v4236
    %4238 = vst [vmem:[#allocation5 + $0x1f8] sm:$0x7f] %v4237
    %4239 = vst.msk [vmem:[#allocation5 + $0x220] sm:$0xff] %vm2947, %v4211
    %4240 = vst.msk [vmem:[#allocation5 + $0x248] sm:$0xff] %vm2947, %v4212
    %4241 = vst.msk [vmem:[#allocation5 + $0x270] sm:$0xff] %vm2947, %v4213
    %4242 = vst.msk [vmem:[#allocation5 + $0x298] sm:$0xff] %vm2947, %v4214
    %4243 = vst.msk [vmem:[#allocation5 + $0x2c0] sm:$0xff] %vm2947, %v4215
    %4244 = vst.msk [vmem:[#allocation5 + $0x2e8] sm:$0xff] %vm2947, %v4216
    %4245 = vst.msk [vmem:[#allocation5 + $0x310] sm:$0xff] %vm2947, %v4217
    %4246 = vst.msk [vmem:[#allocation5 + $0x338] sm:$0xff] %vm2947, %v4218
    %4247 = vst.msk [vmem:[#allocation5 + $0x360] sm:$0xff] %vm2947, %v4219
    %4248 = vst.msk [vmem:[#allocation5 + $0x388] sm:$0xff] %vm2947, %v4220
    %4249 = vst.msk [vmem:[#allocation5 + $0x3b0] sm:$0xff] %vm2947, %v4221
    %4250 = vst.msk [vmem:[#allocation5 + $0x3d8] sm:$0xff] %vm2947, %v4222
    %v4251 = vld [vmem:[#allocation5 + $0x400] sm:$0x7f]
    %v4252 = vsel %vm3018, %v4223, %v4251
    %4253 = vst [vmem:[#allocation5 + $0x400] sm:$0x7f] %v4252
    %v4254 = vld [vmem:[#allocation2 + $0x10] sm:$0xff]
    %v4255 = vld [vmem:[#allocation2 + $0x18] sm:$0xff]
    %v4256 = vld [vmem:[#allocation2 + $0x20] sm:$0xff]
    %v4257 = vld [vmem:[#allocation2 + $0x28] sm:$0xff]
    %v4258 = vld [vmem:[#allocation2 + $0x30] sm:$0xff]
    %v4259 = vld [vmem:[#allocation2 + $0x38] sm:$0xff]
    %v4260 = vld [vmem:[#allocation2 + $0x40] sm:$0xff]
    %v4261 = vld [vmem:[#allocation2 + $0x48] sm:$0xff]
    %v4262 = vld [vmem:[#allocation2 + $0x50] sm:$0xff]
    %v4263 = vld [vmem:[#allocation2 + $0x58] sm:$0xff]
    %v4264 = vld [vmem:[#allocation2 + $0x60] sm:$0xff]
    %v4265 = vld [vmem:[#allocation2 + $0x68] sm:$0xff]
    %v4266 = vld [vmem:[#allocation2 + $0x70] sm:$0x7f]
    %v4267 = vld [vmem:[#allocation2 + $0x88] sm:$0xff]
    %v4268 = vld [vmem:[#allocation2 + $0x90] sm:$0xff]
    %v4269 = vld [vmem:[#allocation2 + $0x98] sm:$0xff]
    %v4270 = vld [vmem:[#allocation2 + $0xa0] sm:$0xff]
    %v4271 = vld [vmem:[#allocation2 + $0xa8] sm:$0xff]
    %v4272 = vld [vmem:[#allocation2 + $0xb0] sm:$0xff]
    %v4273 = vld [vmem:[#allocation2 + $0xb8] sm:$0xff]
    %v4274 = vld [vmem:[#allocation2 + $0xc0] sm:$0xff]
    %v4275 = vld [vmem:[#allocation2 + $0xc8] sm:$0xff]
    %v4276 = vld [vmem:[#allocation2 + $0xd0] sm:$0xff]
    %v4277 = vld [vmem:[#allocation2 + $0xd8] sm:$0xff]
    %v4278 = vld [vmem:[#allocation2 + $0xe0] sm:$0xff]
    %v4279 = vld [vmem:[#allocation2 + $0xe8] sm:$0x7f]
    %v4281 = vshrl.u32 %v4254, 16
    %v4283 = vshll.u32 %v4254, 16
    %v4285 = vrot.slane %v4283, 1
    %v4286 = vor.u32 %v4281, %v4285
    %v4288 = vshll.u32 %v4255, 16
    %v4290 = vrot.slane %v4288, 1
    %v4291 = vsel %vm3063, %v4286, %v4290
    %v4292 = vshrl.u32 %v4255, 16
    %v4294 = vor.u32 %v4292, %v4290
    %v4296 = vshll.u32 %v4256, 16
    %v4298 = vrot.slane %v4296, 1
    %v4299 = vsel %vm3063, %v4294, %v4298
    %v4300 = vshrl.u32 %v4256, 16
    %v4302 = vor.u32 %v4300, %v4298
    %v4304 = vshll.u32 %v4257, 16
    %v4306 = vrot.slane %v4304, 1
    %v4307 = vsel %vm3063, %v4302, %v4306
    %v4308 = vshrl.u32 %v4257, 16
    %v4310 = vor.u32 %v4308, %v4306
    %v4312 = vshll.u32 %v4258, 16
    %v4314 = vrot.slane %v4312, 1
    %v4315 = vsel %vm3063, %v4310, %v4314
    %v4316 = vshrl.u32 %v4258, 16
    %v4318 = vor.u32 %v4316, %v4314
    %v4320 = vshll.u32 %v4259, 16
    %v4322 = vrot.slane %v4320, 1
    %v4323 = vsel %vm3063, %v4318, %v4322
    %v4324 = vshrl.u32 %v4259, 16
    %v4326 = vor.u32 %v4324, %v4322
    %v4328 = vshll.u32 %v4260, 16
    %v4330 = vrot.slane %v4328, 1
    %v4331 = vsel %vm3063, %v4326, %v4330
    %v4332 = vshrl.u32 %v4260, 16
    %v4334 = vor.u32 %v4332, %v4330
    %v4336 = vshll.u32 %v4261, 16
    %v4338 = vrot.slane %v4336, 1
    %v4339 = vsel %vm3063, %v4334, %v4338
    %v4340 = vshrl.u32 %v4261, 16
    %v4342 = vor.u32 %v4340, %v4338
    %v4344 = vshll.u32 %v4262, 16
    %v4346 = vrot.slane %v4344, 1
    %v4347 = vsel %vm3063, %v4342, %v4346
    %v4348 = vshrl.u32 %v4262, 16
    %v4350 = vor.u32 %v4348, %v4346
    %v4352 = vshll.u32 %v4263, 16
    %v4354 = vrot.slane %v4352, 1
    %v4355 = vsel %vm3063, %v4350, %v4354
    %v4356 = vshrl.u32 %v4263, 16
    %v4358 = vor.u32 %v4356, %v4354
    %v4360 = vshll.u32 %v4264, 16
    %v4362 = vrot.slane %v4360, 1
    %v4363 = vsel %vm3063, %v4358, %v4362
    %v4364 = vshrl.u32 %v4264, 16
    %v4366 = vor.u32 %v4364, %v4362
    %v4368 = vshll.u32 %v4265, 16
    %v4370 = vrot.slane %v4368, 1
    %v4371 = vsel %vm3063, %v4366, %v4370
    %v4372 = vshrl.u32 %v4265, 16
    %v4374 = vor.u32 %v4372, %v4370
    %v4376 = vshll.u32 %v4266, 16
    %v4378 = vrot.slane %v4376, 1
    %v4379 = vsel %vm3063, %v4374, %v4378
    %v4380 = vshrl.u32 %v4266, 16
    %v4382 = vor.u32 %v4380, %v4378
    %v4384 = vshrl.u32 %v4267, 16
    %v4386 = vshll.u32 %v4267, 16
    %v4388 = vrot.slane %v4386, 1
    %v4389 = vor.u32 %v4384, %v4388
    %v4391 = vshll.u32 %v4268, 16
    %v4393 = vrot.slane %v4391, 1
    %v4394 = vsel %vm3063, %v4389, %v4393
    %v4395 = vshrl.u32 %v4268, 16
    %v4397 = vor.u32 %v4395, %v4393
    %v4399 = vshll.u32 %v4269, 16
    %v4401 = vrot.slane %v4399, 1
    %v4402 = vsel %vm3063, %v4397, %v4401
    %v4403 = vshrl.u32 %v4269, 16
    %v4405 = vor.u32 %v4403, %v4401
    %v4407 = vshll.u32 %v4270, 16
    %v4409 = vrot.slane %v4407, 1
    %v4410 = vsel %vm3063, %v4405, %v4409
    %v4411 = vshrl.u32 %v4270, 16
    %v4413 = vor.u32 %v4411, %v4409
    %v4415 = vshll.u32 %v4271, 16
    %v4417 = vrot.slane %v4415, 1
    %v4418 = vsel %vm3063, %v4413, %v4417
    %v4419 = vshrl.u32 %v4271, 16
    %v4421 = vor.u32 %v4419, %v4417
    %v4423 = vshll.u32 %v4272, 16
    %v4425 = vrot.slane %v4423, 1
    %v4426 = vsel %vm3063, %v4421, %v4425
    %v4427 = vshrl.u32 %v4272, 16
    %v4429 = vor.u32 %v4427, %v4425
    %v4431 = vshll.u32 %v4273, 16
    %v4433 = vrot.slane %v4431, 1
    %v4434 = vsel %vm3063, %v4429, %v4433
    %v4435 = vshrl.u32 %v4273, 16
    %v4437 = vor.u32 %v4435, %v4433
    %v4439 = vshll.u32 %v4274, 16
    %v4441 = vrot.slane %v4439, 1
    %v4442 = vsel %vm3063, %v4437, %v4441
    %v4443 = vshrl.u32 %v4274, 16
    %v4445 = vor.u32 %v4443, %v4441
    %v4447 = vshll.u32 %v4275, 16
    %v4449 = vrot.slane %v4447, 1
    %v4450 = vsel %vm3063, %v4445, %v4449
    %v4451 = vshrl.u32 %v4275, 16
    %v4453 = vor.u32 %v4451, %v4449
    %v4455 = vshll.u32 %v4276, 16
    %v4457 = vrot.slane %v4455, 1
    %v4458 = vsel %vm3063, %v4453, %v4457
    %v4459 = vshrl.u32 %v4276, 16
    %v4461 = vor.u32 %v4459, %v4457
    %v4463 = vshll.u32 %v4277, 16
    %v4465 = vrot.slane %v4463, 1
    %v4466 = vsel %vm3063, %v4461, %v4465
    %v4467 = vshrl.u32 %v4277, 16
    %v4469 = vor.u32 %v4467, %v4465
    %v4471 = vshll.u32 %v4278, 16
    %v4473 = vrot.slane %v4471, 1
    %v4474 = vsel %vm3063, %v4469, %v4473
    %v4475 = vshrl.u32 %v4278, 16
    %v4477 = vor.u32 %v4475, %v4473
    %v4479 = vshll.u32 %v4279, 16
    %v4481 = vrot.slane %v4479, 1
    %v4482 = vsel %vm3063, %v4477, %v4481
    %v4483 = vshrl.u32 %v4279, 16
    %v4485 = vor.u32 %v4483, %v4481
    %4486 = vrot.lane.b32.xlu0 %v4291, 64
    %v4487 = vpop.permute.xlu0 %4486
    %4488 = vrot.lane.b32.xlu0 %v4299, 64
    %v4489 = vpop.permute.xlu0 %4488
    %4490 = vrot.lane.b32.xlu0 %v4307, 64
    %v4491 = vpop.permute.xlu0 %4490
    %4492 = vrot.lane.b32.xlu0 %v4315, 64
    %v4493 = vpop.permute.xlu0 %4492
    %4494 = vrot.lane.b32.xlu0 %v4323, 64
    %v4495 = vpop.permute.xlu0 %4494
    %4496 = vrot.lane.b32.xlu0 %v4331, 64
    %v4497 = vpop.permute.xlu0 %4496
    %4498 = vrot.lane.b32.xlu0 %v4339, 64
    %v4499 = vpop.permute.xlu0 %4498
    %4500 = vrot.lane.b32.xlu0 %v4347, 64
    %v4501 = vpop.permute.xlu0 %4500
    %4502 = vrot.lane.b32.xlu0 %v4355, 64
    %v4503 = vpop.permute.xlu0 %4502
    %4504 = vrot.lane.b32.xlu0 %v4363, 64
    %v4505 = vpop.permute.xlu0 %4504
    %4506 = vrot.lane.b32.xlu0 %v4371, 64
    %v4507 = vpop.permute.xlu0 %4506
    %4508 = vrot.lane.b32.xlu0 %v4379, 64
    %v4509 = vpop.permute.xlu0 %4508
    %4510 = vrot.lane.b32.xlu0 %v4382, 64
    %v4511 = vpop.permute.xlu0 %4510
    %4512 = vrot.lane.b32.xlu0 %v4394, 64
    %v4513 = vpop.permute.xlu0 %4512
    %4514 = vrot.lane.b32.xlu0 %v4402, 64
    %v4515 = vpop.permute.xlu0 %4514
    %4516 = vrot.lane.b32.xlu0 %v4410, 64
    %v4517 = vpop.permute.xlu0 %4516
    %4518 = vrot.lane.b32.xlu0 %v4418, 64
    %v4519 = vpop.permute.xlu0 %4518
    %4520 = vrot.lane.b32.xlu0 %v4426, 64
    %v4521 = vpop.permute.xlu0 %4520
    %4522 = vrot.lane.b32.xlu0 %v4434, 64
    %v4523 = vpop.permute.xlu0 %4522
    %4524 = vrot.lane.b32.xlu0 %v4442, 64
    %v4525 = vpop.permute.xlu0 %4524
    %4526 = vrot.lane.b32.xlu0 %v4450, 64
    %v4527 = vpop.permute.xlu0 %4526
    %4528 = vrot.lane.b32.xlu0 %v4458, 64
    %v4529 = vpop.permute.xlu0 %4528
    %4530 = vrot.lane.b32.xlu0 %v4466, 64
    %v4531 = vpop.permute.xlu0 %4530
    %4532 = vrot.lane.b32.xlu0 %v4474, 64
    %v4533 = vpop.permute.xlu0 %4532
    %4534 = vrot.lane.b32.xlu0 %v4482, 64
    %v4535 = vpop.permute.xlu0 %4534
    %4536 = vrot.lane.b32.xlu0 %v4485, 64
    %v4537 = vpop.permute.xlu0 %4536
    %4564 = vst.msk [vmem:[#allocation5 + $0x18] sm:$0xff] %vm3348, %v4487
    %4565 = vst.msk [vmem:[#allocation5 + $0x40] sm:$0xff] %vm3348, %v4489
    %4566 = vst.msk [vmem:[#allocation5 + $0x68] sm:$0xff] %vm3348, %v4491
    %4567 = vst.msk [vmem:[#allocation5 + $0x90] sm:$0xff] %vm3348, %v4493
    %4568 = vst.msk [vmem:[#allocation5 + $0xb8] sm:$0xff] %vm3348, %v4495
    %4569 = vst.msk [vmem:[#allocation5 + $0xe0] sm:$0xff] %vm3348, %v4497
    %4570 = vst.msk [vmem:[#allocation5 + $0x108] sm:$0xff] %vm3348, %v4499
    %4571 = vst.msk [vmem:[#allocation5 + $0x130] sm:$0xff] %vm3348, %v4501
    %4572 = vst.msk [vmem:[#allocation5 + $0x158] sm:$0xff] %vm3348, %v4503
    %4573 = vst.msk [vmem:[#allocation5 + $0x180] sm:$0xff] %vm3348, %v4505
    %4574 = vst.msk [vmem:[#allocation5 + $0x1a8] sm:$0xff] %vm3348, %v4507
    %4575 = vst.msk [vmem:[#allocation5 + $0x1d0] sm:$0xff] %vm3348, %v4509
    %v4576 = vld [vmem:[#allocation5 + $0x1f8] sm:$0x7f]
    %v4577 = vsel %vm3362, %v4511, %v4576
    %4578 = vst [vmem:[#allocation5 + $0x1f8] sm:$0x7f] %v4577
    %4579 = vst.msk [vmem:[#allocation5 + $0x220] sm:$0xff] %vm3348, %v4513
    %4580 = vst.msk [vmem:[#allocation5 + $0x248] sm:$0xff] %vm3348, %v4515
    %4581 = vst.msk [vmem:[#allocation5 + $0x270] sm:$0xff] %vm3348, %v4517
    %4582 = vst.msk [vmem:[#allocation5 + $0x298] sm:$0xff] %vm3348, %v4519
    %4583 = vst.msk [vmem:[#allocation5 + $0x2c0] sm:$0xff] %vm3348, %v4521
    %4584 = vst.msk [vmem:[#allocation5 + $0x2e8] sm:$0xff] %vm3348, %v4523
    %4585 = vst.msk [vmem:[#allocation5 + $0x310] sm:$0xff] %vm3348, %v4525
    %4586 = vst.msk [vmem:[#allocation5 + $0x338] sm:$0xff] %vm3348, %v4527
    %4587 = vst.msk [vmem:[#allocation5 + $0x360] sm:$0xff] %vm3348, %v4529
    %4588 = vst.msk [vmem:[#allocation5 + $0x388] sm:$0xff] %vm3348, %v4531
    %4589 = vst.msk [vmem:[#allocation5 + $0x3b0] sm:$0xff] %vm3348, %v4533
    %4590 = vst.msk [vmem:[#allocation5 + $0x3d8] sm:$0xff] %vm3348, %v4535
    %v4591 = vld [vmem:[#allocation5 + $0x400] sm:$0x7f]
    %v4592 = vsel %vm3362, %v4537, %v4591
    %4593 = vst [vmem:[#allocation5 + $0x400] sm:$0x7f] %v4592
    %v4594 = vld [vmem:[#allocation2 + $0x10] sm:$0xfe]
    %v4595 = vld [vmem:[#allocation2 + $0x18] sm:$0xff]
    %v4596 = vld [vmem:[#allocation2 + $0x20] sm:$0xff]
    %v4597 = vld [vmem:[#allocation2 + $0x28] sm:$0xff]
    %v4598 = vld [vmem:[#allocation2 + $0x30] sm:$0xff]
    %v4599 = vld [vmem:[#allocation2 + $0x38] sm:$0xff]
    %v4600 = vld [vmem:[#allocation2 + $0x40] sm:$0xff]
    %v4601 = vld [vmem:[#allocation2 + $0x48] sm:$0xff]
    %v4602 = vld [vmem:[#allocation2 + $0x50] sm:$0xff]
    %v4603 = vld [vmem:[#allocation2 + $0x58] sm:$0xff]
    %v4604 = vld [vmem:[#allocation2 + $0x60] sm:$0xff]
    %v4605 = vld [vmem:[#allocation2 + $0x68] sm:$0xff]
    %v4606 = vld [vmem:[#allocation2 + $0x70] sm:$0xff]
    %v4607 = vld [vmem:[#allocation2 + $0x88] sm:$0xfe]
    %v4608 = vld [vmem:[#allocation2 + $0x90] sm:$0xff]
    %v4609 = vld [vmem:[#allocation2 + $0x98] sm:$0xff]
    %v4610 = vld [vmem:[#allocation2 + $0xa0] sm:$0xff]
    %v4611 = vld [vmem:[#allocation2 + $0xa8] sm:$0xff]
    %v4612 = vld [vmem:[#allocation2 + $0xb0] sm:$0xff]
    %v4613 = vld [vmem:[#allocation2 + $0xb8] sm:$0xff]
    %v4614 = vld [vmem:[#allocation2 + $0xc0] sm:$0xff]
    %v4615 = vld [vmem:[#allocation2 + $0xc8] sm:$0xff]
    %v4616 = vld [vmem:[#allocation2 + $0xd0] sm:$0xff]
    %v4617 = vld [vmem:[#allocation2 + $0xd8] sm:$0xff]
    %v4618 = vld [vmem:[#allocation2 + $0xe0] sm:$0xff]
    %v4619 = vld [vmem:[#allocation2 + $0xe8] sm:$0xff]
    %v4646 = vrot.slane %v4594, 1
    %v4647 = vrot.slane %v4595, 1
    %v4648 = vsel %vm3433, %v4646, %v4647
    %v4649 = vrot.slane %v4596, 1
    %v4650 = vsel %vm3433, %v4647, %v4649
    %v4651 = vrot.slane %v4597, 1
    %v4652 = vsel %vm3433, %v4649, %v4651
    %v4653 = vrot.slane %v4598, 1
    %v4654 = vsel %vm3433, %v4651, %v4653
    %v4655 = vrot.slane %v4599, 1
    %v4656 = vsel %vm3433, %v4653, %v4655
    %v4657 = vrot.slane %v4600, 1
    %v4658 = vsel %vm3433, %v4655, %v4657
    %v4659 = vrot.slane %v4601, 1
    %v4660 = vsel %vm3433, %v4657, %v4659
    %v4661 = vrot.slane %v4602, 1
    %v4662 = vsel %vm3433, %v4659, %v4661
    %v4663 = vrot.slane %v4603, 1
    %v4664 = vsel %vm3433, %v4661, %v4663
    %v4665 = vrot.slane %v4604, 1
    %v4666 = vsel %vm3433, %v4663, %v4665
    %v4667 = vrot.slane %v4605, 1
    %v4668 = vsel %vm3433, %v4665, %v4667
    %v4669 = vrot.slane %v4606, 1
    %v4670 = vsel %vm3433, %v4667, %v4669
    %v4671 = vrot.slane %v4607, 1
    %v4672 = vrot.slane %v4608, 1
    %v4673 = vsel %vm3433, %v4671, %v4672
    %v4674 = vrot.slane %v4609, 1
    %v4675 = vsel %vm3433, %v4672, %v4674
    %v4676 = vrot.slane %v4610, 1
    %v4677 = vsel %vm3433, %v4674, %v4676
    %v4678 = vrot.slane %v4611, 1
    %v4679 = vsel %vm3433, %v4676, %v4678
    %v4680 = vrot.slane %v4612, 1
    %v4681 = vsel %vm3433, %v4678, %v4680
    %v4682 = vrot.slane %v4613, 1
    %v4683 = vsel %vm3433, %v4680, %v4682
    %v4684 = vrot.slane %v4614, 1
    %v4685 = vsel %vm3433, %v4682, %v4684
    %v4686 = vrot.slane %v4615, 1
    %v4687 = vsel %vm3433, %v4684, %v4686
    %v4688 = vrot.slane %v4616, 1
    %v4689 = vsel %vm3433, %v4686, %v4688
    %v4690 = vrot.slane %v4617, 1
    %v4691 = vsel %vm3433, %v4688, %v4690
    %v4692 = vrot.slane %v4618, 1
    %v4693 = vsel %vm3433, %v4690, %v4692
    %v4694 = vrot.slane %v4619, 1
    %v4695 = vsel %vm3433, %v4692, %v4694
    %4722 = vst.msk [vmem:[#allocation5 + $0x20] sm:$0xff] %vm2947, %v4648
    %4723 = vst.msk [vmem:[#allocation5 + $0x48] sm:$0xff] %vm2947, %v4650
    %4724 = vst.msk [vmem:[#allocation5 + $0x70] sm:$0xff] %vm2947, %v4652
    %4725 = vst.msk [vmem:[#allocation5 + $0x98] sm:$0xff] %vm2947, %v4654
    %4726 = vst.msk [vmem:[#allocation5 + $0xc0] sm:$0xff] %vm2947, %v4656
    %4727 = vst.msk [vmem:[#allocation5 + $0xe8] sm:$0xff] %vm2947, %v4658
    %4728 = vst.msk [vmem:[#allocation5 + $0x110] sm:$0xff] %vm2947, %v4660
    %4729 = vst.msk [vmem:[#allocation5 + $0x138] sm:$0xff] %vm2947, %v4662
    %4730 = vst.msk [vmem:[#allocation5 + $0x160] sm:$0xff] %vm2947, %v4664
    %4731 = vst.msk [vmem:[#allocation5 + $0x188] sm:$0xff] %vm2947, %v4666
    %4732 = vst.msk [vmem:[#allocation5 + $0x1b0] sm:$0xff] %vm2947, %v4668
    %4733 = vst.msk [vmem:[#allocation5 + $0x1d8] sm:$0xff] %vm2947, %v4670
    %v4734 = vld [vmem:[#allocation5 + $0x200] sm:$0x7f]
    %v4735 = vsel %vm3018, %v4669, %v4734
    %4736 = vst [vmem:[#allocation5 + $0x200] sm:$0x7f] %v4735
    %4737 = vst.msk [vmem:[#allocation5 + $0x228] sm:$0xff] %vm2947, %v4673
    %4738 = vst.msk [vmem:[#allocation5 + $0x250] sm:$0xff] %vm2947, %v4675
    %4739 = vst.msk [vmem:[#allocation5 + $0x278] sm:$0xff] %vm2947, %v4677
    %4740 = vst.msk [vmem:[#allocation5 + $0x2a0] sm:$0xff] %vm2947, %v4679
    %4741 = vst.msk [vmem:[#allocation5 + $0x2c8] sm:$0xff] %vm2947, %v4681
    %4742 = vst.msk [vmem:[#allocation5 + $0x2f0] sm:$0xff] %vm2947, %v4683
    %4743 = vst.msk [vmem:[#allocation5 + $0x318] sm:$0xff] %vm2947, %v4685
    %4744 = vst.msk [vmem:[#allocation5 + $0x340] sm:$0xff] %vm2947, %v4687
    %4745 = vst.msk [vmem:[#allocation5 + $0x368] sm:$0xff] %vm2947, %v4689
    %4746 = vst.msk [vmem:[#allocation5 + $0x390] sm:$0xff] %vm2947, %v4691
    %4747 = vst.msk [vmem:[#allocation5 + $0x3b8] sm:$0xff] %vm2947, %v4693
    %4748 = vst.msk [vmem:[#allocation5 + $0x3e0] sm:$0xff] %vm2947, %v4695
    %v4749 = vld [vmem:[#allocation5 + $0x408] sm:$0x7f]
    %v4750 = vsel %vm3018, %v4694, %v4749
    %4751 = vst [vmem:[#allocation5 + $0x408] sm:$0x7f] %v4750
    %v4752 = vld [vmem:[#allocation5] sm:$0xff]
    %v4753 = vld [vmem:[#allocation5 + $0x8] sm:$0xff]
    %v4754 = vld [vmem:[#allocation5 + $0x10] sm:$0xff]
    %v4755 = vld [vmem:[#allocation5 + $0x18] sm:$0xff]
    %v4756 = vld [vmem:[#allocation5 + $0x20] sm:$0xff]
    %v4757 = vld [vmem:[#allocation5 + $0x28] sm:$0xff]
    %v4758 = vld [vmem:[#allocation5 + $0x30] sm:$0xff]
    %v4759 = vld [vmem:[#allocation5 + $0x38] sm:$0xff]
    %v4760 = vld [vmem:[#allocation5 + $0x40] sm:$0xff]
    %v4761 = vld [vmem:[#allocation5 + $0x48] sm:$0xff]
    %v4762 = vld [vmem:[#allocation5 + $0x50] sm:$0xff]
    %v4763 = vld [vmem:[#allocation5 + $0x58] sm:$0xff]
    %v4764 = vld [vmem:[#allocation5 + $0x60] sm:$0xff]
    %v4765 = vld [vmem:[#allocation5 + $0x68] sm:$0xff]
    %v4766 = vld [vmem:[#allocation5 + $0x70] sm:$0xff]
    %v4767 = vld [vmem:[#allocation5 + $0x78] sm:$0xff]
    %v4768 = vld [vmem:[#allocation5 + $0x80] sm:$0xff]
    %v4769 = vld [vmem:[#allocation5 + $0x88] sm:$0xff]
    %v4770 = vld [vmem:[#allocation5 + $0x90] sm:$0xff]
    %v4771 = vld [vmem:[#allocation5 + $0x98] sm:$0xff]
    %v4772 = vld [vmem:[#allocation5 + $0xa0] sm:$0xff]
    %v4773 = vld [vmem:[#allocation5 + $0xa8] sm:$0xff]
    %v4774 = vld [vmem:[#allocation5 + $0xb0] sm:$0xff]
    %v4775 = vld [vmem:[#allocation5 + $0xb8] sm:$0xff]
    %v4776 = vld [vmem:[#allocation5 + $0xc0] sm:$0xff]
    %v4777 = vld [vmem:[#allocation5 + $0xc8] sm:$0xff]
    %v4778 = vld [vmem:[#allocation5 + $0xd0] sm:$0xff]
    %v4779 = vld [vmem:[#allocation5 + $0xd8] sm:$0xff]
    %v4780 = vld [vmem:[#allocation5 + $0xe0] sm:$0xff]
    %v4781 = vld [vmem:[#allocation5 + $0xe8] sm:$0xff]
    %v4782 = vld [vmem:[#allocation5 + $0xf0] sm:$0xff]
    %v4783 = vld [vmem:[#allocation5 + $0xf8] sm:$0xff]
    %v4784 = vld [vmem:[#allocation5 + $0x100] sm:$0xff]
    %v4785 = vld [vmem:[#allocation5 + $0x108] sm:$0xff]
    %v4786 = vld [vmem:[#allocation5 + $0x110] sm:$0xff]
    %v4787 = vld [vmem:[#allocation5 + $0x118] sm:$0xff]
    %v4788 = vld [vmem:[#allocation5 + $0x120] sm:$0xff]
    %v4789 = vld [vmem:[#allocation5 + $0x128] sm:$0xff]
    %v4790 = vld [vmem:[#allocation5 + $0x130] sm:$0xff]
    %v4791 = vld [vmem:[#allocation5 + $0x138] sm:$0xff]
    %v4792 = vld [vmem:[#allocation5 + $0x140] sm:$0xff]
    %v4793 = vld [vmem:[#allocation5 + $0x148] sm:$0xff]
    %v4794 = vld [vmem:[#allocation5 + $0x150] sm:$0xff]
    %v4795 = vld [vmem:[#allocation5 + $0x158] sm:$0xff]
    %v4796 = vld [vmem:[#allocation5 + $0x160] sm:$0xff]
    %v4797 = vld [vmem:[#allocation5 + $0x168] sm:$0xff]
    %v4798 = vld [vmem:[#allocation5 + $0x170] sm:$0xff]
    %v4799 = vld [vmem:[#allocation5 + $0x178] sm:$0xff]
    %v4800 = vld [vmem:[#allocation5 + $0x180] sm:$0xff]
    %v4801 = vld [vmem:[#allocation5 + $0x188] sm:$0xff]
    %v4802 = vld [vmem:[#allocation5 + $0x190] sm:$0xff]
    %v4803 = vld [vmem:[#allocation5 + $0x198] sm:$0xff]
    %v4804 = vld [vmem:[#allocation5 + $0x1a0] sm:$0xff]
    %v4805 = vld [vmem:[#allocation5 + $0x1a8] sm:$0xff]
    %v4806 = vld [vmem:[#allocation5 + $0x1b0] sm:$0xff]
    %v4807 = vld [vmem:[#allocation5 + $0x1b8] sm:$0xff]
    %v4808 = vld [vmem:[#allocation5 + $0x1c0] sm:$0xff]
    %v4809 = vld [vmem:[#allocation5 + $0x1c8] sm:$0xff]
    %v4810 = vld [vmem:[#allocation5 + $0x1d0] sm:$0xff]
    %v4811 = vld [vmem:[#allocation5 + $0x1d8] sm:$0xff]
    %v4812 = vld [vmem:[#allocation5 + $0x1e0] sm:$0xff]
    %v4813 = vld [vmem:[#allocation5 + $0x1e8] sm:$0xff]
    %v4814 = vld [vmem:[#allocation5 + $0x1f0] sm:$0xff]
    %v4815 = vld [vmem:[#allocation5 + $0x1f8] sm:$0xff]
    %v4816 = vld [vmem:[#allocation5 + $0x200] sm:$0xff]
    %v4817 = vld [vmem:[#allocation5 + $0x208] sm:$0xff]
    %v4818 = vld [vmem:[#allocation5 + $0x210] sm:$0xff]
    %v4819 = vld [vmem:[#allocation5 + $0x218] sm:$0xff]
    %v4820 = vld [vmem:[#allocation5 + $0x220] sm:$0xff]
    %v4821 = vld [vmem:[#allocation5 + $0x228] sm:$0xff]
    %v4822 = vld [vmem:[#allocation5 + $0x230] sm:$0xff]
    %v4823 = vld [vmem:[#allocation5 + $0x238] sm:$0xff]
    %v4824 = vld [vmem:[#allocation5 + $0x240] sm:$0xff]
    %v4825 = vld [vmem:[#allocation5 + $0x248] sm:$0xff]
    %v4826 = vld [vmem:[#allocation5 + $0x250] sm:$0xff]
    %v4827 = vld [vmem:[#allocation5 + $0x258] sm:$0xff]
    %v4828 = vld [vmem:[#allocation5 + $0x260] sm:$0xff]
    %v4829 = vld [vmem:[#allocation5 + $0x268] sm:$0xff]
    %v4830 = vld [vmem:[#allocation5 + $0x270] sm:$0xff]
    %v4831 = vld [vmem:[#allocation5 + $0x278] sm:$0xff]
    %v4832 = vld [vmem:[#allocation5 + $0x280] sm:$0xff]
    %v4833 = vld [vmem:[#allocation5 + $0x288] sm:$0xff]
    %v4834 = vld [vmem:[#allocation5 + $0x290] sm:$0xff]
    %v4835 = vld [vmem:[#allocation5 + $0x298] sm:$0xff]
    %v4836 = vld [vmem:[#allocation5 + $0x2a0] sm:$0xff]
    %v4837 = vld [vmem:[#allocation5 + $0x2a8] sm:$0xff]
    %v4838 = vld [vmem:[#allocation5 + $0x2b0] sm:$0xff]
    %v4839 = vld [vmem:[#allocation5 + $0x2b8] sm:$0xff]
    %v4840 = vld [vmem:[#allocation5 + $0x2c0] sm:$0xff]
    %v4841 = vld [vmem:[#allocation5 + $0x2c8] sm:$0xff]
    %v4842 = vld [vmem:[#allocation5 + $0x2d0] sm:$0xff]
    %v4843 = vld [vmem:[#allocation5 + $0x2d8] sm:$0xff]
    %v4844 = vld [vmem:[#allocation5 + $0x2e0] sm:$0xff]
    %v4845 = vld [vmem:[#allocation5 + $0x2e8] sm:$0xff]
    %v4846 = vld [vmem:[#allocation5 + $0x2f0] sm:$0xff]
    %v4847 = vld [vmem:[#allocation5 + $0x2f8] sm:$0xff]
    %v4848 = vld [vmem:[#allocation5 + $0x300] sm:$0xff]
    %v4849 = vld [vmem:[#allocation5 + $0x308] sm:$0xff]
    %v4850 = vld [vmem:[#allocation5 + $0x310] sm:$0xff]
    %v4851 = vld [vmem:[#allocation5 + $0x318] sm:$0xff]
    %v4852 = vld [vmem:[#allocation5 + $0x320] sm:$0xff]
    %v4853 = vld [vmem:[#allocation5 + $0x328] sm:$0xff]
    %v4854 = vld [vmem:[#allocation5 + $0x330] sm:$0xff]
    %v4855 = vld [vmem:[#allocation5 + $0x338] sm:$0xff]
    %v4856 = vld [vmem:[#allocation5 + $0x340] sm:$0xff]
    %v4857 = vld [vmem:[#allocation5 + $0x348] sm:$0xff]
    %v4858 = vld [vmem:[#allocation5 + $0x350] sm:$0xff]
    %v4859 = vld [vmem:[#allocation5 + $0x358] sm:$0xff]
    %v4860 = vld [vmem:[#allocation5 + $0x360] sm:$0xff]
    %v4861 = vld [vmem:[#allocation5 + $0x368] sm:$0xff]
    %v4862 = vld [vmem:[#allocation5 + $0x370] sm:$0xff]
    %v4863 = vld [vmem:[#allocation5 + $0x378] sm:$0xff]
    %v4864 = vld [vmem:[#allocation5 + $0x380] sm:$0xff]
    %v4865 = vld [vmem:[#allocation5 + $0x388] sm:$0xff]
    %v4866 = vld [vmem:[#allocation5 + $0x390] sm:$0xff]
    %v4867 = vld [vmem:[#allocation5 + $0x398] sm:$0xff]
    %v4868 = vld [vmem:[#allocation5 + $0x3a0] sm:$0xff]
    %v4869 = vld [vmem:[#allocation5 + $0x3a8] sm:$0xff]
    %v4870 = vld [vmem:[#allocation5 + $0x3b0] sm:$0xff]
    %v4871 = vld [vmem:[#allocation5 + $0x3b8] sm:$0xff]
    %v4872 = vld [vmem:[#allocation5 + $0x3c0] sm:$0xff]
    %v4873 = vld [vmem:[#allocation5 + $0x3c8] sm:$0xff]
    %v4874 = vld [vmem:[#allocation5 + $0x3d0] sm:$0xff]
    %v4875 = vld [vmem:[#allocation5 + $0x3d8] sm:$0xff]
    %v4876 = vld [vmem:[#allocation5 + $0x3e0] sm:$0xff]
    %v4877 = vld [vmem:[#allocation5 + $0x3e8] sm:$0xff]
    %v4878 = vld [vmem:[#allocation5 + $0x3f0] sm:$0xff]
    %v4879 = vld [vmem:[#allocation5 + $0x3f8] sm:$0xff]
    %v4880 = vld [vmem:[#allocation5 + $0x400] sm:$0xff]
    %v4881 = vld [vmem:[#allocation5 + $0x408] sm:$0xff]
    %v4882 = vld [vmem:[%s2] sm:$0xf]
    %v4883 = vld [vmem:[%s2 + $0x4] sm:$0xf]
    %v4884 = vld [vmem:[%s2 + $0x8] sm:$0xf]
    %v4885 = vld [vmem:[%s2 + $0xc] sm:$0xf]
    %v4886 = vld [vmem:[%s2 + $0x10] sm:$0xf]
    %v4887 = vld [vmem:[%s2 + $0x14] sm:$0xf]
    %v4888 = vld [vmem:[%s2 + $0x18] sm:$0xf]
    %v4889 = vld [vmem:[%s2 + $0x1c] sm:$0xf]
    %v4890 = vld [vmem:[%s2 + $0x20] sm:$0xf]
    %v4891 = vld [vmem:[%s2 + $0x24] sm:$0xf]
    %v4892 = vld [vmem:[%s2 + $0x28] sm:$0xf]
    %v4893 = vld [vmem:[%s2 + $0x2c] sm:$0xf]
    %v4894 = vld [vmem:[%s2 + $0x30] sm:$0xf]
    %v4895 = vld [vmem:[%s2 + $0x34] sm:$0xf]
    %v4896 = vld [vmem:[%s2 + $0x38] sm:$0xf]
    %v4897 = vld [vmem:[%s2 + $0x3c] sm:$0xf]
    %v4898 = vld [vmem:[%s2 + $0x40] sm:$0xf]
    %v4899 = vld [vmem:[%s2 + $0x44] sm:$0xf]
    %v4900 = vld [vmem:[%s2 + $0x48] sm:$0xf]
    %v4901 = vld [vmem:[%s2 + $0x4c] sm:$0xf]
    %v4902 = vld [vmem:[%s2 + $0x50] sm:$0xf]
    %v4903 = vld [vmem:[%s2 + $0x54] sm:$0xf]
    %v4904 = vld [vmem:[%s2 + $0x58] sm:$0xf]
    %v4905 = vld [vmem:[%s2 + $0x5c] sm:$0xf]
    %v4906 = vld [vmem:[%s2 + $0x60] sm:$0xf]
    %v4907 = vld [vmem:[%s2 + $0x64] sm:$0xf]
    %v4908 = vld [vmem:[%s2 + $0x68] sm:$0xf]
    %v4909 = vld [vmem:[%s2 + $0x6c] sm:$0xf]
    %v4910 = vld [vmem:[%s2 + $0x70] sm:$0xf]
    %v4911 = vld [vmem:[%s2 + $0x74] sm:$0xf]
    %v4912 = vld [vmem:[%s2 + $0x78] sm:$0xf]
    %v4913 = vld [vmem:[%s2 + $0x7c] sm:$0xf]
    %v4914 = vld [vmem:[%s2 + $0x80] sm:$0xf]
    %v4915 = vld [vmem:[%s2 + $0x84] sm:$0xf]
    %v4916 = vld [vmem:[%s2 + $0x88] sm:$0xf]
    %v4917 = vld [vmem:[%s2 + $0x8c] sm:$0xf]
    %v4918 = vld [vmem:[%s2 + $0x90] sm:$0xf]
    %v4919 = vld [vmem:[%s2 + $0x94] sm:$0xf]
    %v4920 = vld [vmem:[%s2 + $0x98] sm:$0xf]
    %v4921 = vld [vmem:[%s2 + $0x9c] sm:$0xf]
    %v4922 = vld [vmem:[%s2 + $0xa0] sm:$0xf]
    %v4923 = vld [vmem:[%s2 + $0xa4] sm:$0xf]
    %v4924 = vld [vmem:[%s2 + $0xa8] sm:$0xf]
    %v4925 = vld [vmem:[%s2 + $0xac] sm:$0xf]
    %v4926 = vld [vmem:[%s2 + $0xb0] sm:$0xf]
    %v4927 = vld [vmem:[%s2 + $0xb4] sm:$0xf]
    %v4928 = vld [vmem:[%s2 + $0xb8] sm:$0xf]
    %v4929 = vld [vmem:[%s2 + $0xbc] sm:$0xf]
    %v4930 = vld [vmem:[%s2 + $0xc0] sm:$0xf]
    %v4931 = vld [vmem:[%s2 + $0xc4] sm:$0xf]
    %v4932 = vld [vmem:[%s2 + $0xc8] sm:$0xf]
    %v4933 = vld [vmem:[%s2 + $0xcc] sm:$0xf]
    %v4934 = vld [vmem:[%s2 + $0xd0] sm:$0xf]
    %v4935 = vld [vmem:[%s2 + $0xd4] sm:$0xf]
    %v4936 = vld [vmem:[%s2 + $0xd8] sm:$0xf]
    %v4937 = vld [vmem:[%s2 + $0xdc] sm:$0xf]
    %v4938 = vld [vmem:[%s2 + $0xe0] sm:$0xf]
    %v4939 = vld [vmem:[%s2 + $0xe4] sm:$0xf]
    %v4940 = vld [vmem:[%s2 + $0xe8] sm:$0xf]
    %v4941 = vld [vmem:[%s2 + $0xec] sm:$0xf]
    %v4942 = vld [vmem:[%s2 + $0xf0] sm:$0xf]
    %v4943 = vld [vmem:[%s2 + $0xf4] sm:$0xf]
    %v4944 = vld [vmem:[%s2 + $0xf8] sm:$0xf]
    %v4945 = vld [vmem:[%s2 + $0xfc] sm:$0xf]
    %v4946 = vld [vmem:[%s2 + $0x100] sm:$0xf]
    %v4947 = vld [vmem:[%s2 + $0x104] sm:$0xf]
    %v4948 = vld [vmem:[%s2 + $0x108] sm:$0xf]
    %v4949 = vld [vmem:[%s2 + $0x10c] sm:$0xf]
    %v4950 = vld [vmem:[%s2 + $0x110] sm:$0xf]
    %v4951 = vld [vmem:[%s2 + $0x114] sm:$0xf]
    %v4952 = vld [vmem:[%s2 + $0x118] sm:$0xf]
    %v4953 = vld [vmem:[%s2 + $0x11c] sm:$0xf]
    %v5026 = vunpack.c.l.b16 %v4882
    %v5027 = vunpack.c.l.b16 %v4883
    %v5028 = vunpack.c.l.b16 %v4884
    %v5029 = vunpack.c.l.b16 %v4885
    %v5030 = vunpack.c.l.b16 %v4886
    %v5031 = vunpack.c.l.b16 %v4887
    %v5032 = vunpack.c.l.b16 %v4888
    %v5033 = vunpack.c.l.b16 %v4889
    %v5034 = vunpack.c.l.b16 %v4890
    %v5035 = vunpack.c.l.b16 %v4891
    %v5036 = vunpack.c.l.b16 %v4892
    %v5037 = vunpack.c.l.b16 %v4893
    %v5038 = vunpack.c.l.b16 %v4894
    %v5039 = vunpack.c.l.b16 %v4895
    %v5040 = vunpack.c.l.b16 %v4896
    %v5041 = vunpack.c.l.b16 %v4897
    %v5042 = vunpack.c.l.b16 %v4898
    %v5043 = vunpack.c.l.b16 %v4899
    %v5044 = vunpack.c.l.b16 %v4900
    %v5045 = vunpack.c.l.b16 %v4901
    %v5046 = vunpack.c.l.b16 %v4902
    %v5047 = vunpack.c.l.b16 %v4903
    %v5048 = vunpack.c.l.b16 %v4904
    %v5049 = vunpack.c.l.b16 %v4905
    %v5050 = vunpack.c.l.b16 %v4906
    %v5051 = vunpack.c.l.b16 %v4907
    %v5052 = vunpack.c.l.b16 %v4908
    %v5053 = vunpack.c.l.b16 %v4909
    %v5054 = vunpack.c.l.b16 %v4910
    %v5055 = vunpack.c.l.b16 %v4911
    %v5056 = vunpack.c.l.b16 %v4912
    %v5057 = vunpack.c.l.b16 %v4913
    %v5058 = vunpack.c.l.b16 %v4914
    %v5059 = vunpack.c.l.b16 %v4915
    %v5060 = vunpack.c.l.b16 %v4916
    %v5061 = vunpack.c.l.b16 %v4917
    %v5062 = vunpack.c.l.b16 %v4918
    %v5063 = vunpack.c.l.b16 %v4919
    %v5064 = vunpack.c.l.b16 %v4920
    %v5065 = vunpack.c.l.b16 %v4921
    %v5066 = vunpack.c.l.b16 %v4922
    %v5067 = vunpack.c.l.b16 %v4923
    %v5068 = vunpack.c.l.b16 %v4924
    %v5069 = vunpack.c.l.b16 %v4925
    %v5070 = vunpack.c.l.b16 %v4926
    %v5071 = vunpack.c.l.b16 %v4927
    %v5072 = vunpack.c.l.b16 %v4928
    %v5073 = vunpack.c.l.b16 %v4929
    %v5074 = vunpack.c.l.b16 %v4930
    %v5075 = vunpack.c.l.b16 %v4931
    %v5076 = vunpack.c.l.b16 %v4932
    %v5077 = vunpack.c.l.b16 %v4933
    %v5078 = vunpack.c.l.b16 %v4934
    %v5079 = vunpack.c.l.b16 %v4935
    %v5080 = vunpack.c.l.b16 %v4936
    %v5081 = vunpack.c.l.b16 %v4937
    %v5082 = vunpack.c.l.b16 %v4938
    %v5083 = vunpack.c.l.b16 %v4939
    %v5084 = vunpack.c.l.b16 %v4940
    %v5085 = vunpack.c.l.b16 %v4941
    %v5086 = vunpack.c.l.b16 %v4942
    %v5087 = vunpack.c.l.b16 %v4943
    %v5088 = vunpack.c.l.b16 %v4944
    %v5089 = vunpack.c.l.b16 %v4945
    %v5090 = vunpack.c.l.b16 %v4946
    %v5091 = vunpack.c.l.b16 %v4947
    %v5092 = vunpack.c.l.b16 %v4948
    %v5093 = vunpack.c.l.b16 %v4949
    %v5094 = vunpack.c.l.b16 %v4950
    %v5095 = vunpack.c.l.b16 %v4951
    %v5096 = vunpack.c.l.b16 %v4952
    %v5097 = vunpack.c.l.b16 %v4953
    %v5098 = vpack.c.b16 %v5027, %v5026
    %v5099 = vpack.c.b16 %v5029, %v5028
    %v5100 = vpack.c.b16 %v5031, %v5030
    %v5101 = vpack.c.b16 %v5033, %v5032
    %v5102 = vpack.c.b16 %v5035, %v5034
    %v5103 = vpack.c.b16 %v5037, %v5036
    %v5104 = vpack.c.b16 %v5039, %v5038
    %v5105 = vpack.c.b16 %v5041, %v5040
    %v5106 = vpack.c.b16 %v5043, %v5042
    %v5107 = vpack.c.b16 %v5045, %v5044
    %v5108 = vpack.c.b16 %v5047, %v5046
    %v5109 = vpack.c.b16 %v5049, %v5048
    %v5110 = vpack.c.b16 %v5051, %v5050
    %v5111 = vpack.c.b16 %v5053, %v5052
    %v5112 = vpack.c.b16 %v5055, %v5054
    %v5113 = vpack.c.b16 %v5057, %v5056
    %v5114 = vpack.c.b16 %v5059, %v5058
    %v5115 = vpack.c.b16 %v5061, %v5060
    %v5116 = vpack.c.b16 %v5063, %v5062
    %v5117 = vpack.c.b16 %v5065, %v5064
    %v5118 = vpack.c.b16 %v5067, %v5066
    %v5119 = vpack.c.b16 %v5069, %v5068
    %v5120 = vpack.c.b16 %v5071, %v5070
    %v5121 = vpack.c.b16 %v5073, %v5072
    %v5122 = vpack.c.b16 %v5075, %v5074
    %v5123 = vpack.c.b16 %v5077, %v5076
    %v5124 = vpack.c.b16 %v5079, %v5078
    %v5125 = vpack.c.b16 %v5081, %v5080
    %v5126 = vpack.c.b16 %v5083, %v5082
    %v5127 = vpack.c.b16 %v5085, %v5084
    %v5128 = vpack.c.b16 %v5087, %v5086
    %v5129 = vpack.c.b16 %v5089, %v5088
    %v5130 = vpack.c.b16 %v5091, %v5090
    %v5131 = vpack.c.b16 %v5093, %v5092
    %v5132 = vpack.c.b16 %v5095, %v5094
    %v5133 = vpack.c.b16 %v5097, %v5096
    %v5171 = vsel %vm2947, %v4756, 0
    %v5174 = vsel %vm2947, %v4761, 0
    %v5177 = vsel %vm2947, %v4766, 0
    %v5180 = vsel %vm2947, %v4771, 0
    %v5183 = vsel %vm2947, %v4776, 0
    %v5186 = vsel %vm2947, %v4781, 0
    %v5189 = vsel %vm2947, %v4786, 0
    %v5192 = vsel %vm2947, %v4791, 0
    %v5195 = vsel %vm2947, %v4796, 0
    %v5198 = vsel %vm2947, %v4801, 0
    %v5201 = vsel %vm2947, %v4806, 0
    %v5204 = vsel %vm2947, %v4811, 0
    %v5207 = vsel %vm2947, %v4816, 0
    %v5210 = vsel %vm2947, %v4821, 0
    %v5213 = vsel %vm2947, %v4826, 0
    %v5216 = vsel %vm2947, %v4831, 0
    %v5219 = vsel %vm2947, %v4836, 0
    %v5222 = vsel %vm2947, %v4841, 0
    %v5225 = vsel %vm2947, %v4846, 0
    %v5228 = vsel %vm2947, %v4851, 0
    %v5231 = vsel %vm2947, %v4856, 0
    %v5234 = vsel %vm2947, %v4861, 0
    %v5237 = vsel %vm2947, %v4866, 0
    %v5240 = vsel %vm2947, %v4871, 0
    %v5243 = vsel %vm2947, %v4876, 0
    %v5246 = vsel %vm2947, %v4881, 0
    %5248 = vmatprep.subr.bf16.mxu0 0
    %5249 = vmatpush1.bf16.msra.mxu0 %v5098
    %5250 = vmatprep.subr.bf16.mxu0 0
    %5251 = vmatpush1.bf16.msra.mxu0 %v5099
    %5252 = vmatprep.subr.bf16.mxu0 0
    %5253 = vmatpush1.bf16.msra.mxu0 %v5100
    %5254 = vmatprep.subr.bf16.mxu0 0
    %5255 = vmatpush1.bf16.msra.mxu0 %v5101
    %5256 = vmatprep.subr.bf16.mxu0 0
    %5257 = vmatpush1.bf16.msra.mxu0 %v5102
    %5258 = vmatprep.subr.bf16.mxu0 0
    %5259 = vmatpush1.bf16.msra.mxu0 %v5103
    %5260 = vmatprep.subr.bf16.mxu0 0
    %5261 = vmatpush1.bf16.msra.mxu0 %v5104
    %5262 = vmatprep.subr.bf16.mxu0 0
    %5263 = vmatpush1.bf16.msra.mxu0 %v5105
    %5264 = vmatprep.subr.bf16.mxu0 0
    %5265 = vmatpush1.bf16.msra.mxu0 %v5106
    %5266 = vmatprep.subr.bf16.mxu0 0
    %5267 = vmatpush1.bf16.msra.mxu0 %v5107
    %5268 = vmatprep.subr.bf16.mxu0 0
    %5269 = vmatpush1.bf16.msra.mxu0 %v5108
    %5270 = vmatprep.subr.bf16.mxu0 0
    %5271 = vmatpush1.bf16.msra.mxu0 %v5109
    %5272 = vmatprep.subr.bf16.mxu0 0
    %5273 = vmatpush1.bf16.msra.mxu0 %v5110
    %5274 = vmatprep.subr.bf16.mxu0 0
    %5275 = vmatpush1.bf16.msra.mxu0 %v5111
    %5276 = vmatprep.subr.bf16.mxu0 0
    %5277 = vmatpush1.bf16.msra.mxu0 %v5112
    %5278 = vmatprep.subr.bf16.mxu0 0
    %5279 = vmatpush1.bf16.msra.mxu0 %v5113
    %5280 = vmatprep.mubr.bf16.mxu0 %v4753
    %5281 = vmatmul.mubr.bf16.gmra.mrb[0].mxu0 %v4752
    %v5282 = vpop.f32.mrb[0].mxu0
    %v5283 = vadd.f32 0.0, %v5282
    %v5284 = vpop.f32.mrb[0].mxu0
    %v5285 = vpop.f32.mrb[0].mxu0
    %v5286 = vadd.f32 0.0, %v5285
    %v5287 = vpop.f32.mrb[0].mxu0
    %5288 = vmatprep.mubr.bf16.mxu0 %v4758
    %5289 = vmatmul.mubr.bf16.gmra.mrb[0].mxu0 %v4757
    %v5290 = vpop.f32.mrb[0].mxu0
    %v5291 = vadd.f32 0.0, %v5290
    %v5292 = vpop.f32.mrb[0].mxu0
    %v5293 = vpop.f32.mrb[0].mxu0
    %v5294 = vadd.f32 0.0, %v5293
    %v5295 = vpop.f32.mrb[0].mxu0
    %5296 = vmatprep.mubr.bf16.mxu0 %v4763
    %5297 = vmatmul.mubr.bf16.gmra.mrb[0].mxu0 %v4762
    %v5298 = vpop.f32.mrb[0].mxu0
    %v5299 = vadd.f32 0.0, %v5298
    %v5300 = vpop.f32.mrb[0].mxu0
    %v5301 = vpop.f32.mrb[0].mxu0
    %v5302 = vadd.f32 0.0, %v5301
    %v5303 = vpop.f32.mrb[0].mxu0
    %5304 = vmatprep.mubr.bf16.mxu0 %v4768
    %5305 = vmatmul.mubr.bf16.gmra.mrb[0].mxu0 %v4767
    %v5306 = vpop.f32.mrb[0].mxu0
    %v5307 = vadd.f32 0.0, %v5306
    %v5308 = vpop.f32.mrb[0].mxu0
    %v5309 = vpop.f32.mrb[0].mxu0
    %v5310 = vadd.f32 0.0, %v5309
    %v5311 = vpop.f32.mrb[0].mxu0
    %5312 = vmatprep.mubr.bf16.mxu0 %v4773
    %5313 = vmatmul.mubr.bf16.gmra.mrb[0].mxu0 %v4772
    %v5314 = vpop.f32.mrb[0].mxu0
    %v5315 = vadd.f32 0.0, %v5314
    %v5316 = vpop.f32.mrb[0].mxu0
    %v5317 = vpop.f32.mrb[0].mxu0
    %v5318 = vadd.f32 0.0, %v5317
    %v5319 = vpop.f32.mrb[0].mxu0
    %5320 = vmatprep.mubr.bf16.mxu0 %v4778
    %5321 = vmatmul.mubr.bf16.gmra.mrb[0].mxu0 %v4777
    %v5322 = vpop.f32.mrb[0].mxu0
    %v5323 = vadd.f32 0.0, %v5322
    %v5324 = vpop.f32.mrb[0].mxu0
    %v5325 = vpop.f32.mrb[0].mxu0
    %v5326 = vadd.f32 0.0, %v5325
    %v5327 = vpop.f32.mrb[0].mxu0
    %5328 = vmatprep.mubr.bf16.mxu0 %v4783
    %5329 = vmatmul.mubr.bf16.gmra.mrb[0].mxu0 %v4782
    %v5330 = vpop.f32.mrb[0].mxu0
    %v5331 = vadd.f32 0.0, %v5330
    %v5332 = vpop.f32.mrb[0].mxu0
    %v5333 = vpop.f32.mrb[0].mxu0
    %v5334 = vadd.f32 0.0, %v5333
    %v5335 = vpop.f32.mrb[0].mxu0
    %5336 = vmatprep.mubr.bf16.mxu0 %v4788
    %5337 = vmatmul.mubr.bf16.gmra.mrb[0].mxu0 %v4787
    %v5338 = vpop.f32.mrb[0].mxu0
    %v5339 = vadd.f32 0.0, %v5338
    %v5340 = vpop.f32.mrb[0].mxu0
    %v5341 = vpop.f32.mrb[0].mxu0
    %v5342 = vadd.f32 0.0, %v5341
    %v5343 = vpop.f32.mrb[0].mxu0
    %5344 = vmatprep.mubr.bf16.mxu0 %v4793
    %5345 = vmatmul.mubr.bf16.gmra.mrb[0].mxu0 %v4792
    %v5346 = vpop.f32.mrb[0].mxu0
    %v5347 = vadd.f32 0.0, %v5346
    %v5348 = vpop.f32.mrb[0].mxu0
    %v5349 = vpop.f32.mrb[0].mxu0
    %v5350 = vadd.f32 0.0, %v5349
    %v5351 = vpop.f32.mrb[0].mxu0
    %5352 = vmatprep.mubr.bf16.mxu0 %v4798
    %5353 = vmatmul.mubr.bf16.gmra.mrb[0].mxu0 %v4797
    %v5354 = vpop.f32.mrb[0].mxu0
    %v5355 = vadd.f32 0.0, %v5354
    %v5356 = vpop.f32.mrb[0].mxu0
    %v5357 = vpop.f32.mrb[0].mxu0
    %v5358 = vadd.f32 0.0, %v5357
    %v5359 = vpop.f32.mrb[0].mxu0
    %5360 = vmatprep.mubr.bf16.mxu0 %v4803
    %5361 = vmatmul.mubr.bf16.gmra.mrb[0].mxu0 %v4802
    %v5362 = vpop.f32.mrb[0].mxu0
    %v5363 = vadd.f32 0.0, %v5362
    %v5364 = vpop.f32.mrb[0].mxu0
    %v5365 = vpop.f32.mrb[0].mxu0
    %v5366 = vadd.f32 0.0, %v5365
    %v5367 = vpop.f32.mrb[0].mxu0
    %5368 = vmatprep.mubr.bf16.mxu0 %v4808
    %5369 = vmatmul.mubr.bf16.gmra.mrb[0].mxu0 %v4807
    %v5370 = vpop.f32.mrb[0].mxu0
    %v5371 = vadd.f32 0.0, %v5370
    %v5372 = vpop.f32.mrb[0].mxu0
    %v5373 = vpop.f32.mrb[0].mxu0
    %v5374 = vadd.f32 0.0, %v5373
    %v5375 = vpop.f32.mrb[0].mxu0
    %5376 = vmatprep.mubr.bf16.mxu0 %v4813
    %5377 = vmatmul.mubr.bf16.gmra.mrb[0].mxu0 %v4812
    %v5378 = vpop.f32.mrb[0].mxu0
    %v5379 = vadd.f32 0.0, %v5378
    %v5380 = vpop.f32.mrb[0].mxu0
    %v5381 = vpop.f32.mrb[0].mxu0
    %v5382 = vadd.f32 0.0, %v5381
    %v5383 = vpop.f32.mrb[0].mxu0
    %5384 = vmatprep.mubr.bf16.mxu0 %v4818
    %5385 = vmatmul.mubr.bf16.gmra.mrb[0].mxu0 %v4817
    %v5386 = vpop.f32.mrb[0].mxu0
    %v5387 = vadd.f32 0.0, %v5386
    %v5388 = vpop.f32.mrb[0].mxu0
    %v5389 = vpop.f32.mrb[0].mxu0
    %v5390 = vadd.f32 0.0, %v5389
    %v5391 = vpop.f32.mrb[0].mxu0
    %5392 = vmatprep.mubr.bf16.mxu0 %v4823
    %5393 = vmatmul.mubr.bf16.gmra.mrb[0].mxu0 %v4822
    %v5394 = vpop.f32.mrb[0].mxu0
    %v5395 = vadd.f32 0.0, %v5394
    %v5396 = vpop.f32.mrb[0].mxu0
    %v5397 = vpop.f32.mrb[0].mxu0
    %v5398 = vadd.f32 0.0, %v5397
    %v5399 = vpop.f32.mrb[0].mxu0
    %5400 = vmatprep.mubr.bf16.mxu0 %v4828
    %5401 = vmatmul.mubr.bf16.gmra.mrb[0].mxu0 %v4827
    %v5402 = vpop.f32.mrb[0].mxu0
    %v5403 = vadd.f32 0.0, %v5402
    %v5404 = vpop.f32.mrb[0].mxu0
    %v5405 = vpop.f32.mrb[0].mxu0
    %v5406 = vadd.f32 0.0, %v5405
    %v5407 = vpop.f32.mrb[0].mxu0
    %5408 = vmatprep.mubr.bf16.mxu0 %v4833
    %5409 = vmatmul.mubr.bf16.gmra.mrb[0].mxu0 %v4832
    %v5410 = vpop.f32.mrb[0].mxu0
    %v5411 = vadd.f32 0.0, %v5410
    %v5412 = vpop.f32.mrb[0].mxu0
    %v5413 = vpop.f32.mrb[0].mxu0
    %v5414 = vadd.f32 0.0, %v5413
    %v5415 = vpop.f32.mrb[0].mxu0
    %5416 = vmatprep.mubr.bf16.mxu0 %v4838
    %5417 = vmatmul.mubr.bf16.gmra.mrb[0].mxu0 %v4837
    %v5418 = vpop.f32.mrb[0].mxu0
    %v5419 = vadd.f32 0.0, %v5418
    %v5420 = vpop.f32.mrb[0].mxu0
    %v5421 = vpop.f32.mrb[0].mxu0
    %v5422 = vadd.f32 0.0, %v5421
    %v5423 = vpop.f32.mrb[0].mxu0
    %5424 = vmatprep.mubr.bf16.mxu0 %v4843
    %5425 = vmatmul.mubr.bf16.gmra.mrb[0].mxu0 %v4842
    %v5426 = vpop.f32.mrb[0].mxu0
    %v5427 = vadd.f32 0.0, %v5426
    %v5428 = vpop.f32.mrb[0].mxu0
    %v5429 = vpop.f32.mrb[0].mxu0
    %v5430 = vadd.f32 0.0, %v5429
    %v5431 = vpop.f32.mrb[0].mxu0
    %5432 = vmatprep.mubr.bf16.mxu0 %v4848
    %5433 = vmatmul.mubr.bf16.gmra.mrb[0].mxu0 %v4847
    %v5434 = vpop.f32.mrb[0].mxu0
    %v5435 = vadd.f32 0.0, %v5434
    %v5436 = vpop.f32.mrb[0].mxu0
    %v5437 = vpop.f32.mrb[0].mxu0
    %v5438 = vadd.f32 0.0, %v5437
    %v5439 = vpop.f32.mrb[0].mxu0
    %5440 = vmatprep.mubr.bf16.mxu0 %v4853
    %5441 = vmatmul.mubr.bf16.gmra.mrb[0].mxu0 %v4852
    %v5442 = vpop.f32.mrb[0].mxu0
    %v5443 = vadd.f32 0.0, %v5442
    %v5444 = vpop.f32.mrb[0].mxu0
    %v5445 = vpop.f32.mrb[0].mxu0
    %v5446 = vadd.f32 0.0, %v5445
    %v5447 = vpop.f32.mrb[0].mxu0
    %5448 = vmatprep.mubr.bf16.mxu0 %v4858
    %5449 = vmatmul.mubr.bf16.gmra.mrb[0].mxu0 %v4857
    %v5450 = vpop.f32.mrb[0].mxu0
    %v5451 = vadd.f32 0.0, %v5450
    %v5452 = vpop.f32.mrb[0].mxu0
    %v5453 = vpop.f32.mrb[0].mxu0
    %v5454 = vadd.f32 0.0, %v5453
    %v5455 = vpop.f32.mrb[0].mxu0
    %5456 = vmatprep.mubr.bf16.mxu0 %v4863
    %5457 = vmatmul.mubr.bf16.gmra.mrb[0].mxu0 %v4862
    %v5458 = vpop.f32.mrb[0].mxu0
    %v5459 = vadd.f32 0.0, %v5458
    %v5460 = vpop.f32.mrb[0].mxu0
    %v5461 = vpop.f32.mrb[0].mxu0
    %v5462 = vadd.f32 0.0, %v5461
    %v5463 = vpop.f32.mrb[0].mxu0
    %5464 = vmatprep.mubr.bf16.mxu0 %v4868
    %5465 = vmatmul.mubr.bf16.gmra.mrb[0].mxu0 %v4867
    %v5466 = vpop.f32.mrb[0].mxu0
    %v5467 = vadd.f32 0.0, %v5466
    %v5468 = vpop.f32.mrb[0].mxu0
    %v5469 = vpop.f32.mrb[0].mxu0
    %v5470 = vadd.f32 0.0, %v5469
    %v5471 = vpop.f32.mrb[0].mxu0
    %5472 = vmatprep.mubr.bf16.mxu0 %v4873
    %5473 = vmatmul.mubr.bf16.gmra.mrb[0].mxu0 %v4872
    %v5474 = vpop.f32.mrb[0].mxu0
    %v5475 = vadd.f32 0.0, %v5474
    %v5476 = vpop.f32.mrb[0].mxu0
    %v5477 = vpop.f32.mrb[0].mxu0
    %v5478 = vadd.f32 0.0, %v5477
    %v5479 = vpop.f32.mrb[0].mxu0
    %5480 = vmatprep.mubr.bf16.mxu0 %v4878
    %5481 = vmatmul.mubr.bf16.gmra.mrb[0].mxu0 %v4877
    %v5482 = vpop.f32.mrb[0].mxu0
    %v5483 = vadd.f32 0.0, %v5482
    %v5484 = vpop.f32.mrb[0].mxu0
    %v5485 = vpop.f32.mrb[0].mxu0
    %v5486 = vadd.f32 0.0, %v5485
    %v5487 = vpop.f32.mrb[0].mxu0
    %5488 = vdwg.mxu0
    %5489 = vmatprep.subr.bf16.mxu0 0
    %5490 = vmatpush1.bf16.msra.mxu0 %v5114
    %5491 = vmatprep.subr.bf16.mxu0 0
    %5492 = vmatpush1.bf16.msra.mxu0 %v5115
    %5493 = vmatprep.subr.bf16.mxu0 0
    %5494 = vmatpush1.bf16.msra.mxu0 %v5116
    %5495 = vmatprep.subr.bf16.mxu0 0
    %5496 = vmatpush1.bf16.msra.mxu0 %v5117
    %5497 = vmatprep.subr.bf16.mxu0 0
    %5498 = vmatpush1.bf16.msra.mxu0 %v5118
    %5499 = vmatprep.subr.bf16.mxu0 0
    %5500 = vmatpush1.bf16.msra.mxu0 %v5119
    %5501 = vmatprep.subr.bf16.mxu0 0
    %5502 = vmatpush1.bf16.msra.mxu0 %v5120
    %5503 = vmatprep.subr.bf16.mxu0 0
    %5504 = vmatpush1.bf16.msra.mxu0 %v5121
    %5505 = vmatprep.subr.bf16.mxu0 0
    %5506 = vmatpush1.bf16.msra.mxu0 %v5122
    %5507 = vmatprep.subr.bf16.mxu0 0
    %5508 = vmatpush1.bf16.msra.mxu0 %v5123
    %5509 = vmatprep.subr.bf16.mxu0 0
    %5510 = vmatpush1.bf16.msra.mxu0 %v5124
    %5511 = vmatprep.subr.bf16.mxu0 0
    %5512 = vmatpush1.bf16.msra.mxu0 %v5125
    %5513 = vmatprep.subr.bf16.mxu0 0
    %5514 = vmatpush1.bf16.msra.mxu0 %v5126
    %5515 = vmatprep.subr.bf16.mxu0 0
    %5516 = vmatpush1.bf16.msra.mxu0 %v5127
    %5517 = vmatprep.subr.bf16.mxu0 0
    %5518 = vmatpush1.bf16.msra.mxu0 %v5128
    %5519 = vmatprep.subr.bf16.mxu0 0
    %5520 = vmatpush1.bf16.msra.mxu0 %v5129
    %5521 = vmatprep.mubr.bf16.mxu0 %v4755
    %5522 = vmatmul.mubr.bf16.gmra.mrb[0].mxu0 %v4754
    %v5523 = vpop.f32.mrb[0].mxu0
    %v5524 = vadd.f32 %v5283, %v5523
    %v5525 = vpop.f32.mrb[0].mxu0
    %v5526 = vpop.f32.mrb[0].mxu0
    %v5527 = vadd.f32 %v5286, %v5526
    %v5528 = vpop.f32.mrb[0].mxu0
    %5529 = vmatprep.mubr.bf16.mxu0 %v4760
    %5530 = vmatmul.mubr.bf16.gmra.mrb[0].mxu0 %v4759
    %v5531 = vpop.f32.mrb[0].mxu0
    %v5532 = vadd.f32 %v5291, %v5531
    %v5533 = vpop.f32.mrb[0].mxu0
    %v5534 = vpop.f32.mrb[0].mxu0
    %v5535 = vadd.f32 %v5294, %v5534
    %v5536 = vpop.f32.mrb[0].mxu0
    %5537 = vmatprep.mubr.bf16.mxu0 %v4765
    %5538 = vmatmul.mubr.bf16.gmra.mrb[0].mxu0 %v4764
    %v5539 = vpop.f32.mrb[0].mxu0
    %v5540 = vadd.f32 %v5299, %v5539
    %v5541 = vpop.f32.mrb[0].mxu0
    %v5542 = vpop.f32.mrb[0].mxu0
    %v5543 = vadd.f32 %v5302, %v5542
    %v5544 = vpop.f32.mrb[0].mxu0
    %5545 = vmatprep.mubr.bf16.mxu0 %v4770
    %5546 = vmatmul.mubr.bf16.gmra.mrb[0].mxu0 %v4769
    %v5547 = vpop.f32.mrb[0].mxu0
    %v5548 = vadd.f32 %v5307, %v5547
    %v5549 = vpop.f32.mrb[0].mxu0
    %v5550 = vpop.f32.mrb[0].mxu0
    %v5551 = vadd.f32 %v5310, %v5550
    %v5552 = vpop.f32.mrb[0].mxu0
    %5553 = vmatprep.mubr.bf16.mxu0 %v4775
    %5554 = vmatmul.mubr.bf16.gmra.mrb[0].mxu0 %v4774
    %v5555 = vpop.f32.mrb[0].mxu0
    %v5556 = vadd.f32 %v5315, %v5555
    %v5557 = vpop.f32.mrb[0].mxu0
    %v5558 = vpop.f32.mrb[0].mxu0
    %v5559 = vadd.f32 %v5318, %v5558
    %v5560 = vpop.f32.mrb[0].mxu0
    %5561 = vmatprep.mubr.bf16.mxu0 %v4780
    %5562 = vmatmul.mubr.bf16.gmra.mrb[0].mxu0 %v4779
    %v5563 = vpop.f32.mrb[0].mxu0
    %v5564 = vadd.f32 %v5323, %v5563
    %v5565 = vpop.f32.mrb[0].mxu0
    %v5566 = vpop.f32.mrb[0].mxu0
    %v5567 = vadd.f32 %v5326, %v5566
    %v5568 = vpop.f32.mrb[0].mxu0
    %5569 = vmatprep.mubr.bf16.mxu0 %v4785
    %5570 = vmatmul.mubr.bf16.gmra.mrb[0].mxu0 %v4784
    %v5571 = vpop.f32.mrb[0].mxu0
    %v5572 = vadd.f32 %v5331, %v5571
    %v5573 = vpop.f32.mrb[0].mxu0
    %v5574 = vpop.f32.mrb[0].mxu0
    %v5575 = vadd.f32 %v5334, %v5574
    %v5576 = vpop.f32.mrb[0].mxu0
    %5577 = vmatprep.mubr.bf16.mxu0 %v4790
    %5578 = vmatmul.mubr.bf16.gmra.mrb[0].mxu0 %v4789
    %v5579 = vpop.f32.mrb[0].mxu0
    %v5580 = vadd.f32 %v5339, %v5579
    %v5581 = vpop.f32.mrb[0].mxu0
    %v5582 = vpop.f32.mrb[0].mxu0
    %v5583 = vadd.f32 %v5342, %v5582
    %v5584 = vpop.f32.mrb[0].mxu0
    %5585 = vmatprep.mubr.bf16.mxu0 %v4795
    %5586 = vmatmul.mubr.bf16.gmra.mrb[0].mxu0 %v4794
    %v5587 = vpop.f32.mrb[0].mxu0
    %v5588 = vadd.f32 %v5347, %v5587
    %v5589 = vpop.f32.mrb[0].mxu0
    %v5590 = vpop.f32.mrb[0].mxu0
    %v5591 = vadd.f32 %v5350, %v5590
    %v5592 = vpop.f32.mrb[0].mxu0
    %5593 = vmatprep.mubr.bf16.mxu0 %v4800
    %5594 = vmatmul.mubr.bf16.gmra.mrb[0].mxu0 %v4799
    %v5595 = vpop.f32.mrb[0].mxu0
    %v5596 = vadd.f32 %v5355, %v5595
    %v5597 = vpop.f32.mrb[0].mxu0
    %v5598 = vpop.f32.mrb[0].mxu0
    %v5599 = vadd.f32 %v5358, %v5598
    %v5600 = vpop.f32.mrb[0].mxu0
    %5601 = vmatprep.mubr.bf16.mxu0 %v4805
    %5602 = vmatmul.mubr.bf16.gmra.mrb[0].mxu0 %v4804
    %v5603 = vpop.f32.mrb[0].mxu0
    %v5604 = vadd.f32 %v5363, %v5603
    %v5605 = vpop.f32.mrb[0].mxu0
    %v5606 = vpop.f32.mrb[0].mxu0
    %v5607 = vadd.f32 %v5366, %v5606
    %v5608 = vpop.f32.mrb[0].mxu0
    %5609 = vmatprep.mubr.bf16.mxu0 %v4810
    %5610 = vmatmul.mubr.bf16.gmra.mrb[0].mxu0 %v4809
    %v5611 = vpop.f32.mrb[0].mxu0
    %v5612 = vadd.f32 %v5371, %v5611
    %v5613 = vpop.f32.mrb[0].mxu0
    %v5614 = vpop.f32.mrb[0].mxu0
    %v5615 = vadd.f32 %v5374, %v5614
    %v5616 = vpop.f32.mrb[0].mxu0
    %5617 = vmatprep.mubr.bf16.mxu0 %v4815
    %5618 = vmatmul.mubr.bf16.gmra.mrb[0].mxu0 %v4814
    %v5619 = vpop.f32.mrb[0].mxu0
    %v5620 = vadd.f32 %v5379, %v5619
    %v5621 = vpop.f32.mrb[0].mxu0
    %v5622 = vpop.f32.mrb[0].mxu0
    %v5623 = vadd.f32 %v5382, %v5622
    %v5624 = vpop.f32.mrb[0].mxu0
    %5625 = vmatprep.mubr.bf16.mxu0 %v4820
    %5626 = vmatmul.mubr.bf16.gmra.mrb[0].mxu0 %v4819
    %v5627 = vpop.f32.mrb[0].mxu0
    %v5628 = vadd.f32 %v5387, %v5627
    %v5629 = vpop.f32.mrb[0].mxu0
    %v5630 = vpop.f32.mrb[0].mxu0
    %v5631 = vadd.f32 %v5390, %v5630
    %v5632 = vpop.f32.mrb[0].mxu0
    %5633 = vmatprep.mubr.bf16.mxu0 %v4825
    %5634 = vmatmul.mubr.bf16.gmra.mrb[0].mxu0 %v4824
    %v5635 = vpop.f32.mrb[0].mxu0
    %v5636 = vadd.f32 %v5395, %v5635
    %v5637 = vpop.f32.mrb[0].mxu0
    %v5638 = vpop.f32.mrb[0].mxu0
    %v5639 = vadd.f32 %v5398, %v5638
    %v5640 = vpop.f32.mrb[0].mxu0
    %5641 = vmatprep.mubr.bf16.mxu0 %v4830
    %5642 = vmatmul.mubr.bf16.gmra.mrb[0].mxu0 %v4829
    %v5643 = vpop.f32.mrb[0].mxu0
    %v5644 = vadd.f32 %v5403, %v5643
    %v5645 = vpop.f32.mrb[0].mxu0
    %v5646 = vpop.f32.mrb[0].mxu0
    %v5647 = vadd.f32 %v5406, %v5646
    %v5648 = vpop.f32.mrb[0].mxu0
    %5649 = vmatprep.mubr.bf16.mxu0 %v4835
    %5650 = vmatmul.mubr.bf16.gmra.mrb[0].mxu0 %v4834
    %v5651 = vpop.f32.mrb[0].mxu0
    %v5652 = vadd.f32 %v5411, %v5651
    %v5653 = vpop.f32.mrb[0].mxu0
    %v5654 = vpop.f32.mrb[0].mxu0
    %v5655 = vadd.f32 %v5414, %v5654
    %v5656 = vpop.f32.mrb[0].mxu0
    %5657 = vmatprep.mubr.bf16.mxu0 %v4840
    %5658 = vmatmul.mubr.bf16.gmra.mrb[0].mxu0 %v4839
    %v5659 = vpop.f32.mrb[0].mxu0
    %v5660 = vadd.f32 %v5419, %v5659
    %v5661 = vpop.f32.mrb[0].mxu0
    %v5662 = vpop.f32.mrb[0].mxu0
    %v5663 = vadd.f32 %v5422, %v5662
    %v5664 = vpop.f32.mrb[0].mxu0
    %5665 = vmatprep.mubr.bf16.mxu0 %v4845
    %5666 = vmatmul.mubr.bf16.gmra.mrb[0].mxu0 %v4844
    %v5667 = vpop.f32.mrb[0].mxu0
    %v5668 = vadd.f32 %v5427, %v5667
    %v5669 = vpop.f32.mrb[0].mxu0
    %v5670 = vpop.f32.mrb[0].mxu0
    %v5671 = vadd.f32 %v5430, %v5670
    %v5672 = vpop.f32.mrb[0].mxu0
    %5673 = vmatprep.mubr.bf16.mxu0 %v4850
    %5674 = vmatmul.mubr.bf16.gmra.mrb[0].mxu0 %v4849
    %v5675 = vpop.f32.mrb[0].mxu0
    %v5676 = vadd.f32 %v5435, %v5675
    %v5677 = vpop.f32.mrb[0].mxu0
    %v5678 = vpop.f32.mrb[0].mxu0
    %v5679 = vadd.f32 %v5438, %v5678
    %v5680 = vpop.f32.mrb[0].mxu0
    %5681 = vmatprep.mubr.bf16.mxu0 %v4855
    %5682 = vmatmul.mubr.bf16.gmra.mrb[0].mxu0 %v4854
    %v5683 = vpop.f32.mrb[0].mxu0
    %v5684 = vadd.f32 %v5443, %v5683
    %v5685 = vpop.f32.mrb[0].mxu0
    %v5686 = vpop.f32.mrb[0].mxu0
    %v5687 = vadd.f32 %v5446, %v5686
    %v5688 = vpop.f32.mrb[0].mxu0
    %5689 = vmatprep.mubr.bf16.mxu0 %v4860
    %5690 = vmatmul.mubr.bf16.gmra.mrb[0].mxu0 %v4859
    %v5691 = vpop.f32.mrb[0].mxu0
    %v5692 = vadd.f32 %v5451, %v5691
    %v5693 = vpop.f32.mrb[0].mxu0
    %v5694 = vpop.f32.mrb[0].mxu0
    %v5695 = vadd.f32 %v5454, %v5694
    %v5696 = vpop.f32.mrb[0].mxu0
    %5697 = vmatprep.mubr.bf16.mxu0 %v4865
    %5698 = vmatmul.mubr.bf16.gmra.mrb[0].mxu0 %v4864
    %v5699 = vpop.f32.mrb[0].mxu0
    %v5700 = vadd.f32 %v5459, %v5699
    %v5701 = vpop.f32.mrb[0].mxu0
    %v5702 = vpop.f32.mrb[0].mxu0
    %v5703 = vadd.f32 %v5462, %v5702
    %v5704 = vpop.f32.mrb[0].mxu0
    %5705 = vmatprep.mubr.bf16.mxu0 %v4870
    %5706 = vmatmul.mubr.bf16.gmra.mrb[0].mxu0 %v4869
    %v5707 = vpop.f32.mrb[0].mxu0
    %v5708 = vadd.f32 %v5467, %v5707
    %v5709 = vpop.f32.mrb[0].mxu0
    %v5710 = vpop.f32.mrb[0].mxu0
    %v5711 = vadd.f32 %v5470, %v5710
    %v5712 = vpop.f32.mrb[0].mxu0
    %5713 = vmatprep.mubr.bf16.mxu0 %v4875
    %5714 = vmatmul.mubr.bf16.gmra.mrb[0].mxu0 %v4874
    %v5715 = vpop.f32.mrb[0].mxu0
    %v5716 = vadd.f32 %v5475, %v5715
    %v5717 = vpop.f32.mrb[0].mxu0
    %v5718 = vpop.f32.mrb[0].mxu0
    %v5719 = vadd.f32 %v5478, %v5718
    %v5720 = vpop.f32.mrb[0].mxu0
    %5721 = vmatprep.mubr.bf16.mxu0 %v4880
    %5722 = vmatmul.mubr.bf16.gmra.mrb[0].mxu0 %v4879
    %v5723 = vpop.f32.mrb[0].mxu0
    %v5724 = vadd.f32 %v5483, %v5723
    %v5725 = vpop.f32.mrb[0].mxu0
    %v5726 = vpop.f32.mrb[0].mxu0
    %v5727 = vadd.f32 %v5486, %v5726
    %v5728 = vpop.f32.mrb[0].mxu0
    %5729 = vdwg.mxu0
    %5730 = vmatprep.subr.bf16.mxu0 0
    %5731 = vmatpush1.bf16.msra.mxu0 %v5130
    %5732 = vmatprep.subr.bf16.mxu0 0
    %5733 = vmatpush1.bf16.msra.mxu0 %v5131
    %5734 = vmatprep.subr.bf16.mxu0 0
    %5735 = vmatpush1.bf16.msra.mxu0 %v5132
    %5736 = vmatprep.subr.bf16.mxu0 0
    %5737 = vmatpush1.bf16.msra.mxu0 %v5133
    %5738 = vmatprep.subr.bf16.mxu0 0
    %5739 = vmatpush1.bf16.msra.mxu0 0
    %5740 = vmatprep.subr.bf16.mxu0 0
    %5741 = vmatpush1.bf16.msra.mxu0 0
    %5742 = vmatprep.subr.bf16.mxu0 0
    %5743 = vmatpush1.bf16.msra.mxu0 0
    %5744 = vmatprep.subr.bf16.mxu0 0
    %5745 = vmatpush1.bf16.msra.mxu0 0
    %5746 = vmatprep.subr.bf16.mxu0 0
    %5747 = vmatpush1.bf16.msra.mxu0 0
    %5748 = vmatprep.subr.bf16.mxu0 0
    %5749 = vmatpush1.bf16.msra.mxu0 0
    %5750 = vmatprep.subr.bf16.mxu0 0
    %5751 = vmatpush1.bf16.msra.mxu0 0
    %5752 = vmatprep.subr.bf16.mxu0 0
    %5753 = vmatpush1.bf16.msra.mxu0 0
    %5754 = vmatprep.subr.bf16.mxu0 0
    %5755 = vmatpush1.bf16.msra.mxu0 0
    %5756 = vmatprep.subr.bf16.mxu0 0
    %5757 = vmatpush1.bf16.msra.mxu0 0
    %5758 = vmatprep.subr.bf16.mxu0 0
    %5759 = vmatpush1.bf16.msra.mxu0 0
    %5760 = vmatprep.subr.bf16.mxu0 0
    %5761 = vmatpush1.bf16.msra.mxu0 0
    %5762 = vmatprep.mubr.bf16.mxu0 0
    %5763 = vmatmul.mubr.bf16.gmra.mrb[0].mxu0 %v5171
    %v5764 = vpop.f32.mrb[0].mxu0
    %v5765 = vadd.f32 %v5524, %v5764
    %v5766 = vpop.f32.mrb[0].mxu0
    %v5767 = vpop.f32.mrb[0].mxu0
    %v5768 = vadd.f32 %v5527, %v5767
    %v5769 = vpop.f32.mrb[0].mxu0
    %5770 = vmatprep.mubr.bf16.mxu0 0
    %5771 = vmatmul.mubr.bf16.gmra.mrb[0].mxu0 %v5174
    %v5772 = vpop.f32.mrb[0].mxu0
    %v5773 = vadd.f32 %v5532, %v5772
    %v5774 = vpop.f32.mrb[0].mxu0
    %v5775 = vpop.f32.mrb[0].mxu0
    %v5776 = vadd.f32 %v5535, %v5775
    %v5777 = vpop.f32.mrb[0].mxu0
    %5778 = vmatprep.mubr.bf16.mxu0 0
    %5779 = vmatmul.mubr.bf16.gmra.mrb[0].mxu0 %v5177
    %v5780 = vpop.f32.mrb[0].mxu0
    %v5781 = vadd.f32 %v5540, %v5780
    %v5782 = vpop.f32.mrb[0].mxu0
    %v5783 = vpop.f32.mrb[0].mxu0
    %v5784 = vadd.f32 %v5543, %v5783
    %v5785 = vpop.f32.mrb[0].mxu0
    %5786 = vmatprep.mubr.bf16.mxu0 0
    %5787 = vmatmul.mubr.bf16.gmra.mrb[0].mxu0 %v5180
    %v5788 = vpop.f32.mrb[0].mxu0
    %v5789 = vadd.f32 %v5548, %v5788
    %v5790 = vpop.f32.mrb[0].mxu0
    %v5791 = vpop.f32.mrb[0].mxu0
    %v5792 = vadd.f32 %v5551, %v5791
    %v5793 = vpop.f32.mrb[0].mxu0
    %5794 = vmatprep.mubr.bf16.mxu0 0
    %5795 = vmatmul.mubr.bf16.gmra.mrb[0].mxu0 %v5183
    %v5796 = vpop.f32.mrb[0].mxu0
    %v5797 = vadd.f32 %v5556, %v5796
    %v5798 = vpop.f32.mrb[0].mxu0
    %v5799 = vpop.f32.mrb[0].mxu0
    %v5800 = vadd.f32 %v5559, %v5799
    %v5801 = vpop.f32.mrb[0].mxu0
    %5802 = vmatprep.mubr.bf16.mxu0 0
    %5803 = vmatmul.mubr.bf16.gmra.mrb[0].mxu0 %v5186
    %v5804 = vpop.f32.mrb[0].mxu0
    %v5805 = vadd.f32 %v5564, %v5804
    %v5806 = vpop.f32.mrb[0].mxu0
    %v5807 = vpop.f32.mrb[0].mxu0
    %v5808 = vadd.f32 %v5567, %v5807
    %v5809 = vpop.f32.mrb[0].mxu0
    %5810 = vmatprep.mubr.bf16.mxu0 0
    %5811 = vmatmul.mubr.bf16.gmra.mrb[0].mxu0 %v5189
    %v5812 = vpop.f32.mrb[0].mxu0
    %v5813 = vadd.f32 %v5572, %v5812
    %v5814 = vpop.f32.mrb[0].mxu0
    %v5815 = vpop.f32.mrb[0].mxu0
    %v5816 = vadd.f32 %v5575, %v5815
    %v5817 = vpop.f32.mrb[0].mxu0
    %5818 = vmatprep.mubr.bf16.mxu0 0
    %5819 = vmatmul.mubr.bf16.gmra.mrb[0].mxu0 %v5192
    %v5820 = vpop.f32.mrb[0].mxu0
    %v5821 = vadd.f32 %v5580, %v5820
    %v5822 = vpop.f32.mrb[0].mxu0
    %v5823 = vpop.f32.mrb[0].mxu0
    %v5824 = vadd.f32 %v5583, %v5823
    %v5825 = vpop.f32.mrb[0].mxu0
    %5826 = vmatprep.mubr.bf16.mxu0 0
    %5827 = vmatmul.mubr.bf16.gmra.mrb[0].mxu0 %v5195
    %v5828 = vpop.f32.mrb[0].mxu0
    %v5829 = vadd.f32 %v5588, %v5828
    %v5830 = vpop.f32.mrb[0].mxu0
    %v5831 = vpop.f32.mrb[0].mxu0
    %v5832 = vadd.f32 %v5591, %v5831
    %v5833 = vpop.f32.mrb[0].mxu0
    %5834 = vmatprep.mubr.bf16.mxu0 0
    %5835 = vmatmul.mubr.bf16.gmra.mrb[0].mxu0 %v5198
    %v5836 = vpop.f32.mrb[0].mxu0
    %v5837 = vadd.f32 %v5596, %v5836
    %v5838 = vpop.f32.mrb[0].mxu0
    %v5839 = vpop.f32.mrb[0].mxu0
    %v5840 = vadd.f32 %v5599, %v5839
    %v5841 = vpop.f32.mrb[0].mxu0
    %5842 = vmatprep.mubr.bf16.mxu0 0
    %5843 = vmatmul.mubr.bf16.gmra.mrb[0].mxu0 %v5201
    %v5844 = vpop.f32.mrb[0].mxu0
    %v5845 = vadd.f32 %v5604, %v5844
    %v5846 = vpop.f32.mrb[0].mxu0
    %v5847 = vpop.f32.mrb[0].mxu0
    %v5848 = vadd.f32 %v5607, %v5847
    %v5849 = vpop.f32.mrb[0].mxu0
    %5850 = vmatprep.mubr.bf16.mxu0 0
    %5851 = vmatmul.mubr.bf16.gmra.mrb[0].mxu0 %v5204
    %v5852 = vpop.f32.mrb[0].mxu0
    %v5853 = vadd.f32 %v5612, %v5852
    %v5854 = vpop.f32.mrb[0].mxu0
    %v5855 = vpop.f32.mrb[0].mxu0
    %v5856 = vadd.f32 %v5615, %v5855
    %v5857 = vpop.f32.mrb[0].mxu0
    %5858 = vmatprep.mubr.bf16.mxu0 0
    %5859 = vmatmul.mubr.bf16.gmra.mrb[0].mxu0 %v5207
    %v5860 = vpop.f32.mrb[0].mxu0
    %v5861 = vadd.f32 %v5620, %v5860
    %v5862 = vpop.f32.mrb[0].mxu0
    %v5863 = vpop.f32.mrb[0].mxu0
    %v5864 = vadd.f32 %v5623, %v5863
    %v5865 = vpop.f32.mrb[0].mxu0
    %5866 = vmatprep.mubr.bf16.mxu0 0
    %5867 = vmatmul.mubr.bf16.gmra.mrb[0].mxu0 %v5210
    %v5868 = vpop.f32.mrb[0].mxu0
    %v5869 = vadd.f32 %v5628, %v5868
    %v5870 = vpop.f32.mrb[0].mxu0
    %v5871 = vpop.f32.mrb[0].mxu0
    %v5872 = vadd.f32 %v5631, %v5871
    %v5873 = vpop.f32.mrb[0].mxu0
    %5874 = vmatprep.mubr.bf16.mxu0 0
    %5875 = vmatmul.mubr.bf16.gmra.mrb[0].mxu0 %v5213
    %v5876 = vpop.f32.mrb[0].mxu0
    %v5877 = vadd.f32 %v5636, %v5876
    %v5878 = vpop.f32.mrb[0].mxu0
    %v5879 = vpop.f32.mrb[0].mxu0
    %v5880 = vadd.f32 %v5639, %v5879
    %v5881 = vpop.f32.mrb[0].mxu0
    %5882 = vmatprep.mubr.bf16.mxu0 0
    %5883 = vmatmul.mubr.bf16.gmra.mrb[0].mxu0 %v5216
    %v5884 = vpop.f32.mrb[0].mxu0
    %v5885 = vadd.f32 %v5644, %v5884
    %v5886 = vpop.f32.mrb[0].mxu0
    %v5887 = vpop.f32.mrb[0].mxu0
    %v5888 = vadd.f32 %v5647, %v5887
    %v5889 = vpop.f32.mrb[0].mxu0
    %5890 = vmatprep.mubr.bf16.mxu0 0
    %5891 = vmatmul.mubr.bf16.gmra.mrb[0].mxu0 %v5219
    %v5892 = vpop.f32.mrb[0].mxu0
    %v5893 = vadd.f32 %v5652, %v5892
    %v5894 = vpop.f32.mrb[0].mxu0
    %v5895 = vpop.f32.mrb[0].mxu0
    %v5896 = vadd.f32 %v5655, %v5895
    %v5897 = vpop.f32.mrb[0].mxu0
    %5898 = vmatprep.mubr.bf16.mxu0 0
    %5899 = vmatmul.mubr.bf16.gmra.mrb[0].mxu0 %v5222
    %v5900 = vpop.f32.mrb[0].mxu0
    %v5901 = vadd.f32 %v5660, %v5900
    %v5902 = vpop.f32.mrb[0].mxu0
    %v5903 = vpop.f32.mrb[0].mxu0
    %v5904 = vadd.f32 %v5663, %v5903
    %v5905 = vpop.f32.mrb[0].mxu0
    %5906 = vmatprep.mubr.bf16.mxu0 0
    %5907 = vmatmul.mubr.bf16.gmra.mrb[0].mxu0 %v5225
    %v5908 = vpop.f32.mrb[0].mxu0
    %v5909 = vadd.f32 %v5668, %v5908
    %v5910 = vpop.f32.mrb[0].mxu0
    %v5911 = vpop.f32.mrb[0].mxu0
    %v5912 = vadd.f32 %v5671, %v5911
    %v5913 = vpop.f32.mrb[0].mxu0
    %5914 = vmatprep.mubr.bf16.mxu0 0
    %5915 = vmatmul.mubr.bf16.gmra.mrb[0].mxu0 %v5228
    %v5916 = vpop.f32.mrb[0].mxu0
    %v5917 = vadd.f32 %v5676, %v5916
    %v5918 = vpop.f32.mrb[0].mxu0
    %v5919 = vpop.f32.mrb[0].mxu0
    %v5920 = vadd.f32 %v5679, %v5919
    %v5921 = vpop.f32.mrb[0].mxu0
    %5922 = vmatprep.mubr.bf16.mxu0 0
    %5923 = vmatmul.mubr.bf16.gmra.mrb[0].mxu0 %v5231
    %v5924 = vpop.f32.mrb[0].mxu0
    %v5925 = vadd.f32 %v5684, %v5924
    %v5926 = vpop.f32.mrb[0].mxu0
    %v5927 = vpop.f32.mrb[0].mxu0
    %v5928 = vadd.f32 %v5687, %v5927
    %v5929 = vpop.f32.mrb[0].mxu0
    %5930 = vmatprep.mubr.bf16.mxu0 0
    %5931 = vmatmul.mubr.bf16.gmra.mrb[0].mxu0 %v5234
    %v5932 = vpop.f32.mrb[0].mxu0
    %v5933 = vadd.f32 %v5692, %v5932
    %v5934 = vpop.f32.mrb[0].mxu0
    %v5935 = vpop.f32.mrb[0].mxu0
    %v5936 = vadd.f32 %v5695, %v5935
    %v5937 = vpop.f32.mrb[0].mxu0
    %5938 = vmatprep.mubr.bf16.mxu0 0
    %5939 = vmatmul.mubr.bf16.gmra.mrb[0].mxu0 %v5237
    %v5940 = vpop.f32.mrb[0].mxu0
    %v5941 = vadd.f32 %v5700, %v5940
    %v5942 = vpop.f32.mrb[0].mxu0
    %v5943 = vpop.f32.mrb[0].mxu0
    %v5944 = vadd.f32 %v5703, %v5943
    %v5945 = vpop.f32.mrb[0].mxu0
    %5946 = vmatprep.mubr.bf16.mxu0 0
    %5947 = vmatmul.mubr.bf16.gmra.mrb[0].mxu0 %v5240
    %v5948 = vpop.f32.mrb[0].mxu0
    %v5949 = vadd.f32 %v5708, %v5948
    %v5950 = vpop.f32.mrb[0].mxu0
    %v5951 = vpop.f32.mrb[0].mxu0
    %v5952 = vadd.f32 %v5711, %v5951
    %v5953 = vpop.f32.mrb[0].mxu0
    %5954 = vmatprep.mubr.bf16.mxu0 0
    %5955 = vmatmul.mubr.bf16.gmra.mrb[0].mxu0 %v5243
    %v5956 = vpop.f32.mrb[0].mxu0
    %v5957 = vadd.f32 %v5716, %v5956
    %v5958 = vpop.f32.mrb[0].mxu0
    %v5959 = vpop.f32.mrb[0].mxu0
    %v5960 = vadd.f32 %v5719, %v5959
    %v5961 = vpop.f32.mrb[0].mxu0
    %5962 = vmatprep.mubr.bf16.mxu0 0
    %5963 = vmatmul.mubr.bf16.gmra.mrb[0].mxu0 %v5246
    %v5964 = vpop.f32.mrb[0].mxu0
    %v5965 = vadd.f32 %v5724, %v5964
    %v5966 = vpop.f32.mrb[0].mxu0
    %v5967 = vpop.f32.mrb[0].mxu0
    %v5968 = vadd.f32 %v5727, %v5967
    %v5969 = vpop.f32.mrb[0].mxu0
    %5970 = vdwg.mxu0
    %s5971 = scalar_lea.vmem %s8, 1
    %v5972 = vld [vmem:[%s5971] sm:$0x1]
    %v5974 = vlaneseq
    %v5975 = vshrl.u32 %v5974, 7
    %v5976 = vsub.s32 0, %v5975
    %v5977 = vrot.slane %v5972, %v5976
    %v5979 = vadd.f32 %v5765, %v5977
    %v5980 = vadd.f32 %v5768, %v5977
    %v5981 = vadd.f32 %v5773, %v5977
    %v5982 = vadd.f32 %v5776, %v5977
    %v5983 = vadd.f32 %v5781, %v5977
    %v5984 = vadd.f32 %v5784, %v5977
    %v5985 = vadd.f32 %v5789, %v5977
    %v5986 = vadd.f32 %v5792, %v5977
    %v5987 = vadd.f32 %v5797, %v5977
    %v5988 = vadd.f32 %v5800, %v5977
    %v5989 = vadd.f32 %v5805, %v5977
    %v5990 = vadd.f32 %v5808, %v5977
    %v5991 = vadd.f32 %v5813, %v5977
    %v5992 = vadd.f32 %v5816, %v5977
    %v5993 = vadd.f32 %v5821, %v5977
    %v5994 = vadd.f32 %v5824, %v5977
    %v5995 = vadd.f32 %v5829, %v5977
    %v5996 = vadd.f32 %v5832, %v5977
    %v5997 = vadd.f32 %v5837, %v5977
    %v5998 = vadd.f32 %v5840, %v5977
    %v5999 = vadd.f32 %v5845, %v5977
    %v6000 = vadd.f32 %v5848, %v5977
    %v6001 = vadd.f32 %v5853, %v5977
    %v6002 = vadd.f32 %v5856, %v5977
    %v6003 = vadd.f32 %v5861, %v5977
    %v6004 = vadd.f32 %v5864, %v5977
    %v6005 = vadd.f32 %v5869, %v5977
    %v6006 = vadd.f32 %v5872, %v5977
    %v6007 = vadd.f32 %v5877, %v5977
    %v6008 = vadd.f32 %v5880, %v5977
    %v6009 = vadd.f32 %v5885, %v5977
    %v6010 = vadd.f32 %v5888, %v5977
    %v6011 = vadd.f32 %v5893, %v5977
    %v6012 = vadd.f32 %v5896, %v5977
    %v6013 = vadd.f32 %v5901, %v5977
    %v6014 = vadd.f32 %v5904, %v5977
    %v6015 = vadd.f32 %v5909, %v5977
    %v6016 = vadd.f32 %v5912, %v5977
    %v6017 = vadd.f32 %v5917, %v5977
    %v6018 = vadd.f32 %v5920, %v5977
    %v6019 = vadd.f32 %v5925, %v5977
    %v6020 = vadd.f32 %v5928, %v5977
    %v6021 = vadd.f32 %v5933, %v5977
    %v6022 = vadd.f32 %v5936, %v5977
    %v6023 = vadd.f32 %v5941, %v5977
    %v6024 = vadd.f32 %v5944, %v5977
    %v6025 = vadd.f32 %v5949, %v5977
    %v6026 = vadd.f32 %v5952, %v5977
    %v6027 = vadd.f32 %v5957, %v5977
    %v6028 = vadd.f32 %v5960, %v5977
    %v6029 = vadd.f32 %v5965, %v5977
    %v6030 = vadd.f32 %v5968, %v5977
    %v6031 = vmax.f32 %v5979, 0.0
    %v6032 = vmax.f32 %v5980, 0.0
    %v6033 = vmax.f32 %v5981, 0.0
    %v6034 = vmax.f32 %v5982, 0.0
    %v6035 = vmax.f32 %v5983, 0.0
    %v6036 = vmax.f32 %v5984, 0.0
    %v6037 = vmax.f32 %v5985, 0.0
    %v6038 = vmax.f32 %v5986, 0.0
    %v6039 = vmax.f32 %v5987, 0.0
    %v6040 = vmax.f32 %v5988, 0.0
    %v6041 = vmax.f32 %v5989, 0.0
    %v6042 = vmax.f32 %v5990, 0.0
    %v6043 = vmax.f32 %v5991, 0.0
    %v6044 = vmax.f32 %v5992, 0.0
    %v6045 = vmax.f32 %v5993, 0.0
    %v6046 = vmax.f32 %v5994, 0.0
    %v6047 = vmax.f32 %v5995, 0.0
    %v6048 = vmax.f32 %v5996, 0.0
    %v6049 = vmax.f32 %v5997, 0.0
    %v6050 = vmax.f32 %v5998, 0.0
    %v6051 = vmax.f32 %v5999, 0.0
    %v6052 = vmax.f32 %v6000, 0.0
    %v6053 = vmax.f32 %v6001, 0.0
    %v6054 = vmax.f32 %v6002, 0.0
    %v6055 = vmax.f32 %v6003, 0.0
    %v6056 = vmax.f32 %v6004, 0.0
    %v6057 = vmax.f32 %v6005, 0.0
    %v6058 = vmax.f32 %v6006, 0.0
    %v6059 = vmax.f32 %v6007, 0.0
    %v6060 = vmax.f32 %v6008, 0.0
    %v6061 = vmax.f32 %v6009, 0.0
    %v6062 = vmax.f32 %v6010, 0.0
    %v6063 = vmax.f32 %v6011, 0.0
    %v6064 = vmax.f32 %v6012, 0.0
    %v6065 = vmax.f32 %v6013, 0.0
    %v6066 = vmax.f32 %v6014, 0.0
    %v6067 = vmax.f32 %v6015, 0.0
    %v6068 = vmax.f32 %v6016, 0.0
    %v6069 = vmax.f32 %v6017, 0.0
    %v6070 = vmax.f32 %v6018, 0.0
    %v6071 = vmax.f32 %v6019, 0.0
    %v6072 = vmax.f32 %v6020, 0.0
    %v6073 = vmax.f32 %v6021, 0.0
    %v6074 = vmax.f32 %v6022, 0.0
    %v6075 = vmax.f32 %v6023, 0.0
    %v6076 = vmax.f32 %v6024, 0.0
    %v6077 = vmax.f32 %v6025, 0.0
    %v6078 = vmax.f32 %v6026, 0.0
    %v6079 = vmax.f32 %v6027, 0.0
    %v6080 = vmax.f32 %v6028, 0.0
    %v6081 = vmax.f32 %v6029, 0.0
    %v6082 = vmax.f32 %v6030, 0.0
    %vm6135 = vcmask 1046528
    %v6136 = vrot.slane %v6031, 1
    %v6137 = vrot.slane %v6032, 1
    %v6138 = vsel %vm6135, %v6136, %v6137
    %v6139 = vrot.slane %v6033, 1
    %v6140 = vsel %vm6135, %v6137, %v6139
    %v6141 = vrot.slane %v6034, 1
    %v6142 = vsel %vm6135, %v6139, %v6141
    %v6143 = vrot.slane %v6035, 1
    %v6144 = vsel %vm6135, %v6141, %v6143
    %v6145 = vrot.slane %v6036, 1
    %v6146 = vsel %vm6135, %v6143, %v6145
    %v6147 = vrot.slane %v6037, 1
    %v6148 = vsel %vm6135, %v6145, %v6147
    %v6149 = vrot.slane %v6038, 1
    %v6150 = vsel %vm6135, %v6147, %v6149
    %v6151 = vrot.slane %v6039, 1
    %v6152 = vsel %vm6135, %v6149, %v6151
    %v6153 = vrot.slane %v6040, 1
    %v6154 = vsel %vm6135, %v6151, %v6153
    %v6155 = vrot.slane %v6041, 1
    %v6156 = vsel %vm6135, %v6153, %v6155
    %v6157 = vrot.slane %v6042, 1
    %v6158 = vsel %vm6135, %v6155, %v6157
    %v6159 = vrot.slane %v6043, 1
    %v6160 = vsel %vm6135, %v6157, %v6159
    %v6161 = vrot.slane %v6044, 1
    %v6162 = vsel %vm6135, %v6159, %v6161
    %v6163 = vrot.slane %v6045, 1
    %v6164 = vsel %vm6135, %v6161, %v6163
    %v6165 = vrot.slane %v6046, 1
    %v6166 = vsel %vm6135, %v6163, %v6165
    %v6167 = vrot.slane %v6047, 1
    %v6168 = vsel %vm6135, %v6165, %v6167
    %v6169 = vrot.slane %v6048, 1
    %v6170 = vsel %vm6135, %v6167, %v6169
    %v6171 = vrot.slane %v6049, 1
    %v6172 = vsel %vm6135, %v6169, %v6171
    %v6173 = vrot.slane %v6050, 1
    %v6174 = vsel %vm6135, %v6171, %v6173
    %v6175 = vrot.slane %v6051, 1
    %v6176 = vsel %vm6135, %v6173, %v6175
    %v6177 = vrot.slane %v6052, 1
    %v6178 = vsel %vm6135, %v6175, %v6177
    %v6179 = vrot.slane %v6053, 1
    %v6180 = vsel %vm6135, %v6177, %v6179
    %v6181 = vrot.slane %v6054, 1
    %v6182 = vsel %vm6135, %v6179, %v6181
    %v6183 = vrot.slane %v6055, 1
    %v6184 = vsel %vm6135, %v6181, %v6183
    %v6185 = vrot.slane %v6056, 1
    %v6186 = vsel %vm6135, %v6183, %v6185
    %v6187 = vrot.slane %v6057, 1
    %v6188 = vrot.slane %v6058, 1
    %v6189 = vsel %vm6135, %v6187, %v6188
    %v6190 = vrot.slane %v6059, 1
    %v6191 = vsel %vm6135, %v6188, %v6190
    %v6192 = vrot.slane %v6060, 1
    %v6193 = vsel %vm6135, %v6190, %v6192
    %v6194 = vrot.slane %v6061, 1
    %v6195 = vsel %vm6135, %v6192, %v6194
    %v6196 = vrot.slane %v6062, 1
    %v6197 = vsel %vm6135, %v6194, %v6196
    %v6198 = vrot.slane %v6063, 1
    %v6199 = vsel %vm6135, %v6196, %v6198
    %v6200 = vrot.slane %v6064, 1
    %v6201 = vsel %vm6135, %v6198, %v6200
    %v6202 = vrot.slane %v6065, 1
    %v6203 = vsel %vm6135, %v6200, %v6202
    %v6204 = vrot.slane %v6066, 1
    %v6205 = vsel %vm6135, %v6202, %v6204
    %v6206 = vrot.slane %v6067, 1
    %v6207 = vsel %vm6135, %v6204, %v6206
    %v6208 = vrot.slane %v6068, 1
    %v6209 = vsel %vm6135, %v6206, %v6208
    %v6210 = vrot.slane %v6069, 1
    %v6211 = vsel %vm6135, %v6208, %v6210
    %v6212 = vrot.slane %v6070, 1
    %v6213 = vsel %vm6135, %v6210, %v6212
    %v6214 = vrot.slane %v6071, 1
    %v6215 = vsel %vm6135, %v6212, %v6214
    %v6216 = vrot.slane %v6072, 1
    %v6217 = vsel %vm6135, %v6214, %v6216
    %v6218 = vrot.slane %v6073, 1
    %v6219 = vsel %vm6135, %v6216, %v6218
    %v6220 = vrot.slane %v6074, 1
    %v6221 = vsel %vm6135, %v6218, %v6220
    %v6222 = vrot.slane %v6075, 1
    %v6223 = vsel %vm6135, %v6220, %v6222
    %v6224 = vrot.slane %v6076, 1
    %v6225 = vsel %vm6135, %v6222, %v6224
    %v6226 = vrot.slane %v6077, 1
    %v6227 = vsel %vm6135, %v6224, %v6226
    %v6228 = vrot.slane %v6078, 1
    %v6229 = vsel %vm6135, %v6226, %v6228
    %v6230 = vrot.slane %v6079, 1
    %v6231 = vsel %vm6135, %v6228, %v6230
    %v6232 = vrot.slane %v6080, 1
    %v6233 = vsel %vm6135, %v6230, %v6232
    %v6234 = vrot.slane %v6081, 1
    %v6235 = vsel %vm6135, %v6232, %v6234
    %v6236 = vrot.slane %v6082, 1
    %v6237 = vsel %vm6135, %v6234, %v6236
    %v6290 = vmax.f32 %v6031, %v6138
    %v6291 = vmax.f32 %v6032, %v6140
    %v6292 = vmax.f32 %v6033, %v6142
    %v6293 = vmax.f32 %v6034, %v6144
    %v6294 = vmax.f32 %v6035, %v6146
    %v6295 = vmax.f32 %v6036, %v6148
    %v6296 = vmax.f32 %v6037, %v6150
    %v6297 = vmax.f32 %v6038, %v6152
    %v6298 = vmax.f32 %v6039, %v6154
    %v6299 = vmax.f32 %v6040, %v6156
    %v6300 = vmax.f32 %v6041, %v6158
    %v6301 = vmax.f32 %v6042, %v6160
    %v6302 = vmax.f32 %v6043, %v6162
    %v6303 = vmax.f32 %v6044, %v6164
    %v6304 = vmax.f32 %v6045, %v6166
    %v6305 = vmax.f32 %v6046, %v6168
    %v6306 = vmax.f32 %v6047, %v6170
    %v6307 = vmax.f32 %v6048, %v6172
    %v6308 = vmax.f32 %v6049, %v6174
    %v6309 = vmax.f32 %v6050, %v6176
    %v6310 = vmax.f32 %v6051, %v6178
    %v6311 = vmax.f32 %v6052, %v6180
    %v6312 = vmax.f32 %v6053, %v6182
    %v6313 = vmax.f32 %v6054, %v6184
    %v6314 = vmax.f32 %v6055, %v6186
    %v6315 = vmax.f32 %v6056, %v6185
    %v6316 = vmax.f32 %v6057, %v6189
    %v6317 = vmax.f32 %v6058, %v6191
    %v6318 = vmax.f32 %v6059, %v6193
    %v6319 = vmax.f32 %v6060, %v6195
    %v6320 = vmax.f32 %v6061, %v6197
    %v6321 = vmax.f32 %v6062, %v6199
    %v6322 = vmax.f32 %v6063, %v6201
    %v6323 = vmax.f32 %v6064, %v6203
    %v6324 = vmax.f32 %v6065, %v6205
    %v6325 = vmax.f32 %v6066, %v6207
    %v6326 = vmax.f32 %v6067, %v6209
    %v6327 = vmax.f32 %v6068, %v6211
    %v6328 = vmax.f32 %v6069, %v6213
    %v6329 = vmax.f32 %v6070, %v6215
    %v6330 = vmax.f32 %v6071, %v6217
    %v6331 = vmax.f32 %v6072, %v6219
    %v6332 = vmax.f32 %v6073, %v6221
    %v6333 = vmax.f32 %v6074, %v6223
    %v6334 = vmax.f32 %v6075, %v6225
    %v6335 = vmax.f32 %v6076, %v6227
    %v6336 = vmax.f32 %v6077, %v6229
    %v6337 = vmax.f32 %v6078, %v6231
    %v6338 = vmax.f32 %v6079, %v6233
    %v6339 = vmax.f32 %v6080, %v6235
    %v6340 = vmax.f32 %v6081, %v6237
    %v6341 = vmax.f32 %v6082, %v6236
    %v6342 = vmax.f32 %v6290, %v6292
    %v6343 = vmax.f32 %v6291, %v6293
    %v6344 = vmax.f32 %v6292, %v6294
    %v6345 = vmax.f32 %v6293, %v6295
    %v6346 = vmax.f32 %v6294, %v6296
    %v6347 = vmax.f32 %v6295, %v6297
    %v6348 = vmax.f32 %v6296, %v6298
    %v6349 = vmax.f32 %v6297, %v6299
    %v6350 = vmax.f32 %v6298, %v6300
    %v6351 = vmax.f32 %v6299, %v6301
    %v6352 = vmax.f32 %v6300, %v6302
    %v6353 = vmax.f32 %v6301, %v6303
    %v6354 = vmax.f32 %v6302, %v6304
    %v6355 = vmax.f32 %v6303, %v6305
    %v6356 = vmax.f32 %v6304, %v6306
    %v6357 = vmax.f32 %v6305, %v6307
    %v6358 = vmax.f32 %v6306, %v6308
    %v6359 = vmax.f32 %v6307, %v6309
    %v6360 = vmax.f32 %v6308, %v6310
    %v6361 = vmax.f32 %v6309, %v6311
    %v6362 = vmax.f32 %v6310, %v6312
    %v6363 = vmax.f32 %v6311, %v6313
    %v6364 = vmax.f32 %v6312, %v6314
    %v6365 = vmax.f32 %v6313, %v6315
    %v6366 = vmax.f32 %v6316, %v6318
    %v6367 = vmax.f32 %v6317, %v6319
    %v6368 = vmax.f32 %v6318, %v6320
    %v6369 = vmax.f32 %v6319, %v6321
    %v6370 = vmax.f32 %v6320, %v6322
    %v6371 = vmax.f32 %v6321, %v6323
    %v6372 = vmax.f32 %v6322, %v6324
    %v6373 = vmax.f32 %v6323, %v6325
    %v6374 = vmax.f32 %v6324, %v6326
    %v6375 = vmax.f32 %v6325, %v6327
    %v6376 = vmax.f32 %v6326, %v6328
    %v6377 = vmax.f32 %v6327, %v6329
    %v6378 = vmax.f32 %v6328, %v6330
    %v6379 = vmax.f32 %v6329, %v6331
    %v6380 = vmax.f32 %v6330, %v6332
    %v6381 = vmax.f32 %v6331, %v6333
    %v6382 = vmax.f32 %v6332, %v6334
    %v6383 = vmax.f32 %v6333, %v6335
    %v6384 = vmax.f32 %v6334, %v6336
    %v6385 = vmax.f32 %v6335, %v6337
    %v6386 = vmax.f32 %v6336, %v6338
    %v6387 = vmax.f32 %v6337, %v6339
    %v6388 = vmax.f32 %v6338, %v6340
    %v6389 = vmax.f32 %v6339, %v6341
    %v6390 = vpack.c.bf16 %v6343, %v6342
    %v6391 = vpack.c.bf16 %v6345, %v6344
    %v6392 = vpack.c.bf16 %v6347, %v6346
    %v6393 = vpack.c.bf16 %v6349, %v6348
    %v6394 = vpack.c.bf16 %v6351, %v6350
    %v6395 = vpack.c.bf16 %v6353, %v6352
    %v6396 = vpack.c.bf16 %v6355, %v6354
    %v6397 = vpack.c.bf16 %v6357, %v6356
    %v6398 = vpack.c.bf16 %v6359, %v6358
    %v6399 = vpack.c.bf16 %v6361, %v6360
    %v6400 = vpack.c.bf16 %v6363, %v6362
    %v6401 = vpack.c.bf16 %v6365, %v6364
    %v6402 = vpack.c.bf16 %v6367, %v6366
    %v6403 = vpack.c.bf16 %v6369, %v6368
    %v6404 = vpack.c.bf16 %v6371, %v6370
    %v6405 = vpack.c.bf16 %v6373, %v6372
    %v6406 = vpack.c.bf16 %v6375, %v6374
    %v6407 = vpack.c.bf16 %v6377, %v6376
    %v6408 = vpack.c.bf16 %v6379, %v6378
    %v6409 = vpack.c.bf16 %v6381, %v6380
    %v6410 = vpack.c.bf16 %v6383, %v6382
    %v6411 = vpack.c.bf16 %v6385, %v6384
    %v6412 = vpack.c.bf16 %v6387, %v6386
    %v6413 = vpack.c.bf16 %v6389, %v6388
    %v6414 = vld [vmem:[%s5] sm:$0xff]
    %v6415 = vld [vmem:[%s5 + $0x8] sm:$0xff]
    %v6416 = vld [vmem:[%s5 + $0x10] sm:$0xff]
    %v6417 = vld [vmem:[%s5 + $0x18] sm:$0xff]
    %v6418 = vld [vmem:[%s5 + $0x20] sm:$0xff]
    %v6419 = vld [vmem:[%s5 + $0x28] sm:$0xff]
    %v6420 = vld [vmem:[%s5 + $0x30] sm:$0xff]
    %v6421 = vld [vmem:[%s5 + $0x38] sm:$0xff]
    %v6430 = vunpack.c.l.b16 %v6414
    %v6431 = vunpack.c.h.b16 %v6414
    %v6432 = vunpack.c.l.b16 %v6415
    %v6433 = vunpack.c.h.b16 %v6415
    %v6434 = vunpack.c.l.b16 %v6416
    %v6435 = vunpack.c.h.b16 %v6416
    %v6436 = vunpack.c.l.b16 %v6417
    %v6437 = vunpack.c.h.b16 %v6417
    %v6438 = vunpack.c.l.b16 %v6418
    %v6439 = vunpack.c.h.b16 %v6418
    %v6440 = vunpack.c.l.b16 %v6419
    %v6441 = vunpack.c.h.b16 %v6419
    %v6442 = vunpack.c.l.b16 %v6420
    %v6443 = vunpack.c.h.b16 %v6420
    %v6444 = vunpack.c.l.b16 %v6421
    %v6445 = vunpack.c.h.b16 %v6421
    %v6446 = vpack.c.b16 %v6432, %v6430
    %v6447 = vpack.c.b16 %v6433, %v6431
    %v6448 = vpack.c.b16 %v6436, %v6434
    %v6449 = vpack.c.b16 %v6437, %v6435
    %v6450 = vpack.c.b16 %v6440, %v6438
    %v6451 = vpack.c.b16 %v6441, %v6439
    %v6452 = vpack.c.b16 %v6444, %v6442
    %v6453 = vpack.c.b16 %v6445, %v6443
    %vm6458 = vcmask 490496
    %v6460 = vsel %vm6458, %v6447, 0
    %v6463 = vsel %vm6458, %v6449, 0
    %v6466 = vsel %vm6458, %v6451, 0
    %v6469 = vsel %vm6458, %v6453, 0
    %v6472 = vsel %vm1251, %v6401, 0
    %6474 = vmatprep.subr.bf16.mxu0 0
    %6475 = vmatpush1.bf16.msra.mxu0 %v6390
    %6476 = vmatprep.subr.bf16.mxu0 0
    %6477 = vmatpush1.bf16.msra.mxu0 %v6391
    %6478 = vmatprep.subr.bf16.mxu0 0
    %6479 = vmatpush1.bf16.msra.mxu0 %v6392
    %6480 = vmatprep.subr.bf16.mxu0 0
    %6481 = vmatpush1.bf16.msra.mxu0 %v6393
    %6482 = vmatprep.subr.bf16.mxu0 0
    %6483 = vmatpush1.bf16.msra.mxu0 %v6394
    %6484 = vmatprep.subr.bf16.mxu0 0
    %6485 = vmatpush1.bf16.msra.mxu0 %v6395
    %6486 = vmatprep.subr.bf16.mxu0 0
    %6487 = vmatpush1.bf16.msra.mxu0 %v6396
    %6488 = vmatprep.subr.bf16.mxu0 0
    %6489 = vmatpush1.bf16.msra.mxu0 %v6397
    %6490 = vmatprep.subr.bf16.mxu0 0
    %6491 = vmatpush1.bf16.msra.mxu0 %v6398
    %6492 = vmatprep.subr.bf16.mxu0 0
    %6493 = vmatpush1.bf16.msra.mxu0 %v6399
    %6494 = vmatprep.subr.bf16.mxu0 0
    %6495 = vmatpush1.bf16.msra.mxu0 %v6400
    %6496 = vmatprep.subr.bf16.mxu0 0
    %6497 = vmatpush1.bf16.msra.mxu0 %v6472
    %6498 = vmatprep.subr.bf16.mxu0 0
    %6499 = vmatpush1.bf16.msra.mxu0 0
    %6500 = vmatprep.subr.bf16.mxu0 0
    %6501 = vmatpush1.bf16.msra.mxu0 0
    %6502 = vmatprep.subr.bf16.mxu0 0
    %6503 = vmatpush1.bf16.msra.mxu0 0
    %6504 = vmatprep.subr.bf16.mxu0 0
    %6505 = vmatpush1.bf16.msra.mxu0 0
    %6506 = vmatprep.mubr.bf16.mxu0 %v6460
    %6507 = vmatmul.mubr.bf16.gmra.mrb[0].mxu0 %v6446
    %v6508 = vpop.f32.mrb[0].mxu0
    %v6509 = vadd.f32 0.0, %v6508
    %v6510 = vpop.f32.mrb[0].mxu0
    %v6511 = vpop.f32.mrb[0].mxu0
    %v6512 = vadd.f32 0.0, %v6511
    %v6513 = vpop.f32.mrb[0].mxu0
    %6514 = vmatprep.mubr.bf16.mxu0 %v6463
    %6515 = vmatmul.mubr.bf16.gmra.mrb[0].mxu0 %v6448
    %v6516 = vpop.f32.mrb[0].mxu0
    %v6517 = vadd.f32 0.0, %v6516
    %v6518 = vpop.f32.mrb[0].mxu0
    %v6519 = vpop.f32.mrb[0].mxu0
    %v6520 = vadd.f32 0.0, %v6519
    %v6521 = vpop.f32.mrb[0].mxu0
    %6522 = vmatprep.mubr.bf16.mxu0 %v6466
    %6523 = vmatmul.mubr.bf16.gmra.mrb[0].mxu0 %v6450
    %v6524 = vpop.f32.mrb[0].mxu0
    %v6525 = vadd.f32 0.0, %v6524
    %v6526 = vpop.f32.mrb[0].mxu0
    %v6527 = vpop.f32.mrb[0].mxu0
    %v6528 = vadd.f32 0.0, %v6527
    %v6529 = vpop.f32.mrb[0].mxu0
    %6530 = vmatprep.mubr.bf16.mxu0 %v6469
    %6531 = vmatmul.mubr.bf16.gmra.mrb[0].mxu0 %v6452
    %v6532 = vpop.f32.mrb[0].mxu0
    %v6533 = vadd.f32 0.0, %v6532
    %v6534 = vpop.f32.mrb[0].mxu0
    %v6535 = vpop.f32.mrb[0].mxu0
    %v6536 = vadd.f32 0.0, %v6535
    %v6537 = vpop.f32.mrb[0].mxu0
    %6538 = vdwg.mxu0
    %v6539 = vpack.c.bf16 %v6512, %v6509
    %v6540 = vpack.c.bf16 %v6520, %v6517
    %v6541 = vpack.c.bf16 %v6528, %v6525
    %v6542 = vpack.c.bf16 %v6536, %v6533
    %6543 = vst.msk [vmem:[#allocation3] sm:$0xff] %vm2947, %v6539
    %6544 = vst.msk [vmem:[#allocation3 + $0x8] sm:$0xff] %vm2947, %v6540
    %6545 = vst.msk [vmem:[#allocation3 + $0x10] sm:$0xff] %vm2947, %v6541
    %6546 = vst.msk [vmem:[#allocation3 + $0x18] sm:$0xff] %vm2947, %v6542
    %v6548 = vsel %vm1251, %v6413, 0
    %6550 = vmatprep.subr.bf16.mxu0 0
    %6551 = vmatpush1.bf16.msra.mxu0 %v6402
    %6552 = vmatprep.subr.bf16.mxu0 0
    %6553 = vmatpush1.bf16.msra.mxu0 %v6403
    %6554 = vmatprep.subr.bf16.mxu0 0
    %6555 = vmatpush1.bf16.msra.mxu0 %v6404
    %6556 = vmatprep.subr.bf16.mxu0 0
    %6557 = vmatpush1.bf16.msra.mxu0 %v6405
    %6558 = vmatprep.subr.bf16.mxu0 0
    %6559 = vmatpush1.bf16.msra.mxu0 %v6406
    %6560 = vmatprep.subr.bf16.mxu0 0
    %6561 = vmatpush1.bf16.msra.mxu0 %v6407
    %6562 = vmatprep.subr.bf16.mxu0 0
    %6563 = vmatpush1.bf16.msra.mxu0 %v6408
    %6564 = vmatprep.subr.bf16.mxu0 0
    %6565 = vmatpush1.bf16.msra.mxu0 %v6409
    %6566 = vmatprep.subr.bf16.mxu0 0
    %6567 = vmatpush1.bf16.msra.mxu0 %v6410
    %6568 = vmatprep.subr.bf16.mxu0 0
    %6569 = vmatpush1.bf16.msra.mxu0 %v6411
    %6570 = vmatprep.subr.bf16.mxu0 0
    %6571 = vmatpush1.bf16.msra.mxu0 %v6412
    %6572 = vmatprep.subr.bf16.mxu0 0
    %6573 = vmatpush1.bf16.msra.mxu0 %v6548
    %6574 = vmatprep.subr.bf16.mxu0 0
    %6575 = vmatpush1.bf16.msra.mxu0 0
    %6576 = vmatprep.subr.bf16.mxu0 0
    %6577 = vmatpush1.bf16.msra.mxu0 0
    %6578 = vmatprep.subr.bf16.mxu0 0
    %6579 = vmatpush1.bf16.msra.mxu0 0
    %6580 = vmatprep.subr.bf16.mxu0 0
    %6581 = vmatpush1.bf16.msra.mxu0 0
    %6582 = vmatprep.mubr.bf16.mxu0 %v6460
    %6583 = vmatmul.mubr.bf16.gmra.mrb[0].mxu0 %v6446
    %v6584 = vpop.f32.mrb[0].mxu0
    %v6585 = vadd.f32 0.0, %v6584
    %v6586 = vpop.f32.mrb[0].mxu0
    %v6587 = vpop.f32.mrb[0].mxu0
    %v6588 = vadd.f32 0.0, %v6587
    %v6589 = vpop.f32.mrb[0].mxu0
    %6590 = vmatprep.mubr.bf16.mxu0 %v6463
    %6591 = vmatmul.mubr.bf16.gmra.mrb[0].mxu0 %v6448
    %v6592 = vpop.f32.mrb[0].mxu0
    %v6593 = vadd.f32 0.0, %v6592
    %v6594 = vpop.f32.mrb[0].mxu0
    %v6595 = vpop.f32.mrb[0].mxu0
    %v6596 = vadd.f32 0.0, %v6595
    %v6597 = vpop.f32.mrb[0].mxu0
    %6598 = vmatprep.mubr.bf16.mxu0 %v6466
    %6599 = vmatmul.mubr.bf16.gmra.mrb[0].mxu0 %v6450
    %v6600 = vpop.f32.mrb[0].mxu0
    %v6601 = vadd.f32 0.0, %v6600
    %v6602 = vpop.f32.mrb[0].mxu0
    %v6603 = vpop.f32.mrb[0].mxu0
    %v6604 = vadd.f32 0.0, %v6603
    %v6605 = vpop.f32.mrb[0].mxu0
    %6606 = vmatprep.mubr.bf16.mxu0 %v6469
    %6607 = vmatmul.mubr.bf16.gmra.mrb[0].mxu0 %v6452
    %v6608 = vpop.f32.mrb[0].mxu0
    %v6609 = vadd.f32 0.0, %v6608
    %v6610 = vpop.f32.mrb[0].mxu0
    %v6611 = vpop.f32.mrb[0].mxu0
    %v6612 = vadd.f32 0.0, %v6611
    %v6613 = vpop.f32.mrb[0].mxu0
    %6614 = vdwg.mxu0
    %v6615 = vpack.c.bf16 %v6588, %v6585
    %v6616 = vpack.c.bf16 %v6596, %v6593
    %v6617 = vpack.c.bf16 %v6604, %v6601
    %v6618 = vpack.c.bf16 %v6612, %v6609
    %s6619 = scalar_lea.vmem [#allocation3], 32
    %6620 = vst.msk [vmem:[%s6619] sm:$0xff] %vm2947, %v6615
    %6621 = vst.msk [vmem:[%s6619 + $0x8] sm:$0xff] %vm2947, %v6616
    %6622 = vst.msk [vmem:[%s6619 + $0x10] sm:$0xff] %vm2947, %v6617
    %6623 = vst.msk [vmem:[%s6619 + $0x18] sm:$0xff] %vm2947, %v6618
    %v6624 = vld [vmem:[#allocation3] sm:$0xff]
    %v6625 = vld [vmem:[#allocation3 + $0x8] sm:$0xff]
    %v6626 = vld [vmem:[#allocation3 + $0x10] sm:$0x7f]
    %v6627 = vld [vmem:[#allocation3 + $0x20] sm:$0xff]
    %v6628 = vld [vmem:[#allocation3 + $0x28] sm:$0xff]
    %v6629 = vld [vmem:[#allocation3 + $0x30] sm:$0x7f]
    %6630 = vst.msk [vmem:[#allocation5] sm:$0xff] %vm2947, %v6624
    %6631 = vst.msk [vmem:[#allocation5 + $0x28] sm:$0xff] %vm2947, %v6625
    %vm6632 = vcmask 522240
    %6633 = vst.msk [vmem:[#allocation5 + $0x50] sm:$0x7f] %vm6632, %v6626
    %6634 = vst.msk [vmem:[#allocation5 + $0x208] sm:$0xff] %vm2947, %v6627
    %6635 = vst.msk [vmem:[#allocation5 + $0x230] sm:$0xff] %vm2947, %v6628
    %6636 = vst.msk [vmem:[#allocation5 + $0x258] sm:$0x7f] %vm6632, %v6629
    %v6637 = vld [vmem:[#allocation3] sm:$0xff]
    %v6638 = vld [vmem:[#allocation3 + $0x8] sm:$0xff]
    %v6639 = vld [vmem:[#allocation3 + $0x10] sm:$0xff]
    %v6640 = vld [vmem:[#allocation3 + $0x20] sm:$0xff]
    %v6641 = vld [vmem:[#allocation3 + $0x28] sm:$0xff]
    %v6642 = vld [vmem:[#allocation3 + $0x30] sm:$0xff]
    %v6644 = vshrl.u32 %v6637, 16
    %v6646 = vshll.u32 %v6637, 16
    %v6648 = vrot.slane %v6646, 1
    %v6649 = vor.u32 %v6644, %v6648
    %v6651 = vshll.u32 %v6638, 16
    %v6653 = vrot.slane %v6651, 1
    %v6654 = vsel %vm3063, %v6649, %v6653
    %v6655 = vshrl.u32 %v6638, 16
    %v6657 = vor.u32 %v6655, %v6653
    %v6659 = vshll.u32 %v6639, 16
    %v6661 = vrot.slane %v6659, 1
    %v6662 = vsel %vm3063, %v6657, %v6661
    %v6663 = vshrl.u32 %v6639, 16
    %v6665 = vor.u32 %v6663, %v6661
    %v6667 = vshrl.u32 %v6640, 16
    %v6669 = vshll.u32 %v6640, 16
    %v6671 = vrot.slane %v6669, 1
    %v6672 = vor.u32 %v6667, %v6671
    %v6674 = vshll.u32 %v6641, 16
    %v6676 = vrot.slane %v6674, 1
    %v6677 = vsel %vm3063, %v6672, %v6676
    %v6678 = vshrl.u32 %v6641, 16
    %v6680 = vor.u32 %v6678, %v6676
    %v6682 = vshll.u32 %v6642, 16
    %v6684 = vrot.slane %v6682, 1
    %v6685 = vsel %vm3063, %v6680, %v6684
    %v6686 = vshrl.u32 %v6642, 16
    %v6688 = vor.u32 %v6686, %v6684
    %6689 = vrot.lane.b32.xlu0 %v6654, 64
    %v6690 = vpop.permute.xlu0 %6689
    %6691 = vrot.lane.b32.xlu0 %v6662, 64
    %v6692 = vpop.permute.xlu0 %6691
    %6693 = vrot.lane.b32.xlu0 %v6665, 64
    %v6694 = vpop.permute.xlu0 %6693
    %6695 = vrot.lane.b32.xlu0 %v6677, 64
    %v6696 = vpop.permute.xlu0 %6695
    %6697 = vrot.lane.b32.xlu0 %v6685, 64
    %v6698 = vpop.permute.xlu0 %6697
    %6699 = vrot.lane.b32.xlu0 %v6688, 64
    %v6700 = vpop.permute.xlu0 %6699
    %6707 = vst.msk [vmem:[#allocation5] sm:$0xff] %vm3348, %v6690
    %6708 = vst.msk [vmem:[#allocation5 + $0x28] sm:$0xff] %vm3348, %v6692
    %vm6709 = vcmask 1047040
    %6710 = vst.msk [vmem:[#allocation5 + $0x50] sm:$0x7f] %vm6709, %v6694
    %6711 = vst.msk [vmem:[#allocation5 + $0x208] sm:$0xff] %vm3348, %v6696
    %6712 = vst.msk [vmem:[#allocation5 + $0x230] sm:$0xff] %vm3348, %v6698
    %6713 = vst.msk [vmem:[#allocation5 + $0x258] sm:$0x7f] %vm6709, %v6700
    %v6714 = vld [vmem:[#allocation3] sm:$0xfe]
    %v6715 = vld [vmem:[#allocation3 + $0x8] sm:$0xff]
    %v6716 = vld [vmem:[#allocation3 + $0x10] sm:$0xff]
    %v6717 = vld [vmem:[#allocation3 + $0x20] sm:$0xfe]
    %v6718 = vld [vmem:[#allocation3 + $0x28] sm:$0xff]
    %v6719 = vld [vmem:[#allocation3 + $0x30] sm:$0xff]
    %v6726 = vrot.slane %v6714, 1
    %v6727 = vrot.slane %v6715, 1
    %v6728 = vsel %vm3433, %v6726, %v6727
    %v6729 = vrot.slane %v6716, 1
    %v6730 = vsel %vm3433, %v6727, %v6729
    %v6731 = vrot.slane %v6717, 1
    %v6732 = vrot.slane %v6718, 1
    %v6733 = vsel %vm3433, %v6731, %v6732
    %v6734 = vrot.slane %v6719, 1
    %v6735 = vsel %vm3433, %v6732, %v6734
    %6742 = vst.msk [vmem:[#allocation5 + $0x8] sm:$0xff] %vm2947, %v6728
    %6743 = vst.msk [vmem:[#allocation5 + $0x30] sm:$0xff] %vm2947, %v6730
    %6744 = vst.msk [vmem:[#allocation5 + $0x58] sm:$0x7f] %vm6632, %v6729
    %6745 = vst.msk [vmem:[#allocation5 + $0x210] sm:$0xff] %vm2947, %v6733
    %6746 = vst.msk [vmem:[#allocation5 + $0x238] sm:$0xff] %vm2947, %v6735
    %6747 = vst.msk [vmem:[#allocation5 + $0x260] sm:$0x7f] %vm6632, %v6734
    %v6748 = vld [vmem:[#allocation3] sm:$0xf0]
    %v6749 = vld [vmem:[#allocation3 + $0x8] sm:$0xff]
    %v6750 = vld [vmem:[#allocation3 + $0x10] sm:$0xff]
    %v6751 = vld [vmem:[#allocation3 + $0x18] sm:$0x7]
    %v6752 = vld [vmem:[#allocation3 + $0x20] sm:$0xf0]
    %v6753 = vld [vmem:[#allocation3 + $0x28] sm:$0xff]
    %v6754 = vld [vmem:[#allocation3 + $0x30] sm:$0xff]
    %v6755 = vld [vmem:[#allocation3 + $0x38] sm:$0x7]
    %vm6764 = vcmask 1043456
    %v6765 = vrot.slane %v6748, 4
    %v6766 = vrot.slane %v6749, 4
    %v6767 = vsel %vm6764, %v6765, %v6766
    %v6768 = vrot.slane %v6750, 4
    %v6769 = vsel %vm6764, %v6766, %v6768
    %v6770 = vrot.slane %v6751, 4
    %v6771 = vsel %vm6764, %v6768, %v6770
    %v6772 = vrot.slane %v6752, 4
    %v6773 = vrot.slane %v6753, 4
    %v6774 = vsel %vm6764, %v6772, %v6773
    %v6775 = vrot.slane %v6754, 4
    %v6776 = vsel %vm6764, %v6773, %v6775
    %v6777 = vrot.slane %v6755, 4
    %v6778 = vsel %vm6764, %v6775, %v6777
    %6779 = vrot.lane.b32.xlu0 %v6767, 64
    %v6780 = vpop.permute.xlu0 %6779
    %6781 = vrot.lane.b32.xlu0 %v6769, 64
    %v6782 = vpop.permute.xlu0 %6781
    %6783 = vrot.lane.b32.xlu0 %v6771, 64
    %v6784 = vpop.permute.xlu0 %6783
    %6785 = vrot.lane.b32.xlu0 %v6774, 64
    %v6786 = vpop.permute.xlu0 %6785
    %6787 = vrot.lane.b32.xlu0 %v6776, 64
    %v6788 = vpop.permute.xlu0 %6787
    %6789 = vrot.lane.b32.xlu0 %v6778, 64
    %v6790 = vpop.permute.xlu0 %6789
    %6797 = vst.msk [vmem:[#allocation5 + $0x8] sm:$0xff] %vm3348, %v6780
    %6798 = vst.msk [vmem:[#allocation5 + $0x30] sm:$0xff] %vm3348, %v6782
    %6799 = vst.msk [vmem:[#allocation5 + $0x58] sm:$0x7f] %vm6709, %v6784
    %6800 = vst.msk [vmem:[#allocation5 + $0x210] sm:$0xff] %vm3348, %v6786
    %6801 = vst.msk [vmem:[#allocation5 + $0x238] sm:$0xff] %vm3348, %v6788
    %6802 = vst.msk [vmem:[#allocation5 + $0x260] sm:$0x7f] %vm6709, %v6790
    %v6803 = vld [vmem:[#allocation3] sm:$0xf0]
    %v6804 = vld [vmem:[#allocation3 + $0x8] sm:$0xff]
    %v6805 = vld [vmem:[#allocation3 + $0x10] sm:$0xff]
    %v6806 = vld [vmem:[#allocation3 + $0x18] sm:$0xf]
    %v6807 = vld [vmem:[#allocation3 + $0x20] sm:$0xf0]
    %v6808 = vld [vmem:[#allocation3 + $0x28] sm:$0xff]
    %v6809 = vld [vmem:[#allocation3 + $0x30] sm:$0xff]
    %v6810 = vld [vmem:[#allocation3 + $0x38] sm:$0xf]
    %vm6811 = vsmask.f32 3328
    %v6813 = vshrl.u32 %v6803, 16
    %v6815 = vrot.slane %v6813, 4
    %v6816 = vshll.u32 %v6803, 16
    %v6818 = vrot.slane %v6816, 5
    %v6819 = vor.u32 %v6815, %v6818
    %v6821 = vshrl.u32 %v6804, 16
    %v6823 = vrot.slane %v6821, 4
    %v6824 = vshll.u32 %v6804, 16
    %v6826 = vrot.slane %v6824, 5
    %v6827 = vor.u32 %v6823, %v6826
    %v6828 = vsel %vm6811, %v6819, %v6827
    %v6830 = vshrl.u32 %v6805, 16
    %v6832 = vrot.slane %v6830, 4
    %v6833 = vshll.u32 %v6805, 16
    %v6835 = vrot.slane %v6833, 5
    %v6836 = vor.u32 %v6832, %v6835
    %v6837 = vsel %vm6811, %v6827, %v6836
    %v6839 = vshrl.u32 %v6806, 16
    %v6841 = vrot.slane %v6839, 4
    %v6842 = vshll.u32 %v6806, 16
    %v6844 = vrot.slane %v6842, 5
    %v6845 = vor.u32 %v6841, %v6844
    %v6846 = vsel %vm6811, %v6836, %v6845
    %v6848 = vshrl.u32 %v6807, 16
    %v6850 = vrot.slane %v6848, 4
    %v6851 = vshll.u32 %v6807, 16
    %v6853 = vrot.slane %v6851, 5
    %v6854 = vor.u32 %v6850, %v6853
    %v6856 = vshrl.u32 %v6808, 16
    %v6858 = vrot.slane %v6856, 4
    %v6859 = vshll.u32 %v6808, 16
    %v6861 = vrot.slane %v6859, 5
    %v6862 = vor.u32 %v6858, %v6861
    %v6863 = vsel %vm6811, %v6854, %v6862
    %v6865 = vshrl.u32 %v6809, 16
    %v6867 = vrot.slane %v6865, 4
    %v6868 = vshll.u32 %v6809, 16
    %v6870 = vrot.slane %v6868, 5
    %v6871 = vor.u32 %v6867, %v6870
    %v6872 = vsel %vm6811, %v6862, %v6871
    %v6874 = vshrl.u32 %v6810, 16
    %v6876 = vrot.slane %v6874, 4
    %v6877 = vshll.u32 %v6810, 16
    %v6879 = vrot.slane %v6877, 5
    %v6880 = vor.u32 %v6876, %v6879
    %v6881 = vsel %vm6811, %v6871, %v6880
    %6888 = vst.msk [vmem:[#allocation5 + $0x10] sm:$0xff] %vm2947, %v6828
    %6889 = vst.msk [vmem:[#allocation5 + $0x38] sm:$0xff] %vm2947, %v6837
    %6890 = vst.msk [vmem:[#allocation5 + $0x60] sm:$0x7f] %vm6632, %v6846
    %6891 = vst.msk [vmem:[#allocation5 + $0x218] sm:$0xff] %vm2947, %v6863
    %6892 = vst.msk [vmem:[#allocation5 + $0x240] sm:$0xff] %vm2947, %v6872
    %6893 = vst.msk [vmem:[#allocation5 + $0x268] sm:$0x7f] %vm6632, %v6881
    %v6894 = vld [vmem:[#allocation3] sm:$0xe0]
    %v6895 = vld [vmem:[#allocation3 + $0x8] sm:$0xff]
    %v6896 = vld [vmem:[#allocation3 + $0x10] sm:$0xff]
    %v6897 = vld [vmem:[#allocation3 + $0x18] sm:$0xf]
    %v6898 = vld [vmem:[#allocation3 + $0x20] sm:$0xe0]
    %v6899 = vld [vmem:[#allocation3 + $0x28] sm:$0xff]
    %v6900 = vld [vmem:[#allocation3 + $0x30] sm:$0xff]
    %v6901 = vld [vmem:[#allocation3 + $0x38] sm:$0xf]
    %vm6910 = vcmask 1042432
    %v6911 = vrot.slane %v6894, 5
    %v6912 = vrot.slane %v6895, 5
    %v6913 = vsel %vm6910, %v6911, %v6912
    %v6914 = vrot.slane %v6896, 5
    %v6915 = vsel %vm6910, %v6912, %v6914
    %v6916 = vrot.slane %v6897, 5
    %v6917 = vsel %vm6910, %v6914, %v6916
    %v6918 = vrot.slane %v6898, 5
    %v6919 = vrot.slane %v6899, 5
    %v6920 = vsel %vm6910, %v6918, %v6919
    %v6921 = vrot.slane %v6900, 5
    %v6922 = vsel %vm6910, %v6919, %v6921
    %v6923 = vrot.slane %v6901, 5
    %v6924 = vsel %vm6910, %v6921, %v6923
    %6925 = vrot.lane.b32.xlu0 %v6913, 64
    %v6926 = vpop.permute.xlu0 %6925
    %6927 = vrot.lane.b32.xlu0 %v6915, 64
    %v6928 = vpop.permute.xlu0 %6927
    %6929 = vrot.lane.b32.xlu0 %v6917, 64
    %v6930 = vpop.permute.xlu0 %6929
    %6931 = vrot.lane.b32.xlu0 %v6920, 64
    %v6932 = vpop.permute.xlu0 %6931
    %6933 = vrot.lane.b32.xlu0 %v6922, 64
    %v6934 = vpop.permute.xlu0 %6933
    %6935 = vrot.lane.b32.xlu0 %v6924, 64
    %v6936 = vpop.permute.xlu0 %6935
    %6943 = vst.msk [vmem:[#allocation5 + $0x10] sm:$0xff] %vm3348, %v6926
    %6944 = vst.msk [vmem:[#allocation5 + $0x38] sm:$0xff] %vm3348, %v6928
    %6945 = vst.msk [vmem:[#allocation5 + $0x60] sm:$0x7f] %vm6709, %v6930
    %6946 = vst.msk [vmem:[#allocation5 + $0x218] sm:$0xff] %vm3348, %v6932
    %6947 = vst.msk [vmem:[#allocation5 + $0x240] sm:$0xff] %vm3348, %v6934
    %6948 = vst.msk [vmem:[#allocation5 + $0x268] sm:$0x7f] %vm6709, %v6936
    %v6949 = vld [vmem:[#allocation3 + $0x8] sm:$0xff]
    %v6950 = vld [vmem:[#allocation3 + $0x10] sm:$0xff]
    %v6951 = vld [vmem:[#allocation3 + $0x18] sm:$0x7f]
    %v6952 = vld [vmem:[#allocation3 + $0x28] sm:$0xff]
    %v6953 = vld [vmem:[#allocation3 + $0x30] sm:$0xff]
    %v6954 = vld [vmem:[#allocation3 + $0x38] sm:$0x7f]
    %6955 = vst.msk [vmem:[#allocation5 + $0x18] sm:$0xff] %vm2947, %v6949
    %6956 = vst.msk [vmem:[#allocation5 + $0x40] sm:$0xff] %vm2947, %v6950
    %6957 = vst.msk [vmem:[#allocation5 + $0x68] sm:$0x7f] %vm6632, %v6951
    %6958 = vst.msk [vmem:[#allocation5 + $0x220] sm:$0xff] %vm2947, %v6952
    %6959 = vst.msk [vmem:[#allocation5 + $0x248] sm:$0xff] %vm2947, %v6953
    %6960 = vst.msk [vmem:[#allocation5 + $0x270] sm:$0x7f] %vm6632, %v6954
    %v6961 = vld [vmem:[#allocation3 + $0x8] sm:$0xff]
    %v6962 = vld [vmem:[#allocation3 + $0x10] sm:$0xff]
    %v6963 = vld [vmem:[#allocation3 + $0x18] sm:$0xff]
    %v6964 = vld [vmem:[#allocation3 + $0x28] sm:$0xff]
    %v6965 = vld [vmem:[#allocation3 + $0x30] sm:$0xff]
    %v6966 = vld [vmem:[#allocation3 + $0x38] sm:$0xff]
    %v6968 = vshrl.u32 %v6961, 16
    %v6970 = vshll.u32 %v6961, 16
    %v6972 = vrot.slane %v6970, 1
    %v6973 = vor.u32 %v6968, %v6972
    %v6975 = vshll.u32 %v6962, 16
    %v6977 = vrot.slane %v6975, 1
    %v6978 = vsel %vm3063, %v6973, %v6977
    %v6979 = vshrl.u32 %v6962, 16
    %v6981 = vor.u32 %v6979, %v6977
    %v6983 = vshll.u32 %v6963, 16
    %v6985 = vrot.slane %v6983, 1
    %v6986 = vsel %vm3063, %v6981, %v6985
    %v6987 = vshrl.u32 %v6963, 16
    %v6989 = vor.u32 %v6987, %v6985
    %v6991 = vshrl.u32 %v6964, 16
    %v6993 = vshll.u32 %v6964, 16
    %v6995 = vrot.slane %v6993, 1
    %v6996 = vor.u32 %v6991, %v6995
    %v6998 = vshll.u32 %v6965, 16
    %v7000 = vrot.slane %v6998, 1
    %v7001 = vsel %vm3063, %v6996, %v7000
    %v7002 = vshrl.u32 %v6965, 16
    %v7004 = vor.u32 %v7002, %v7000
    %v7006 = vshll.u32 %v6966, 16
    %v7008 = vrot.slane %v7006, 1
    %v7009 = vsel %vm3063, %v7004, %v7008
    %v7010 = vshrl.u32 %v6966, 16
    %v7012 = vor.u32 %v7010, %v7008
    %7013 = vrot.lane.b32.xlu0 %v6978, 64
    %v7014 = vpop.permute.xlu0 %7013
    %7015 = vrot.lane.b32.xlu0 %v6986, 64
    %v7016 = vpop.permute.xlu0 %7015
    %7017 = vrot.lane.b32.xlu0 %v6989, 64
    %v7018 = vpop.permute.xlu0 %7017
    %7019 = vrot.lane.b32.xlu0 %v7001, 64
    %v7020 = vpop.permute.xlu0 %7019
    %7021 = vrot.lane.b32.xlu0 %v7009, 64
    %v7022 = vpop.permute.xlu0 %7021
    %7023 = vrot.lane.b32.xlu0 %v7012, 64
    %v7024 = vpop.permute.xlu0 %7023
    %7031 = vst.msk [vmem:[#allocation5 + $0x18] sm:$0xff] %vm3348, %v7014
    %7032 = vst.msk [vmem:[#allocation5 + $0x40] sm:$0xff] %vm3348, %v7016
    %7033 = vst.msk [vmem:[#allocation5 + $0x68] sm:$0x7f] %vm6709, %v7018
    %7034 = vst.msk [vmem:[#allocation5 + $0x220] sm:$0xff] %vm3348, %v7020
    %7035 = vst.msk [vmem:[#allocation5 + $0x248] sm:$0xff] %vm3348, %v7022
    %7036 = vst.msk [vmem:[#allocation5 + $0x270] sm:$0x7f] %vm6709, %v7024
    %v7037 = vld [vmem:[#allocation3 + $0x8] sm:$0xfe]
    %v7038 = vld [vmem:[#allocation3 + $0x10] sm:$0xff]
    %v7039 = vld [vmem:[#allocation3 + $0x18] sm:$0xff]
    %v7040 = vld [vmem:[#allocation3 + $0x28] sm:$0xfe]
    %v7041 = vld [vmem:[#allocation3 + $0x30] sm:$0xff]
    %v7042 = vld [vmem:[#allocation3 + $0x38] sm:$0xff]
    %v7049 = vrot.slane %v7037, 1
    %v7050 = vrot.slane %v7038, 1
    %v7051 = vsel %vm3433, %v7049, %v7050
    %v7052 = vrot.slane %v7039, 1
    %v7053 = vsel %vm3433, %v7050, %v7052
    %v7054 = vrot.slane %v7040, 1
    %v7055 = vrot.slane %v7041, 1
    %v7056 = vsel %vm3433, %v7054, %v7055
    %v7057 = vrot.slane %v7042, 1
    %v7058 = vsel %vm3433, %v7055, %v7057
    %7065 = vst.msk [vmem:[#allocation5 + $0x20] sm:$0xff] %vm2947, %v7051
    %7066 = vst.msk [vmem:[#allocation5 + $0x48] sm:$0xff] %vm2947, %v7053
    %7067 = vst.msk [vmem:[#allocation5 + $0x70] sm:$0x7f] %vm6632, %v7052
    %7068 = vst.msk [vmem:[#allocation5 + $0x228] sm:$0xff] %vm2947, %v7056
    %7069 = vst.msk [vmem:[#allocation5 + $0x250] sm:$0xff] %vm2947, %v7058
    %7070 = vst.msk [vmem:[#allocation5 + $0x278] sm:$0x7f] %vm6632, %v7057
    %v7071 = vld [vmem:[#allocation5] sm:$0xff]
    %v7072 = vld [vmem:[#allocation5 + $0x8] sm:$0xff]
    %v7073 = vld [vmem:[#allocation5 + $0x10] sm:$0xff]
    %v7074 = vld [vmem:[#allocation5 + $0x18] sm:$0xff]
    %v7075 = vld [vmem:[#allocation5 + $0x20] sm:$0xff]
    %v7076 = vld [vmem:[#allocation5 + $0x28] sm:$0xff]
    %v7077 = vld [vmem:[#allocation5 + $0x30] sm:$0xff]
    %v7078 = vld [vmem:[#allocation5 + $0x38] sm:$0xff]
    %v7079 = vld [vmem:[#allocation5 + $0x40] sm:$0xff]
    %v7080 = vld [vmem:[#allocation5 + $0x48] sm:$0xff]
    %v7081 = vld [vmem:[#allocation5 + $0x50] sm:$0xff]
    %v7082 = vld [vmem:[#allocation5 + $0x58] sm:$0xff]
    %v7083 = vld [vmem:[#allocation5 + $0x60] sm:$0xff]
    %v7084 = vld [vmem:[#allocation5 + $0x68] sm:$0xff]
    %v7085 = vld [vmem:[#allocation5 + $0x70] sm:$0xff]
    %v7086 = vld [vmem:[#allocation5 + $0x208] sm:$0xff]
    %v7087 = vld [vmem:[#allocation5 + $0x210] sm:$0xff]
    %v7088 = vld [vmem:[#allocation5 + $0x218] sm:$0xff]
    %v7089 = vld [vmem:[#allocation5 + $0x220] sm:$0xff]
    %v7090 = vld [vmem:[#allocation5 + $0x228] sm:$0xff]
    %v7091 = vld [vmem:[#allocation5 + $0x230] sm:$0xff]
    %v7092 = vld [vmem:[#allocation5 + $0x238] sm:$0xff]
    %v7093 = vld [vmem:[#allocation5 + $0x240] sm:$0xff]
    %v7094 = vld [vmem:[#allocation5 + $0x248] sm:$0xff]
    %v7095 = vld [vmem:[#allocation5 + $0x250] sm:$0xff]
    %v7096 = vld [vmem:[#allocation5 + $0x258] sm:$0xff]
    %v7097 = vld [vmem:[#allocation5 + $0x260] sm:$0xff]
    %v7098 = vld [vmem:[#allocation5 + $0x268] sm:$0xff]
    %v7099 = vld [vmem:[#allocation5 + $0x270] sm:$0xff]
    %v7100 = vld [vmem:[#allocation5 + $0x278] sm:$0xff]
    %v7101 = vld [vmem:[%s3] sm:$0xf]
    %v7102 = vld [vmem:[%s3 + $0x4] sm:$0xf]
    %v7103 = vld [vmem:[%s3 + $0x8] sm:$0xf]
    %v7104 = vld [vmem:[%s3 + $0xc] sm:$0xf]
    %v7105 = vld [vmem:[%s3 + $0x10] sm:$0xf]
    %v7106 = vld [vmem:[%s3 + $0x14] sm:$0xf]
    %v7107 = vld [vmem:[%s3 + $0x18] sm:$0xf]
    %v7108 = vld [vmem:[%s3 + $0x1c] sm:$0xf]
    %v7109 = vld [vmem:[%s3 + $0x20] sm:$0xf]
    %v7110 = vld [vmem:[%s3 + $0x24] sm:$0xf]
    %v7111 = vld [vmem:[%s3 + $0x28] sm:$0xf]
    %v7112 = vld [vmem:[%s3 + $0x2c] sm:$0xf]
    %v7113 = vld [vmem:[%s3 + $0x30] sm:$0xf]
    %v7114 = vld [vmem:[%s3 + $0x34] sm:$0xf]
    %v7115 = vld [vmem:[%s3 + $0x38] sm:$0xf]
    %v7116 = vld [vmem:[%s3 + $0x3c] sm:$0xf]
    %v7117 = vld [vmem:[%s3 + $0x40] sm:$0xf]
    %v7118 = vld [vmem:[%s3 + $0x44] sm:$0xf]
    %v7119 = vld [vmem:[%s3 + $0x48] sm:$0xf]
    %v7120 = vld [vmem:[%s3 + $0x4c] sm:$0xf]
    %v7121 = vld [vmem:[%s3 + $0x50] sm:$0xf]
    %v7122 = vld [vmem:[%s3 + $0x54] sm:$0xf]
    %v7123 = vld [vmem:[%s3 + $0x58] sm:$0xf]
    %v7124 = vld [vmem:[%s3 + $0x5c] sm:$0xf]
    %v7125 = vld [vmem:[%s3 + $0x60] sm:$0xf]
    %v7126 = vld [vmem:[%s3 + $0x64] sm:$0xf]
    %v7127 = vld [vmem:[%s3 + $0x68] sm:$0xf]
    %v7128 = vld [vmem:[%s3 + $0x6c] sm:$0xf]
    %v7129 = vld [vmem:[%s3 + $0x70] sm:$0xf]
    %v7130 = vld [vmem:[%s3 + $0x74] sm:$0xf]
    %v7131 = vld [vmem:[%s3 + $0x78] sm:$0xf]
    %v7132 = vld [vmem:[%s3 + $0x7c] sm:$0xf]
    %v7133 = vld [vmem:[%s3 + $0x80] sm:$0xf]
    %v7134 = vld [vmem:[%s3 + $0x84] sm:$0xf]
    %v7135 = vld [vmem:[%s3 + $0x88] sm:$0xf]
    %v7136 = vld [vmem:[%s3 + $0x8c] sm:$0xf]
    %v7137 = vld [vmem:[%s3 + $0x90] sm:$0xf]
    %v7138 = vld [vmem:[%s3 + $0x94] sm:$0xf]
    %v7139 = vld [vmem:[%s3 + $0x98] sm:$0xf]
    %v7140 = vld [vmem:[%s3 + $0x9c] sm:$0xf]
    %v7141 = vld [vmem:[%s3 + $0xa0] sm:$0xf]
    %v7142 = vld [vmem:[%s3 + $0xa4] sm:$0xf]
    %v7143 = vld [vmem:[%s3 + $0xa8] sm:$0xf]
    %v7144 = vld [vmem:[%s3 + $0xac] sm:$0xf]
    %v7145 = vld [vmem:[%s3 + $0xb0] sm:$0xf]
    %v7146 = vld [vmem:[%s3 + $0xb4] sm:$0xf]
    %v7147 = vld [vmem:[%s3 + $0xb8] sm:$0xf]
    %v7148 = vld [vmem:[%s3 + $0xbc] sm:$0xf]
    %v7149 = vld [vmem:[%s3 + $0xc0] sm:$0xf]
    %v7150 = vld [vmem:[%s3 + $0xc4] sm:$0xf]
    %v7151 = vld [vmem:[%s3 + $0xc8] sm:$0xf]
    %v7152 = vld [vmem:[%s3 + $0xcc] sm:$0xf]
    %v7153 = vld [vmem:[%s3 + $0xd0] sm:$0xf]
    %v7154 = vld [vmem:[%s3 + $0xd4] sm:$0xf]
    %v7155 = vld [vmem:[%s3 + $0xd8] sm:$0xf]
    %v7156 = vld [vmem:[%s3 + $0xdc] sm:$0xf]
    %v7157 = vld [vmem:[%s3 + $0xe0] sm:$0xf]
    %v7158 = vld [vmem:[%s3 + $0xe4] sm:$0xf]
    %v7159 = vld [vmem:[%s3 + $0xe8] sm:$0xf]
    %v7160 = vld [vmem:[%s3 + $0xec] sm:$0xf]
    %v7161 = vld [vmem:[%s3 + $0xf0] sm:$0xf]
    %v7162 = vld [vmem:[%s3 + $0xf4] sm:$0xf]
    %v7163 = vld [vmem:[%s3 + $0xf8] sm:$0xf]
    %v7164 = vld [vmem:[%s3 + $0xfc] sm:$0xf]
    %v7165 = vld [vmem:[%s3 + $0x100] sm:$0xf]
    %v7166 = vld [vmem:[%s3 + $0x104] sm:$0xf]
    %v7167 = vld [vmem:[%s3 + $0x108] sm:$0xf]
    %v7168 = vld [vmem:[%s3 + $0x10c] sm:$0xf]
    %v7169 = vld [vmem:[%s3 + $0x110] sm:$0xf]
    %v7170 = vld [vmem:[%s3 + $0x114] sm:$0xf]
    %v7171 = vld [vmem:[%s3 + $0x118] sm:$0xf]
    %v7172 = vld [vmem:[%s3 + $0x11c] sm:$0xf]
    %v7245 = vunpack.c.l.b16 %v7101
    %v7246 = vunpack.c.l.b16 %v7102
    %v7247 = vunpack.c.l.b16 %v7103
    %v7248 = vunpack.c.l.b16 %v7104
    %v7249 = vunpack.c.l.b16 %v7105
    %v7250 = vunpack.c.l.b16 %v7106
    %v7251 = vunpack.c.l.b16 %v7107
    %v7252 = vunpack.c.l.b16 %v7108
    %v7253 = vunpack.c.l.b16 %v7109
    %v7254 = vunpack.c.l.b16 %v7110
    %v7255 = vunpack.c.l.b16 %v7111
    %v7256 = vunpack.c.l.b16 %v7112
    %v7257 = vunpack.c.l.b16 %v7113
    %v7258 = vunpack.c.l.b16 %v7114
    %v7259 = vunpack.c.l.b16 %v7115
    %v7260 = vunpack.c.l.b16 %v7116
    %v7261 = vunpack.c.l.b16 %v7117
    %v7262 = vunpack.c.l.b16 %v7118
    %v7263 = vunpack.c.l.b16 %v7119
    %v7264 = vunpack.c.l.b16 %v7120
    %v7265 = vunpack.c.l.b16 %v7121
    %v7266 = vunpack.c.l.b16 %v7122
    %v7267 = vunpack.c.l.b16 %v7123
    %v7268 = vunpack.c.l.b16 %v7124
    %v7269 = vunpack.c.l.b16 %v7125
    %v7270 = vunpack.c.l.b16 %v7126
    %v7271 = vunpack.c.l.b16 %v7127
    %v7272 = vunpack.c.l.b16 %v7128
    %v7273 = vunpack.c.l.b16 %v7129
    %v7274 = vunpack.c.l.b16 %v7130
    %v7275 = vunpack.c.l.b16 %v7131
    %v7276 = vunpack.c.l.b16 %v7132
    %v7277 = vunpack.c.l.b16 %v7133
    %v7278 = vunpack.c.l.b16 %v7134
    %v7279 = vunpack.c.l.b16 %v7135
    %v7280 = vunpack.c.l.b16 %v7136
    %v7281 = vunpack.c.l.b16 %v7137
    %v7282 = vunpack.c.l.b16 %v7138
    %v7283 = vunpack.c.l.b16 %v7139
    %v7284 = vunpack.c.l.b16 %v7140
    %v7285 = vunpack.c.l.b16 %v7141
    %v7286 = vunpack.c.l.b16 %v7142
    %v7287 = vunpack.c.l.b16 %v7143
    %v7288 = vunpack.c.l.b16 %v7144
    %v7289 = vunpack.c.l.b16 %v7145
    %v7290 = vunpack.c.l.b16 %v7146
    %v7291 = vunpack.c.l.b16 %v7147
    %v7292 = vunpack.c.l.b16 %v7148
    %v7293 = vunpack.c.l.b16 %v7149
    %v7294 = vunpack.c.l.b16 %v7150
    %v7295 = vunpack.c.l.b16 %v7151
    %v7296 = vunpack.c.l.b16 %v7152
    %v7297 = vunpack.c.l.b16 %v7153
    %v7298 = vunpack.c.l.b16 %v7154
    %v7299 = vunpack.c.l.b16 %v7155
    %v7300 = vunpack.c.l.b16 %v7156
    %v7301 = vunpack.c.l.b16 %v7157
    %v7302 = vunpack.c.l.b16 %v7158
    %v7303 = vunpack.c.l.b16 %v7159
    %v7304 = vunpack.c.l.b16 %v7160
    %v7305 = vunpack.c.l.b16 %v7161
    %v7306 = vunpack.c.l.b16 %v7162
    %v7307 = vunpack.c.l.b16 %v7163
    %v7308 = vunpack.c.l.b16 %v7164
    %v7309 = vunpack.c.l.b16 %v7165
    %v7310 = vunpack.c.l.b16 %v7166
    %v7311 = vunpack.c.l.b16 %v7167
    %v7312 = vunpack.c.l.b16 %v7168
    %v7313 = vunpack.c.l.b16 %v7169
    %v7314 = vunpack.c.l.b16 %v7170
    %v7315 = vunpack.c.l.b16 %v7171
    %v7316 = vunpack.c.l.b16 %v7172
    %v7317 = vpack.c.b16 %v7246, %v7245
    %v7318 = vpack.c.b16 %v7248, %v7247
    %v7319 = vpack.c.b16 %v7250, %v7249
    %v7320 = vpack.c.b16 %v7252, %v7251
    %v7321 = vpack.c.b16 %v7254, %v7253
    %v7322 = vpack.c.b16 %v7256, %v7255
    %v7323 = vpack.c.b16 %v7258, %v7257
    %v7324 = vpack.c.b16 %v7260, %v7259
    %v7325 = vpack.c.b16 %v7262, %v7261
    %v7326 = vpack.c.b16 %v7264, %v7263
    %v7327 = vpack.c.b16 %v7266, %v7265
    %v7328 = vpack.c.b16 %v7268, %v7267
    %v7329 = vpack.c.b16 %v7270, %v7269
    %v7330 = vpack.c.b16 %v7272, %v7271
    %v7331 = vpack.c.b16 %v7274, %v7273
    %v7332 = vpack.c.b16 %v7276, %v7275
    %v7333 = vpack.c.b16 %v7278, %v7277
    %v7334 = vpack.c.b16 %v7280, %v7279
    %v7335 = vpack.c.b16 %v7282, %v7281
    %v7336 = vpack.c.b16 %v7284, %v7283
    %v7337 = vpack.c.b16 %v7286, %v7285
    %v7338 = vpack.c.b16 %v7288, %v7287
    %v7339 = vpack.c.b16 %v7290, %v7289
    %v7340 = vpack.c.b16 %v7292, %v7291
    %v7341 = vpack.c.b16 %v7294, %v7293
    %v7342 = vpack.c.b16 %v7296, %v7295
    %v7343 = vpack.c.b16 %v7298, %v7297
    %v7344 = vpack.c.b16 %v7300, %v7299
    %v7345 = vpack.c.b16 %v7302, %v7301
    %v7346 = vpack.c.b16 %v7304, %v7303
    %v7347 = vpack.c.b16 %v7306, %v7305
    %v7348 = vpack.c.b16 %v7308, %v7307
    %v7349 = vpack.c.b16 %v7310, %v7309
    %v7350 = vpack.c.b16 %v7312, %v7311
    %v7351 = vpack.c.b16 %v7314, %v7313
    %v7352 = vpack.c.b16 %v7316, %v7315
    %v7390 = vsel %vm2947, %v7075, 0
    %v7393 = vsel %vm2947, %v7080, 0
    %v7396 = vsel %vm2947, %v7085, 0
    %v7399 = vsel %vm2947, %v7090, 0
    %v7402 = vsel %vm2947, %v7095, 0
    %v7405 = vsel %vm2947, %v7100, 0
    %7407 = vmatprep.subr.bf16.mxu0 0
    %7408 = vmatpush1.bf16.msra.mxu0 %v7317
    %7409 = vmatprep.subr.bf16.mxu0 0
    %7410 = vmatpush1.bf16.msra.mxu0 %v7318
    %7411 = vmatprep.subr.bf16.mxu0 0
    %7412 = vmatpush1.bf16.msra.mxu0 %v7319
    %7413 = vmatprep.subr.bf16.mxu0 0
    %7414 = vmatpush1.bf16.msra.mxu0 %v7320
    %7415 = vmatprep.subr.bf16.mxu0 0
    %7416 = vmatpush1.bf16.msra.mxu0 %v7321
    %7417 = vmatprep.subr.bf16.mxu0 0
    %7418 = vmatpush1.bf16.msra.mxu0 %v7322
    %7419 = vmatprep.subr.bf16.mxu0 0
    %7420 = vmatpush1.bf16.msra.mxu0 %v7323
    %7421 = vmatprep.subr.bf16.mxu0 0
    %7422 = vmatpush1.bf16.msra.mxu0 %v7324
    %7423 = vmatprep.subr.bf16.mxu0 0
    %7424 = vmatpush1.bf16.msra.mxu0 %v7325
    %7425 = vmatprep.subr.bf16.mxu0 0
    %7426 = vmatpush1.bf16.msra.mxu0 %v7326
    %7427 = vmatprep.subr.bf16.mxu0 0
    %7428 = vmatpush1.bf16.msra.mxu0 %v7327
    %7429 = vmatprep.subr.bf16.mxu0 0
    %7430 = vmatpush1.bf16.msra.mxu0 %v7328
    %7431 = vmatprep.subr.bf16.mxu0 0
    %7432 = vmatpush1.bf16.msra.mxu0 %v7329
    %7433 = vmatprep.subr.bf16.mxu0 0
    %7434 = vmatpush1.bf16.msra.mxu0 %v7330
    %7435 = vmatprep.subr.bf16.mxu0 0
    %7436 = vmatpush1.bf16.msra.mxu0 %v7331
    %7437 = vmatprep.subr.bf16.mxu0 0
    %7438 = vmatpush1.bf16.msra.mxu0 %v7332
    %7439 = vmatprep.mubr.bf16.mxu0 %v7072
    %7440 = vmatmul.mubr.bf16.gmra.mrb[0].mxu0 %v7071
    %v7441 = vpop.f32.mrb[0].mxu0
    %v7442 = vadd.f32 0.0, %v7441
    %v7443 = vpop.f32.mrb[0].mxu0
    %v7444 = vpop.f32.mrb[0].mxu0
    %v7445 = vadd.f32 0.0, %v7444
    %v7446 = vpop.f32.mrb[0].mxu0
    %7447 = vmatprep.mubr.bf16.mxu0 %v7077
    %7448 = vmatmul.mubr.bf16.gmra.mrb[0].mxu0 %v7076
    %v7449 = vpop.f32.mrb[0].mxu0
    %v7450 = vadd.f32 0.0, %v7449
    %v7451 = vpop.f32.mrb[0].mxu0
    %v7452 = vpop.f32.mrb[0].mxu0
    %v7453 = vadd.f32 0.0, %v7452
    %v7454 = vpop.f32.mrb[0].mxu0
    %7455 = vmatprep.mubr.bf16.mxu0 %v7082
    %7456 = vmatmul.mubr.bf16.gmra.mrb[0].mxu0 %v7081
    %v7457 = vpop.f32.mrb[0].mxu0
    %v7458 = vadd.f32 0.0, %v7457
    %v7459 = vpop.f32.mrb[0].mxu0
    %v7460 = vpop.f32.mrb[0].mxu0
    %v7461 = vadd.f32 0.0, %v7460
    %v7462 = vpop.f32.mrb[0].mxu0
    %7463 = vmatprep.mubr.bf16.mxu0 %v7087
    %7464 = vmatmul.mubr.bf16.gmra.mrb[0].mxu0 %v7086
    %v7465 = vpop.f32.mrb[0].mxu0
    %v7466 = vadd.f32 0.0, %v7465
    %v7467 = vpop.f32.mrb[0].mxu0
    %v7468 = vpop.f32.mrb[0].mxu0
    %v7469 = vadd.f32 0.0, %v7468
    %v7470 = vpop.f32.mrb[0].mxu0
    %7471 = vmatprep.mubr.bf16.mxu0 %v7092
    %7472 = vmatmul.mubr.bf16.gmra.mrb[0].mxu0 %v7091
    %v7473 = vpop.f32.mrb[0].mxu0
    %v7474 = vadd.f32 0.0, %v7473
    %v7475 = vpop.f32.mrb[0].mxu0
    %v7476 = vpop.f32.mrb[0].mxu0
    %v7477 = vadd.f32 0.0, %v7476
    %v7478 = vpop.f32.mrb[0].mxu0
    %7479 = vmatprep.mubr.bf16.mxu0 %v7097
    %7480 = vmatmul.mubr.bf16.gmra.mrb[0].mxu0 %v7096
    %v7481 = vpop.f32.mrb[0].mxu0
    %v7482 = vadd.f32 0.0, %v7481
    %v7483 = vpop.f32.mrb[0].mxu0
    %v7484 = vpop.f32.mrb[0].mxu0
    %v7485 = vadd.f32 0.0, %v7484
    %v7486 = vpop.f32.mrb[0].mxu0
    %7487 = vdwg.mxu0
    %7488 = vmatprep.subr.bf16.mxu0 0
    %7489 = vmatpush1.bf16.msra.mxu0 %v7333
    %7490 = vmatprep.subr.bf16.mxu0 0
    %7491 = vmatpush1.bf16.msra.mxu0 %v7334
    %7492 = vmatprep.subr.bf16.mxu0 0
    %7493 = vmatpush1.bf16.msra.mxu0 %v7335
    %7494 = vmatprep.subr.bf16.mxu0 0
    %7495 = vmatpush1.bf16.msra.mxu0 %v7336
    %7496 = vmatprep.subr.bf16.mxu0 0
    %7497 = vmatpush1.bf16.msra.mxu0 %v7337
    %7498 = vmatprep.subr.bf16.mxu0 0
    %7499 = vmatpush1.bf16.msra.mxu0 %v7338
    %7500 = vmatprep.subr.bf16.mxu0 0
    %7501 = vmatpush1.bf16.msra.mxu0 %v7339
    %7502 = vmatprep.subr.bf16.mxu0 0
    %7503 = vmatpush1.bf16.msra.mxu0 %v7340
    %7504 = vmatprep.subr.bf16.mxu0 0
    %7505 = vmatpush1.bf16.msra.mxu0 %v7341
    %7506 = vmatprep.subr.bf16.mxu0 0
    %7507 = vmatpush1.bf16.msra.mxu0 %v7342
    %7508 = vmatprep.subr.bf16.mxu0 0
    %7509 = vmatpush1.bf16.msra.mxu0 %v7343
    %7510 = vmatprep.subr.bf16.mxu0 0
    %7511 = vmatpush1.bf16.msra.mxu0 %v7344
    %7512 = vmatprep.subr.bf16.mxu0 0
    %7513 = vmatpush1.bf16.msra.mxu0 %v7345
    %7514 = vmatprep.subr.bf16.mxu0 0
    %7515 = vmatpush1.bf16.msra.mxu0 %v7346
    %7516 = vmatprep.subr.bf16.mxu0 0
    %7517 = vmatpush1.bf16.msra.mxu0 %v7347
    %7518 = vmatprep.subr.bf16.mxu0 0
    %7519 = vmatpush1.bf16.msra.mxu0 %v7348
    %7520 = vmatprep.mubr.bf16.mxu0 %v7074
    %7521 = vmatmul.mubr.bf16.gmra.mrb[0].mxu0 %v7073
    %v7522 = vpop.f32.mrb[0].mxu0
    %v7523 = vadd.f32 %v7442, %v7522
    %v7524 = vpop.f32.mrb[0].mxu0
    %v7525 = vpop.f32.mrb[0].mxu0
    %v7526 = vadd.f32 %v7445, %v7525
    %v7527 = vpop.f32.mrb[0].mxu0
    %7528 = vmatprep.mubr.bf16.mxu0 %v7079
    %7529 = vmatmul.mubr.bf16.gmra.mrb[0].mxu0 %v7078
    %v7530 = vpop.f32.mrb[0].mxu0
    %v7531 = vadd.f32 %v7450, %v7530
    %v7532 = vpop.f32.mrb[0].mxu0
    %v7533 = vpop.f32.mrb[0].mxu0
    %v7534 = vadd.f32 %v7453, %v7533
    %v7535 = vpop.f32.mrb[0].mxu0
    %7536 = vmatprep.mubr.bf16.mxu0 %v7084
    %7537 = vmatmul.mubr.bf16.gmra.mrb[0].mxu0 %v7083
    %v7538 = vpop.f32.mrb[0].mxu0
    %v7539 = vadd.f32 %v7458, %v7538
    %v7540 = vpop.f32.mrb[0].mxu0
    %v7541 = vpop.f32.mrb[0].mxu0
    %v7542 = vadd.f32 %v7461, %v7541
    %v7543 = vpop.f32.mrb[0].mxu0
    %7544 = vmatprep.mubr.bf16.mxu0 %v7089
    %7545 = vmatmul.mubr.bf16.gmra.mrb[0].mxu0 %v7088
    %v7546 = vpop.f32.mrb[0].mxu0
    %v7547 = vadd.f32 %v7466, %v7546
    %v7548 = vpop.f32.mrb[0].mxu0
    %v7549 = vpop.f32.mrb[0].mxu0
    %v7550 = vadd.f32 %v7469, %v7549
    %v7551 = vpop.f32.mrb[0].mxu0
    %7552 = vmatprep.mubr.bf16.mxu0 %v7094
    %7553 = vmatmul.mubr.bf16.gmra.mrb[0].mxu0 %v7093
    %v7554 = vpop.f32.mrb[0].mxu0
    %v7555 = vadd.f32 %v7474, %v7554
    %v7556 = vpop.f32.mrb[0].mxu0
    %v7557 = vpop.f32.mrb[0].mxu0
    %v7558 = vadd.f32 %v7477, %v7557
    %v7559 = vpop.f32.mrb[0].mxu0
    %7560 = vmatprep.mubr.bf16.mxu0 %v7099
    %7561 = vmatmul.mubr.bf16.gmra.mrb[0].mxu0 %v7098
    %v7562 = vpop.f32.mrb[0].mxu0
    %v7563 = vadd.f32 %v7482, %v7562
    %v7564 = vpop.f32.mrb[0].mxu0
    %v7565 = vpop.f32.mrb[0].mxu0
    %v7566 = vadd.f32 %v7485, %v7565
    %v7567 = vpop.f32.mrb[0].mxu0
    %7568 = vdwg.mxu0
    %7569 = vmatprep.subr.bf16.mxu0 0
    %7570 = vmatpush1.bf16.msra.mxu0 %v7349
    %7571 = vmatprep.subr.bf16.mxu0 0
    %7572 = vmatpush1.bf16.msra.mxu0 %v7350
    %7573 = vmatprep.subr.bf16.mxu0 0
    %7574 = vmatpush1.bf16.msra.mxu0 %v7351
    %7575 = vmatprep.subr.bf16.mxu0 0
    %7576 = vmatpush1.bf16.msra.mxu0 %v7352
    %7577 = vmatprep.subr.bf16.mxu0 0
    %7578 = vmatpush1.bf16.msra.mxu0 0
    %7579 = vmatprep.subr.bf16.mxu0 0
    %7580 = vmatpush1.bf16.msra.mxu0 0
    %7581 = vmatprep.subr.bf16.mxu0 0
    %7582 = vmatpush1.bf16.msra.mxu0 0
    %7583 = vmatprep.subr.bf16.mxu0 0
    %7584 = vmatpush1.bf16.msra.mxu0 0
    %7585 = vmatprep.subr.bf16.mxu0 0
    %7586 = vmatpush1.bf16.msra.mxu0 0
    %7587 = vmatprep.subr.bf16.mxu0 0
    %7588 = vmatpush1.bf16.msra.mxu0 0
    %7589 = vmatprep.subr.bf16.mxu0 0
    %7590 = vmatpush1.bf16.msra.mxu0 0
    %7591 = vmatprep.subr.bf16.mxu0 0
    %7592 = vmatpush1.bf16.msra.mxu0 0
    %7593 = vmatprep.subr.bf16.mxu0 0
    %7594 = vmatpush1.bf16.msra.mxu0 0
    %7595 = vmatprep.subr.bf16.mxu0 0
    %7596 = vmatpush1.bf16.msra.mxu0 0
    %7597 = vmatprep.subr.bf16.mxu0 0
    %7598 = vmatpush1.bf16.msra.mxu0 0
    %7599 = vmatprep.subr.bf16.mxu0 0
    %7600 = vmatpush1.bf16.msra.mxu0 0
    %7601 = vmatprep.mubr.bf16.mxu0 0
    %7602 = vmatmul.mubr.bf16.gmra.mrb[0].mxu0 %v7390
    %v7603 = vpop.f32.mrb[0].mxu0
    %v7604 = vadd.f32 %v7523, %v7603
    %v7605 = vpop.f32.mrb[0].mxu0
    %v7606 = vpop.f32.mrb[0].mxu0
    %v7607 = vadd.f32 %v7526, %v7606
    %v7608 = vpop.f32.mrb[0].mxu0
    %7609 = vmatprep.mubr.bf16.mxu0 0
    %7610 = vmatmul.mubr.bf16.gmra.mrb[0].mxu0 %v7393
    %v7611 = vpop.f32.mrb[0].mxu0
    %v7612 = vadd.f32 %v7531, %v7611
    %v7613 = vpop.f32.mrb[0].mxu0
    %v7614 = vpop.f32.mrb[0].mxu0
    %v7615 = vadd.f32 %v7534, %v7614
    %v7616 = vpop.f32.mrb[0].mxu0
    %7617 = vmatprep.mubr.bf16.mxu0 0
    %7618 = vmatmul.mubr.bf16.gmra.mrb[0].mxu0 %v7396
    %v7619 = vpop.f32.mrb[0].mxu0
    %v7620 = vadd.f32 %v7539, %v7619
    %v7621 = vpop.f32.mrb[0].mxu0
    %v7622 = vpop.f32.mrb[0].mxu0
    %v7623 = vadd.f32 %v7542, %v7622
    %v7624 = vpop.f32.mrb[0].mxu0
    %7625 = vmatprep.mubr.bf16.mxu0 0
    %7626 = vmatmul.mubr.bf16.gmra.mrb[0].mxu0 %v7399
    %v7627 = vpop.f32.mrb[0].mxu0
    %v7628 = vadd.f32 %v7547, %v7627
    %v7629 = vpop.f32.mrb[0].mxu0
    %v7630 = vpop.f32.mrb[0].mxu0
    %v7631 = vadd.f32 %v7550, %v7630
    %v7632 = vpop.f32.mrb[0].mxu0
    %7633 = vmatprep.mubr.bf16.mxu0 0
    %7634 = vmatmul.mubr.bf16.gmra.mrb[0].mxu0 %v7402
    %v7635 = vpop.f32.mrb[0].mxu0
    %v7636 = vadd.f32 %v7555, %v7635
    %v7637 = vpop.f32.mrb[0].mxu0
    %v7638 = vpop.f32.mrb[0].mxu0
    %v7639 = vadd.f32 %v7558, %v7638
    %v7640 = vpop.f32.mrb[0].mxu0
    %7641 = vmatprep.mubr.bf16.mxu0 0
    %7642 = vmatmul.mubr.bf16.gmra.mrb[0].mxu0 %v7405
    %v7643 = vpop.f32.mrb[0].mxu0
    %v7644 = vadd.f32 %v7563, %v7643
    %v7645 = vpop.f32.mrb[0].mxu0
    %v7646 = vpop.f32.mrb[0].mxu0
    %v7647 = vadd.f32 %v7566, %v7646
    %v7648 = vpop.f32.mrb[0].mxu0
    %7649 = vdwg.mxu0
    %s7650 = scalar_lea.vmem %s8, 2
    %v7651 = vld [vmem:[%s7650] sm:$0x1]
    %v7653 = vlaneseq
    %v7654 = vshrl.u32 %v7653, 7
    %v7655 = vsub.s32 0, %v7654
    %v7656 = vrot.slane %v7651, %v7655
    %v7658 = vadd.f32 %v7604, %v7656
    %v7659 = vadd.f32 %v7607, %v7656
    %v7660 = vadd.f32 %v7612, %v7656
    %v7661 = vadd.f32 %v7615, %v7656
    %v7662 = vadd.f32 %v7620, %v7656
    %v7663 = vadd.f32 %v7623, %v7656
    %v7664 = vadd.f32 %v7628, %v7656
    %v7665 = vadd.f32 %v7631, %v7656
    %v7666 = vadd.f32 %v7636, %v7656
    %v7667 = vadd.f32 %v7639, %v7656
    %v7668 = vadd.f32 %v7644, %v7656
    %v7669 = vadd.f32 %v7647, %v7656
    %v7670 = vmax.f32 %v7658, 0.0
    %v7671 = vmax.f32 %v7659, 0.0
    %v7672 = vmax.f32 %v7660, 0.0
    %v7673 = vmax.f32 %v7661, 0.0
    %v7674 = vmax.f32 %v7662, 0.0
    %v7675 = vmax.f32 %v7663, 0.0
    %v7676 = vmax.f32 %v7664, 0.0
    %v7677 = vmax.f32 %v7665, 0.0
    %v7678 = vmax.f32 %v7666, 0.0
    %v7679 = vmax.f32 %v7667, 0.0
    %v7680 = vmax.f32 %v7668, 0.0
    %v7681 = vmax.f32 %v7669, 0.0
    %v7694 = vrot.slane %v7670, 1
    %v7695 = vrot.slane %v7671, 1
    %v7696 = vsel %vm6135, %v7694, %v7695
    %v7697 = vrot.slane %v7672, 1
    %v7698 = vsel %vm6135, %v7695, %v7697
    %v7699 = vrot.slane %v7673, 1
    %v7700 = vsel %vm6135, %v7697, %v7699
    %v7701 = vrot.slane %v7674, 1
    %v7702 = vsel %vm6135, %v7699, %v7701
    %v7703 = vrot.slane %v7675, 1
    %v7704 = vsel %vm6135, %v7701, %v7703
    %v7705 = vrot.slane %v7676, 1
    %v7706 = vrot.slane %v7677, 1
    %v7707 = vsel %vm6135, %v7705, %v7706
    %v7708 = vrot.slane %v7678, 1
    %v7709 = vsel %vm6135, %v7706, %v7708
    %v7710 = vrot.slane %v7679, 1
    %v7711 = vsel %vm6135, %v7708, %v7710
    %v7712 = vrot.slane %v7680, 1
    %v7713 = vsel %vm6135, %v7710, %v7712
    %v7714 = vrot.slane %v7681, 1
    %v7715 = vsel %vm6135, %v7712, %v7714
    %v7728 = vmax.f32 %v7670, %v7696
    %v7729 = vmax.f32 %v7671, %v7698
    %v7730 = vmax.f32 %v7672, %v7700
    %v7731 = vmax.f32 %v7673, %v7702
    %v7732 = vmax.f32 %v7674, %v7704
    %v7733 = vmax.f32 %v7675, %v7703
    %v7734 = vmax.f32 %v7676, %v7707
    %v7735 = vmax.f32 %v7677, %v7709
    %v7736 = vmax.f32 %v7678, %v7711
    %v7737 = vmax.f32 %v7679, %v7713
    %v7738 = vmax.f32 %v7680, %v7715
    %v7739 = vmax.f32 %v7681, %v7714
    %v7740 = vmax.f32 %v7728, %v7729
    %v7741 = vmax.f32 %v7729, %v7730
    %v7742 = vmax.f32 %v7730, %v7731
    %v7743 = vmax.f32 %v7731, %v7732
    %v7744 = vmax.f32 %v7732, %v7733
    %v7745 = vmax.f32 %v7734, %v7735
    %v7746 = vmax.f32 %v7735, %v7736
    %v7747 = vmax.f32 %v7736, %v7737
    %v7748 = vmax.f32 %v7737, %v7738
    %v7749 = vmax.f32 %v7738, %v7739
    %v7750 = vpack.c.bf16 %v7741, %v7740
    %v7751 = vpack.c.bf16 %v7743, %v7742
    %v7752 = vpack.c.bf16 %v7744, %v7744
    %v7753 = vpack.c.bf16 %v7746, %v7745
    %v7754 = vpack.c.bf16 %v7748, %v7747
    %v7755 = vpack.c.bf16 %v7749, %v7749
    %v7756 = vld [vmem:[%s6] sm:$0xf]
    %v7757 = vld [vmem:[%s6 + $0x4] sm:$0xf]
    %v7758 = vld [vmem:[%s6 + $0x8] sm:$0xf]
    %v7759 = vld [vmem:[%s6 + $0xc] sm:$0xf]
    %v7760 = vld [vmem:[%s6 + $0x10] sm:$0xf]
    %v7766 = vunpack.c.l.b16 %v7756
    %v7767 = vunpack.c.l.b16 %v7757
    %v7768 = vunpack.c.l.b16 %v7758
    %v7769 = vunpack.c.l.b16 %v7759
    %v7770 = vunpack.c.l.b16 %v7760
    %v7771 = vpack.c.b16 %v7767, %v7766
    %v7772 = vpack.c.b16 %v7769, %v7768
    %v7773 = vpack.c.b16 %v7770, %v7770
    %vm7774 = vcmask 302080
    %v7776 = vsel %vm7774, %v7771, 0
    %v7779 = vsel %vm7774, %v7772, 0
    %v7782 = vsel %vm7774, %v7773, 0
    %vm7784 = vcmask 1041408
    %vm7785 = vcmask 1042432
    %v7786 = vsel %vm7784, 4294967295, 65535
    %v7787 = vsel %vm7785, %v7786, 0
    %v7789 = vand.u32 %v7752, %v7787
    %7791 = vmatprep.subr.bf16.mxu0 0
    %7792 = vmatpush1.bf16.msra.mxu0 %v7750
    %7793 = vmatprep.subr.bf16.mxu0 0
    %7794 = vmatpush1.bf16.msra.mxu0 %v7751
    %7795 = vmatprep.subr.bf16.mxu0 0
    %7796 = vmatpush1.bf16.msra.mxu0 %v7789
    %7797 = vmatprep.subr.bf16.mxu0 0
    %7798 = vmatpush1.bf16.msra.mxu0 0
    %7799 = vmatprep.subr.bf16.mxu0 0
    %7800 = vmatpush1.bf16.msra.mxu0 0
    %7801 = vmatprep.subr.bf16.mxu0 0
    %7802 = vmatpush1.bf16.msra.mxu0 0
    %7803 = vmatprep.subr.bf16.mxu0 0
    %7804 = vmatpush1.bf16.msra.mxu0 0
    %7805 = vmatprep.subr.bf16.mxu0 0
    %7806 = vmatpush1.bf16.msra.mxu0 0
    %7807 = vmatprep.subr.bf16.mxu0 0
    %7808 = vmatpush1.bf16.msra.mxu0 0
    %7809 = vmatprep.subr.bf16.mxu0 0
    %7810 = vmatpush1.bf16.msra.mxu0 0
    %7811 = vmatprep.subr.bf16.mxu0 0
    %7812 = vmatpush1.bf16.msra.mxu0 0
    %7813 = vmatprep.subr.bf16.mxu0 0
    %7814 = vmatpush1.bf16.msra.mxu0 0
    %7815 = vmatprep.subr.bf16.mxu0 0
    %7816 = vmatpush1.bf16.msra.mxu0 0
    %7817 = vmatprep.subr.bf16.mxu0 0
    %7818 = vmatpush1.bf16.msra.mxu0 0
    %7819 = vmatprep.subr.bf16.mxu0 0
    %7820 = vmatpush1.bf16.msra.mxu0 0
    %7821 = vmatprep.subr.bf16.mxu0 0
    %7822 = vmatpush1.bf16.msra.mxu0 0
    %7823 = vmatprep.mubr.bf16.mxu0 0
    %7824 = vmatmul.mubr.bf16.gmra.mrb[0].mxu0 %v7776
    %v7825 = vpop.f32.mrb[0].mxu0
    %v7826 = vadd.f32 0.0, %v7825
    %v7827 = vpop.f32.mrb[0].mxu0
    %v7828 = vpop.f32.mrb[0].mxu0
    %v7829 = vadd.f32 0.0, %v7828
    %v7830 = vpop.f32.mrb[0].mxu0
    %7831 = vmatprep.mubr.bf16.mxu0 0
    %7832 = vmatmul.mubr.bf16.gmra.mrb[0].mxu0 %v7779
    %v7833 = vpop.f32.mrb[0].mxu0
    %v7834 = vadd.f32 0.0, %v7833
    %v7835 = vpop.f32.mrb[0].mxu0
    %v7836 = vpop.f32.mrb[0].mxu0
    %v7837 = vadd.f32 0.0, %v7836
    %v7838 = vpop.f32.mrb[0].mxu0
    %7839 = vmatprep.mubr.bf16.mxu0 0
    %7840 = vmatmul.mubr.bf16.gmra.mrb[0].mxu0 %v7782
    %v7841 = vpop.f32.mrb[0].mxu0
    %v7842 = vadd.f32 0.0, %v7841
    %v7843 = vpop.f32.mrb[0].mxu0
    %v7844 = vpop.f32.mrb[0].mxu0
    %v7845 = vpop.f32.mrb[0].mxu0
    %7846 = vdwg.mxu0
    %v7847 = vpack.c.bf16 %v7829, %v7826
    %v7848 = vpack.c.bf16 %v7837, %v7834
    %v7849 = vpack.c.bf16 %v7842, %v7842
    %v7853 = vunpack.c.l.b16 %v7847
    %v7854 = vunpack.c.h.b16 %v7847
    %v7855 = vunpack.c.l.b16 %v7848
    %v7856 = vunpack.c.h.b16 %v7848
    %v7857 = vunpack.c.l.b16 %v7849
    %v7858 = vpack.c.b16 %v7853, %v7853
    %v7859 = vpack.c.b16 %v7854, %v7854
    %v7860 = vpack.c.b16 %v7855, %v7855
    %v7861 = vpack.c.b16 %v7856, %v7856
    %v7862 = vpack.c.b16 %v7857, %v7857
    %vm7868 = vcmask 519168
    %7869 = vst.msk [vmem:[#allocation4] sm:$0xf] %vm7868, %v7858
    %7870 = vst.msk [vmem:[#allocation4 + $0x4] sm:$0xf] %vm7868, %v7859
    %7871 = vst.msk [vmem:[#allocation4 + $0x8] sm:$0xf] %vm7868, %v7860
    %7872 = vst.msk [vmem:[#allocation4 + $0xc] sm:$0xf] %vm7868, %v7861
    %7873 = vst.msk [vmem:[#allocation4 + $0x10] sm:$0xf] %vm7868, %v7862
    %v7875 = vand.u32 %v7755, %v7787
    %7877 = vmatprep.subr.bf16.mxu0 0
    %7878 = vmatpush1.bf16.msra.mxu0 %v7753
    %7879 = vmatprep.subr.bf16.mxu0 0
    %7880 = vmatpush1.bf16.msra.mxu0 %v7754
    %7881 = vmatprep.subr.bf16.mxu0 0
    %7882 = vmatpush1.bf16.msra.mxu0 %v7875
    %7883 = vmatprep.subr.bf16.mxu0 0
    %7884 = vmatpush1.bf16.msra.mxu0 0
    %7885 = vmatprep.subr.bf16.mxu0 0
    %7886 = vmatpush1.bf16.msra.mxu0 0
    %7887 = vmatprep.subr.bf16.mxu0 0
    %7888 = vmatpush1.bf16.msra.mxu0 0
    %7889 = vmatprep.subr.bf16.mxu0 0
    %7890 = vmatpush1.bf16.msra.mxu0 0
    %7891 = vmatprep.subr.bf16.mxu0 0
    %7892 = vmatpush1.bf16.msra.mxu0 0
    %7893 = vmatprep.subr.bf16.mxu0 0
    %7894 = vmatpush1.bf16.msra.mxu0 0
    %7895 = vmatprep.subr.bf16.mxu0 0
    %7896 = vmatpush1.bf16.msra.mxu0 0
    %7897 = vmatprep.subr.bf16.mxu0 0
    %7898 = vmatpush1.bf16.msra.mxu0 0
    %7899 = vmatprep.subr.bf16.mxu0 0
    %7900 = vmatpush1.bf16.msra.mxu0 0
    %7901 = vmatprep.subr.bf16.mxu0 0
    %7902 = vmatpush1.bf16.msra.mxu0 0
    %7903 = vmatprep.subr.bf16.mxu0 0
    %7904 = vmatpush1.bf16.msra.mxu0 0
    %7905 = vmatprep.subr.bf16.mxu0 0
    %7906 = vmatpush1.bf16.msra.mxu0 0
    %7907 = vmatprep.subr.bf16.mxu0 0
    %7908 = vmatpush1.bf16.msra.mxu0 0
    %7909 = vmatprep.mubr.bf16.mxu0 0
    %7910 = vmatmul.mubr.bf16.gmra.mrb[0].mxu0 %v7776
    %v7911 = vpop.f32.mrb[0].mxu0
    %v7912 = vadd.f32 0.0, %v7911
    %v7913 = vpop.f32.mrb[0].mxu0
    %v7914 = vpop.f32.mrb[0].mxu0
    %v7915 = vadd.f32 0.0, %v7914
    %v7916 = vpop.f32.mrb[0].mxu0
    %7917 = vmatprep.mubr.bf16.mxu0 0
    %7918 = vmatmul.mubr.bf16.gmra.mrb[0].mxu0 %v7779
    %v7919 = vpop.f32.mrb[0].mxu0
    %v7920 = vadd.f32 0.0, %v7919
    %v7921 = vpop.f32.mrb[0].mxu0
    %v7922 = vpop.f32.mrb[0].mxu0
    %v7923 = vadd.f32 0.0, %v7922
    %v7924 = vpop.f32.mrb[0].mxu0
    %7925 = vmatprep.mubr.bf16.mxu0 0
    %7926 = vmatmul.mubr.bf16.gmra.mrb[0].mxu0 %v7782
    %v7927 = vpop.f32.mrb[0].mxu0
    %v7928 = vadd.f32 0.0, %v7927
    %v7929 = vpop.f32.mrb[0].mxu0
    %v7930 = vpop.f32.mrb[0].mxu0
    %v7931 = vpop.f32.mrb[0].mxu0
    %7932 = vdwg.mxu0
    %v7933 = vpack.c.bf16 %v7915, %v7912
    %v7934 = vpack.c.bf16 %v7923, %v7920
    %v7935 = vpack.c.bf16 %v7928, %v7928
    %v7939 = vunpack.c.l.b16 %v7933
    %v7940 = vunpack.c.h.b16 %v7933
    %v7941 = vunpack.c.l.b16 %v7934
    %v7942 = vunpack.c.h.b16 %v7934
    %v7943 = vunpack.c.l.b16 %v7935
    %v7944 = vpack.c.b16 %v7939, %v7939
    %v7945 = vpack.c.b16 %v7940, %v7940
    %v7946 = vpack.c.b16 %v7941, %v7941
    %v7947 = vpack.c.b16 %v7942, %v7942
    %v7948 = vpack.c.b16 %v7943, %v7943
    %s7954 = scalar_lea.vmem [#allocation4], 20
    %7955 = vst.msk [vmem:[%s7954] sm:$0xf] %vm7868, %v7944
    %7956 = vst.msk [vmem:[%s7954 + $0x4] sm:$0xf] %vm7868, %v7945
    %7957 = vst.msk [vmem:[%s7954 + $0x8] sm:$0xf] %vm7868, %v7946
    %7958 = vst.msk [vmem:[%s7954 + $0xc] sm:$0xf] %vm7868, %v7947
    %7959 = vst.msk [vmem:[%s7954 + $0x10] sm:$0xf] %vm7868, %v7948
    %v7960 = vld [vmem:[#allocation4] sm:$0xf]
    %v7961 = vld [vmem:[#allocation4 + $0x4] sm:$0xf]
    %v7962 = vld [vmem:[#allocation4 + $0x8] sm:$0x3]
    %v7963 = vld [vmem:[#allocation4 + $0x14] sm:$0xf]
    %v7964 = vld [vmem:[#allocation4 + $0x18] sm:$0xf]
    %v7965 = vld [vmem:[#allocation4 + $0x1c] sm:$0x3]
    %v7972 = vunpack.c.l.b16 %v7960
    %v7973 = vunpack.c.l.b16 %v7961
    %v7974 = vunpack.c.l.b16 %v7962
    %v7975 = vunpack.c.l.b16 %v7963
    %v7976 = vunpack.c.l.b16 %v7964
    %v7977 = vunpack.c.l.b16 %v7965
    %v7978 = vpack.c.b16 %v7973, %v7972
    %v7979 = vpack.c.b16 %v7974, %v7974
    %v7980 = vpack.c.b16 %v7976, %v7975
    %v7981 = vpack.c.b16 %v7977, %v7977
    %7986 = vst.msk [vmem:[#allocation5] sm:$0xff] %vm2947, %v7978
    %vm7987 = vcmask 517120
    %vm7988 = vsmask.f32 1280
    %vm7989 = vmand %vm7987, %vm7988
    %v7990 = vld [vmem:[#allocation5 + $0x28] sm:$0x3]
    %v7991 = vsel %vm7989, %v7979, %v7990
    %7992 = vst [vmem:[#allocation5 + $0x28] sm:$0x3] %v7991
    %7993 = vst.msk [vmem:[#allocation5 + $0x208] sm:$0xff] %vm2947, %v7980
    %v7994 = vld [vmem:[#allocation5 + $0x230] sm:$0x3]
    %v7995 = vsel %vm7989, %v7981, %v7994
    %7996 = vst [vmem:[#allocation5 + $0x230] sm:$0x3] %v7995
    %v7997 = vld [vmem:[#allocation4] sm:$0xf]
    %v7998 = vld [vmem:[#allocation4 + $0x4] sm:$0xf]
    %v7999 = vld [vmem:[#allocation4 + $0x8] sm:$0x3]
    %v8000 = vld [vmem:[#allocation4 + $0x14] sm:$0xf]
    %v8001 = vld [vmem:[#allocation4 + $0x18] sm:$0xf]
    %v8002 = vld [vmem:[#allocation4 + $0x1c] sm:$0x3]
    %v8009 = vunpack.c.l.b16 %v7997
    %v8010 = vunpack.c.l.b16 %v7998
    %v8011 = vunpack.c.l.b16 %v7999
    %v8012 = vunpack.c.l.b16 %v8000
    %v8013 = vunpack.c.l.b16 %v8001
    %v8014 = vunpack.c.l.b16 %v8002
    %v8015 = vpack.c.b16 %v8010, %v8009
    %v8016 = vpack.c.b16 %v8011, %v8011
    %v8017 = vpack.c.b16 %v8013, %v8012
    %v8018 = vpack.c.b16 %v8014, %v8014
    %v8020 = vshrl.u32 %v8015, 16
    %v8022 = vshll.u32 %v8015, 16
    %v8024 = vrot.slane %v8022, 1
    %v8025 = vor.u32 %v8020, %v8024
    %v8027 = vshll.u32 %v8016, 16
    %v8029 = vrot.slane %v8027, 1
    %v8030 = vsel %vm3063, %v8025, %v8029
    %v8031 = vshrl.u32 %v8016, 16
    %v8033 = vor.u32 %v8031, %v8029
    %v8035 = vshrl.u32 %v8017, 16
    %v8037 = vshll.u32 %v8017, 16
    %v8039 = vrot.slane %v8037, 1
    %v8040 = vor.u32 %v8035, %v8039
    %v8042 = vshll.u32 %v8018, 16
    %v8044 = vrot.slane %v8042, 1
    %v8045 = vsel %vm3063, %v8040, %v8044
    %v8046 = vshrl.u32 %v8018, 16
    %v8048 = vor.u32 %v8046, %v8044
    %8049 = vrot.lane.b32.xlu0 %v8030, 64
    %v8050 = vpop.permute.xlu0 %8049
    %8051 = vrot.lane.b32.xlu0 %v8033, 64
    %v8052 = vpop.permute.xlu0 %8051
    %8053 = vrot.lane.b32.xlu0 %v8045, 64
    %v8054 = vpop.permute.xlu0 %8053
    %8055 = vrot.lane.b32.xlu0 %v8048, 64
    %v8056 = vpop.permute.xlu0 %8055
    %8061 = vst.msk [vmem:[#allocation5] sm:$0xff] %vm3348, %v8050
    %vm8062 = vcmask 1041920
    %vm8063 = vmand %vm8062, %vm7988
    %v8064 = vld [vmem:[#allocation5 + $0x28] sm:$0x3]
    %v8065 = vsel %vm8063, %v8052, %v8064
    %8066 = vst [vmem:[#allocation5 + $0x28] sm:$0x3] %v8065
    %8067 = vst.msk [vmem:[#allocation5 + $0x208] sm:$0xff] %vm3348, %v8054
    %v8068 = vld [vmem:[#allocation5 + $0x230] sm:$0x3]
    %v8069 = vsel %vm8063, %v8056, %v8068
    %8070 = vst [vmem:[#allocation5 + $0x230] sm:$0x3] %v8069
    %v8071 = vld [vmem:[#allocation4] sm:$0xe]
    %v8072 = vld [vmem:[#allocation4 + $0x4] sm:$0xf]
    %v8073 = vld [vmem:[#allocation4 + $0x8] sm:$0x7]
    %v8074 = vld [vmem:[#allocation4 + $0x14] sm:$0xe]
    %v8075 = vld [vmem:[#allocation4 + $0x18] sm:$0xf]
    %v8076 = vld [vmem:[#allocation4 + $0x1c] sm:$0x7]
    %v8083 = vunpack.c.l.b16 %v8071
    %v8084 = vunpack.c.l.b16 %v8072
    %v8085 = vunpack.c.l.b16 %v8073
    %v8086 = vunpack.c.l.b16 %v8074
    %v8087 = vunpack.c.l.b16 %v8075
    %v8088 = vunpack.c.l.b16 %v8076
    %v8089 = vpack.c.b16 %v8084, %v8083
    %v8090 = vpack.c.b16 %v8085, %v8085
    %v8091 = vpack.c.b16 %v8087, %v8086
    %v8092 = vpack.c.b16 %v8088, %v8088
    %v8093 = vrot.slane %v8089, 1
    %v8094 = vrot.slane %v8090, 1
    %v8095 = vsel %vm3433, %v8093, %v8094
    %v8096 = vrot.slane %v8091, 1
    %v8097 = vrot.slane %v8092, 1
    %v8098 = vsel %vm3433, %v8096, %v8097
    %8103 = vst.msk [vmem:[#allocation5 + $0x8] sm:$0xff] %vm2947, %v8095
    %v8104 = vld [vmem:[#allocation5 + $0x30] sm:$0x3]
    %v8105 = vsel %vm7989, %v8094, %v8104
    %8106 = vst [vmem:[#allocation5 + $0x30] sm:$0x3] %v8105
    %8107 = vst.msk [vmem:[#allocation5 + $0x210] sm:$0xff] %vm2947, %v8098
    %v8108 = vld [vmem:[#allocation5 + $0x238] sm:$0x3]
    %v8109 = vsel %vm7989, %v8097, %v8108
    %8110 = vst [vmem:[#allocation5 + $0x238] sm:$0x3] %v8109
    %v8111 = vld [vmem:[#allocation4 + $0x4] sm:$0xf]
    %v8112 = vld [vmem:[#allocation4 + $0x8] sm:$0xf]
    %v8113 = vld [vmem:[#allocation4 + $0xc] sm:$0x3]
    %v8114 = vld [vmem:[#allocation4 + $0x18] sm:$0xf]
    %v8115 = vld [vmem:[#allocation4 + $0x1c] sm:$0xf]
    %v8116 = vld [vmem:[#allocation4 + $0x20] sm:$0x3]
    %v8123 = vunpack.c.l.b16 %v8111
    %v8124 = vunpack.c.l.b16 %v8112
    %v8125 = vunpack.c.l.b16 %v8113
    %v8126 = vunpack.c.l.b16 %v8114
    %v8127 = vunpack.c.l.b16 %v8115
    %v8128 = vunpack.c.l.b16 %v8116
    %v8129 = vpack.c.b16 %v8124, %v8123
    %v8130 = vpack.c.b16 %v8125, %v8125
    %v8131 = vpack.c.b16 %v8127, %v8126
    %v8132 = vpack.c.b16 %v8128, %v8128
    %8133 = vrot.lane.b32.xlu0 %v8129, 64
    %v8134 = vpop.permute.xlu0 %8133
    %8135 = vrot.lane.b32.xlu0 %v8130, 64
    %v8136 = vpop.permute.xlu0 %8135
    %8137 = vrot.lane.b32.xlu0 %v8131, 64
    %v8138 = vpop.permute.xlu0 %8137
    %8139 = vrot.lane.b32.xlu0 %v8132, 64
    %v8140 = vpop.permute.xlu0 %8139
    %8145 = vst.msk [vmem:[#allocation5 + $0x8] sm:$0xff] %vm3348, %v8134
    %v8146 = vld [vmem:[#allocation5 + $0x30] sm:$0x3]
    %v8147 = vsel %vm8063, %v8136, %v8146
    %8148 = vst [vmem:[#allocation5 + $0x30] sm:$0x3] %v8147
    %8149 = vst.msk [vmem:[#allocation5 + $0x210] sm:$0xff] %vm3348, %v8138
    %v8150 = vld [vmem:[#allocation5 + $0x238] sm:$0x3]
    %v8151 = vsel %vm8063, %v8140, %v8150
    %8152 = vst [vmem:[#allocation5 + $0x238] sm:$0x3] %v8151
    %v8153 = vld [vmem:[#allocation4 + $0x4] sm:$0xf]
    %v8154 = vld [vmem:[#allocation4 + $0x8] sm:$0xf]
    %v8155 = vld [vmem:[#allocation4 + $0xc] sm:$0x3]
    %v8156 = vld [vmem:[#allocation4 + $0x18] sm:$0xf]
    %v8157 = vld [vmem:[#allocation4 + $0x1c] sm:$0xf]
    %v8158 = vld [vmem:[#allocation4 + $0x20] sm:$0x3]
    %v8165 = vunpack.c.l.b16 %v8153
    %v8166 = vunpack.c.l.b16 %v8154
    %v8167 = vunpack.c.l.b16 %v8155
    %v8168 = vunpack.c.l.b16 %v8156
    %v8169 = vunpack.c.l.b16 %v8157
    %v8170 = vunpack.c.l.b16 %v8158
    %v8171 = vpack.c.b16 %v8166, %v8165
    %v8172 = vpack.c.b16 %v8167, %v8167
    %v8173 = vpack.c.b16 %v8169, %v8168
    %v8174 = vpack.c.b16 %v8170, %v8170
    %v8176 = vshrl.u32 %v8171, 16
    %v8178 = vshll.u32 %v8171, 16
    %v8180 = vrot.slane %v8178, 1
    %v8181 = vor.u32 %v8176, %v8180
    %v8183 = vshll.u32 %v8172, 16
    %v8185 = vrot.slane %v8183, 1
    %v8186 = vsel %vm3063, %v8181, %v8185
    %v8187 = vshrl.u32 %v8172, 16
    %v8189 = vor.u32 %v8187, %v8185
    %v8191 = vshrl.u32 %v8173, 16
    %v8193 = vshll.u32 %v8173, 16
    %v8195 = vrot.slane %v8193, 1
    %v8196 = vor.u32 %v8191, %v8195
    %v8198 = vshll.u32 %v8174, 16
    %v8200 = vrot.slane %v8198, 1
    %v8201 = vsel %vm3063, %v8196, %v8200
    %v8202 = vshrl.u32 %v8174, 16
    %v8204 = vor.u32 %v8202, %v8200
    %8209 = vst.msk [vmem:[#allocation5 + $0x10] sm:$0xff] %vm2947, %v8186
    %v8210 = vld [vmem:[#allocation5 + $0x38] sm:$0x3]
    %v8211 = vsel %vm7989, %v8189, %v8210
    %8212 = vst [vmem:[#allocation5 + $0x38] sm:$0x3] %v8211
    %8213 = vst.msk [vmem:[#allocation5 + $0x218] sm:$0xff] %vm2947, %v8201
    %v8214 = vld [vmem:[#allocation5 + $0x240] sm:$0x3]
    %v8215 = vsel %vm7989, %v8204, %v8214
    %8216 = vst [vmem:[#allocation5 + $0x240] sm:$0x3] %v8215
    %v8217 = vld [vmem:[#allocation4 + $0x4] sm:$0xe]
    %v8218 = vld [vmem:[#allocation4 + $0x8] sm:$0xf]
    %v8219 = vld [vmem:[#allocation4 + $0xc] sm:$0x7]
    %v8220 = vld [vmem:[#allocation4 + $0x18] sm:$0xe]
    %v8221 = vld [vmem:[#allocation4 + $0x1c] sm:$0xf]
    %v8222 = vld [vmem:[#allocation4 + $0x20] sm:$0x7]
    %v8229 = vunpack.c.l.b16 %v8217
    %v8230 = vunpack.c.l.b16 %v8218
    %v8231 = vunpack.c.l.b16 %v8219
    %v8232 = vunpack.c.l.b16 %v8220
    %v8233 = vunpack.c.l.b16 %v8221
    %v8234 = vunpack.c.l.b16 %v8222
    %v8235 = vpack.c.b16 %v8230, %v8229
    %v8236 = vpack.c.b16 %v8231, %v8231
    %v8237 = vpack.c.b16 %v8233, %v8232
    %v8238 = vpack.c.b16 %v8234, %v8234
    %v8239 = vrot.slane %v8235, 1
    %v8240 = vrot.slane %v8236, 1
    %v8241 = vsel %vm3433, %v8239, %v8240
    %v8242 = vrot.slane %v8237, 1
    %v8243 = vrot.slane %v8238, 1
    %v8244 = vsel %vm3433, %v8242, %v8243
    %8245 = vrot.lane.b32.xlu0 %v8241, 64
    %v8246 = vpop.permute.xlu0 %8245
    %8247 = vrot.lane.b32.xlu0 %v8240, 64
    %v8248 = vpop.permute.xlu0 %8247
    %8249 = vrot.lane.b32.xlu0 %v8244, 64
    %v8250 = vpop.permute.xlu0 %8249
    %8251 = vrot.lane.b32.xlu0 %v8243, 64
    %v8252 = vpop.permute.xlu0 %8251
    %8257 = vst.msk [vmem:[#allocation5 + $0x10] sm:$0xff] %vm3348, %v8246
    %v8258 = vld [vmem:[#allocation5 + $0x38] sm:$0x3]
    %v8259 = vsel %vm8063, %v8248, %v8258
    %8260 = vst [vmem:[#allocation5 + $0x38] sm:$0x3] %v8259
    %8261 = vst.msk [vmem:[#allocation5 + $0x218] sm:$0xff] %vm3348, %v8250
    %v8262 = vld [vmem:[#allocation5 + $0x240] sm:$0x3]
    %v8263 = vsel %vm8063, %v8252, %v8262
    %8264 = vst [vmem:[#allocation5 + $0x240] sm:$0x3] %v8263
    %v8265 = vld [vmem:[#allocation4 + $0x8] sm:$0xf]
    %v8266 = vld [vmem:[#allocation4 + $0xc] sm:$0xf]
    %v8267 = vld [vmem:[#allocation4 + $0x10] sm:$0x3]
    %v8268 = vld [vmem:[#allocation4 + $0x1c] sm:$0xf]
    %v8269 = vld [vmem:[#allocation4 + $0x20] sm:$0xf]
    %v8270 = vld [vmem:[#allocation4 + $0x24] sm:$0x3]
    %v8277 = vunpack.c.l.b16 %v8265
    %v8278 = vunpack.c.l.b16 %v8266
    %v8279 = vunpack.c.l.b16 %v8267
    %v8280 = vunpack.c.l.b16 %v8268
    %v8281 = vunpack.c.l.b16 %v8269
    %v8282 = vunpack.c.l.b16 %v8270
    %v8283 = vpack.c.b16 %v8278, %v8277
    %v8284 = vpack.c.b16 %v8279, %v8279
    %v8285 = vpack.c.b16 %v8281, %v8280
    %v8286 = vpack.c.b16 %v8282, %v8282
    %8291 = vst.msk [vmem:[#allocation5 + $0x18] sm:$0xff] %vm2947, %v8283
    %v8292 = vld [vmem:[#allocation5 + $0x40] sm:$0x3]
    %v8293 = vsel %vm7989, %v8284, %v8292
    %8294 = vst [vmem:[#allocation5 + $0x40] sm:$0x3] %v8293
    %8295 = vst.msk [vmem:[#allocation5 + $0x220] sm:$0xff] %vm2947, %v8285
    %v8296 = vld [vmem:[#allocation5 + $0x248] sm:$0x3]
    %v8297 = vsel %vm7989, %v8286, %v8296
    %8298 = vst [vmem:[#allocation5 + $0x248] sm:$0x3] %v8297
    %v8299 = vld [vmem:[#allocation4 + $0x8] sm:$0xf]
    %v8300 = vld [vmem:[#allocation4 + $0xc] sm:$0xf]
    %v8301 = vld [vmem:[#allocation4 + $0x10] sm:$0x3]
    %v8302 = vld [vmem:[#allocation4 + $0x1c] sm:$0xf]
    %v8303 = vld [vmem:[#allocation4 + $0x20] sm:$0xf]
    %v8304 = vld [vmem:[#allocation4 + $0x24] sm:$0x3]
    %v8311 = vunpack.c.l.b16 %v8299
    %v8312 = vunpack.c.l.b16 %v8300
    %v8313 = vunpack.c.l.b16 %v8301
    %v8314 = vunpack.c.l.b16 %v8302
    %v8315 = vunpack.c.l.b16 %v8303
    %v8316 = vunpack.c.l.b16 %v8304
    %v8317 = vpack.c.b16 %v8312, %v8311
    %v8318 = vpack.c.b16 %v8313, %v8313
    %v8319 = vpack.c.b16 %v8315, %v8314
    %v8320 = vpack.c.b16 %v8316, %v8316
    %v8322 = vshrl.u32 %v8317, 16
    %v8324 = vshll.u32 %v8317, 16
    %v8326 = vrot.slane %v8324, 1
    %v8327 = vor.u32 %v8322, %v8326
    %v8329 = vshll.u32 %v8318, 16
    %v8331 = vrot.slane %v8329, 1
    %v8332 = vsel %vm3063, %v8327, %v8331
    %v8333 = vshrl.u32 %v8318, 16
    %v8335 = vor.u32 %v8333, %v8331
    %v8337 = vshrl.u32 %v8319, 16
    %v8339 = vshll.u32 %v8319, 16
    %v8341 = vrot.slane %v8339, 1
    %v8342 = vor.u32 %v8337, %v8341
    %v8344 = vshll.u32 %v8320, 16
    %v8346 = vrot.slane %v8344, 1
    %v8347 = vsel %vm3063, %v8342, %v8346
    %v8348 = vshrl.u32 %v8320, 16
    %v8350 = vor.u32 %v8348, %v8346
    %8351 = vrot.lane.b32.xlu0 %v8332, 64
    %v8352 = vpop.permute.xlu0 %8351
    %8353 = vrot.lane.b32.xlu0 %v8335, 64
    %v8354 = vpop.permute.xlu0 %8353
    %8355 = vrot.lane.b32.xlu0 %v8347, 64
    %v8356 = vpop.permute.xlu0 %8355
    %8357 = vrot.lane.b32.xlu0 %v8350, 64
    %v8358 = vpop.permute.xlu0 %8357
    %8363 = vst.msk [vmem:[#allocation5 + $0x18] sm:$0xff] %vm3348, %v8352
    %v8364 = vld [vmem:[#allocation5 + $0x40] sm:$0x3]
    %v8365 = vsel %vm8063, %v8354, %v8364
    %8366 = vst [vmem:[#allocation5 + $0x40] sm:$0x3] %v8365
    %8367 = vst.msk [vmem:[#allocation5 + $0x220] sm:$0xff] %vm3348, %v8356
    %v8368 = vld [vmem:[#allocation5 + $0x248] sm:$0x3]
    %v8369 = vsel %vm8063, %v8358, %v8368
    %8370 = vst [vmem:[#allocation5 + $0x248] sm:$0x3] %v8369
    %v8371 = vld [vmem:[#allocation4 + $0x8] sm:$0xe]
    %v8372 = vld [vmem:[#allocation4 + $0xc] sm:$0xf]
    %v8373 = vld [vmem:[#allocation4 + $0x10] sm:$0x7]
    %v8374 = vld [vmem:[#allocation4 + $0x1c] sm:$0xe]
    %v8375 = vld [vmem:[#allocation4 + $0x20] sm:$0xf]
    %v8376 = vld [vmem:[#allocation4 + $0x24] sm:$0x7]
    %v8383 = vunpack.c.l.b16 %v8371
    %v8384 = vunpack.c.l.b16 %v8372
    %v8385 = vunpack.c.l.b16 %v8373
    %v8386 = vunpack.c.l.b16 %v8374
    %v8387 = vunpack.c.l.b16 %v8375
    %v8388 = vunpack.c.l.b16 %v8376
    %v8389 = vpack.c.b16 %v8384, %v8383
    %v8390 = vpack.c.b16 %v8385, %v8385
    %v8391 = vpack.c.b16 %v8387, %v8386
    %v8392 = vpack.c.b16 %v8388, %v8388
    %v8393 = vrot.slane %v8389, 1
    %v8394 = vrot.slane %v8390, 1
    %v8395 = vsel %vm3433, %v8393, %v8394
    %v8396 = vrot.slane %v8391, 1
    %v8397 = vrot.slane %v8392, 1
    %v8398 = vsel %vm3433, %v8396, %v8397
    %8403 = vst.msk [vmem:[#allocation5 + $0x20] sm:$0xff] %vm2947, %v8395
    %v8404 = vld [vmem:[#allocation5 + $0x48] sm:$0x3]
    %v8405 = vsel %vm7989, %v8394, %v8404
    %8406 = vst [vmem:[#allocation5 + $0x48] sm:$0x3] %v8405
    %8407 = vst.msk [vmem:[#allocation5 + $0x228] sm:$0xff] %vm2947, %v8398
    %v8408 = vld [vmem:[#allocation5 + $0x250] sm:$0x3]
    %v8409 = vsel %vm7989, %v8397, %v8408
    %8410 = vst [vmem:[#allocation5 + $0x250] sm:$0x3] %v8409
    %v8411 = vld [vmem:[#allocation5] sm:$0xff]
    %v8412 = vld [vmem:[#allocation5 + $0x8] sm:$0xff]
    %v8413 = vld [vmem:[#allocation5 + $0x10] sm:$0xff]
    %v8414 = vld [vmem:[#allocation5 + $0x18] sm:$0xff]
    %v8415 = vld [vmem:[#allocation5 + $0x20] sm:$0xff]
    %v8416 = vld [vmem:[#allocation5 + $0x28] sm:$0xf]
    %v8417 = vld [vmem:[#allocation5 + $0x30] sm:$0xf]
    %v8418 = vld [vmem:[#allocation5 + $0x38] sm:$0xf]
    %v8419 = vld [vmem:[#allocation5 + $0x40] sm:$0xf]
    %v8420 = vld [vmem:[#allocation5 + $0x48] sm:$0xf]
    %v8421 = vld [vmem:[#allocation5 + $0x208] sm:$0xff]
    %v8422 = vld [vmem:[#allocation5 + $0x210] sm:$0xff]
    %v8423 = vld [vmem:[#allocation5 + $0x218] sm:$0xff]
    %v8424 = vld [vmem:[#allocation5 + $0x220] sm:$0xff]
    %v8425 = vld [vmem:[#allocation5 + $0x228] sm:$0xff]
    %v8426 = vld [vmem:[#allocation5 + $0x230] sm:$0xf]
    %v8427 = vld [vmem:[#allocation5 + $0x238] sm:$0xf]
    %v8428 = vld [vmem:[#allocation5 + $0x240] sm:$0xf]
    %v8429 = vld [vmem:[#allocation5 + $0x248] sm:$0xf]
    %v8430 = vld [vmem:[#allocation5 + $0x250] sm:$0xf]
    %v8451 = vunpack.c.l.b16 %v8411
    %v8452 = vunpack.c.l.b16 %v8412
    %v8453 = vunpack.c.l.b16 %v8413
    %v8454 = vunpack.c.l.b16 %v8414
    %v8455 = vunpack.c.l.b16 %v8415
    %v8456 = vunpack.c.h.b16 %v8411
    %v8457 = vunpack.c.h.b16 %v8412
    %v8458 = vunpack.c.h.b16 %v8413
    %v8459 = vunpack.c.h.b16 %v8414
    %v8460 = vunpack.c.h.b16 %v8415
    %v8461 = vunpack.c.l.b16 %v8416
    %v8462 = vunpack.c.l.b16 %v8417
    %v8463 = vunpack.c.l.b16 %v8418
    %v8464 = vunpack.c.l.b16 %v8419
    %v8465 = vunpack.c.l.b16 %v8420
    %v8466 = vunpack.c.l.b16 %v8421
    %v8467 = vunpack.c.l.b16 %v8422
    %v8468 = vunpack.c.l.b16 %v8423
    %v8469 = vunpack.c.l.b16 %v8424
    %v8470 = vunpack.c.l.b16 %v8425
    %v8471 = vunpack.c.h.b16 %v8421
    %v8472 = vunpack.c.h.b16 %v8422
    %v8473 = vunpack.c.h.b16 %v8423
    %v8474 = vunpack.c.h.b16 %v8424
    %v8475 = vunpack.c.h.b16 %v8425
    %v8476 = vunpack.c.l.b16 %v8426
    %v8477 = vunpack.c.l.b16 %v8427
    %v8478 = vunpack.c.l.b16 %v8428
    %v8479 = vunpack.c.l.b16 %v8429
    %v8480 = vunpack.c.l.b16 %v8430
    %v8481 = vld [vmem:[%s4] sm:$0xf]
    %v8482 = vld [vmem:[%s4 + $0x4] sm:$0xf]
    %v8483 = vld [vmem:[%s4 + $0x8] sm:$0xf]
    %v8484 = vld [vmem:[%s4 + $0xc] sm:$0xf]
    %v8485 = vld [vmem:[%s4 + $0x10] sm:$0xf]
    %v8486 = vld [vmem:[%s4 + $0x14] sm:$0xf]
    %v8487 = vld [vmem:[%s4 + $0x18] sm:$0xf]
    %v8488 = vld [vmem:[%s4 + $0x1c] sm:$0xf]
    %v8489 = vld [vmem:[%s4 + $0x20] sm:$0xf]
    %v8490 = vld [vmem:[%s4 + $0x24] sm:$0xf]
    %v8491 = vld [vmem:[%s4 + $0x28] sm:$0xf]
    %v8492 = vld [vmem:[%s4 + $0x2c] sm:$0xf]
    %v8493 = vld [vmem:[%s4 + $0x30] sm:$0xf]
    %v8494 = vld [vmem:[%s4 + $0x34] sm:$0xf]
    %v8495 = vld [vmem:[%s4 + $0x38] sm:$0xf]
    %v8496 = vld [vmem:[%s4 + $0x3c] sm:$0xf]
    %v8497 = vld [vmem:[%s4 + $0x40] sm:$0xf]
    %v8498 = vld [vmem:[%s4 + $0x44] sm:$0xf]
    %v8499 = vld [vmem:[%s4 + $0x48] sm:$0xf]
    %v8500 = vld [vmem:[%s4 + $0x4c] sm:$0xf]
    %v8501 = vld [vmem:[%s4 + $0x50] sm:$0xf]
    %v8502 = vld [vmem:[%s4 + $0x54] sm:$0xf]
    %v8503 = vld [vmem:[%s4 + $0x58] sm:$0xf]
    %v8504 = vld [vmem:[%s4 + $0x5c] sm:$0xf]
    %v8505 = vld [vmem:[%s4 + $0x60] sm:$0xf]
    %v8506 = vld [vmem:[%s4 + $0x64] sm:$0xf]
    %v8507 = vld [vmem:[%s4 + $0x68] sm:$0xf]
    %v8508 = vld [vmem:[%s4 + $0x6c] sm:$0xf]
    %v8509 = vld [vmem:[%s4 + $0x70] sm:$0xf]
    %v8510 = vld [vmem:[%s4 + $0x74] sm:$0xf]
    %v8511 = vld [vmem:[%s4 + $0x78] sm:$0xf]
    %v8512 = vld [vmem:[%s4 + $0x7c] sm:$0xf]
    %v8513 = vld [vmem:[%s4 + $0x80] sm:$0xf]
    %v8514 = vld [vmem:[%s4 + $0x84] sm:$0xf]
    %v8515 = vld [vmem:[%s4 + $0x88] sm:$0xf]
    %v8516 = vld [vmem:[%s4 + $0x8c] sm:$0xf]
    %v8517 = vld [vmem:[%s4 + $0x90] sm:$0xf]
    %v8518 = vld [vmem:[%s4 + $0x94] sm:$0xf]
    %v8519 = vld [vmem:[%s4 + $0x98] sm:$0xf]
    %v8520 = vld [vmem:[%s4 + $0x9c] sm:$0xf]
    %v8521 = vld [vmem:[%s4 + $0xa0] sm:$0xf]
    %v8522 = vld [vmem:[%s4 + $0xa4] sm:$0xf]
    %v8523 = vld [vmem:[%s4 + $0xa8] sm:$0xf]
    %v8524 = vld [vmem:[%s4 + $0xac] sm:$0xf]
    %v8525 = vld [vmem:[%s4 + $0xb0] sm:$0xf]
    %v8526 = vld [vmem:[%s4 + $0xb4] sm:$0xf]
    %v8527 = vld [vmem:[%s4 + $0xb8] sm:$0xf]
    %v8528 = vld [vmem:[%s4 + $0xbc] sm:$0xf]
    %v8529 = vld [vmem:[%s4 + $0xc0] sm:$0xf]
    %v8530 = vld [vmem:[%s4 + $0xc4] sm:$0xf]
    %v8531 = vld [vmem:[%s4 + $0xc8] sm:$0xf]
    %v8532 = vld [vmem:[%s4 + $0xcc] sm:$0xf]
    %v8533 = vld [vmem:[%s4 + $0xd0] sm:$0xf]
    %v8534 = vld [vmem:[%s4 + $0xd4] sm:$0xf]
    %v8535 = vld [vmem:[%s4 + $0xd8] sm:$0xf]
    %v8536 = vld [vmem:[%s4 + $0xdc] sm:$0xf]
    %v8537 = vld [vmem:[%s4 + $0xe0] sm:$0xf]
    %v8538 = vld [vmem:[%s4 + $0xe4] sm:$0xf]
    %v8539 = vld [vmem:[%s4 + $0xe8] sm:$0xf]
    %v8540 = vld [vmem:[%s4 + $0xec] sm:$0xf]
    %v8541 = vld [vmem:[%s4 + $0xf0] sm:$0xf]
    %v8542 = vld [vmem:[%s4 + $0xf4] sm:$0xf]
    %v8543 = vld [vmem:[%s4 + $0xf8] sm:$0xf]
    %v8544 = vld [vmem:[%s4 + $0xfc] sm:$0xf]
    %v8545 = vld [vmem:[%s4 + $0x100] sm:$0xf]
    %v8546 = vld [vmem:[%s4 + $0x104] sm:$0xf]
    %v8547 = vld [vmem:[%s4 + $0x108] sm:$0xf]
    %v8548 = vld [vmem:[%s4 + $0x10c] sm:$0xf]
    %v8549 = vld [vmem:[%s4 + $0x110] sm:$0xf]
    %v8550 = vld [vmem:[%s4 + $0x114] sm:$0xf]
    %v8551 = vld [vmem:[%s4 + $0x118] sm:$0xf]
    %v8552 = vld [vmem:[%s4 + $0x11c] sm:$0xf]
    %v8553 = vpack.c.b16 %v8456, %v8451
    %v8554 = vpack.c.b16 %v8457, %v8452
    %v8555 = vpack.c.b16 %v8458, %v8453
    %v8556 = vpack.c.b16 %v8459, %v8454
    %v8557 = vpack.c.b16 %v8460, %v8455
    %v8558 = vpack.c.b16 %v8466, %v8461
    %v8559 = vpack.c.b16 %v8467, %v8462
    %v8560 = vpack.c.b16 %v8468, %v8463
    %v8561 = vpack.c.b16 %v8469, %v8464
    %v8562 = vpack.c.b16 %v8470, %v8465
    %v8563 = vpack.c.b16 %v8476, %v8471
    %v8564 = vpack.c.b16 %v8477, %v8472
    %v8565 = vpack.c.b16 %v8478, %v8473
    %v8566 = vpack.c.b16 %v8479, %v8474
    %v8567 = vpack.c.b16 %v8480, %v8475
    %v8652 = vunpack.c.l.b16 %v8481
    %v8653 = vunpack.c.l.b16 %v8482
    %v8654 = vunpack.c.l.b16 %v8483
    %v8655 = vunpack.c.l.b16 %v8484
    %v8656 = vunpack.c.l.b16 %v8485
    %v8657 = vunpack.c.l.b16 %v8486
    %v8658 = vunpack.c.l.b16 %v8487
    %v8659 = vunpack.c.l.b16 %v8488
    %v8660 = vunpack.c.l.b16 %v8489
    %v8661 = vunpack.c.l.b16 %v8490
    %v8662 = vunpack.c.l.b16 %v8491
    %v8663 = vunpack.c.l.b16 %v8492
    %v8664 = vunpack.c.l.b16 %v8493
    %v8665 = vunpack.c.l.b16 %v8494
    %v8666 = vunpack.c.l.b16 %v8495
    %v8667 = vunpack.c.l.b16 %v8496
    %v8668 = vunpack.c.l.b16 %v8497
    %v8669 = vunpack.c.l.b16 %v8498
    %v8670 = vunpack.c.l.b16 %v8499
    %v8671 = vunpack.c.l.b16 %v8500
    %v8672 = vunpack.c.l.b16 %v8501
    %v8673 = vunpack.c.l.b16 %v8502
    %v8674 = vunpack.c.l.b16 %v8503
    %v8675 = vunpack.c.l.b16 %v8504
    %v8676 = vunpack.c.l.b16 %v8505
    %v8677 = vunpack.c.l.b16 %v8506
    %v8678 = vunpack.c.l.b16 %v8507
    %v8679 = vunpack.c.l.b16 %v8508
    %v8680 = vunpack.c.l.b16 %v8509
    %v8681 = vunpack.c.l.b16 %v8510
    %v8682 = vunpack.c.l.b16 %v8511
    %v8683 = vunpack.c.l.b16 %v8512
    %v8684 = vunpack.c.l.b16 %v8513
    %v8685 = vunpack.c.l.b16 %v8514
    %v8686 = vunpack.c.l.b16 %v8515
    %v8687 = vunpack.c.l.b16 %v8516
    %v8688 = vunpack.c.l.b16 %v8517
    %v8689 = vunpack.c.l.b16 %v8518
    %v8690 = vunpack.c.l.b16 %v8519
    %v8691 = vunpack.c.l.b16 %v8520
    %v8692 = vunpack.c.l.b16 %v8521
    %v8693 = vunpack.c.l.b16 %v8522
    %v8694 = vunpack.c.l.b16 %v8523
    %v8695 = vunpack.c.l.b16 %v8524
    %v8696 = vunpack.c.l.b16 %v8525
    %v8697 = vunpack.c.l.b16 %v8526
    %v8698 = vunpack.c.l.b16 %v8527
    %v8699 = vunpack.c.l.b16 %v8528
    %v8700 = vunpack.c.l.b16 %v8529
    %v8701 = vunpack.c.l.b16 %v8530
    %v8702 = vunpack.c.l.b16 %v8531
    %v8703 = vunpack.c.l.b16 %v8532
    %v8704 = vunpack.c.l.b16 %v8533
    %v8705 = vunpack.c.l.b16 %v8534
    %v8706 = vunpack.c.l.b16 %v8535
    %v8707 = vunpack.c.l.b16 %v8536
    %v8708 = vunpack.c.l.b16 %v8537
    %v8709 = vunpack.c.l.b16 %v8538
    %v8710 = vunpack.c.l.b16 %v8539
    %v8711 = vunpack.c.l.b16 %v8540
    %v8712 = vunpack.c.l.b16 %v8541
    %v8713 = vunpack.c.l.b16 %v8542
    %v8714 = vunpack.c.l.b16 %v8543
    %v8715 = vunpack.c.l.b16 %v8544
    %v8716 = vunpack.c.l.b16 %v8545
    %v8717 = vunpack.c.l.b16 %v8546
    %v8718 = vunpack.c.l.b16 %v8547
    %v8719 = vunpack.c.l.b16 %v8548
    %v8720 = vunpack.c.l.b16 %v8549
    %v8721 = vunpack.c.l.b16 %v8550
    %v8722 = vunpack.c.l.b16 %v8551
    %v8723 = vunpack.c.l.b16 %v8552
    %v8724 = vpack.c.b16 %v8653, %v8652
    %v8725 = vpack.c.b16 %v8655, %v8654
    %v8726 = vpack.c.b16 %v8657, %v8656
    %v8727 = vpack.c.b16 %v8659, %v8658
    %v8728 = vpack.c.b16 %v8661, %v8660
    %v8729 = vpack.c.b16 %v8663, %v8662
    %v8730 = vpack.c.b16 %v8665, %v8664
    %v8731 = vpack.c.b16 %v8667, %v8666
    %v8732 = vpack.c.b16 %v8669, %v8668
    %v8733 = vpack.c.b16 %v8671, %v8670
    %v8734 = vpack.c.b16 %v8673, %v8672
    %v8735 = vpack.c.b16 %v8675, %v8674
    %v8736 = vpack.c.b16 %v8677, %v8676
    %v8737 = vpack.c.b16 %v8679, %v8678
    %v8738 = vpack.c.b16 %v8681, %v8680
    %v8739 = vpack.c.b16 %v8683, %v8682
    %v8740 = vpack.c.b16 %v8685, %v8684
    %v8741 = vpack.c.b16 %v8687, %v8686
    %v8742 = vpack.c.b16 %v8689, %v8688
    %v8743 = vpack.c.b16 %v8691, %v8690
    %v8744 = vpack.c.b16 %v8693, %v8692
    %v8745 = vpack.c.b16 %v8695, %v8694
    %v8746 = vpack.c.b16 %v8697, %v8696
    %v8747 = vpack.c.b16 %v8699, %v8698
    %v8748 = vpack.c.b16 %v8701, %v8700
    %v8749 = vpack.c.b16 %v8703, %v8702
    %v8750 = vpack.c.b16 %v8705, %v8704
    %v8751 = vpack.c.b16 %v8707, %v8706
    %v8752 = vpack.c.b16 %v8709, %v8708
    %v8753 = vpack.c.b16 %v8711, %v8710
    %v8754 = vpack.c.b16 %v8713, %v8712
    %v8755 = vpack.c.b16 %v8715, %v8714
    %v8756 = vpack.c.b16 %v8717, %v8716
    %v8757 = vpack.c.b16 %v8719, %v8718
    %v8758 = vpack.c.b16 %v8721, %v8720
    %v8759 = vpack.c.b16 %v8723, %v8722
    %v8797 = vsel %vm2947, %v8557, 0
    %v8800 = vsel %vm2947, %v8562, 0
    %v8803 = vsel %vm2947, %v8567, 0
    %8805 = vmatprep.subr.bf16.mxu0 0
    %8806 = vmatpush1.bf16.msra.mxu0 %v8724
    %8807 = vmatprep.subr.bf16.mxu0 0
    %8808 = vmatpush1.bf16.msra.mxu0 %v8725
    %8809 = vmatprep.subr.bf16.mxu0 0
    %8810 = vmatpush1.bf16.msra.mxu0 %v8726
    %8811 = vmatprep.subr.bf16.mxu0 0
    %8812 = vmatpush1.bf16.msra.mxu0 %v8727
    %8813 = vmatprep.subr.bf16.mxu0 0
    %8814 = vmatpush1.bf16.msra.mxu0 %v8728
    %8815 = vmatprep.subr.bf16.mxu0 0
    %8816 = vmatpush1.bf16.msra.mxu0 %v8729
    %8817 = vmatprep.subr.bf16.mxu0 0
    %8818 = vmatpush1.bf16.msra.mxu0 %v8730
    %8819 = vmatprep.subr.bf16.mxu0 0
    %8820 = vmatpush1.bf16.msra.mxu0 %v8731
    %8821 = vmatprep.subr.bf16.mxu0 0
    %8822 = vmatpush1.bf16.msra.mxu0 %v8732
    %8823 = vmatprep.subr.bf16.mxu0 0
    %8824 = vmatpush1.bf16.msra.mxu0 %v8733
    %8825 = vmatprep.subr.bf16.mxu0 0
    %8826 = vmatpush1.bf16.msra.mxu0 %v8734
    %8827 = vmatprep.subr.bf16.mxu0 0
    %8828 = vmatpush1.bf16.msra.mxu0 %v8735
    %8829 = vmatprep.subr.bf16.mxu0 0
    %8830 = vmatpush1.bf16.msra.mxu0 %v8736
    %8831 = vmatprep.subr.bf16.mxu0 0
    %8832 = vmatpush1.bf16.msra.mxu0 %v8737
    %8833 = vmatprep.subr.bf16.mxu0 0
    %8834 = vmatpush1.bf16.msra.mxu0 %v8738
    %8835 = vmatprep.subr.bf16.mxu0 0
    %8836 = vmatpush1.bf16.msra.mxu0 %v8739
    %8837 = vmatprep.mubr.bf16.mxu0 %v8554
    %8838 = vmatmul.mubr.bf16.gmra.mrb[0].mxu0 %v8553
    %v8839 = vpop.f32.mrb[0].mxu0
    %v8840 = vadd.f32 0.0, %v8839
    %v8841 = vpop.f32.mrb[0].mxu0
    %v8842 = vpop.f32.mrb[0].mxu0
    %v8843 = vadd.f32 0.0, %v8842
    %v8844 = vpop.f32.mrb[0].mxu0
    %8845 = vmatprep.mubr.bf16.mxu0 %v8559
    %8846 = vmatmul.mubr.bf16.gmra.mrb[0].mxu0 %v8558
    %v8847 = vpop.f32.mrb[0].mxu0
    %v8848 = vadd.f32 0.0, %v8847
    %v8849 = vpop.f32.mrb[0].mxu0
    %v8850 = vpop.f32.mrb[0].mxu0
    %v8851 = vadd.f32 0.0, %v8850
    %v8852 = vpop.f32.mrb[0].mxu0
    %8853 = vmatprep.mubr.bf16.mxu0 %v8564
    %8854 = vmatmul.mubr.bf16.gmra.mrb[0].mxu0 %v8563
    %v8855 = vpop.f32.mrb[0].mxu0
    %v8856 = vadd.f32 0.0, %v8855
    %v8857 = vpop.f32.mrb[0].mxu0
    %v8858 = vpop.f32.mrb[0].mxu0
    %v8859 = vadd.f32 0.0, %v8858
    %v8860 = vpop.f32.mrb[0].mxu0
    %8861 = vdwg.mxu0
    %8862 = vmatprep.subr.bf16.mxu0 0
    %8863 = vmatpush1.bf16.msra.mxu0 %v8740
    %8864 = vmatprep.subr.bf16.mxu0 0
    %8865 = vmatpush1.bf16.msra.mxu0 %v8741
    %8866 = vmatprep.subr.bf16.mxu0 0
    %8867 = vmatpush1.bf16.msra.mxu0 %v8742
    %8868 = vmatprep.subr.bf16.mxu0 0
    %8869 = vmatpush1.bf16.msra.mxu0 %v8743
    %8870 = vmatprep.subr.bf16.mxu0 0
    %8871 = vmatpush1.bf16.msra.mxu0 %v8744
    %8872 = vmatprep.subr.bf16.mxu0 0
    %8873 = vmatpush1.bf16.msra.mxu0 %v8745
    %8874 = vmatprep.subr.bf16.mxu0 0
    %8875 = vmatpush1.bf16.msra.mxu0 %v8746
    %8876 = vmatprep.subr.bf16.mxu0 0
    %8877 = vmatpush1.bf16.msra.mxu0 %v8747
    %8878 = vmatprep.subr.bf16.mxu0 0
    %8879 = vmatpush1.bf16.msra.mxu0 %v8748
    %8880 = vmatprep.subr.bf16.mxu0 0
    %8881 = vmatpush1.bf16.msra.mxu0 %v8749
    %8882 = vmatprep.subr.bf16.mxu0 0
    %8883 = vmatpush1.bf16.msra.mxu0 %v8750
    %8884 = vmatprep.subr.bf16.mxu0 0
    %8885 = vmatpush1.bf16.msra.mxu0 %v8751
    %8886 = vmatprep.subr.bf16.mxu0 0
    %8887 = vmatpush1.bf16.msra.mxu0 %v8752
    %8888 = vmatprep.subr.bf16.mxu0 0
    %8889 = vmatpush1.bf16.msra.mxu0 %v8753
    %8890 = vmatprep.subr.bf16.mxu0 0
    %8891 = vmatpush1.bf16.msra.mxu0 %v8754
    %8892 = vmatprep.subr.bf16.mxu0 0
    %8893 = vmatpush1.bf16.msra.mxu0 %v8755
    %8894 = vmatprep.mubr.bf16.mxu0 %v8556
    %8895 = vmatmul.mubr.bf16.gmra.mrb[0].mxu0 %v8555
    %v8896 = vpop.f32.mrb[0].mxu0
    %v8897 = vadd.f32 %v8840, %v8896
    %v8898 = vpop.f32.mrb[0].mxu0
    %v8899 = vpop.f32.mrb[0].mxu0
    %v8900 = vadd.f32 %v8843, %v8899
    %v8901 = vpop.f32.mrb[0].mxu0
    %8902 = vmatprep.mubr.bf16.mxu0 %v8561
    %8903 = vmatmul.mubr.bf16.gmra.mrb[0].mxu0 %v8560
    %v8904 = vpop.f32.mrb[0].mxu0
    %v8905 = vadd.f32 %v8848, %v8904
    %v8906 = vpop.f32.mrb[0].mxu0
    %v8907 = vpop.f32.mrb[0].mxu0
    %v8908 = vadd.f32 %v8851, %v8907
    %v8909 = vpop.f32.mrb[0].mxu0
    %8910 = vmatprep.mubr.bf16.mxu0 %v8566
    %8911 = vmatmul.mubr.bf16.gmra.mrb[0].mxu0 %v8565
    %v8912 = vpop.f32.mrb[0].mxu0
    %v8913 = vadd.f32 %v8856, %v8912
    %v8914 = vpop.f32.mrb[0].mxu0
    %v8915 = vpop.f32.mrb[0].mxu0
    %v8916 = vadd.f32 %v8859, %v8915
    %v8917 = vpop.f32.mrb[0].mxu0
    %8918 = vdwg.mxu0
    %8919 = vmatprep.subr.bf16.mxu0 0
    %8920 = vmatpush1.bf16.msra.mxu0 %v8756
    %8921 = vmatprep.subr.bf16.mxu0 0
    %8922 = vmatpush1.bf16.msra.mxu0 %v8757
    %8923 = vmatprep.subr.bf16.mxu0 0
    %8924 = vmatpush1.bf16.msra.mxu0 %v8758
    %8925 = vmatprep.subr.bf16.mxu0 0
    %8926 = vmatpush1.bf16.msra.mxu0 %v8759
    %8927 = vmatprep.subr.bf16.mxu0 0
    %8928 = vmatpush1.bf16.msra.mxu0 0
    %8929 = vmatprep.subr.bf16.mxu0 0
    %8930 = vmatpush1.bf16.msra.mxu0 0
    %8931 = vmatprep.subr.bf16.mxu0 0
    %8932 = vmatpush1.bf16.msra.mxu0 0
    %8933 = vmatprep.subr.bf16.mxu0 0
    %8934 = vmatpush1.bf16.msra.mxu0 0
    %8935 = vmatprep.subr.bf16.mxu0 0
    %8936 = vmatpush1.bf16.msra.mxu0 0
    %8937 = vmatprep.subr.bf16.mxu0 0
    %8938 = vmatpush1.bf16.msra.mxu0 0
    %8939 = vmatprep.subr.bf16.mxu0 0
    %8940 = vmatpush1.bf16.msra.mxu0 0
    %8941 = vmatprep.subr.bf16.mxu0 0
    %8942 = vmatpush1.bf16.msra.mxu0 0
    %8943 = vmatprep.subr.bf16.mxu0 0
    %8944 = vmatpush1.bf16.msra.mxu0 0
    %8945 = vmatprep.subr.bf16.mxu0 0
    %8946 = vmatpush1.bf16.msra.mxu0 0
    %8947 = vmatprep.subr.bf16.mxu0 0
    %8948 = vmatpush1.bf16.msra.mxu0 0
    %8949 = vmatprep.subr.bf16.mxu0 0
    %8950 = vmatpush1.bf16.msra.mxu0 0
    %8951 = vmatprep.mubr.bf16.mxu0 0
    %8952 = vmatmul.mubr.bf16.gmra.mrb[0].mxu0 %v8797
    %v8953 = vpop.f32.mrb[0].mxu0
    %v8954 = vadd.f32 %v8897, %v8953
    %v8955 = vpop.f32.mrb[0].mxu0
    %v8956 = vpop.f32.mrb[0].mxu0
    %v8957 = vadd.f32 %v8900, %v8956
    %v8958 = vpop.f32.mrb[0].mxu0
    %8959 = vmatprep.mubr.bf16.mxu0 0
    %8960 = vmatmul.mubr.bf16.gmra.mrb[0].mxu0 %v8800
    %v8961 = vpop.f32.mrb[0].mxu0
    %v8962 = vadd.f32 %v8905, %v8961
    %v8963 = vpop.f32.mrb[0].mxu0
    %v8964 = vpop.f32.mrb[0].mxu0
    %v8965 = vadd.f32 %v8908, %v8964
    %v8966 = vpop.f32.mrb[0].mxu0
    %8967 = vmatprep.mubr.bf16.mxu0 0
    %8968 = vmatmul.mubr.bf16.gmra.mrb[0].mxu0 %v8803
    %v8969 = vpop.f32.mrb[0].mxu0
    %v8970 = vadd.f32 %v8913, %v8969
    %v8971 = vpop.f32.mrb[0].mxu0
    %v8972 = vpop.f32.mrb[0].mxu0
    %v8973 = vadd.f32 %v8916, %v8972
    %v8974 = vpop.f32.mrb[0].mxu0
    %8975 = vdwg.mxu0
    %s8976 = scalar_lea.vmem %s8, 3
    %v8977 = vld [vmem:[%s8976] sm:$0x1]
    %v8979 = vlaneseq
    %v8980 = vshrl.u32 %v8979, 7
    %v8981 = vsub.s32 0, %v8980
    %v8982 = vrot.slane %v8977, %v8981
    %v8984 = vadd.f32 %v8954, %v8982
    %v8985 = vadd.f32 %v8957, %v8982
    %v8986 = vadd.f32 %v8962, %v8982
    %v8987 = vadd.f32 %v8965, %v8982
    %v8988 = vadd.f32 %v8970, %v8982
    %v8989 = vadd.f32 %v8973, %v8982
    %v8990 = vmax.f32 %v8984, 0.0
    %v8991 = vmax.f32 %v8985, 0.0
    %v8992 = vmax.f32 %v8986, 0.0
    %v8993 = vmax.f32 %v8987, 0.0
    %v8994 = vmax.f32 %v8988, 0.0
    %v8995 = vmax.f32 %v8989, 0.0
    %v9002 = vrot.slane %v8990, 1
    %v9003 = vrot.slane %v8991, 1
    %v9004 = vsel %vm6135, %v9002, %v9003
    %v9005 = vrot.slane %v8992, 1
    %v9006 = vsel %vm6135, %v9003, %v9005
    %v9007 = vrot.slane %v8993, 1
    %v9008 = vrot.slane %v8994, 1
    %v9009 = vsel %vm6135, %v9007, %v9008
    %v9010 = vrot.slane %v8995, 1
    %v9011 = vsel %vm6135, %v9008, %v9010
    %v9016 = vmax.f32 %v8990, %v9004
    %v9017 = vmax.f32 %v8991, %v9006
    %v9018 = vmax.f32 %v8993, %v9009
    %v9019 = vmax.f32 %v8994, %v9011
    %v9020 = vmax.f32 %v9016, %v9017
    %v9021 = vmax.f32 %v9018, %v9019
    %vm9022 = vcmask 516096
    %9023 = vst.msk [vmem:[#allocation6] sm:$0x1] %vm9022, %v9020
    %9024 = vst.msk [vmem:[#allocation6 + $0x1] sm:$0x1] %vm9022, %v9021
    // Predicated region
    $region38: #{_forward_impl.1} parent=1 // pred_check
      _
    $region39: #{_forward_impl.1} parent=1 // pred_check_branch
      %9026 = sbr.rel (0) target = $region41
    $region40: #{_forward_impl.1} parent=1 // pred_region
      %s9028 = ssub.s32 32, 32
      %9029 = vsyncadd [#allocation7], %s9028
      %s9030 = sshll.u32 [#allocation6], 4
      %s9031 = int_to_ptr.vmem [resolvable:$true] %s9030
      %9036 = dma.vmem_to_hbm [thread:$0]  %s9031, 32, %s9, [#allocation7], 16, 16, 1
    $region41: #{_forward_impl.1} parent=1 // pred_fallthru
      _
    // Predicated region
    $region42: #{_forward_impl.1} parent=1 // pred_check
      _
    $region43: #{_forward_impl.1} parent=1 // pred_check_branch
      %9038 = sbr.rel (0) target = $region45
    $region44: #{_forward_impl.1} parent=1 // pred_region
      %9039 = dma.done [#allocation7], 32
    $region45: #{_forward_impl.1} parent=1 // pred_fallthru
      _
    %9040 = vsyncpa [#allocation7], 1

</llo_original>
